<compile_context>
chip_gen: v7x
topology: tpu7x:2x2x1
jax: 0.10.0
libtpu: 0.0.40
codegen_flags: <defaults>
</compile_context>

<pallas_src>
import functools

import numpy as np

import jax
import jax.numpy as jnp
from jax.experimental import pallas as pl
from jax.experimental.pallas import tpu as pltpu


def _embedding_kernel(freq_ref, x_ref, o_ref, *, in_channels, n_freqs):
    """One batch tile: build the full (TB, C_out) slab and store it once."""
    x32 = x_ref[...].astype(jnp.float32)                       # (TB, C)

    # Lane-packed frequency scaling: one wide multiply + one wide sin/cos
    # on a (TB, N_freqs*C) operand instead of N_freqs narrow (TB, C) ops.
    xw = jnp.concatenate([x32] * n_freqs, axis=-1)             # (TB, N*C)
    xw = xw * freq_ref[...].astype(jnp.float32)                # bcast (1, N*C)
    sw = jnp.sin(xw)                                           # (TB, N*C)
    cw = jnp.cos(xw)                                           # (TB, N*C)

    # Assemble output in the PyTorch ordering:
    #   [x, sin(f0 x), cos(f0 x), sin(f1 x), cos(f1 x), ...]
    c = in_channels
    pieces = [x32]
    for i in range(n_freqs):
        pieces.append(sw[:, i * c:(i + 1) * c])
        pieces.append(cw[:, i * c:(i + 1) * c])
    out = jnp.concatenate(pieces, axis=-1)                     # (TB, C_out)

    # Single wide store per tile, cast back to the I/O dtype.
    o_ref[...] = out.astype(o_ref.dtype)


def make_embedding(in_channels: int, N_freqs: int, logscale: bool = True,
                   block_rows: int = 4096):
    """Returns a callable f(x: (B, in_channels)) -> (B, out_channels)."""
    if logscale:
        freq_bands = 2.0 ** np.linspace(0.0, N_freqs - 1, N_freqs)
    else:
        freq_bands = np.linspace(1.0, 2.0 ** (N_freqs - 1), N_freqs)
    # Static per-column frequency row: [f0]*C, [f1]*C, ... shape (N*C,)
    freq_wide = np.repeat(freq_bands.astype(np.float32), in_channels)
    out_channels = in_channels * (2 * N_freqs + 1)

    kernel = functools.partial(
        _embedding_kernel, in_channels=in_channels, n_freqs=N_freqs
    )

    def embed(x):
        B, C = x.shape
        assert C == in_channels, (C, in_channels)

        # Batch tile: multiple of 8 (sublane rule); sized well under the
        # v7x scoped-VMEM budget even with double buffering.
        tb = min(block_rows, max(8, B))
        tb = max(8, (tb // 8) * 8)
        n_blocks = pl.cdiv(B, tb)
        b_padded = n_blocks * tb
        xp = x if b_padded == B else jnp.pad(x, ((0, b_padded - B), (0, 0)))

        freq_arr = jnp.asarray(freq_wide).reshape(1, N_freqs * in_channels)

        out = pl.pallas_call(
            kernel,
            out_shape=jax.ShapeDtypeStruct((b_padded, out_channels), x.dtype),
            grid=(n_blocks,),
            in_specs=[
                # static freq row, same block every step
                pl.BlockSpec((1, N_freqs * in_channels), lambda i: (0, 0)),
                # batch-tiled input
                pl.BlockSpec((tb, in_channels), lambda i: (i, 0)),
            ],
            out_specs=pl.BlockSpec((tb, out_channels), lambda i: (i, 0)),
            compiler_params=pltpu.CompilerParams(
                dimension_semantics=("parallel",),
            ),
        )(freq_arr, xp)

        return out[:B] if b_padded != B else out

    return embed


def _reference_embed(x, in_channels, N_freqs, logscale=True):
    """Pure-JAX reference matching the PyTorch forward."""
    if logscale:
        freq_bands = 2.0 ** jnp.linspace(0.0, N_freqs - 1, N_freqs)
    else:
        freq_bands = jnp.linspace(1.0, 2.0 ** (N_freqs - 1), N_freqs)
    out = [x]
    for f in freq_bands:
        out.append(jnp.sin(f * x))
        out.append(jnp.cos(f * x))
    return jnp.concatenate(out, axis=-1)


if __name__ == "__main__":
    key = jax.random.PRNGKey(0)
    k1, k2 = jax.random.split(key)

    # --- edge_e = Embedding(3, 4) on xyz-like directions -----------------
    B1, C1, NF = 1000, 3, 4
    xyz = jax.random.normal(k1, (B1, C1), dtype=jnp.float32)
    edge_embed = make_embedding(C1, NF, logscale=True, block_rows=256)
    out_edge = edge_embed(xyz)
    jax.block_until_ready(out_edge)
    ref_edge = _reference_embed(xyz, C1, NF, logscale=True)
    assert out_edge.shape == (B1, C1 * (2 * NF + 1)), out_edge.shape
    assert jnp.allclose(out_edge, ref_edge, atol=1e-4, rtol=1e-5), \
        "edge_e embedding mismatch vs reference"

    # --- pe = Embedding(2, 4) on (theta, phi)-style 2-D features ---------
    B2, C2 = 642, 2   # icosphere-ish vertex count, small
    theta_phi = jax.random.uniform(k2, (B2, C2), dtype=jnp.float32)
    pe_embed = make_embedding(C2, NF, logscale=True, block_rows=256)
    out_pe = pe_embed(theta_phi)
    jax.block_until_ready(out_pe)
    ref_pe = _reference_embed(theta_phi, C2, NF, logscale=True)
    assert out_pe.shape == (B2, C2 * (2 * NF + 1)), out_pe.shape
    assert jnp.allclose(out_pe, ref_pe, atol=1e-4, rtol=1e-5), \
        "pe embedding mismatch vs reference"

    print("KERNEL_OK")
</pallas_src>

<mosaic_0001>
module attributes {stable_mosaic.version = 11 : i64} {
  func.func @_embedding_kernel(%arg0: i32, %arg1: memref<1x12xf32, #tpu.memory_space<vmem>>, %arg2: memref<256x3xf32, #tpu.memory_space<vmem>>, %arg3: memref<256x27xf32, #tpu.memory_space<vmem>>) attributes {dimension_semantics = [#tpu.dimension_semantics<parallel>], iteration_bounds = array<i64: 4>, scalar_prefetch = 0 : i64, scratch_operands = 0 : i64, tpu.core_type = #tpu.core_type<tc>, window_params = [{pipeline_mode = #tpu.pipeline_mode<synchronous>, transform_indices = @transform_0, window_bounds = array<i64: 1, 12>}, {transform_indices = @transform_1, window_bounds = array<i64: 256, 3>}, {transform_indices = @transform_2, window_bounds = array<i64: 256, 27>}]} {
    %c0 = arith.constant 0 : index
    %c0_0 = arith.constant 0 : index
    %0 = vector.load %arg2[%c0, %c0_0] : memref<256x3xf32, #tpu.memory_space<vmem>>, vector<256x3xf32>
    %1 = tpu.concatenate %0, %0, %0, %0 in 1 : vector<256x3xf32>, vector<256x3xf32>, vector<256x3xf32>, vector<256x3xf32> -> vector<256x12xf32>
    %c0_1 = arith.constant 0 : index
    %c0_2 = arith.constant 0 : index
    %2 = vector.load %arg1[%c0_1, %c0_2] : memref<1x12xf32, #tpu.memory_space<vmem>>, vector<1x12xf32>
    %3 = vector.broadcast %2 : vector<1x12xf32> to vector<256x12xf32>
    %4 = arith.mulf %1, %3 : vector<256x12xf32>
    %5 = math.sin %4 : vector<256x12xf32>
    %6 = math.cos %4 : vector<256x12xf32>
    %7 = vector.extract_strided_slice %5 {offsets = [0, 0], sizes = [256, 3], strides = [1, 1]} : vector<256x12xf32> to vector<256x3xf32>
    %8 = vector.extract_strided_slice %6 {offsets = [0, 0], sizes = [256, 3], strides = [1, 1]} : vector<256x12xf32> to vector<256x3xf32>
    %9 = vector.extract_strided_slice %5 {offsets = [0, 3], sizes = [256, 3], strides = [1, 1]} : vector<256x12xf32> to vector<256x3xf32>
    %10 = vector.extract_strided_slice %6 {offsets = [0, 3], sizes = [256, 3], strides = [1, 1]} : vector<256x12xf32> to vector<256x3xf32>
    %11 = vector.extract_strided_slice %5 {offsets = [0, 6], sizes = [256, 3], strides = [1, 1]} : vector<256x12xf32> to vector<256x3xf32>
    %12 = vector.extract_strided_slice %6 {offsets = [0, 6], sizes = [256, 3], strides = [1, 1]} : vector<256x12xf32> to vector<256x3xf32>
    %13 = vector.extract_strided_slice %5 {offsets = [0, 9], sizes = [256, 3], strides = [1, 1]} : vector<256x12xf32> to vector<256x3xf32>
    %14 = vector.extract_strided_slice %6 {offsets = [0, 9], sizes = [256, 3], strides = [1, 1]} : vector<256x12xf32> to vector<256x3xf32>
    %15 = tpu.concatenate %0, %7, %8, %9, %10, %11, %12, %13, %14 in 1 : vector<256x3xf32>, vector<256x3xf32>, vector<256x3xf32>, vector<256x3xf32>, vector<256x3xf32>, vector<256x3xf32>, vector<256x3xf32>, vector<256x3xf32>, vector<256x3xf32> -> vector<256x27xf32>
    %c0_3 = arith.constant 0 : index
    %c0_4 = arith.constant 0 : index
    %16 = vector.load %arg3[%c0_3, %c0_4] : memref<256x27xf32, #tpu.memory_space<vmem>>, vector<256x27xf32>
    tpu.vector_store %arg3[%c0_3, %c0_4], %15 {strides = array<i32>} : memref<256x27xf32, #tpu.memory_space<vmem>>, vector<256x27xf32>,
    return
  }
  func.func @transform_0(%arg0: i32) -> (i32, i32) {
    %c0_i32 = arith.constant 0 : i32
    %c0_i32_0 = arith.constant 0 : i32
    %c0_i32_1 = arith.constant 0 : i32
    return %c0_i32, %c0_i32_0 : i32, i32
  }
  func.func @transform_1(%arg0: i32) -> (i32, i32) {
    %c0_i32 = arith.constant 0 : i32
    %c0_i32_0 = arith.constant 0 : i32
    return %arg0, %c0_i32 : i32, i32
  }
  func.func @transform_2(%arg0: i32) -> (i32, i32) {
    %c0_i32 = arith.constant 0 : i32
    %c0_i32_0 = arith.constant 0 : i32
    return %arg0, %c0_i32 : i32, i32
  }
}

</mosaic_0001>

<llo_original>
// kernel: tpu_custom_call.1
$region0: #{tpu_custom_call.1}
  #allocation0 [shape = 'u32[]', space=smem, size = 0x4, offset = 0x4, fixed_abs, tag = 'smem constant byte address 0x4 - core index']
  #allocation1 [shape = 'u32[144,128]{1,0:T(1,128)}', space=vmem, size = 0x12000, scoped, tag = 'internal scratch']
  %s0 = inlined_call_operand.vmem [shape: f32[1,12], index: 0, kind: input, shape index: {}]
  %s1 = inlined_call_operand.vmem [shape: f32[1024,3], index: 1, kind: input, shape index: {}]
  %s2 = inlined_call_operand.vmem [shape: f32[1024,27], index: 2, kind: output, shape index: {}]
  %s3 = sld [smem:[#allocation0]]
  $region41: #{tpu_custom_call.1} parent=0
    _
  %s5 = ssub.s32 1, %s3
  %s6 = scalar_select 0, %s5, %s3
  loop: start=0, step=1, limit=6
  $region2: #{tpu_custom_call.1} parent=0 // loop_pre_header
    _
  $region3: #{tpu_custom_call.1} parent=0 // loop_header
    %s8 = sphi 0, %s12
    %p9 = scmp.ge.s32.totalorder %s8, 6
    %s16 = sphi 0, %s16
    %s18 = sphi 0, %s16
    %s19 = sphi 0, %s18
    %s33 = sphi 0, %s19
    %s39 = sphi 0, %s41
    %s42 = sphi 0, %s39
    %s43 = sphi 0, %s42
    %s59 = sphi 0, %s43
    %s65 = sphi 0, %s67
    %s68 = sphi 0, %s65
    %s69 = sphi 0, %s68
    %s85 = sphi 0, %s69
  $region4: #{tpu_custom_call.1} parent=0 // loop_header_branch
    %11 = sbr.rel (%p9) target = $region8
  $region5: #{tpu_custom_call.1} parent=0 // loop_body
    %s13 = ssub.s32 %s8, 1
    %s14 = ssub.s32 %s8, 2
    %s15 = sadd.s32 %s8, 1
    %s17 = sadd.s32 %s16, 1
    %p20 = scmp.eq.s32.totalorder %s8, 3
    %p21 = scmp.ne.s32.totalorder %s16, %s18
    %p22 = scmp.eq.s32.totalorder %s8, 0
    %p23 = por %p21, %p22
    %p24 = scmp.ne.s32.totalorder %s16, %s18
    %p25 = scmp.eq.s32.totalorder %s13, 3
    %p26 = por %p24, %p25
    %p27 = scmp.ne.s32.totalorder %s18, %s19
    %p28 = scmp.eq.s32.totalorder %s13, 0
    %p29 = por %p27, %p28
    %p30 = scmp.ne.s32.totalorder %s18, %s19
    %p31 = scmp.eq.s32.totalorder %s14, 3
    %p32 = por %p30, %p31
    %p34 = scmp.ne.s32.totalorder %s19, %s33
    %p35 = scmp.eq.s32.totalorder %s14, 0
    %p36 = por %p34, %p35
    %s37 = ssub.s32 %s8, %s15
    %p38 = scmp.eq.s32.totalorder %s37, 0
    %s40 = sadd.s32 %s39, 1
    %s41 = scalar_select %p38, %s39, %s40
    %p44 = pneg %p38
    %p45 = scmp.eq.s32.totalorder %s8, 3
    %p46 = por %p44, %p45
    %p47 = scmp.ne.s32.totalorder %s39, %s42
    %p48 = scmp.eq.s32.totalorder %s8, 0
    %p49 = por %p47, %p48
    %p50 = scmp.ne.s32.totalorder %s39, %s42
    %p51 = scmp.eq.s32.totalorder %s13, 3
    %p52 = por %p50, %p51
    %p53 = scmp.ne.s32.totalorder %s42, %s43
    %p54 = scmp.eq.s32.totalorder %s13, 0
    %p55 = por %p53, %p54
    %p56 = scmp.ne.s32.totalorder %s42, %s43
    %p57 = scmp.eq.s32.totalorder %s14, 3
    %p58 = por %p56, %p57
    %p60 = scmp.ne.s32.totalorder %s43, %s59
    %p61 = scmp.eq.s32.totalorder %s14, 0
    %p62 = por %p60, %p61
    %s63 = ssub.s32 %s8, %s15
    %p64 = scmp.eq.s32.totalorder %s63, 0
    %s66 = sadd.s32 %s65, 1
    %s67 = scalar_select %p64, %s65, %s66
    %p70 = pneg %p64
    %p71 = scmp.eq.s32.totalorder %s8, 3
    %p72 = por %p70, %p71
    %p73 = scmp.ne.s32.totalorder %s65, %s68
    %p74 = scmp.eq.s32.totalorder %s8, 0
    %p75 = por %p73, %p74
    %p76 = scmp.ne.s32.totalorder %s65, %s68
    %p77 = scmp.eq.s32.totalorder %s13, 3
    %p78 = por %p76, %p77
    %p79 = scmp.ne.s32.totalorder %s68, %s69
    %p80 = scmp.eq.s32.totalorder %s13, 0
    %p81 = por %p79, %p80
    %p82 = scmp.ne.s32.totalorder %s68, %s69
    %p83 = scmp.eq.s32.totalorder %s14, 3
    %p84 = por %p82, %p83
    %p86 = scmp.ne.s32.totalorder %s69, %s85
    %p87 = scmp.eq.s32.totalorder %s14, 0
    %p88 = por %p86, %p87
    %p89 = scmp.le.s32.totalorder 1, %s8
    %p90 = scmp.lt.s32.totalorder %s8, 5
    %p91 = pnand %p89, %p90
    %p92 = pneg %p91
    // Predicated region
    $region9: #{tpu_custom_call.1} parent=5 // pred_check
      _
    $region10: #{tpu_custom_call.1} parent=5 // pred_check_branch
      %94 = sbr.rel (%p91) target = $region12
    $region11: #{tpu_custom_call.1} parent=5 // pred_region
      %s95 = ssub.s32 %s8, 1
      // Predicated region
      $region13: #{tpu_custom_call.1} parent=11 // pred_check
        %p96 = pneg %p29
      $region14: #{tpu_custom_call.1} parent=11 // pred_check_branch
        %98 = sbr.rel (%p96) target = $region16
      $region15: #{tpu_custom_call.1} parent=11 // pred_region
        _
      $region16: #{tpu_custom_call.1} parent=11 // pred_fallthru
        _
    $region12: #{tpu_custom_call.1} parent=5 // pred_fallthru
      _
    %p99 = scmp.lt.s32.totalorder %s8, 4
    // Predicated region
    $region17: #{tpu_custom_call.1} parent=5 // pred_check
      %p100 = pneg %p99
    $region18: #{tpu_custom_call.1} parent=5 // pred_check_branch
      %102 = sbr.rel (%p100) target = $region20
    $region19: #{tpu_custom_call.1} parent=5 // pred_region
      // Predicated region
      $region21: #{tpu_custom_call.1} parent=19 // pred_check
        %p103 = pneg %p49
      $region22: #{tpu_custom_call.1} parent=19 // pred_check_branch
        %105 = sbr.rel (%p103) target = $region24
      $region23: #{tpu_custom_call.1} parent=19 // pred_region
        %s106 = smul.u32 32, %s8
        %p107 = scmp.lt.s32.totalorder %s106, 127
        %s108 = scalar_select %p107, %s106, 127
        %s109 = smul.addr %s108, 8
        %s110 = scalar_lea.vmem %s1, %s109
        %s111 = smul.u32 32, %s8
      $region24: #{tpu_custom_call.1} parent=19 // pred_fallthru
        _
    $region20: #{tpu_custom_call.1} parent=5 // pred_fallthru
      _
    %p112 = scmp.le.s32.totalorder 1, %s8
    %p113 = scmp.lt.s32.totalorder %s8, 5
    %p114 = pnand %p112, %p113
    %p115 = pneg %p114
    // Predicated region
    $region25: #{tpu_custom_call.1} parent=5 // pred_check
      _
    $region26: #{tpu_custom_call.1} parent=5 // pred_check_branch
      %117 = sbr.rel (%p114) target = $region28
    $region27: #{tpu_custom_call.1} parent=5 // pred_region
      %s118 = ssub.s32 %s8, 1
      %p119 = pneg %p29
      %p120 = pneg %p26
      %s121 = smul.u32 32, %s13
      %p122 = scmp.lt.s32.totalorder %s121, 127
      %s123 = scalar_select %p122, %s121, 127
      %s124 = smul.addr %s123, 8
      %s125 = scalar_lea.vmem %s1, %s124
      %p126 = pneg %p55
      %p127 = pneg %p52
      %p128 = pneg %p81
      %p129 = pneg %p78
      %s130 = smul.u32 32, %s13
      %p131 = scmp.lt.s32.totalorder %s130, 127
      %s132 = scalar_select %p131, %s130, 127
      %s133 = smul.addr %s132, 8
      %s134 = scalar_lea.vmem %s2, %s133
      %s135 = smul.u32 32, %s13
      %p136 = scmp.lt.s32.totalorder %s135, 127
      %s137 = scalar_select %p136, %s135, 127
      %s138 = smul.addr %s137, 8
      %s139 = scalar_lea.vmem %s1, %s138
      %s140 = smul.u32 32, %s13
      %s141 = smul.u32 32, %s13
      %p142 = scmp.lt.s32.totalorder %s141, 127
      %s143 = scalar_select %p142, %s141, 127
      %s144 = smul.addr %s143, 8
      %s145 = scalar_lea.vmem %s2, %s144
      %s146 = smul.u32 32, %s13
      %v147 = vld [vmem:[%s139] sm:$0xff]
      %v148 = vld [vmem:[%s139 + $0x8] sm:$0xff]
      %v149 = vld [vmem:[%s139 + $0x10] sm:$0xff]
      %v150 = vld [vmem:[%s139 + $0x18] sm:$0xff]
      %v151 = vld [vmem:[%s139 + $0x20] sm:$0xff]
      %v152 = vld [vmem:[%s139 + $0x28] sm:$0xff]
      %v153 = vld [vmem:[%s139 + $0x30] sm:$0xff]
      %v154 = vld [vmem:[%s139 + $0x38] sm:$0xff]
      %v155 = vld [vmem:[%s139 + $0x40] sm:$0xff]
      %v156 = vld [vmem:[%s139 + $0x48] sm:$0xff]
      %v157 = vld [vmem:[%s139 + $0x50] sm:$0xff]
      %v158 = vld [vmem:[%s139 + $0x58] sm:$0xff]
      %v159 = vld [vmem:[%s139 + $0x60] sm:$0xff]
      %v160 = vld [vmem:[%s139 + $0x68] sm:$0xff]
      %v161 = vld [vmem:[%s139 + $0x70] sm:$0xff]
      %v162 = vld [vmem:[%s139 + $0x78] sm:$0xff]
      %v163 = vld [vmem:[%s139 + $0x80] sm:$0xff]
      %v164 = vld [vmem:[%s139 + $0x88] sm:$0xff]
      %v165 = vld [vmem:[%s139 + $0x90] sm:$0xff]
      %v166 = vld [vmem:[%s139 + $0x98] sm:$0xff]
      %v167 = vld [vmem:[%s139 + $0xa0] sm:$0xff]
      %v168 = vld [vmem:[%s139 + $0xa8] sm:$0xff]
      %v169 = vld [vmem:[%s139 + $0xb0] sm:$0xff]
      %v170 = vld [vmem:[%s139 + $0xb8] sm:$0xff]
      %v171 = vld [vmem:[%s139 + $0xc0] sm:$0xff]
      %v172 = vld [vmem:[%s139 + $0xc8] sm:$0xff]
      %v173 = vld [vmem:[%s139 + $0xd0] sm:$0xff]
      %v174 = vld [vmem:[%s139 + $0xd8] sm:$0xff]
      %v175 = vld [vmem:[%s139 + $0xe0] sm:$0xff]
      %v176 = vld [vmem:[%s139 + $0xe8] sm:$0xff]
      %v177 = vld [vmem:[%s139 + $0xf0] sm:$0xff]
      %v178 = vld [vmem:[%s139 + $0xf8] sm:$0xff]
      %211 = vrot.lane.b32.xlu0 %v147, 3
      %v212 = vpop.permute.xlu0 %211
      %213 = vrot.lane.b32.xlu0 %v148, 3
      %v214 = vpop.permute.xlu0 %213
      %215 = vrot.lane.b32.xlu0 %v149, 3
      %v216 = vpop.permute.xlu0 %215
      %217 = vrot.lane.b32.xlu0 %v150, 3
      %v218 = vpop.permute.xlu0 %217
      %219 = vrot.lane.b32.xlu0 %v151, 3
      %v220 = vpop.permute.xlu0 %219
      %221 = vrot.lane.b32.xlu0 %v152, 3
      %v222 = vpop.permute.xlu0 %221
      %223 = vrot.lane.b32.xlu0 %v153, 3
      %v224 = vpop.permute.xlu0 %223
      %225 = vrot.lane.b32.xlu0 %v154, 3
      %v226 = vpop.permute.xlu0 %225
      %227 = vrot.lane.b32.xlu0 %v155, 3
      %v228 = vpop.permute.xlu0 %227
      %229 = vrot.lane.b32.xlu0 %v156, 3
      %v230 = vpop.permute.xlu0 %229
      %231 = vrot.lane.b32.xlu0 %v157, 3
      %v232 = vpop.permute.xlu0 %231
      %233 = vrot.lane.b32.xlu0 %v158, 3
      %v234 = vpop.permute.xlu0 %233
      %235 = vrot.lane.b32.xlu0 %v159, 3
      %v236 = vpop.permute.xlu0 %235
      %237 = vrot.lane.b32.xlu0 %v160, 3
      %v238 = vpop.permute.xlu0 %237
      %239 = vrot.lane.b32.xlu0 %v161, 3
      %v240 = vpop.permute.xlu0 %239
      %241 = vrot.lane.b32.xlu0 %v162, 3
      %v242 = vpop.permute.xlu0 %241
      %243 = vrot.lane.b32.xlu0 %v163, 3
      %v244 = vpop.permute.xlu0 %243
      %245 = vrot.lane.b32.xlu0 %v164, 3
      %v246 = vpop.permute.xlu0 %245
      %247 = vrot.lane.b32.xlu0 %v165, 3
      %v248 = vpop.permute.xlu0 %247
      %249 = vrot.lane.b32.xlu0 %v166, 3
      %v250 = vpop.permute.xlu0 %249
      %251 = vrot.lane.b32.xlu0 %v167, 3
      %v252 = vpop.permute.xlu0 %251
      %253 = vrot.lane.b32.xlu0 %v168, 3
      %v254 = vpop.permute.xlu0 %253
      %255 = vrot.lane.b32.xlu0 %v169, 3
      %v256 = vpop.permute.xlu0 %255
      %257 = vrot.lane.b32.xlu0 %v170, 3
      %v258 = vpop.permute.xlu0 %257
      %259 = vrot.lane.b32.xlu0 %v171, 3
      %v260 = vpop.permute.xlu0 %259
      %261 = vrot.lane.b32.xlu0 %v172, 3
      %v262 = vpop.permute.xlu0 %261
      %263 = vrot.lane.b32.xlu0 %v173, 3
      %v264 = vpop.permute.xlu0 %263
      %265 = vrot.lane.b32.xlu0 %v174, 3
      %v266 = vpop.permute.xlu0 %265
      %267 = vrot.lane.b32.xlu0 %v175, 3
      %v268 = vpop.permute.xlu0 %267
      %269 = vrot.lane.b32.xlu0 %v176, 3
      %v270 = vpop.permute.xlu0 %269
      %271 = vrot.lane.b32.xlu0 %v177, 3
      %v272 = vpop.permute.xlu0 %271
      %273 = vrot.lane.b32.xlu0 %v178, 3
      %v274 = vpop.permute.xlu0 %273
      %307 = vrot.lane.b32.xlu0 %v147, 6
      %v308 = vpop.permute.xlu0 %307
      %309 = vrot.lane.b32.xlu0 %v148, 6
      %v310 = vpop.permute.xlu0 %309
      %311 = vrot.lane.b32.xlu0 %v149, 6
      %v312 = vpop.permute.xlu0 %311
      %313 = vrot.lane.b32.xlu0 %v150, 6
      %v314 = vpop.permute.xlu0 %313
      %315 = vrot.lane.b32.xlu0 %v151, 6
      %v316 = vpop.permute.xlu0 %315
      %317 = vrot.lane.b32.xlu0 %v152, 6
      %v318 = vpop.permute.xlu0 %317
      %319 = vrot.lane.b32.xlu0 %v153, 6
      %v320 = vpop.permute.xlu0 %319
      %321 = vrot.lane.b32.xlu0 %v154, 6
      %v322 = vpop.permute.xlu0 %321
      %323 = vrot.lane.b32.xlu0 %v155, 6
      %v324 = vpop.permute.xlu0 %323
      %325 = vrot.lane.b32.xlu0 %v156, 6
      %v326 = vpop.permute.xlu0 %325
      %327 = vrot.lane.b32.xlu0 %v157, 6
      %v328 = vpop.permute.xlu0 %327
      %329 = vrot.lane.b32.xlu0 %v158, 6
      %v330 = vpop.permute.xlu0 %329
      %331 = vrot.lane.b32.xlu0 %v159, 6
      %v332 = vpop.permute.xlu0 %331
      %333 = vrot.lane.b32.xlu0 %v160, 6
      %v334 = vpop.permute.xlu0 %333
      %335 = vrot.lane.b32.xlu0 %v161, 6
      %v336 = vpop.permute.xlu0 %335
      %337 = vrot.lane.b32.xlu0 %v162, 6
      %v338 = vpop.permute.xlu0 %337
      %339 = vrot.lane.b32.xlu0 %v163, 6
      %v340 = vpop.permute.xlu0 %339
      %341 = vrot.lane.b32.xlu0 %v164, 6
      %v342 = vpop.permute.xlu0 %341
      %343 = vrot.lane.b32.xlu0 %v165, 6
      %v344 = vpop.permute.xlu0 %343
      %345 = vrot.lane.b32.xlu0 %v166, 6
      %v346 = vpop.permute.xlu0 %345
      %347 = vrot.lane.b32.xlu0 %v167, 6
      %v348 = vpop.permute.xlu0 %347
      %349 = vrot.lane.b32.xlu0 %v168, 6
      %v350 = vpop.permute.xlu0 %349
      %351 = vrot.lane.b32.xlu0 %v169, 6
      %v352 = vpop.permute.xlu0 %351
      %353 = vrot.lane.b32.xlu0 %v170, 6
      %v354 = vpop.permute.xlu0 %353
      %355 = vrot.lane.b32.xlu0 %v171, 6
      %v356 = vpop.permute.xlu0 %355
      %357 = vrot.lane.b32.xlu0 %v172, 6
      %v358 = vpop.permute.xlu0 %357
      %359 = vrot.lane.b32.xlu0 %v173, 6
      %v360 = vpop.permute.xlu0 %359
      %361 = vrot.lane.b32.xlu0 %v174, 6
      %v362 = vpop.permute.xlu0 %361
      %363 = vrot.lane.b32.xlu0 %v175, 6
      %v364 = vpop.permute.xlu0 %363
      %365 = vrot.lane.b32.xlu0 %v176, 6
      %v366 = vpop.permute.xlu0 %365
      %367 = vrot.lane.b32.xlu0 %v177, 6
      %v368 = vpop.permute.xlu0 %367
      %369 = vrot.lane.b32.xlu0 %v178, 6
      %v370 = vpop.permute.xlu0 %369
      %403 = vrot.lane.b32.xlu0 %v147, 9
      %v404 = vpop.permute.xlu0 %403
      %405 = vrot.lane.b32.xlu0 %v148, 9
      %v406 = vpop.permute.xlu0 %405
      %407 = vrot.lane.b32.xlu0 %v149, 9
      %v408 = vpop.permute.xlu0 %407
      %409 = vrot.lane.b32.xlu0 %v150, 9
      %v410 = vpop.permute.xlu0 %409
      %411 = vrot.lane.b32.xlu0 %v151, 9
      %v412 = vpop.permute.xlu0 %411
      %413 = vrot.lane.b32.xlu0 %v152, 9
      %v414 = vpop.permute.xlu0 %413
      %415 = vrot.lane.b32.xlu0 %v153, 9
      %v416 = vpop.permute.xlu0 %415
      %417 = vrot.lane.b32.xlu0 %v154, 9
      %v418 = vpop.permute.xlu0 %417
      %419 = vrot.lane.b32.xlu0 %v155, 9
      %v420 = vpop.permute.xlu0 %419
      %421 = vrot.lane.b32.xlu0 %v156, 9
      %v422 = vpop.permute.xlu0 %421
      %423 = vrot.lane.b32.xlu0 %v157, 9
      %v424 = vpop.permute.xlu0 %423
      %425 = vrot.lane.b32.xlu0 %v158, 9
      %v426 = vpop.permute.xlu0 %425
      %427 = vrot.lane.b32.xlu0 %v159, 9
      %v428 = vpop.permute.xlu0 %427
      %429 = vrot.lane.b32.xlu0 %v160, 9
      %v430 = vpop.permute.xlu0 %429
      %431 = vrot.lane.b32.xlu0 %v161, 9
      %v432 = vpop.permute.xlu0 %431
      %433 = vrot.lane.b32.xlu0 %v162, 9
      %v434 = vpop.permute.xlu0 %433
      %435 = vrot.lane.b32.xlu0 %v163, 9
      %v436 = vpop.permute.xlu0 %435
      %437 = vrot.lane.b32.xlu0 %v164, 9
      %v438 = vpop.permute.xlu0 %437
      %439 = vrot.lane.b32.xlu0 %v165, 9
      %v440 = vpop.permute.xlu0 %439
      %441 = vrot.lane.b32.xlu0 %v166, 9
      %v442 = vpop.permute.xlu0 %441
      %443 = vrot.lane.b32.xlu0 %v167, 9
      %v444 = vpop.permute.xlu0 %443
      %445 = vrot.lane.b32.xlu0 %v168, 9
      %v446 = vpop.permute.xlu0 %445
      %447 = vrot.lane.b32.xlu0 %v169, 9
      %v448 = vpop.permute.xlu0 %447
      %449 = vrot.lane.b32.xlu0 %v170, 9
      %v450 = vpop.permute.xlu0 %449
      %451 = vrot.lane.b32.xlu0 %v171, 9
      %v452 = vpop.permute.xlu0 %451
      %453 = vrot.lane.b32.xlu0 %v172, 9
      %v454 = vpop.permute.xlu0 %453
      %455 = vrot.lane.b32.xlu0 %v173, 9
      %v456 = vpop.permute.xlu0 %455
      %457 = vrot.lane.b32.xlu0 %v174, 9
      %v458 = vpop.permute.xlu0 %457
      %459 = vrot.lane.b32.xlu0 %v175, 9
      %v460 = vpop.permute.xlu0 %459
      %461 = vrot.lane.b32.xlu0 %v176, 9
      %v462 = vpop.permute.xlu0 %461
      %463 = vrot.lane.b32.xlu0 %v177, 9
      %v464 = vpop.permute.xlu0 %463
      %465 = vrot.lane.b32.xlu0 %v178, 9
      %v466 = vpop.permute.xlu0 %465
      %vm499 = vcmask 23552
      %v500 = vsel %vm499, %v147, %v212
      %v501 = vsel %vm499, %v148, %v214
      %v502 = vsel %vm499, %v149, %v216
      %v503 = vsel %vm499, %v150, %v218
      %v504 = vsel %vm499, %v151, %v220
      %v505 = vsel %vm499, %v152, %v222
      %v506 = vsel %vm499, %v153, %v224
      %v507 = vsel %vm499, %v154, %v226
      %v508 = vsel %vm499, %v155, %v228
      %v509 = vsel %vm499, %v156, %v230
      %v510 = vsel %vm499, %v157, %v232
      %v511 = vsel %vm499, %v158, %v234
      %v512 = vsel %vm499, %v159, %v236
      %v513 = vsel %vm499, %v160, %v238
      %v514 = vsel %vm499, %v161, %v240
      %v515 = vsel %vm499, %v162, %v242
      %v516 = vsel %vm499, %v163, %v244
      %v517 = vsel %vm499, %v164, %v246
      %v518 = vsel %vm499, %v165, %v248
      %v519 = vsel %vm499, %v166, %v250
      %v520 = vsel %vm499, %v167, %v252
      %v521 = vsel %vm499, %v168, %v254
      %v522 = vsel %vm499, %v169, %v256
      %v523 = vsel %vm499, %v170, %v258
      %v524 = vsel %vm499, %v171, %v260
      %v525 = vsel %vm499, %v172, %v262
      %v526 = vsel %vm499, %v173, %v264
      %v527 = vsel %vm499, %v174, %v266
      %v528 = vsel %vm499, %v175, %v268
      %v529 = vsel %vm499, %v176, %v270
      %v530 = vsel %vm499, %v177, %v272
      %v531 = vsel %vm499, %v178, %v274
      %vm532 = vcmask 48128
      %v533 = vsel %vm532, %v500, %v308
      %v534 = vsel %vm532, %v501, %v310
      %v535 = vsel %vm532, %v502, %v312
      %v536 = vsel %vm532, %v503, %v314
      %v537 = vsel %vm532, %v504, %v316
      %v538 = vsel %vm532, %v505, %v318
      %v539 = vsel %vm532, %v506, %v320
      %v540 = vsel %vm532, %v507, %v322
      %v541 = vsel %vm532, %v508, %v324
      %v542 = vsel %vm532, %v509, %v326
      %v543 = vsel %vm532, %v510, %v328
      %v544 = vsel %vm532, %v511, %v330
      %v545 = vsel %vm532, %v512, %v332
      %v546 = vsel %vm532, %v513, %v334
      %v547 = vsel %vm532, %v514, %v336
      %v548 = vsel %vm532, %v515, %v338
      %v549 = vsel %vm532, %v516, %v340
      %v550 = vsel %vm532, %v517, %v342
      %v551 = vsel %vm532, %v518, %v344
      %v552 = vsel %vm532, %v519, %v346
      %v553 = vsel %vm532, %v520, %v348
      %v554 = vsel %vm532, %v521, %v350
      %v555 = vsel %vm532, %v522, %v352
      %v556 = vsel %vm532, %v523, %v354
      %v557 = vsel %vm532, %v524, %v356
      %v558 = vsel %vm532, %v525, %v358
      %v559 = vsel %vm532, %v526, %v360
      %v560 = vsel %vm532, %v527, %v362
      %v561 = vsel %vm532, %v528, %v364
      %v562 = vsel %vm532, %v529, %v366
      %v563 = vsel %vm532, %v530, %v368
      %v564 = vsel %vm532, %v531, %v370
      %vm565 = vcmask 72704
      %v566 = vsel %vm565, %v533, %v404
      %v567 = vsel %vm565, %v534, %v406
      %v568 = vsel %vm565, %v535, %v408
      %v569 = vsel %vm565, %v536, %v410
      %v570 = vsel %vm565, %v537, %v412
      %v571 = vsel %vm565, %v538, %v414
      %v572 = vsel %vm565, %v539, %v416
      %v573 = vsel %vm565, %v540, %v418
      %v574 = vsel %vm565, %v541, %v420
      %v575 = vsel %vm565, %v542, %v422
      %v576 = vsel %vm565, %v543, %v424
      %v577 = vsel %vm565, %v544, %v426
      %v578 = vsel %vm565, %v545, %v428
      %v579 = vsel %vm565, %v546, %v430
      %v580 = vsel %vm565, %v547, %v432
      %v581 = vsel %vm565, %v548, %v434
      %v582 = vsel %vm565, %v549, %v436
      %v583 = vsel %vm565, %v550, %v438
      %v584 = vsel %vm565, %v551, %v440
      %v585 = vsel %vm565, %v552, %v442
      %v586 = vsel %vm565, %v553, %v444
      %v587 = vsel %vm565, %v554, %v446
      %v588 = vsel %vm565, %v555, %v448
      %v589 = vsel %vm565, %v556, %v450
      %v590 = vsel %vm565, %v557, %v452
      %v591 = vsel %vm565, %v558, %v454
      %v592 = vsel %vm565, %v559, %v456
      %v593 = vsel %vm565, %v560, %v458
      %v594 = vsel %vm565, %v561, %v460
      %v595 = vsel %vm565, %v562, %v462
      %v596 = vsel %vm565, %v563, %v464
      %v597 = vsel %vm565, %v564, %v466
      %v598 = vld [vmem:[%s0] sm:$0x1]
      %v600 = vlaneseq
      %v601 = vshrl.u32 %v600, 7
      %v602 = vsub.s32 0, %v601
      %v603 = vrot.slane %v598, %v602
      %v605 = vmul.f32 %v566, %v603
      %v606 = vmul.f32 %v567, %v603
      %v607 = vmul.f32 %v568, %v603
      %v608 = vmul.f32 %v569, %v603
      %v609 = vmul.f32 %v570, %v603
      %v610 = vmul.f32 %v571, %v603
      %v611 = vmul.f32 %v572, %v603
      %v612 = vmul.f32 %v573, %v603
      %v613 = vmul.f32 %v574, %v603
      %v614 = vmul.f32 %v575, %v603
      %v615 = vmul.f32 %v576, %v603
      %v616 = vmul.f32 %v577, %v603
      %v617 = vmul.f32 %v578, %v603
      %v618 = vmul.f32 %v579, %v603
      %v619 = vmul.f32 %v580, %v603
      %v620 = vmul.f32 %v581, %v603
      %v621 = vmul.f32 %v582, %v603
      %v622 = vmul.f32 %v583, %v603
      %v623 = vmul.f32 %v584, %v603
      %v624 = vmul.f32 %v585, %v603
      %v625 = vmul.f32 %v586, %v603
      %v626 = vmul.f32 %v587, %v603
      %v627 = vmul.f32 %v588, %v603
      %v628 = vmul.f32 %v589, %v603
      %v629 = vmul.f32 %v590, %v603
      %v630 = vmul.f32 %v591, %v603
      %v631 = vmul.f32 %v592, %v603
      %v632 = vmul.f32 %v593, %v603
      %v633 = vmul.f32 %v594, %v603
      %v634 = vmul.f32 %v595, %v603
      %v635 = vmul.f32 %v596, %v603
      %v636 = vmul.f32 %v597, %v603
      %v637 = vand.u32 2147483647, %v605
      %vm638 = vcmp.le.f32.partialorder %v637, 0.7853982
      %vm639 = vcmp.lt.s32.totalorder %v605, 0
      %v640 = vand.u32 %v605, 2139095040
      %v641 = vshrl.u32 %v640, 23
      %v642 = vsub.s32 %v641, 127
      %v643 = vand.u32 2147483647, %v605
      %v644 = vand.u32 %v643, 8388607
      %v645 = vor.u32 %v644, 8388608
      %v646 = vsub.s32 0, %v645
      %v647 = vadd.s32 %v642, 1
      %vm648 = vcmp.gt.s32.totalorder %v647, 0
      %v649 = vsel %vm648, %v647, 0
      %v650 = vshrl.u32 %v649, 5
      %v651 = vand.u32 %v649, 31
      %v652 = vsub.s32 32, %v651
      %v653 = vshrl.u32 683565275, %v652
      %v654 = vshll.u32 683565275, %v651
      %v655 = vshrl.u32 2475754826, %v652
      %v656 = vor.u32 %v654, %v655
      %v657 = vshll.u32 2475754826, %v651
      %v658 = vshrl.u32 2131351028, %v652
      %v659 = vor.u32 %v657, %v658
      %v660 = vshll.u32 2131351028, %v651
      %v661 = vshrl.u32 2102212464, %v652
      %v662 = vor.u32 %v660, %v661
      %v663 = vshll.u32 2102212464, %v651
      %v664 = vshrl.u32 920167782, %v652
      %v665 = vor.u32 %v663, %v664
      %v666 = vshll.u32 920167782, %v651
      %v667 = vshrl.u32 1326507024, %v652
      %v668 = vor.u32 %v666, %v667
      %vm669 = vcmp.lt.s32.totalorder %v650, 1
      %vm670 = vcmp.lt.s32.totalorder %v650, 2
      %vm671 = vcmp.lt.s32.totalorder %v650, 3
      %vm672 = vcmp.lt.s32.totalorder %v650, 4
      %v673 = vsel %vm669, %v653, %v656
      %v674 = vsel %vm672, %v662, 2102212464
      %v675 = vsel %vm671, %v659, %v674
      %v676 = vsel %vm670, %v673, %v675
      %v677 = vsel %vm669, %v656, %v659
      %v678 = vsel %vm672, %v665, 920167782
      %v679 = vsel %vm671, %v662, %v678
      %v680 = vsel %vm670, %v677, %v679
      %v681 = vsel %vm669, %v659, %v662
      %v682 = vsel %vm672, %v668, 1326507024
      %v683 = vsel %vm671, %v665, %v682
      %v684 = vsel %vm670, %v681, %v683
      %v685 = vshll.u32 %v645, 8
      %v686 = vmul.u32.u64.compose %v685, %v684
      %v687 = vextract.low.u32 %v686
      %v688 = vextract.high.u32 %v686
      %v689 = vmul.u32.u64.compose %v685, %v680
      %v690 = vextract.low.u32 %v689
      %v691 = vextract.high.u32 %v689
      %v692 = vmul.u32 %v685, %v676
      %v693 = vadd.s32 %v688, %v690
      %vm694 = vc.u32 %v688, %v690
      %v695 = vadd.s32 %v691, 1
      %v696 = vsel %vm694, %v695, %v691
      %v697 = vadd.s32 %v692, %v696
      %v698 = vadd.s32 %v697, 536870912
      %v699 = vshrl.u32 %v698, 30
      %v700 = vshll.u32 %v699, 30
      %v701 = vsub.s32 %v697, %v700
      %vm702 = vcmp.lt.s32.totalorder %v701, 0
      %v703 = vsub.s32 0, %v701
      %v704 = vsel %vm702, %v703, %v701
      %v705 = vclz %v704
      %v706 = vsub.s32 %v705, 2
      %vm707 = vcmp.gt.s32.totalorder 0, %v706
      %v708 = vsel %vm707, 0, %v706
      %v709 = vsub.s32 32, %v708
      %v710 = vshll.u32 %v701, %v708
      %v711 = vshrl.u32 %v693, %v709
      %v712 = vor.u32 %v710, %v711
      %v713 = vsub.s32 4294967266, %v708
      %v714 = vadd.s32 %v713, 127
      %v715 = vshll.u32 %v714, 23
      %v716 = vor.u32 4788187, %v715
      %v717 = vand.u32 2147483647, %v716
      %v719 = vcvt.s32.f32 %v712
      %v720 = vmul.f32 %v719, %v717
      %v721 = vxor.u32 %v720, 2147483648
      %v722 = vsel %vm639, %v721, %v720
      %v723 = vsub.s32 4, %v699
      %v724 = vsel %vm639, %v723, %v699
      %v725 = vsel %vm638, %v605, %v722
      %v726 = vsel %vm638, 0, %v724
      %v727 = vcosq.f32.pop %v725
      %v728 = vsinq.f32.pop %v725
      %vm729 = vweird.f32 %v605
      %v730 = vadd.s32 %v726, 3
      %v731 = vand.u32 %v730, 3
      %vm732 = vcmp.lt.s32.totalorder %v731, 2
      %vm733 = vcmp.eq.s32.totalorder %v731, 0
      %v734 = vxor.u32 %v728, 2147483648
      %v735 = vsel %vm733, %v727, %v734
      %vm736 = vcmp.eq.s32.totalorder %v731, 2
      %v737 = vxor.u32 %v727, 2147483648
      %v738 = vsel %vm736, %v737, %v728
      %v739 = vsel %vm732, %v735, %v738
      %v740 = vsel %vm729, nan, %v739
      %v741 = vand.u32 2147483647, %v606
      %vm742 = vcmp.le.f32.partialorder %v741, 0.7853982
      %vm743 = vcmp.lt.s32.totalorder %v606, 0
      %v744 = vand.u32 %v606, 2139095040
      %v745 = vshrl.u32 %v744, 23
      %v746 = vsub.s32 %v745, 127
      %v747 = vand.u32 2147483647, %v606
      %v748 = vand.u32 %v747, 8388607
      %v749 = vor.u32 %v748, 8388608
      %v750 = vsub.s32 0, %v749
      %v751 = vadd.s32 %v746, 1
      %vm752 = vcmp.gt.s32.totalorder %v751, 0
      %v753 = vsel %vm752, %v751, 0
      %v754 = vshrl.u32 %v753, 5
      %v755 = vand.u32 %v753, 31
      %v756 = vsub.s32 32, %v755
      %v757 = vshrl.u32 683565275, %v756
      %v758 = vshll.u32 683565275, %v755
      %v759 = vshrl.u32 2475754826, %v756
      %v760 = vor.u32 %v758, %v759
      %v761 = vshll.u32 2475754826, %v755
      %v762 = vshrl.u32 2131351028, %v756
      %v763 = vor.u32 %v761, %v762
      %v764 = vshll.u32 2131351028, %v755
      %v765 = vshrl.u32 2102212464, %v756
      %v766 = vor.u32 %v764, %v765
      %v767 = vshll.u32 2102212464, %v755
      %v768 = vshrl.u32 920167782, %v756
      %v769 = vor.u32 %v767, %v768
      %v770 = vshll.u32 920167782, %v755
      %v771 = vshrl.u32 1326507024, %v756
      %v772 = vor.u32 %v770, %v771
      %vm773 = vcmp.lt.s32.totalorder %v754, 1
      %vm774 = vcmp.lt.s32.totalorder %v754, 2
      %vm775 = vcmp.lt.s32.totalorder %v754, 3
      %vm776 = vcmp.lt.s32.totalorder %v754, 4
      %v777 = vsel %vm773, %v757, %v760
      %v778 = vsel %vm776, %v766, 2102212464
      %v779 = vsel %vm775, %v763, %v778
      %v780 = vsel %vm774, %v777, %v779
      %v781 = vsel %vm773, %v760, %v763
      %v782 = vsel %vm776, %v769, 920167782
      %v783 = vsel %vm775, %v766, %v782
      %v784 = vsel %vm774, %v781, %v783
      %v785 = vsel %vm773, %v763, %v766
      %v786 = vsel %vm776, %v772, 1326507024
      %v787 = vsel %vm775, %v769, %v786
      %v788 = vsel %vm774, %v785, %v787
      %v789 = vshll.u32 %v749, 8
      %v790 = vmul.u32.u64.compose %v789, %v788
      %v791 = vextract.low.u32 %v790
      %v792 = vextract.high.u32 %v790
      %v793 = vmul.u32.u64.compose %v789, %v784
      %v794 = vextract.low.u32 %v793
      %v795 = vextract.high.u32 %v793
      %v796 = vmul.u32 %v789, %v780
      %v797 = vadd.s32 %v792, %v794
      %vm798 = vc.u32 %v792, %v794
      %v799 = vadd.s32 %v795, 1
      %v800 = vsel %vm798, %v799, %v795
      %v801 = vadd.s32 %v796, %v800
      %v802 = vadd.s32 %v801, 536870912
      %v803 = vshrl.u32 %v802, 30
      %v804 = vshll.u32 %v803, 30
      %v805 = vsub.s32 %v801, %v804
      %vm806 = vcmp.lt.s32.totalorder %v805, 0
      %v807 = vsub.s32 0, %v805
      %v808 = vsel %vm806, %v807, %v805
      %v809 = vclz %v808
      %v810 = vsub.s32 %v809, 2
      %vm811 = vcmp.gt.s32.totalorder 0, %v810
      %v812 = vsel %vm811, 0, %v810
      %v813 = vsub.s32 32, %v812
      %v814 = vshll.u32 %v805, %v812
      %v815 = vshrl.u32 %v797, %v813
      %v816 = vor.u32 %v814, %v815
      %v817 = vsub.s32 4294967266, %v812
      %v818 = vadd.s32 %v817, 127
      %v819 = vshll.u32 %v818, 23
      %v820 = vor.u32 4788187, %v819
      %v821 = vand.u32 2147483647, %v820
      %v823 = vcvt.s32.f32 %v816
      %v824 = vmul.f32 %v823, %v821
      %v825 = vxor.u32 %v824, 2147483648
      %v826 = vsel %vm743, %v825, %v824
      %v827 = vsub.s32 4, %v803
      %v828 = vsel %vm743, %v827, %v803
      %v829 = vsel %vm742, %v606, %v826
      %v830 = vsel %vm742, 0, %v828
      %v831 = vcosq.f32.pop %v829
      %v832 = vsinq.f32.pop %v829
      %vm833 = vweird.f32 %v606
      %v834 = vadd.s32 %v830, 3
      %v835 = vand.u32 %v834, 3
      %vm836 = vcmp.lt.s32.totalorder %v835, 2
      %vm837 = vcmp.eq.s32.totalorder %v835, 0
      %v838 = vxor.u32 %v832, 2147483648
      %v839 = vsel %vm837, %v831, %v838
      %vm840 = vcmp.eq.s32.totalorder %v835, 2
      %v841 = vxor.u32 %v831, 2147483648
      %v842 = vsel %vm840, %v841, %v832
      %v843 = vsel %vm836, %v839, %v842
      %v844 = vsel %vm833, nan, %v843
      %v845 = vand.u32 2147483647, %v607
      %vm846 = vcmp.le.f32.partialorder %v845, 0.7853982
      %vm847 = vcmp.lt.s32.totalorder %v607, 0
      %v848 = vand.u32 %v607, 2139095040
      %v849 = vshrl.u32 %v848, 23
      %v850 = vsub.s32 %v849, 127
      %v851 = vand.u32 2147483647, %v607
      %v852 = vand.u32 %v851, 8388607
      %v853 = vor.u32 %v852, 8388608
      %v854 = vsub.s32 0, %v853
      %v855 = vadd.s32 %v850, 1
      %vm856 = vcmp.gt.s32.totalorder %v855, 0
      %v857 = vsel %vm856, %v855, 0
      %v858 = vshrl.u32 %v857, 5
      %v859 = vand.u32 %v857, 31
      %v860 = vsub.s32 32, %v859
      %v861 = vshrl.u32 683565275, %v860
      %v862 = vshll.u32 683565275, %v859
      %v863 = vshrl.u32 2475754826, %v860
      %v864 = vor.u32 %v862, %v863
      %v865 = vshll.u32 2475754826, %v859
      %v866 = vshrl.u32 2131351028, %v860
      %v867 = vor.u32 %v865, %v866
      %v868 = vshll.u32 2131351028, %v859
      %v869 = vshrl.u32 2102212464, %v860
      %v870 = vor.u32 %v868, %v869
      %v871 = vshll.u32 2102212464, %v859
      %v872 = vshrl.u32 920167782, %v860
      %v873 = vor.u32 %v871, %v872
      %v874 = vshll.u32 920167782, %v859
      %v875 = vshrl.u32 1326507024, %v860
      %v876 = vor.u32 %v874, %v875
      %vm877 = vcmp.lt.s32.totalorder %v858, 1
      %vm878 = vcmp.lt.s32.totalorder %v858, 2
      %vm879 = vcmp.lt.s32.totalorder %v858, 3
      %vm880 = vcmp.lt.s32.totalorder %v858, 4
      %v881 = vsel %vm877, %v861, %v864
      %v882 = vsel %vm880, %v870, 2102212464
      %v883 = vsel %vm879, %v867, %v882
      %v884 = vsel %vm878, %v881, %v883
      %v885 = vsel %vm877, %v864, %v867
      %v886 = vsel %vm880, %v873, 920167782
      %v887 = vsel %vm879, %v870, %v886
      %v888 = vsel %vm878, %v885, %v887
      %v889 = vsel %vm877, %v867, %v870
      %v890 = vsel %vm880, %v876, 1326507024
      %v891 = vsel %vm879, %v873, %v890
      %v892 = vsel %vm878, %v889, %v891
      %v893 = vshll.u32 %v853, 8
      %v894 = vmul.u32.u64.compose %v893, %v892
      %v895 = vextract.low.u32 %v894
      %v896 = vextract.high.u32 %v894
      %v897 = vmul.u32.u64.compose %v893, %v888
      %v898 = vextract.low.u32 %v897
      %v899 = vextract.high.u32 %v897
      %v900 = vmul.u32 %v893, %v884
      %v901 = vadd.s32 %v896, %v898
      %vm902 = vc.u32 %v896, %v898
      %v903 = vadd.s32 %v899, 1
      %v904 = vsel %vm902, %v903, %v899
      %v905 = vadd.s32 %v900, %v904
      %v906 = vadd.s32 %v905, 536870912
      %v907 = vshrl.u32 %v906, 30
      %v908 = vshll.u32 %v907, 30
      %v909 = vsub.s32 %v905, %v908
      %vm910 = vcmp.lt.s32.totalorder %v909, 0
      %v911 = vsub.s32 0, %v909
      %v912 = vsel %vm910, %v911, %v909
      %v913 = vclz %v912
      %v914 = vsub.s32 %v913, 2
      %vm915 = vcmp.gt.s32.totalorder 0, %v914
      %v916 = vsel %vm915, 0, %v914
      %v917 = vsub.s32 32, %v916
      %v918 = vshll.u32 %v909, %v916
      %v919 = vshrl.u32 %v901, %v917
      %v920 = vor.u32 %v918, %v919
      %v921 = vsub.s32 4294967266, %v916
      %v922 = vadd.s32 %v921, 127
      %v923 = vshll.u32 %v922, 23
      %v924 = vor.u32 4788187, %v923
      %v925 = vand.u32 2147483647, %v924
      %v927 = vcvt.s32.f32 %v920
      %v928 = vmul.f32 %v927, %v925
      %v929 = vxor.u32 %v928, 2147483648
      %v930 = vsel %vm847, %v929, %v928
      %v931 = vsub.s32 4, %v907
      %v932 = vsel %vm847, %v931, %v907
      %v933 = vsel %vm846, %v607, %v930
      %v934 = vsel %vm846, 0, %v932
      %v935 = vcosq.f32.pop %v933
      %v936 = vsinq.f32.pop %v933
      %vm937 = vweird.f32 %v607
      %v938 = vadd.s32 %v934, 3
      %v939 = vand.u32 %v938, 3
      %vm940 = vcmp.lt.s32.totalorder %v939, 2
      %vm941 = vcmp.eq.s32.totalorder %v939, 0
      %v942 = vxor.u32 %v936, 2147483648
      %v943 = vsel %vm941, %v935, %v942
      %vm944 = vcmp.eq.s32.totalorder %v939, 2
      %v945 = vxor.u32 %v935, 2147483648
      %v946 = vsel %vm944, %v945, %v936
      %v947 = vsel %vm940, %v943, %v946
      %v948 = vsel %vm937, nan, %v947
      %v949 = vand.u32 2147483647, %v608
      %vm950 = vcmp.le.f32.partialorder %v949, 0.7853982
      %vm951 = vcmp.lt.s32.totalorder %v608, 0
      %v952 = vand.u32 %v608, 2139095040
      %v953 = vshrl.u32 %v952, 23
      %v954 = vsub.s32 %v953, 127
      %v955 = vand.u32 2147483647, %v608
      %v956 = vand.u32 %v955, 8388607
      %v957 = vor.u32 %v956, 8388608
      %v958 = vsub.s32 0, %v957
      %v959 = vadd.s32 %v954, 1
      %vm960 = vcmp.gt.s32.totalorder %v959, 0
      %v961 = vsel %vm960, %v959, 0
      %v962 = vshrl.u32 %v961, 5
      %v963 = vand.u32 %v961, 31
      %v964 = vsub.s32 32, %v963
      %v965 = vshrl.u32 683565275, %v964
      %v966 = vshll.u32 683565275, %v963
      %v967 = vshrl.u32 2475754826, %v964
      %v968 = vor.u32 %v966, %v967
      %v969 = vshll.u32 2475754826, %v963
      %v970 = vshrl.u32 2131351028, %v964
      %v971 = vor.u32 %v969, %v970
      %v972 = vshll.u32 2131351028, %v963
      %v973 = vshrl.u32 2102212464, %v964
      %v974 = vor.u32 %v972, %v973
      %v975 = vshll.u32 2102212464, %v963
      %v976 = vshrl.u32 920167782, %v964
      %v977 = vor.u32 %v975, %v976
      %v978 = vshll.u32 920167782, %v963
      %v979 = vshrl.u32 1326507024, %v964
      %v980 = vor.u32 %v978, %v979
      %vm981 = vcmp.lt.s32.totalorder %v962, 1
      %vm982 = vcmp.lt.s32.totalorder %v962, 2
      %vm983 = vcmp.lt.s32.totalorder %v962, 3
      %vm984 = vcmp.lt.s32.totalorder %v962, 4
      %v985 = vsel %vm981, %v965, %v968
      %v986 = vsel %vm984, %v974, 2102212464
      %v987 = vsel %vm983, %v971, %v986
      %v988 = vsel %vm982, %v985, %v987
      %v989 = vsel %vm981, %v968, %v971
      %v990 = vsel %vm984, %v977, 920167782
      %v991 = vsel %vm983, %v974, %v990
      %v992 = vsel %vm982, %v989, %v991
      %v993 = vsel %vm981, %v971, %v974
      %v994 = vsel %vm984, %v980, 1326507024
      %v995 = vsel %vm983, %v977, %v994
      %v996 = vsel %vm982, %v993, %v995
      %v997 = vshll.u32 %v957, 8
      %v998 = vmul.u32.u64.compose %v997, %v996
      %v999 = vextract.low.u32 %v998
      %v1000 = vextract.high.u32 %v998
      %v1001 = vmul.u32.u64.compose %v997, %v992
      %v1002 = vextract.low.u32 %v1001
      %v1003 = vextract.high.u32 %v1001
      %v1004 = vmul.u32 %v997, %v988
      %v1005 = vadd.s32 %v1000, %v1002
      %vm1006 = vc.u32 %v1000, %v1002
      %v1007 = vadd.s32 %v1003, 1
      %v1008 = vsel %vm1006, %v1007, %v1003
      %v1009 = vadd.s32 %v1004, %v1008
      %v1010 = vadd.s32 %v1009, 536870912
      %v1011 = vshrl.u32 %v1010, 30
      %v1012 = vshll.u32 %v1011, 30
      %v1013 = vsub.s32 %v1009, %v1012
      %vm1014 = vcmp.lt.s32.totalorder %v1013, 0
      %v1015 = vsub.s32 0, %v1013
      %v1016 = vsel %vm1014, %v1015, %v1013
      %v1017 = vclz %v1016
      %v1018 = vsub.s32 %v1017, 2
      %vm1019 = vcmp.gt.s32.totalorder 0, %v1018
      %v1020 = vsel %vm1019, 0, %v1018
      %v1021 = vsub.s32 32, %v1020
      %v1022 = vshll.u32 %v1013, %v1020
      %v1023 = vshrl.u32 %v1005, %v1021
      %v1024 = vor.u32 %v1022, %v1023
      %v1025 = vsub.s32 4294967266, %v1020
      %v1026 = vadd.s32 %v1025, 127
      %v1027 = vshll.u32 %v1026, 23
      %v1028 = vor.u32 4788187, %v1027
      %v1029 = vand.u32 2147483647, %v1028
      %v1031 = vcvt.s32.f32 %v1024
      %v1032 = vmul.f32 %v1031, %v1029
      %v1033 = vxor.u32 %v1032, 2147483648
      %v1034 = vsel %vm951, %v1033, %v1032
      %v1035 = vsub.s32 4, %v1011
      %v1036 = vsel %vm951, %v1035, %v1011
      %v1037 = vsel %vm950, %v608, %v1034
      %v1038 = vsel %vm950, 0, %v1036
      %v1039 = vcosq.f32.pop %v1037
      %v1040 = vsinq.f32.pop %v1037
      %vm1041 = vweird.f32 %v608
      %v1042 = vadd.s32 %v1038, 3
      %v1043 = vand.u32 %v1042, 3
      %vm1044 = vcmp.lt.s32.totalorder %v1043, 2
      %vm1045 = vcmp.eq.s32.totalorder %v1043, 0
      %v1046 = vxor.u32 %v1040, 2147483648
      %v1047 = vsel %vm1045, %v1039, %v1046
      %vm1048 = vcmp.eq.s32.totalorder %v1043, 2
      %v1049 = vxor.u32 %v1039, 2147483648
      %v1050 = vsel %vm1048, %v1049, %v1040
      %v1051 = vsel %vm1044, %v1047, %v1050
      %v1052 = vsel %vm1041, nan, %v1051
      %v1053 = vand.u32 2147483647, %v609
      %vm1054 = vcmp.le.f32.partialorder %v1053, 0.7853982
      %vm1055 = vcmp.lt.s32.totalorder %v609, 0
      %v1056 = vand.u32 %v609, 2139095040
      %v1057 = vshrl.u32 %v1056, 23
      %v1058 = vsub.s32 %v1057, 127
      %v1059 = vand.u32 2147483647, %v609
      %v1060 = vand.u32 %v1059, 8388607
      %v1061 = vor.u32 %v1060, 8388608
      %v1062 = vsub.s32 0, %v1061
      %v1063 = vadd.s32 %v1058, 1
      %vm1064 = vcmp.gt.s32.totalorder %v1063, 0
      %v1065 = vsel %vm1064, %v1063, 0
      %v1066 = vshrl.u32 %v1065, 5
      %v1067 = vand.u32 %v1065, 31
      %v1068 = vsub.s32 32, %v1067
      %v1069 = vshrl.u32 683565275, %v1068
      %v1070 = vshll.u32 683565275, %v1067
      %v1071 = vshrl.u32 2475754826, %v1068
      %v1072 = vor.u32 %v1070, %v1071
      %v1073 = vshll.u32 2475754826, %v1067
      %v1074 = vshrl.u32 2131351028, %v1068
      %v1075 = vor.u32 %v1073, %v1074
      %v1076 = vshll.u32 2131351028, %v1067
      %v1077 = vshrl.u32 2102212464, %v1068
      %v1078 = vor.u32 %v1076, %v1077
      %v1079 = vshll.u32 2102212464, %v1067
      %v1080 = vshrl.u32 920167782, %v1068
      %v1081 = vor.u32 %v1079, %v1080
      %v1082 = vshll.u32 920167782, %v1067
      %v1083 = vshrl.u32 1326507024, %v1068
      %v1084 = vor.u32 %v1082, %v1083
      %vm1085 = vcmp.lt.s32.totalorder %v1066, 1
      %vm1086 = vcmp.lt.s32.totalorder %v1066, 2
      %vm1087 = vcmp.lt.s32.totalorder %v1066, 3
      %vm1088 = vcmp.lt.s32.totalorder %v1066, 4
      %v1089 = vsel %vm1085, %v1069, %v1072
      %v1090 = vsel %vm1088, %v1078, 2102212464
      %v1091 = vsel %vm1087, %v1075, %v1090
      %v1092 = vsel %vm1086, %v1089, %v1091
      %v1093 = vsel %vm1085, %v1072, %v1075
      %v1094 = vsel %vm1088, %v1081, 920167782
      %v1095 = vsel %vm1087, %v1078, %v1094
      %v1096 = vsel %vm1086, %v1093, %v1095
      %v1097 = vsel %vm1085, %v1075, %v1078
      %v1098 = vsel %vm1088, %v1084, 1326507024
      %v1099 = vsel %vm1087, %v1081, %v1098
      %v1100 = vsel %vm1086, %v1097, %v1099
      %v1101 = vshll.u32 %v1061, 8
      %v1102 = vmul.u32.u64.compose %v1101, %v1100
      %v1103 = vextract.low.u32 %v1102
      %v1104 = vextract.high.u32 %v1102
      %v1105 = vmul.u32.u64.compose %v1101, %v1096
      %v1106 = vextract.low.u32 %v1105
      %v1107 = vextract.high.u32 %v1105
      %v1108 = vmul.u32 %v1101, %v1092
      %v1109 = vadd.s32 %v1104, %v1106
      %vm1110 = vc.u32 %v1104, %v1106
      %v1111 = vadd.s32 %v1107, 1
      %v1112 = vsel %vm1110, %v1111, %v1107
      %v1113 = vadd.s32 %v1108, %v1112
      %v1114 = vadd.s32 %v1113, 536870912
      %v1115 = vshrl.u32 %v1114, 30
      %v1116 = vshll.u32 %v1115, 30
      %v1117 = vsub.s32 %v1113, %v1116
      %vm1118 = vcmp.lt.s32.totalorder %v1117, 0
      %v1119 = vsub.s32 0, %v1117
      %v1120 = vsel %vm1118, %v1119, %v1117
      %v1121 = vclz %v1120
      %v1122 = vsub.s32 %v1121, 2
      %vm1123 = vcmp.gt.s32.totalorder 0, %v1122
      %v1124 = vsel %vm1123, 0, %v1122
      %v1125 = vsub.s32 32, %v1124
      %v1126 = vshll.u32 %v1117, %v1124
      %v1127 = vshrl.u32 %v1109, %v1125
      %v1128 = vor.u32 %v1126, %v1127
      %v1129 = vsub.s32 4294967266, %v1124
      %v1130 = vadd.s32 %v1129, 127
      %v1131 = vshll.u32 %v1130, 23
      %v1132 = vor.u32 4788187, %v1131
      %v1133 = vand.u32 2147483647, %v1132
      %v1135 = vcvt.s32.f32 %v1128
      %v1136 = vmul.f32 %v1135, %v1133
      %v1137 = vxor.u32 %v1136, 2147483648
      %v1138 = vsel %vm1055, %v1137, %v1136
      %v1139 = vsub.s32 4, %v1115
      %v1140 = vsel %vm1055, %v1139, %v1115
      %v1141 = vsel %vm1054, %v609, %v1138
      %v1142 = vsel %vm1054, 0, %v1140
      %v1143 = vcosq.f32.pop %v1141
      %v1144 = vsinq.f32.pop %v1141
      %vm1145 = vweird.f32 %v609
      %v1146 = vadd.s32 %v1142, 3
      %v1147 = vand.u32 %v1146, 3
      %vm1148 = vcmp.lt.s32.totalorder %v1147, 2
      %vm1149 = vcmp.eq.s32.totalorder %v1147, 0
      %v1150 = vxor.u32 %v1144, 2147483648
      %v1151 = vsel %vm1149, %v1143, %v1150
      %vm1152 = vcmp.eq.s32.totalorder %v1147, 2
      %v1153 = vxor.u32 %v1143, 2147483648
      %v1154 = vsel %vm1152, %v1153, %v1144
      %v1155 = vsel %vm1148, %v1151, %v1154
      %v1156 = vsel %vm1145, nan, %v1155
      %v1157 = vand.u32 2147483647, %v610
      %vm1158 = vcmp.le.f32.partialorder %v1157, 0.7853982
      %vm1159 = vcmp.lt.s32.totalorder %v610, 0
      %v1160 = vand.u32 %v610, 2139095040
      %v1161 = vshrl.u32 %v1160, 23
      %v1162 = vsub.s32 %v1161, 127
      %v1163 = vand.u32 2147483647, %v610
      %v1164 = vand.u32 %v1163, 8388607
      %v1165 = vor.u32 %v1164, 8388608
      %v1166 = vsub.s32 0, %v1165
      %v1167 = vadd.s32 %v1162, 1
      %vm1168 = vcmp.gt.s32.totalorder %v1167, 0
      %v1169 = vsel %vm1168, %v1167, 0
      %v1170 = vshrl.u32 %v1169, 5
      %v1171 = vand.u32 %v1169, 31
      %v1172 = vsub.s32 32, %v1171
      %v1173 = vshrl.u32 683565275, %v1172
      %v1174 = vshll.u32 683565275, %v1171
      %v1175 = vshrl.u32 2475754826, %v1172
      %v1176 = vor.u32 %v1174, %v1175
      %v1177 = vshll.u32 2475754826, %v1171
      %v1178 = vshrl.u32 2131351028, %v1172
      %v1179 = vor.u32 %v1177, %v1178
      %v1180 = vshll.u32 2131351028, %v1171
      %v1181 = vshrl.u32 2102212464, %v1172
      %v1182 = vor.u32 %v1180, %v1181
      %v1183 = vshll.u32 2102212464, %v1171
      %v1184 = vshrl.u32 920167782, %v1172
      %v1185 = vor.u32 %v1183, %v1184
      %v1186 = vshll.u32 920167782, %v1171
      %v1187 = vshrl.u32 1326507024, %v1172
      %v1188 = vor.u32 %v1186, %v1187
      %vm1189 = vcmp.lt.s32.totalorder %v1170, 1
      %vm1190 = vcmp.lt.s32.totalorder %v1170, 2
      %vm1191 = vcmp.lt.s32.totalorder %v1170, 3
      %vm1192 = vcmp.lt.s32.totalorder %v1170, 4
      %v1193 = vsel %vm1189, %v1173, %v1176
      %v1194 = vsel %vm1192, %v1182, 2102212464
      %v1195 = vsel %vm1191, %v1179, %v1194
      %v1196 = vsel %vm1190, %v1193, %v1195
      %v1197 = vsel %vm1189, %v1176, %v1179
      %v1198 = vsel %vm1192, %v1185, 920167782
      %v1199 = vsel %vm1191, %v1182, %v1198
      %v1200 = vsel %vm1190, %v1197, %v1199
      %v1201 = vsel %vm1189, %v1179, %v1182
      %v1202 = vsel %vm1192, %v1188, 1326507024
      %v1203 = vsel %vm1191, %v1185, %v1202
      %v1204 = vsel %vm1190, %v1201, %v1203
      %v1205 = vshll.u32 %v1165, 8
      %v1206 = vmul.u32.u64.compose %v1205, %v1204
      %v1207 = vextract.low.u32 %v1206
      %v1208 = vextract.high.u32 %v1206
      %v1209 = vmul.u32.u64.compose %v1205, %v1200
      %v1210 = vextract.low.u32 %v1209
      %v1211 = vextract.high.u32 %v1209
      %v1212 = vmul.u32 %v1205, %v1196
      %v1213 = vadd.s32 %v1208, %v1210
      %vm1214 = vc.u32 %v1208, %v1210
      %v1215 = vadd.s32 %v1211, 1
      %v1216 = vsel %vm1214, %v1215, %v1211
      %v1217 = vadd.s32 %v1212, %v1216
      %v1218 = vadd.s32 %v1217, 536870912
      %v1219 = vshrl.u32 %v1218, 30
      %v1220 = vshll.u32 %v1219, 30
      %v1221 = vsub.s32 %v1217, %v1220
      %vm1222 = vcmp.lt.s32.totalorder %v1221, 0
      %v1223 = vsub.s32 0, %v1221
      %v1224 = vsel %vm1222, %v1223, %v1221
      %v1225 = vclz %v1224
      %v1226 = vsub.s32 %v1225, 2
      %vm1227 = vcmp.gt.s32.totalorder 0, %v1226
      %v1228 = vsel %vm1227, 0, %v1226
      %v1229 = vsub.s32 32, %v1228
      %v1230 = vshll.u32 %v1221, %v1228
      %v1231 = vshrl.u32 %v1213, %v1229
      %v1232 = vor.u32 %v1230, %v1231
      %v1233 = vsub.s32 4294967266, %v1228
      %v1234 = vadd.s32 %v1233, 127
      %v1235 = vshll.u32 %v1234, 23
      %v1236 = vor.u32 4788187, %v1235
      %v1237 = vand.u32 2147483647, %v1236
      %v1239 = vcvt.s32.f32 %v1232
      %v1240 = vmul.f32 %v1239, %v1237
      %v1241 = vxor.u32 %v1240, 2147483648
      %v1242 = vsel %vm1159, %v1241, %v1240
      %v1243 = vsub.s32 4, %v1219
      %v1244 = vsel %vm1159, %v1243, %v1219
      %v1245 = vsel %vm1158, %v610, %v1242
      %v1246 = vsel %vm1158, 0, %v1244
      %v1247 = vcosq.f32.pop %v1245
      %v1248 = vsinq.f32.pop %v1245
      %vm1249 = vweird.f32 %v610
      %v1250 = vadd.s32 %v1246, 3
      %v1251 = vand.u32 %v1250, 3
      %vm1252 = vcmp.lt.s32.totalorder %v1251, 2
      %vm1253 = vcmp.eq.s32.totalorder %v1251, 0
      %v1254 = vxor.u32 %v1248, 2147483648
      %v1255 = vsel %vm1253, %v1247, %v1254
      %vm1256 = vcmp.eq.s32.totalorder %v1251, 2
      %v1257 = vxor.u32 %v1247, 2147483648
      %v1258 = vsel %vm1256, %v1257, %v1248
      %v1259 = vsel %vm1252, %v1255, %v1258
      %v1260 = vsel %vm1249, nan, %v1259
      %v1261 = vand.u32 2147483647, %v611
      %vm1262 = vcmp.le.f32.partialorder %v1261, 0.7853982
      %vm1263 = vcmp.lt.s32.totalorder %v611, 0
      %v1264 = vand.u32 %v611, 2139095040
      %v1265 = vshrl.u32 %v1264, 23
      %v1266 = vsub.s32 %v1265, 127
      %v1267 = vand.u32 2147483647, %v611
      %v1268 = vand.u32 %v1267, 8388607
      %v1269 = vor.u32 %v1268, 8388608
      %v1270 = vsub.s32 0, %v1269
      %v1271 = vadd.s32 %v1266, 1
      %vm1272 = vcmp.gt.s32.totalorder %v1271, 0
      %v1273 = vsel %vm1272, %v1271, 0
      %v1274 = vshrl.u32 %v1273, 5
      %v1275 = vand.u32 %v1273, 31
      %v1276 = vsub.s32 32, %v1275
      %v1277 = vshrl.u32 683565275, %v1276
      %v1278 = vshll.u32 683565275, %v1275
      %v1279 = vshrl.u32 2475754826, %v1276
      %v1280 = vor.u32 %v1278, %v1279
      %v1281 = vshll.u32 2475754826, %v1275
      %v1282 = vshrl.u32 2131351028, %v1276
      %v1283 = vor.u32 %v1281, %v1282
      %v1284 = vshll.u32 2131351028, %v1275
      %v1285 = vshrl.u32 2102212464, %v1276
      %v1286 = vor.u32 %v1284, %v1285
      %v1287 = vshll.u32 2102212464, %v1275
      %v1288 = vshrl.u32 920167782, %v1276
      %v1289 = vor.u32 %v1287, %v1288
      %v1290 = vshll.u32 920167782, %v1275
      %v1291 = vshrl.u32 1326507024, %v1276
      %v1292 = vor.u32 %v1290, %v1291
      %vm1293 = vcmp.lt.s32.totalorder %v1274, 1
      %vm1294 = vcmp.lt.s32.totalorder %v1274, 2
      %vm1295 = vcmp.lt.s32.totalorder %v1274, 3
      %vm1296 = vcmp.lt.s32.totalorder %v1274, 4
      %v1297 = vsel %vm1293, %v1277, %v1280
      %v1298 = vsel %vm1296, %v1286, 2102212464
      %v1299 = vsel %vm1295, %v1283, %v1298
      %v1300 = vsel %vm1294, %v1297, %v1299
      %v1301 = vsel %vm1293, %v1280, %v1283
      %v1302 = vsel %vm1296, %v1289, 920167782
      %v1303 = vsel %vm1295, %v1286, %v1302
      %v1304 = vsel %vm1294, %v1301, %v1303
      %v1305 = vsel %vm1293, %v1283, %v1286
      %v1306 = vsel %vm1296, %v1292, 1326507024
      %v1307 = vsel %vm1295, %v1289, %v1306
      %v1308 = vsel %vm1294, %v1305, %v1307
      %v1309 = vshll.u32 %v1269, 8
      %v1310 = vmul.u32.u64.compose %v1309, %v1308
      %v1311 = vextract.low.u32 %v1310
      %v1312 = vextract.high.u32 %v1310
      %v1313 = vmul.u32.u64.compose %v1309, %v1304
      %v1314 = vextract.low.u32 %v1313
      %v1315 = vextract.high.u32 %v1313
      %v1316 = vmul.u32 %v1309, %v1300
      %v1317 = vadd.s32 %v1312, %v1314
      %vm1318 = vc.u32 %v1312, %v1314
      %v1319 = vadd.s32 %v1315, 1
      %v1320 = vsel %vm1318, %v1319, %v1315
      %v1321 = vadd.s32 %v1316, %v1320
      %v1322 = vadd.s32 %v1321, 536870912
      %v1323 = vshrl.u32 %v1322, 30
      %v1324 = vshll.u32 %v1323, 30
      %v1325 = vsub.s32 %v1321, %v1324
      %vm1326 = vcmp.lt.s32.totalorder %v1325, 0
      %v1327 = vsub.s32 0, %v1325
      %v1328 = vsel %vm1326, %v1327, %v1325
      %v1329 = vclz %v1328
      %v1330 = vsub.s32 %v1329, 2
      %vm1331 = vcmp.gt.s32.totalorder 0, %v1330
      %v1332 = vsel %vm1331, 0, %v1330
      %v1333 = vsub.s32 32, %v1332
      %v1334 = vshll.u32 %v1325, %v1332
      %v1335 = vshrl.u32 %v1317, %v1333
      %v1336 = vor.u32 %v1334, %v1335
      %v1337 = vsub.s32 4294967266, %v1332
      %v1338 = vadd.s32 %v1337, 127
      %v1339 = vshll.u32 %v1338, 23
      %v1340 = vor.u32 4788187, %v1339
      %v1341 = vand.u32 2147483647, %v1340
      %v1343 = vcvt.s32.f32 %v1336
      %v1344 = vmul.f32 %v1343, %v1341
      %v1345 = vxor.u32 %v1344, 2147483648
      %v1346 = vsel %vm1263, %v1345, %v1344
      %v1347 = vsub.s32 4, %v1323
      %v1348 = vsel %vm1263, %v1347, %v1323
      %v1349 = vsel %vm1262, %v611, %v1346
      %v1350 = vsel %vm1262, 0, %v1348
      %v1351 = vcosq.f32.pop %v1349
      %v1352 = vsinq.f32.pop %v1349
      %vm1353 = vweird.f32 %v611
      %v1354 = vadd.s32 %v1350, 3
      %v1355 = vand.u32 %v1354, 3
      %vm1356 = vcmp.lt.s32.totalorder %v1355, 2
      %vm1357 = vcmp.eq.s32.totalorder %v1355, 0
      %v1358 = vxor.u32 %v1352, 2147483648
      %v1359 = vsel %vm1357, %v1351, %v1358
      %vm1360 = vcmp.eq.s32.totalorder %v1355, 2
      %v1361 = vxor.u32 %v1351, 2147483648
      %v1362 = vsel %vm1360, %v1361, %v1352
      %v1363 = vsel %vm1356, %v1359, %v1362
      %v1364 = vsel %vm1353, nan, %v1363
      %v1365 = vand.u32 2147483647, %v612
      %vm1366 = vcmp.le.f32.partialorder %v1365, 0.7853982
      %vm1367 = vcmp.lt.s32.totalorder %v612, 0
      %v1368 = vand.u32 %v612, 2139095040
      %v1369 = vshrl.u32 %v1368, 23
      %v1370 = vsub.s32 %v1369, 127
      %v1371 = vand.u32 2147483647, %v612
      %v1372 = vand.u32 %v1371, 8388607
      %v1373 = vor.u32 %v1372, 8388608
      %v1374 = vsub.s32 0, %v1373
      %v1375 = vadd.s32 %v1370, 1
      %vm1376 = vcmp.gt.s32.totalorder %v1375, 0
      %v1377 = vsel %vm1376, %v1375, 0
      %v1378 = vshrl.u32 %v1377, 5
      %v1379 = vand.u32 %v1377, 31
      %v1380 = vsub.s32 32, %v1379
      %v1381 = vshrl.u32 683565275, %v1380
      %v1382 = vshll.u32 683565275, %v1379
      %v1383 = vshrl.u32 2475754826, %v1380
      %v1384 = vor.u32 %v1382, %v1383
      %v1385 = vshll.u32 2475754826, %v1379
      %v1386 = vshrl.u32 2131351028, %v1380
      %v1387 = vor.u32 %v1385, %v1386
      %v1388 = vshll.u32 2131351028, %v1379
      %v1389 = vshrl.u32 2102212464, %v1380
      %v1390 = vor.u32 %v1388, %v1389
      %v1391 = vshll.u32 2102212464, %v1379
      %v1392 = vshrl.u32 920167782, %v1380
      %v1393 = vor.u32 %v1391, %v1392
      %v1394 = vshll.u32 920167782, %v1379
      %v1395 = vshrl.u32 1326507024, %v1380
      %v1396 = vor.u32 %v1394, %v1395
      %vm1397 = vcmp.lt.s32.totalorder %v1378, 1
      %vm1398 = vcmp.lt.s32.totalorder %v1378, 2
      %vm1399 = vcmp.lt.s32.totalorder %v1378, 3
      %vm1400 = vcmp.lt.s32.totalorder %v1378, 4
      %v1401 = vsel %vm1397, %v1381, %v1384
      %v1402 = vsel %vm1400, %v1390, 2102212464
      %v1403 = vsel %vm1399, %v1387, %v1402
      %v1404 = vsel %vm1398, %v1401, %v1403
      %v1405 = vsel %vm1397, %v1384, %v1387
      %v1406 = vsel %vm1400, %v1393, 920167782
      %v1407 = vsel %vm1399, %v1390, %v1406
      %v1408 = vsel %vm1398, %v1405, %v1407
      %v1409 = vsel %vm1397, %v1387, %v1390
      %v1410 = vsel %vm1400, %v1396, 1326507024
      %v1411 = vsel %vm1399, %v1393, %v1410
      %v1412 = vsel %vm1398, %v1409, %v1411
      %v1413 = vshll.u32 %v1373, 8
      %v1414 = vmul.u32.u64.compose %v1413, %v1412
      %v1415 = vextract.low.u32 %v1414
      %v1416 = vextract.high.u32 %v1414
      %v1417 = vmul.u32.u64.compose %v1413, %v1408
      %v1418 = vextract.low.u32 %v1417
      %v1419 = vextract.high.u32 %v1417
      %v1420 = vmul.u32 %v1413, %v1404
      %v1421 = vadd.s32 %v1416, %v1418
      %vm1422 = vc.u32 %v1416, %v1418
      %v1423 = vadd.s32 %v1419, 1
      %v1424 = vsel %vm1422, %v1423, %v1419
      %v1425 = vadd.s32 %v1420, %v1424
      %v1426 = vadd.s32 %v1425, 536870912
      %v1427 = vshrl.u32 %v1426, 30
      %v1428 = vshll.u32 %v1427, 30
      %v1429 = vsub.s32 %v1425, %v1428
      %vm1430 = vcmp.lt.s32.totalorder %v1429, 0
      %v1431 = vsub.s32 0, %v1429
      %v1432 = vsel %vm1430, %v1431, %v1429
      %v1433 = vclz %v1432
      %v1434 = vsub.s32 %v1433, 2
      %vm1435 = vcmp.gt.s32.totalorder 0, %v1434
      %v1436 = vsel %vm1435, 0, %v1434
      %v1437 = vsub.s32 32, %v1436
      %v1438 = vshll.u32 %v1429, %v1436
      %v1439 = vshrl.u32 %v1421, %v1437
      %v1440 = vor.u32 %v1438, %v1439
      %v1441 = vsub.s32 4294967266, %v1436
      %v1442 = vadd.s32 %v1441, 127
      %v1443 = vshll.u32 %v1442, 23
      %v1444 = vor.u32 4788187, %v1443
      %v1445 = vand.u32 2147483647, %v1444
      %v1447 = vcvt.s32.f32 %v1440
      %v1448 = vmul.f32 %v1447, %v1445
      %v1449 = vxor.u32 %v1448, 2147483648
      %v1450 = vsel %vm1367, %v1449, %v1448
      %v1451 = vsub.s32 4, %v1427
      %v1452 = vsel %vm1367, %v1451, %v1427
      %v1453 = vsel %vm1366, %v612, %v1450
      %v1454 = vsel %vm1366, 0, %v1452
      %v1455 = vcosq.f32.pop %v1453
      %v1456 = vsinq.f32.pop %v1453
      %vm1457 = vweird.f32 %v612
      %v1458 = vadd.s32 %v1454, 3
      %v1459 = vand.u32 %v1458, 3
      %vm1460 = vcmp.lt.s32.totalorder %v1459, 2
      %vm1461 = vcmp.eq.s32.totalorder %v1459, 0
      %v1462 = vxor.u32 %v1456, 2147483648
      %v1463 = vsel %vm1461, %v1455, %v1462
      %vm1464 = vcmp.eq.s32.totalorder %v1459, 2
      %v1465 = vxor.u32 %v1455, 2147483648
      %v1466 = vsel %vm1464, %v1465, %v1456
      %v1467 = vsel %vm1460, %v1463, %v1466
      %v1468 = vsel %vm1457, nan, %v1467
      %v1469 = vand.u32 2147483647, %v613
      %vm1470 = vcmp.le.f32.partialorder %v1469, 0.7853982
      %vm1471 = vcmp.lt.s32.totalorder %v613, 0
      %v1472 = vand.u32 %v613, 2139095040
      %v1473 = vshrl.u32 %v1472, 23
      %v1474 = vsub.s32 %v1473, 127
      %v1475 = vand.u32 2147483647, %v613
      %v1476 = vand.u32 %v1475, 8388607
      %v1477 = vor.u32 %v1476, 8388608
      %v1478 = vsub.s32 0, %v1477
      %v1479 = vadd.s32 %v1474, 1
      %vm1480 = vcmp.gt.s32.totalorder %v1479, 0
      %v1481 = vsel %vm1480, %v1479, 0
      %v1482 = vshrl.u32 %v1481, 5
      %v1483 = vand.u32 %v1481, 31
      %v1484 = vsub.s32 32, %v1483
      %v1485 = vshrl.u32 683565275, %v1484
      %v1486 = vshll.u32 683565275, %v1483
      %v1487 = vshrl.u32 2475754826, %v1484
      %v1488 = vor.u32 %v1486, %v1487
      %v1489 = vshll.u32 2475754826, %v1483
      %v1490 = vshrl.u32 2131351028, %v1484
      %v1491 = vor.u32 %v1489, %v1490
      %v1492 = vshll.u32 2131351028, %v1483
      %v1493 = vshrl.u32 2102212464, %v1484
      %v1494 = vor.u32 %v1492, %v1493
      %v1495 = vshll.u32 2102212464, %v1483
      %v1496 = vshrl.u32 920167782, %v1484
      %v1497 = vor.u32 %v1495, %v1496
      %v1498 = vshll.u32 920167782, %v1483
      %v1499 = vshrl.u32 1326507024, %v1484
      %v1500 = vor.u32 %v1498, %v1499
      %vm1501 = vcmp.lt.s32.totalorder %v1482, 1
      %vm1502 = vcmp.lt.s32.totalorder %v1482, 2
      %vm1503 = vcmp.lt.s32.totalorder %v1482, 3
      %vm1504 = vcmp.lt.s32.totalorder %v1482, 4
      %v1505 = vsel %vm1501, %v1485, %v1488
      %v1506 = vsel %vm1504, %v1494, 2102212464
      %v1507 = vsel %vm1503, %v1491, %v1506
      %v1508 = vsel %vm1502, %v1505, %v1507
      %v1509 = vsel %vm1501, %v1488, %v1491
      %v1510 = vsel %vm1504, %v1497, 920167782
      %v1511 = vsel %vm1503, %v1494, %v1510
      %v1512 = vsel %vm1502, %v1509, %v1511
      %v1513 = vsel %vm1501, %v1491, %v1494
      %v1514 = vsel %vm1504, %v1500, 1326507024
      %v1515 = vsel %vm1503, %v1497, %v1514
      %v1516 = vsel %vm1502, %v1513, %v1515
      %v1517 = vshll.u32 %v1477, 8
      %v1518 = vmul.u32.u64.compose %v1517, %v1516
      %v1519 = vextract.low.u32 %v1518
      %v1520 = vextract.high.u32 %v1518
      %v1521 = vmul.u32.u64.compose %v1517, %v1512
      %v1522 = vextract.low.u32 %v1521
      %v1523 = vextract.high.u32 %v1521
      %v1524 = vmul.u32 %v1517, %v1508
      %v1525 = vadd.s32 %v1520, %v1522
      %vm1526 = vc.u32 %v1520, %v1522
      %v1527 = vadd.s32 %v1523, 1
      %v1528 = vsel %vm1526, %v1527, %v1523
      %v1529 = vadd.s32 %v1524, %v1528
      %v1530 = vadd.s32 %v1529, 536870912
      %v1531 = vshrl.u32 %v1530, 30
      %v1532 = vshll.u32 %v1531, 30
      %v1533 = vsub.s32 %v1529, %v1532
      %vm1534 = vcmp.lt.s32.totalorder %v1533, 0
      %v1535 = vsub.s32 0, %v1533
      %v1536 = vsel %vm1534, %v1535, %v1533
      %v1537 = vclz %v1536
      %v1538 = vsub.s32 %v1537, 2
      %vm1539 = vcmp.gt.s32.totalorder 0, %v1538
      %v1540 = vsel %vm1539, 0, %v1538
      %v1541 = vsub.s32 32, %v1540
      %v1542 = vshll.u32 %v1533, %v1540
      %v1543 = vshrl.u32 %v1525, %v1541
      %v1544 = vor.u32 %v1542, %v1543
      %v1545 = vsub.s32 4294967266, %v1540
      %v1546 = vadd.s32 %v1545, 127
      %v1547 = vshll.u32 %v1546, 23
      %v1548 = vor.u32 4788187, %v1547
      %v1549 = vand.u32 2147483647, %v1548
      %v1551 = vcvt.s32.f32 %v1544
      %v1552 = vmul.f32 %v1551, %v1549
      %v1553 = vxor.u32 %v1552, 2147483648
      %v1554 = vsel %vm1471, %v1553, %v1552
      %v1555 = vsub.s32 4, %v1531
      %v1556 = vsel %vm1471, %v1555, %v1531
      %v1557 = vsel %vm1470, %v613, %v1554
      %v1558 = vsel %vm1470, 0, %v1556
      %v1559 = vcosq.f32.pop %v1557
      %v1560 = vsinq.f32.pop %v1557
      %vm1561 = vweird.f32 %v613
      %v1562 = vadd.s32 %v1558, 3
      %v1563 = vand.u32 %v1562, 3
      %vm1564 = vcmp.lt.s32.totalorder %v1563, 2
      %vm1565 = vcmp.eq.s32.totalorder %v1563, 0
      %v1566 = vxor.u32 %v1560, 2147483648
      %v1567 = vsel %vm1565, %v1559, %v1566
      %vm1568 = vcmp.eq.s32.totalorder %v1563, 2
      %v1569 = vxor.u32 %v1559, 2147483648
      %v1570 = vsel %vm1568, %v1569, %v1560
      %v1571 = vsel %vm1564, %v1567, %v1570
      %v1572 = vsel %vm1561, nan, %v1571
      %v1573 = vand.u32 2147483647, %v614
      %vm1574 = vcmp.le.f32.partialorder %v1573, 0.7853982
      %vm1575 = vcmp.lt.s32.totalorder %v614, 0
      %v1576 = vand.u32 %v614, 2139095040
      %v1577 = vshrl.u32 %v1576, 23
      %v1578 = vsub.s32 %v1577, 127
      %v1579 = vand.u32 2147483647, %v614
      %v1580 = vand.u32 %v1579, 8388607
      %v1581 = vor.u32 %v1580, 8388608
      %v1582 = vsub.s32 0, %v1581
      %v1583 = vadd.s32 %v1578, 1
      %vm1584 = vcmp.gt.s32.totalorder %v1583, 0
      %v1585 = vsel %vm1584, %v1583, 0
      %v1586 = vshrl.u32 %v1585, 5
      %v1587 = vand.u32 %v1585, 31
      %v1588 = vsub.s32 32, %v1587
      %v1589 = vshrl.u32 683565275, %v1588
      %v1590 = vshll.u32 683565275, %v1587
      %v1591 = vshrl.u32 2475754826, %v1588
      %v1592 = vor.u32 %v1590, %v1591
      %v1593 = vshll.u32 2475754826, %v1587
      %v1594 = vshrl.u32 2131351028, %v1588
      %v1595 = vor.u32 %v1593, %v1594
      %v1596 = vshll.u32 2131351028, %v1587
      %v1597 = vshrl.u32 2102212464, %v1588
      %v1598 = vor.u32 %v1596, %v1597
      %v1599 = vshll.u32 2102212464, %v1587
      %v1600 = vshrl.u32 920167782, %v1588
      %v1601 = vor.u32 %v1599, %v1600
      %v1602 = vshll.u32 920167782, %v1587
      %v1603 = vshrl.u32 1326507024, %v1588
      %v1604 = vor.u32 %v1602, %v1603
      %vm1605 = vcmp.lt.s32.totalorder %v1586, 1
      %vm1606 = vcmp.lt.s32.totalorder %v1586, 2
      %vm1607 = vcmp.lt.s32.totalorder %v1586, 3
      %vm1608 = vcmp.lt.s32.totalorder %v1586, 4
      %v1609 = vsel %vm1605, %v1589, %v1592
      %v1610 = vsel %vm1608, %v1598, 2102212464
      %v1611 = vsel %vm1607, %v1595, %v1610
      %v1612 = vsel %vm1606, %v1609, %v1611
      %v1613 = vsel %vm1605, %v1592, %v1595
      %v1614 = vsel %vm1608, %v1601, 920167782
      %v1615 = vsel %vm1607, %v1598, %v1614
      %v1616 = vsel %vm1606, %v1613, %v1615
      %v1617 = vsel %vm1605, %v1595, %v1598
      %v1618 = vsel %vm1608, %v1604, 1326507024
      %v1619 = vsel %vm1607, %v1601, %v1618
      %v1620 = vsel %vm1606, %v1617, %v1619
      %v1621 = vshll.u32 %v1581, 8
      %v1622 = vmul.u32.u64.compose %v1621, %v1620
      %v1623 = vextract.low.u32 %v1622
      %v1624 = vextract.high.u32 %v1622
      %v1625 = vmul.u32.u64.compose %v1621, %v1616
      %v1626 = vextract.low.u32 %v1625
      %v1627 = vextract.high.u32 %v1625
      %v1628 = vmul.u32 %v1621, %v1612
      %v1629 = vadd.s32 %v1624, %v1626
      %vm1630 = vc.u32 %v1624, %v1626
      %v1631 = vadd.s32 %v1627, 1
      %v1632 = vsel %vm1630, %v1631, %v1627
      %v1633 = vadd.s32 %v1628, %v1632
      %v1634 = vadd.s32 %v1633, 536870912
      %v1635 = vshrl.u32 %v1634, 30
      %v1636 = vshll.u32 %v1635, 30
      %v1637 = vsub.s32 %v1633, %v1636
      %vm1638 = vcmp.lt.s32.totalorder %v1637, 0
      %v1639 = vsub.s32 0, %v1637
      %v1640 = vsel %vm1638, %v1639, %v1637
      %v1641 = vclz %v1640
      %v1642 = vsub.s32 %v1641, 2
      %vm1643 = vcmp.gt.s32.totalorder 0, %v1642
      %v1644 = vsel %vm1643, 0, %v1642
      %v1645 = vsub.s32 32, %v1644
      %v1646 = vshll.u32 %v1637, %v1644
      %v1647 = vshrl.u32 %v1629, %v1645
      %v1648 = vor.u32 %v1646, %v1647
      %v1649 = vsub.s32 4294967266, %v1644
      %v1650 = vadd.s32 %v1649, 127
      %v1651 = vshll.u32 %v1650, 23
      %v1652 = vor.u32 4788187, %v1651
      %v1653 = vand.u32 2147483647, %v1652
      %v1655 = vcvt.s32.f32 %v1648
      %v1656 = vmul.f32 %v1655, %v1653
      %v1657 = vxor.u32 %v1656, 2147483648
      %v1658 = vsel %vm1575, %v1657, %v1656
      %v1659 = vsub.s32 4, %v1635
      %v1660 = vsel %vm1575, %v1659, %v1635
      %v1661 = vsel %vm1574, %v614, %v1658
      %v1662 = vsel %vm1574, 0, %v1660
      %v1663 = vcosq.f32.pop %v1661
      %v1664 = vsinq.f32.pop %v1661
      %vm1665 = vweird.f32 %v614
      %v1666 = vadd.s32 %v1662, 3
      %v1667 = vand.u32 %v1666, 3
      %vm1668 = vcmp.lt.s32.totalorder %v1667, 2
      %vm1669 = vcmp.eq.s32.totalorder %v1667, 0
      %v1670 = vxor.u32 %v1664, 2147483648
      %v1671 = vsel %vm1669, %v1663, %v1670
      %vm1672 = vcmp.eq.s32.totalorder %v1667, 2
      %v1673 = vxor.u32 %v1663, 2147483648
      %v1674 = vsel %vm1672, %v1673, %v1664
      %v1675 = vsel %vm1668, %v1671, %v1674
      %v1676 = vsel %vm1665, nan, %v1675
      %v1677 = vand.u32 2147483647, %v615
      %vm1678 = vcmp.le.f32.partialorder %v1677, 0.7853982
      %vm1679 = vcmp.lt.s32.totalorder %v615, 0
      %v1680 = vand.u32 %v615, 2139095040
      %v1681 = vshrl.u32 %v1680, 23
      %v1682 = vsub.s32 %v1681, 127
      %v1683 = vand.u32 2147483647, %v615
      %v1684 = vand.u32 %v1683, 8388607
      %v1685 = vor.u32 %v1684, 8388608
      %v1686 = vsub.s32 0, %v1685
      %v1687 = vadd.s32 %v1682, 1
      %vm1688 = vcmp.gt.s32.totalorder %v1687, 0
      %v1689 = vsel %vm1688, %v1687, 0
      %v1690 = vshrl.u32 %v1689, 5
      %v1691 = vand.u32 %v1689, 31
      %v1692 = vsub.s32 32, %v1691
      %v1693 = vshrl.u32 683565275, %v1692
      %v1694 = vshll.u32 683565275, %v1691
      %v1695 = vshrl.u32 2475754826, %v1692
      %v1696 = vor.u32 %v1694, %v1695
      %v1697 = vshll.u32 2475754826, %v1691
      %v1698 = vshrl.u32 2131351028, %v1692
      %v1699 = vor.u32 %v1697, %v1698
      %v1700 = vshll.u32 2131351028, %v1691
      %v1701 = vshrl.u32 2102212464, %v1692
      %v1702 = vor.u32 %v1700, %v1701
      %v1703 = vshll.u32 2102212464, %v1691
      %v1704 = vshrl.u32 920167782, %v1692
      %v1705 = vor.u32 %v1703, %v1704
      %v1706 = vshll.u32 920167782, %v1691
      %v1707 = vshrl.u32 1326507024, %v1692
      %v1708 = vor.u32 %v1706, %v1707
      %vm1709 = vcmp.lt.s32.totalorder %v1690, 1
      %vm1710 = vcmp.lt.s32.totalorder %v1690, 2
      %vm1711 = vcmp.lt.s32.totalorder %v1690, 3
      %vm1712 = vcmp.lt.s32.totalorder %v1690, 4
      %v1713 = vsel %vm1709, %v1693, %v1696
      %v1714 = vsel %vm1712, %v1702, 2102212464
      %v1715 = vsel %vm1711, %v1699, %v1714
      %v1716 = vsel %vm1710, %v1713, %v1715
      %v1717 = vsel %vm1709, %v1696, %v1699
      %v1718 = vsel %vm1712, %v1705, 920167782
      %v1719 = vsel %vm1711, %v1702, %v1718
      %v1720 = vsel %vm1710, %v1717, %v1719
      %v1721 = vsel %vm1709, %v1699, %v1702
      %v1722 = vsel %vm1712, %v1708, 1326507024
      %v1723 = vsel %vm1711, %v1705, %v1722
      %v1724 = vsel %vm1710, %v1721, %v1723
      %v1725 = vshll.u32 %v1685, 8
      %v1726 = vmul.u32.u64.compose %v1725, %v1724
      %v1727 = vextract.low.u32 %v1726
      %v1728 = vextract.high.u32 %v1726
      %v1729 = vmul.u32.u64.compose %v1725, %v1720
      %v1730 = vextract.low.u32 %v1729
      %v1731 = vextract.high.u32 %v1729
      %v1732 = vmul.u32 %v1725, %v1716
      %v1733 = vadd.s32 %v1728, %v1730
      %vm1734 = vc.u32 %v1728, %v1730
      %v1735 = vadd.s32 %v1731, 1
      %v1736 = vsel %vm1734, %v1735, %v1731
      %v1737 = vadd.s32 %v1732, %v1736
      %v1738 = vadd.s32 %v1737, 536870912
      %v1739 = vshrl.u32 %v1738, 30
      %v1740 = vshll.u32 %v1739, 30
      %v1741 = vsub.s32 %v1737, %v1740
      %vm1742 = vcmp.lt.s32.totalorder %v1741, 0
      %v1743 = vsub.s32 0, %v1741
      %v1744 = vsel %vm1742, %v1743, %v1741
      %v1745 = vclz %v1744
      %v1746 = vsub.s32 %v1745, 2
      %vm1747 = vcmp.gt.s32.totalorder 0, %v1746
      %v1748 = vsel %vm1747, 0, %v1746
      %v1749 = vsub.s32 32, %v1748
      %v1750 = vshll.u32 %v1741, %v1748
      %v1751 = vshrl.u32 %v1733, %v1749
      %v1752 = vor.u32 %v1750, %v1751
      %v1753 = vsub.s32 4294967266, %v1748
      %v1754 = vadd.s32 %v1753, 127
      %v1755 = vshll.u32 %v1754, 23
      %v1756 = vor.u32 4788187, %v1755
      %v1757 = vand.u32 2147483647, %v1756
      %v1759 = vcvt.s32.f32 %v1752
      %v1760 = vmul.f32 %v1759, %v1757
      %v1761 = vxor.u32 %v1760, 2147483648
      %v1762 = vsel %vm1679, %v1761, %v1760
      %v1763 = vsub.s32 4, %v1739
      %v1764 = vsel %vm1679, %v1763, %v1739
      %v1765 = vsel %vm1678, %v615, %v1762
      %v1766 = vsel %vm1678, 0, %v1764
      %v1767 = vcosq.f32.pop %v1765
      %v1768 = vsinq.f32.pop %v1765
      %vm1769 = vweird.f32 %v615
      %v1770 = vadd.s32 %v1766, 3
      %v1771 = vand.u32 %v1770, 3
      %vm1772 = vcmp.lt.s32.totalorder %v1771, 2
      %vm1773 = vcmp.eq.s32.totalorder %v1771, 0
      %v1774 = vxor.u32 %v1768, 2147483648
      %v1775 = vsel %vm1773, %v1767, %v1774
      %vm1776 = vcmp.eq.s32.totalorder %v1771, 2
      %v1777 = vxor.u32 %v1767, 2147483648
      %v1778 = vsel %vm1776, %v1777, %v1768
      %v1779 = vsel %vm1772, %v1775, %v1778
      %v1780 = vsel %vm1769, nan, %v1779
      %v1781 = vand.u32 2147483647, %v616
      %vm1782 = vcmp.le.f32.partialorder %v1781, 0.7853982
      %vm1783 = vcmp.lt.s32.totalorder %v616, 0
      %v1784 = vand.u32 %v616, 2139095040
      %v1785 = vshrl.u32 %v1784, 23
      %v1786 = vsub.s32 %v1785, 127
      %v1787 = vand.u32 2147483647, %v616
      %v1788 = vand.u32 %v1787, 8388607
      %v1789 = vor.u32 %v1788, 8388608
      %v1790 = vsub.s32 0, %v1789
      %v1791 = vadd.s32 %v1786, 1
      %vm1792 = vcmp.gt.s32.totalorder %v1791, 0
      %v1793 = vsel %vm1792, %v1791, 0
      %v1794 = vshrl.u32 %v1793, 5
      %v1795 = vand.u32 %v1793, 31
      %v1796 = vsub.s32 32, %v1795
      %v1797 = vshrl.u32 683565275, %v1796
      %v1798 = vshll.u32 683565275, %v1795
      %v1799 = vshrl.u32 2475754826, %v1796
      %v1800 = vor.u32 %v1798, %v1799
      %v1801 = vshll.u32 2475754826, %v1795
      %v1802 = vshrl.u32 2131351028, %v1796
      %v1803 = vor.u32 %v1801, %v1802
      %v1804 = vshll.u32 2131351028, %v1795
      %v1805 = vshrl.u32 2102212464, %v1796
      %v1806 = vor.u32 %v1804, %v1805
      %v1807 = vshll.u32 2102212464, %v1795
      %v1808 = vshrl.u32 920167782, %v1796
      %v1809 = vor.u32 %v1807, %v1808
      %v1810 = vshll.u32 920167782, %v1795
      %v1811 = vshrl.u32 1326507024, %v1796
      %v1812 = vor.u32 %v1810, %v1811
      %vm1813 = vcmp.lt.s32.totalorder %v1794, 1
      %vm1814 = vcmp.lt.s32.totalorder %v1794, 2
      %vm1815 = vcmp.lt.s32.totalorder %v1794, 3
      %vm1816 = vcmp.lt.s32.totalorder %v1794, 4
      %v1817 = vsel %vm1813, %v1797, %v1800
      %v1818 = vsel %vm1816, %v1806, 2102212464
      %v1819 = vsel %vm1815, %v1803, %v1818
      %v1820 = vsel %vm1814, %v1817, %v1819
      %v1821 = vsel %vm1813, %v1800, %v1803
      %v1822 = vsel %vm1816, %v1809, 920167782
      %v1823 = vsel %vm1815, %v1806, %v1822
      %v1824 = vsel %vm1814, %v1821, %v1823
      %v1825 = vsel %vm1813, %v1803, %v1806
      %v1826 = vsel %vm1816, %v1812, 1326507024
      %v1827 = vsel %vm1815, %v1809, %v1826
      %v1828 = vsel %vm1814, %v1825, %v1827
      %v1829 = vshll.u32 %v1789, 8
      %v1830 = vmul.u32.u64.compose %v1829, %v1828
      %v1831 = vextract.low.u32 %v1830
      %v1832 = vextract.high.u32 %v1830
      %v1833 = vmul.u32.u64.compose %v1829, %v1824
      %v1834 = vextract.low.u32 %v1833
      %v1835 = vextract.high.u32 %v1833
      %v1836 = vmul.u32 %v1829, %v1820
      %v1837 = vadd.s32 %v1832, %v1834
      %vm1838 = vc.u32 %v1832, %v1834
      %v1839 = vadd.s32 %v1835, 1
      %v1840 = vsel %vm1838, %v1839, %v1835
      %v1841 = vadd.s32 %v1836, %v1840
      %v1842 = vadd.s32 %v1841, 536870912
      %v1843 = vshrl.u32 %v1842, 30
      %v1844 = vshll.u32 %v1843, 30
      %v1845 = vsub.s32 %v1841, %v1844
      %vm1846 = vcmp.lt.s32.totalorder %v1845, 0
      %v1847 = vsub.s32 0, %v1845
      %v1848 = vsel %vm1846, %v1847, %v1845
      %v1849 = vclz %v1848
      %v1850 = vsub.s32 %v1849, 2
      %vm1851 = vcmp.gt.s32.totalorder 0, %v1850
      %v1852 = vsel %vm1851, 0, %v1850
      %v1853 = vsub.s32 32, %v1852
      %v1854 = vshll.u32 %v1845, %v1852
      %v1855 = vshrl.u32 %v1837, %v1853
      %v1856 = vor.u32 %v1854, %v1855
      %v1857 = vsub.s32 4294967266, %v1852
      %v1858 = vadd.s32 %v1857, 127
      %v1859 = vshll.u32 %v1858, 23
      %v1860 = vor.u32 4788187, %v1859
      %v1861 = vand.u32 2147483647, %v1860
      %v1863 = vcvt.s32.f32 %v1856
      %v1864 = vmul.f32 %v1863, %v1861
      %v1865 = vxor.u32 %v1864, 2147483648
      %v1866 = vsel %vm1783, %v1865, %v1864
      %v1867 = vsub.s32 4, %v1843
      %v1868 = vsel %vm1783, %v1867, %v1843
      %v1869 = vsel %vm1782, %v616, %v1866
      %v1870 = vsel %vm1782, 0, %v1868
      %v1871 = vcosq.f32.pop %v1869
      %v1872 = vsinq.f32.pop %v1869
      %vm1873 = vweird.f32 %v616
      %v1874 = vadd.s32 %v1870, 3
      %v1875 = vand.u32 %v1874, 3
      %vm1876 = vcmp.lt.s32.totalorder %v1875, 2
      %vm1877 = vcmp.eq.s32.totalorder %v1875, 0
      %v1878 = vxor.u32 %v1872, 2147483648
      %v1879 = vsel %vm1877, %v1871, %v1878
      %vm1880 = vcmp.eq.s32.totalorder %v1875, 2
      %v1881 = vxor.u32 %v1871, 2147483648
      %v1882 = vsel %vm1880, %v1881, %v1872
      %v1883 = vsel %vm1876, %v1879, %v1882
      %v1884 = vsel %vm1873, nan, %v1883
      %v1885 = vand.u32 2147483647, %v617
      %vm1886 = vcmp.le.f32.partialorder %v1885, 0.7853982
      %vm1887 = vcmp.lt.s32.totalorder %v617, 0
      %v1888 = vand.u32 %v617, 2139095040
      %v1889 = vshrl.u32 %v1888, 23
      %v1890 = vsub.s32 %v1889, 127
      %v1891 = vand.u32 2147483647, %v617
      %v1892 = vand.u32 %v1891, 8388607
      %v1893 = vor.u32 %v1892, 8388608
      %v1894 = vsub.s32 0, %v1893
      %v1895 = vadd.s32 %v1890, 1
      %vm1896 = vcmp.gt.s32.totalorder %v1895, 0
      %v1897 = vsel %vm1896, %v1895, 0
      %v1898 = vshrl.u32 %v1897, 5
      %v1899 = vand.u32 %v1897, 31
      %v1900 = vsub.s32 32, %v1899
      %v1901 = vshrl.u32 683565275, %v1900
      %v1902 = vshll.u32 683565275, %v1899
      %v1903 = vshrl.u32 2475754826, %v1900
      %v1904 = vor.u32 %v1902, %v1903
      %v1905 = vshll.u32 2475754826, %v1899
      %v1906 = vshrl.u32 2131351028, %v1900
      %v1907 = vor.u32 %v1905, %v1906
      %v1908 = vshll.u32 2131351028, %v1899
      %v1909 = vshrl.u32 2102212464, %v1900
      %v1910 = vor.u32 %v1908, %v1909
      %v1911 = vshll.u32 2102212464, %v1899
      %v1912 = vshrl.u32 920167782, %v1900
      %v1913 = vor.u32 %v1911, %v1912
      %v1914 = vshll.u32 920167782, %v1899
      %v1915 = vshrl.u32 1326507024, %v1900
      %v1916 = vor.u32 %v1914, %v1915
      %vm1917 = vcmp.lt.s32.totalorder %v1898, 1
      %vm1918 = vcmp.lt.s32.totalorder %v1898, 2
      %vm1919 = vcmp.lt.s32.totalorder %v1898, 3
      %vm1920 = vcmp.lt.s32.totalorder %v1898, 4
      %v1921 = vsel %vm1917, %v1901, %v1904
      %v1922 = vsel %vm1920, %v1910, 2102212464
      %v1923 = vsel %vm1919, %v1907, %v1922
      %v1924 = vsel %vm1918, %v1921, %v1923
      %v1925 = vsel %vm1917, %v1904, %v1907
      %v1926 = vsel %vm1920, %v1913, 920167782
      %v1927 = vsel %vm1919, %v1910, %v1926
      %v1928 = vsel %vm1918, %v1925, %v1927
      %v1929 = vsel %vm1917, %v1907, %v1910
      %v1930 = vsel %vm1920, %v1916, 1326507024
      %v1931 = vsel %vm1919, %v1913, %v1930
      %v1932 = vsel %vm1918, %v1929, %v1931
      %v1933 = vshll.u32 %v1893, 8
      %v1934 = vmul.u32.u64.compose %v1933, %v1932
      %v1935 = vextract.low.u32 %v1934
      %v1936 = vextract.high.u32 %v1934
      %v1937 = vmul.u32.u64.compose %v1933, %v1928
      %v1938 = vextract.low.u32 %v1937
      %v1939 = vextract.high.u32 %v1937
      %v1940 = vmul.u32 %v1933, %v1924
      %v1941 = vadd.s32 %v1936, %v1938
      %vm1942 = vc.u32 %v1936, %v1938
      %v1943 = vadd.s32 %v1939, 1
      %v1944 = vsel %vm1942, %v1943, %v1939
      %v1945 = vadd.s32 %v1940, %v1944
      %v1946 = vadd.s32 %v1945, 536870912
      %v1947 = vshrl.u32 %v1946, 30
      %v1948 = vshll.u32 %v1947, 30
      %v1949 = vsub.s32 %v1945, %v1948
      %vm1950 = vcmp.lt.s32.totalorder %v1949, 0
      %v1951 = vsub.s32 0, %v1949
      %v1952 = vsel %vm1950, %v1951, %v1949
      %v1953 = vclz %v1952
      %v1954 = vsub.s32 %v1953, 2
      %vm1955 = vcmp.gt.s32.totalorder 0, %v1954
      %v1956 = vsel %vm1955, 0, %v1954
      %v1957 = vsub.s32 32, %v1956
      %v1958 = vshll.u32 %v1949, %v1956
      %v1959 = vshrl.u32 %v1941, %v1957
      %v1960 = vor.u32 %v1958, %v1959
      %v1961 = vsub.s32 4294967266, %v1956
      %v1962 = vadd.s32 %v1961, 127
      %v1963 = vshll.u32 %v1962, 23
      %v1964 = vor.u32 4788187, %v1963
      %v1965 = vand.u32 2147483647, %v1964
      %v1967 = vcvt.s32.f32 %v1960
      %v1968 = vmul.f32 %v1967, %v1965
      %v1969 = vxor.u32 %v1968, 2147483648
      %v1970 = vsel %vm1887, %v1969, %v1968
      %v1971 = vsub.s32 4, %v1947
      %v1972 = vsel %vm1887, %v1971, %v1947
      %v1973 = vsel %vm1886, %v617, %v1970
      %v1974 = vsel %vm1886, 0, %v1972
      %v1975 = vcosq.f32.pop %v1973
      %v1976 = vsinq.f32.pop %v1973
      %vm1977 = vweird.f32 %v617
      %v1978 = vadd.s32 %v1974, 3
      %v1979 = vand.u32 %v1978, 3
      %vm1980 = vcmp.lt.s32.totalorder %v1979, 2
      %vm1981 = vcmp.eq.s32.totalorder %v1979, 0
      %v1982 = vxor.u32 %v1976, 2147483648
      %v1983 = vsel %vm1981, %v1975, %v1982
      %vm1984 = vcmp.eq.s32.totalorder %v1979, 2
      %v1985 = vxor.u32 %v1975, 2147483648
      %v1986 = vsel %vm1984, %v1985, %v1976
      %v1987 = vsel %vm1980, %v1983, %v1986
      %v1988 = vsel %vm1977, nan, %v1987
      %v1989 = vand.u32 2147483647, %v618
      %vm1990 = vcmp.le.f32.partialorder %v1989, 0.7853982
      %vm1991 = vcmp.lt.s32.totalorder %v618, 0
      %v1992 = vand.u32 %v618, 2139095040
      %v1993 = vshrl.u32 %v1992, 23
      %v1994 = vsub.s32 %v1993, 127
      %v1995 = vand.u32 2147483647, %v618
      %v1996 = vand.u32 %v1995, 8388607
      %v1997 = vor.u32 %v1996, 8388608
      %v1998 = vsub.s32 0, %v1997
      %v1999 = vadd.s32 %v1994, 1
      %vm2000 = vcmp.gt.s32.totalorder %v1999, 0
      %v2001 = vsel %vm2000, %v1999, 0
      %v2002 = vshrl.u32 %v2001, 5
      %v2003 = vand.u32 %v2001, 31
      %v2004 = vsub.s32 32, %v2003
      %v2005 = vshrl.u32 683565275, %v2004
      %v2006 = vshll.u32 683565275, %v2003
      %v2007 = vshrl.u32 2475754826, %v2004
      %v2008 = vor.u32 %v2006, %v2007
      %v2009 = vshll.u32 2475754826, %v2003
      %v2010 = vshrl.u32 2131351028, %v2004
      %v2011 = vor.u32 %v2009, %v2010
      %v2012 = vshll.u32 2131351028, %v2003
      %v2013 = vshrl.u32 2102212464, %v2004
      %v2014 = vor.u32 %v2012, %v2013
      %v2015 = vshll.u32 2102212464, %v2003
      %v2016 = vshrl.u32 920167782, %v2004
      %v2017 = vor.u32 %v2015, %v2016
      %v2018 = vshll.u32 920167782, %v2003
      %v2019 = vshrl.u32 1326507024, %v2004
      %v2020 = vor.u32 %v2018, %v2019
      %vm2021 = vcmp.lt.s32.totalorder %v2002, 1
      %vm2022 = vcmp.lt.s32.totalorder %v2002, 2
      %vm2023 = vcmp.lt.s32.totalorder %v2002, 3
      %vm2024 = vcmp.lt.s32.totalorder %v2002, 4
      %v2025 = vsel %vm2021, %v2005, %v2008
      %v2026 = vsel %vm2024, %v2014, 2102212464
      %v2027 = vsel %vm2023, %v2011, %v2026
      %v2028 = vsel %vm2022, %v2025, %v2027
      %v2029 = vsel %vm2021, %v2008, %v2011
      %v2030 = vsel %vm2024, %v2017, 920167782
      %v2031 = vsel %vm2023, %v2014, %v2030
      %v2032 = vsel %vm2022, %v2029, %v2031
      %v2033 = vsel %vm2021, %v2011, %v2014
      %v2034 = vsel %vm2024, %v2020, 1326507024
      %v2035 = vsel %vm2023, %v2017, %v2034
      %v2036 = vsel %vm2022, %v2033, %v2035
      %v2037 = vshll.u32 %v1997, 8
      %v2038 = vmul.u32.u64.compose %v2037, %v2036
      %v2039 = vextract.low.u32 %v2038
      %v2040 = vextract.high.u32 %v2038
      %v2041 = vmul.u32.u64.compose %v2037, %v2032
      %v2042 = vextract.low.u32 %v2041
      %v2043 = vextract.high.u32 %v2041
      %v2044 = vmul.u32 %v2037, %v2028
      %v2045 = vadd.s32 %v2040, %v2042
      %vm2046 = vc.u32 %v2040, %v2042
      %v2047 = vadd.s32 %v2043, 1
      %v2048 = vsel %vm2046, %v2047, %v2043
      %v2049 = vadd.s32 %v2044, %v2048
      %v2050 = vadd.s32 %v2049, 536870912
      %v2051 = vshrl.u32 %v2050, 30
      %v2052 = vshll.u32 %v2051, 30
      %v2053 = vsub.s32 %v2049, %v2052
      %vm2054 = vcmp.lt.s32.totalorder %v2053, 0
      %v2055 = vsub.s32 0, %v2053
      %v2056 = vsel %vm2054, %v2055, %v2053
      %v2057 = vclz %v2056
      %v2058 = vsub.s32 %v2057, 2
      %vm2059 = vcmp.gt.s32.totalorder 0, %v2058
      %v2060 = vsel %vm2059, 0, %v2058
      %v2061 = vsub.s32 32, %v2060
      %v2062 = vshll.u32 %v2053, %v2060
      %v2063 = vshrl.u32 %v2045, %v2061
      %v2064 = vor.u32 %v2062, %v2063
      %v2065 = vsub.s32 4294967266, %v2060
      %v2066 = vadd.s32 %v2065, 127
      %v2067 = vshll.u32 %v2066, 23
      %v2068 = vor.u32 4788187, %v2067
      %v2069 = vand.u32 2147483647, %v2068
      %v2071 = vcvt.s32.f32 %v2064
      %v2072 = vmul.f32 %v2071, %v2069
      %v2073 = vxor.u32 %v2072, 2147483648
      %v2074 = vsel %vm1991, %v2073, %v2072
      %v2075 = vsub.s32 4, %v2051
      %v2076 = vsel %vm1991, %v2075, %v2051
      %v2077 = vsel %vm1990, %v618, %v2074
      %v2078 = vsel %vm1990, 0, %v2076
      %v2079 = vcosq.f32.pop %v2077
      %v2080 = vsinq.f32.pop %v2077
      %vm2081 = vweird.f32 %v618
      %v2082 = vadd.s32 %v2078, 3
      %v2083 = vand.u32 %v2082, 3
      %vm2084 = vcmp.lt.s32.totalorder %v2083, 2
      %vm2085 = vcmp.eq.s32.totalorder %v2083, 0
      %v2086 = vxor.u32 %v2080, 2147483648
      %v2087 = vsel %vm2085, %v2079, %v2086
      %vm2088 = vcmp.eq.s32.totalorder %v2083, 2
      %v2089 = vxor.u32 %v2079, 2147483648
      %v2090 = vsel %vm2088, %v2089, %v2080
      %v2091 = vsel %vm2084, %v2087, %v2090
      %v2092 = vsel %vm2081, nan, %v2091
      %v2093 = vand.u32 2147483647, %v619
      %vm2094 = vcmp.le.f32.partialorder %v2093, 0.7853982
      %vm2095 = vcmp.lt.s32.totalorder %v619, 0
      %v2096 = vand.u32 %v619, 2139095040
      %v2097 = vshrl.u32 %v2096, 23
      %v2098 = vsub.s32 %v2097, 127
      %v2099 = vand.u32 2147483647, %v619
      %v2100 = vand.u32 %v2099, 8388607
      %v2101 = vor.u32 %v2100, 8388608
      %v2102 = vsub.s32 0, %v2101
      %v2103 = vadd.s32 %v2098, 1
      %vm2104 = vcmp.gt.s32.totalorder %v2103, 0
      %v2105 = vsel %vm2104, %v2103, 0
      %v2106 = vshrl.u32 %v2105, 5
      %v2107 = vand.u32 %v2105, 31
      %v2108 = vsub.s32 32, %v2107
      %v2109 = vshrl.u32 683565275, %v2108
      %v2110 = vshll.u32 683565275, %v2107
      %v2111 = vshrl.u32 2475754826, %v2108
      %v2112 = vor.u32 %v2110, %v2111
      %v2113 = vshll.u32 2475754826, %v2107
      %v2114 = vshrl.u32 2131351028, %v2108
      %v2115 = vor.u32 %v2113, %v2114
      %v2116 = vshll.u32 2131351028, %v2107
      %v2117 = vshrl.u32 2102212464, %v2108
      %v2118 = vor.u32 %v2116, %v2117
      %v2119 = vshll.u32 2102212464, %v2107
      %v2120 = vshrl.u32 920167782, %v2108
      %v2121 = vor.u32 %v2119, %v2120
      %v2122 = vshll.u32 920167782, %v2107
      %v2123 = vshrl.u32 1326507024, %v2108
      %v2124 = vor.u32 %v2122, %v2123
      %vm2125 = vcmp.lt.s32.totalorder %v2106, 1
      %vm2126 = vcmp.lt.s32.totalorder %v2106, 2
      %vm2127 = vcmp.lt.s32.totalorder %v2106, 3
      %vm2128 = vcmp.lt.s32.totalorder %v2106, 4
      %v2129 = vsel %vm2125, %v2109, %v2112
      %v2130 = vsel %vm2128, %v2118, 2102212464
      %v2131 = vsel %vm2127, %v2115, %v2130
      %v2132 = vsel %vm2126, %v2129, %v2131
      %v2133 = vsel %vm2125, %v2112, %v2115
      %v2134 = vsel %vm2128, %v2121, 920167782
      %v2135 = vsel %vm2127, %v2118, %v2134
      %v2136 = vsel %vm2126, %v2133, %v2135
      %v2137 = vsel %vm2125, %v2115, %v2118
      %v2138 = vsel %vm2128, %v2124, 1326507024
      %v2139 = vsel %vm2127, %v2121, %v2138
      %v2140 = vsel %vm2126, %v2137, %v2139
      %v2141 = vshll.u32 %v2101, 8
      %v2142 = vmul.u32.u64.compose %v2141, %v2140
      %v2143 = vextract.low.u32 %v2142
      %v2144 = vextract.high.u32 %v2142
      %v2145 = vmul.u32.u64.compose %v2141, %v2136
      %v2146 = vextract.low.u32 %v2145
      %v2147 = vextract.high.u32 %v2145
      %v2148 = vmul.u32 %v2141, %v2132
      %v2149 = vadd.s32 %v2144, %v2146
      %vm2150 = vc.u32 %v2144, %v2146
      %v2151 = vadd.s32 %v2147, 1
      %v2152 = vsel %vm2150, %v2151, %v2147
      %v2153 = vadd.s32 %v2148, %v2152
      %v2154 = vadd.s32 %v2153, 536870912
      %v2155 = vshrl.u32 %v2154, 30
      %v2156 = vshll.u32 %v2155, 30
      %v2157 = vsub.s32 %v2153, %v2156
      %vm2158 = vcmp.lt.s32.totalorder %v2157, 0
      %v2159 = vsub.s32 0, %v2157
      %v2160 = vsel %vm2158, %v2159, %v2157
      %v2161 = vclz %v2160
      %v2162 = vsub.s32 %v2161, 2
      %vm2163 = vcmp.gt.s32.totalorder 0, %v2162
      %v2164 = vsel %vm2163, 0, %v2162
      %v2165 = vsub.s32 32, %v2164
      %v2166 = vshll.u32 %v2157, %v2164
      %v2167 = vshrl.u32 %v2149, %v2165
      %v2168 = vor.u32 %v2166, %v2167
      %v2169 = vsub.s32 4294967266, %v2164
      %v2170 = vadd.s32 %v2169, 127
      %v2171 = vshll.u32 %v2170, 23
      %v2172 = vor.u32 4788187, %v2171
      %v2173 = vand.u32 2147483647, %v2172
      %v2175 = vcvt.s32.f32 %v2168
      %v2176 = vmul.f32 %v2175, %v2173
      %v2177 = vxor.u32 %v2176, 2147483648
      %v2178 = vsel %vm2095, %v2177, %v2176
      %v2179 = vsub.s32 4, %v2155
      %v2180 = vsel %vm2095, %v2179, %v2155
      %v2181 = vsel %vm2094, %v619, %v2178
      %v2182 = vsel %vm2094, 0, %v2180
      %v2183 = vcosq.f32.pop %v2181
      %v2184 = vsinq.f32.pop %v2181
      %vm2185 = vweird.f32 %v619
      %v2186 = vadd.s32 %v2182, 3
      %v2187 = vand.u32 %v2186, 3
      %vm2188 = vcmp.lt.s32.totalorder %v2187, 2
      %vm2189 = vcmp.eq.s32.totalorder %v2187, 0
      %v2190 = vxor.u32 %v2184, 2147483648
      %v2191 = vsel %vm2189, %v2183, %v2190
      %vm2192 = vcmp.eq.s32.totalorder %v2187, 2
      %v2193 = vxor.u32 %v2183, 2147483648
      %v2194 = vsel %vm2192, %v2193, %v2184
      %v2195 = vsel %vm2188, %v2191, %v2194
      %v2196 = vsel %vm2185, nan, %v2195
      %v2197 = vand.u32 2147483647, %v620
      %vm2198 = vcmp.le.f32.partialorder %v2197, 0.7853982
      %vm2199 = vcmp.lt.s32.totalorder %v620, 0
      %v2200 = vand.u32 %v620, 2139095040
      %v2201 = vshrl.u32 %v2200, 23
      %v2202 = vsub.s32 %v2201, 127
      %v2203 = vand.u32 2147483647, %v620
      %v2204 = vand.u32 %v2203, 8388607
      %v2205 = vor.u32 %v2204, 8388608
      %v2206 = vsub.s32 0, %v2205
      %v2207 = vadd.s32 %v2202, 1
      %vm2208 = vcmp.gt.s32.totalorder %v2207, 0
      %v2209 = vsel %vm2208, %v2207, 0
      %v2210 = vshrl.u32 %v2209, 5
      %v2211 = vand.u32 %v2209, 31
      %v2212 = vsub.s32 32, %v2211
      %v2213 = vshrl.u32 683565275, %v2212
      %v2214 = vshll.u32 683565275, %v2211
      %v2215 = vshrl.u32 2475754826, %v2212
      %v2216 = vor.u32 %v2214, %v2215
      %v2217 = vshll.u32 2475754826, %v2211
      %v2218 = vshrl.u32 2131351028, %v2212
      %v2219 = vor.u32 %v2217, %v2218
      %v2220 = vshll.u32 2131351028, %v2211
      %v2221 = vshrl.u32 2102212464, %v2212
      %v2222 = vor.u32 %v2220, %v2221
      %v2223 = vshll.u32 2102212464, %v2211
      %v2224 = vshrl.u32 920167782, %v2212
      %v2225 = vor.u32 %v2223, %v2224
      %v2226 = vshll.u32 920167782, %v2211
      %v2227 = vshrl.u32 1326507024, %v2212
      %v2228 = vor.u32 %v2226, %v2227
      %vm2229 = vcmp.lt.s32.totalorder %v2210, 1
      %vm2230 = vcmp.lt.s32.totalorder %v2210, 2
      %vm2231 = vcmp.lt.s32.totalorder %v2210, 3
      %vm2232 = vcmp.lt.s32.totalorder %v2210, 4
      %v2233 = vsel %vm2229, %v2213, %v2216
      %v2234 = vsel %vm2232, %v2222, 2102212464
      %v2235 = vsel %vm2231, %v2219, %v2234
      %v2236 = vsel %vm2230, %v2233, %v2235
      %v2237 = vsel %vm2229, %v2216, %v2219
      %v2238 = vsel %vm2232, %v2225, 920167782
      %v2239 = vsel %vm2231, %v2222, %v2238
      %v2240 = vsel %vm2230, %v2237, %v2239
      %v2241 = vsel %vm2229, %v2219, %v2222
      %v2242 = vsel %vm2232, %v2228, 1326507024
      %v2243 = vsel %vm2231, %v2225, %v2242
      %v2244 = vsel %vm2230, %v2241, %v2243
      %v2245 = vshll.u32 %v2205, 8
      %v2246 = vmul.u32.u64.compose %v2245, %v2244
      %v2247 = vextract.low.u32 %v2246
      %v2248 = vextract.high.u32 %v2246
      %v2249 = vmul.u32.u64.compose %v2245, %v2240
      %v2250 = vextract.low.u32 %v2249
      %v2251 = vextract.high.u32 %v2249
      %v2252 = vmul.u32 %v2245, %v2236
      %v2253 = vadd.s32 %v2248, %v2250
      %vm2254 = vc.u32 %v2248, %v2250
      %v2255 = vadd.s32 %v2251, 1
      %v2256 = vsel %vm2254, %v2255, %v2251
      %v2257 = vadd.s32 %v2252, %v2256
      %v2258 = vadd.s32 %v2257, 536870912
      %v2259 = vshrl.u32 %v2258, 30
      %v2260 = vshll.u32 %v2259, 30
      %v2261 = vsub.s32 %v2257, %v2260
      %vm2262 = vcmp.lt.s32.totalorder %v2261, 0
      %v2263 = vsub.s32 0, %v2261
      %v2264 = vsel %vm2262, %v2263, %v2261
      %v2265 = vclz %v2264
      %v2266 = vsub.s32 %v2265, 2
      %vm2267 = vcmp.gt.s32.totalorder 0, %v2266
      %v2268 = vsel %vm2267, 0, %v2266
      %v2269 = vsub.s32 32, %v2268
      %v2270 = vshll.u32 %v2261, %v2268
      %v2271 = vshrl.u32 %v2253, %v2269
      %v2272 = vor.u32 %v2270, %v2271
      %v2273 = vsub.s32 4294967266, %v2268
      %v2274 = vadd.s32 %v2273, 127
      %v2275 = vshll.u32 %v2274, 23
      %v2276 = vor.u32 4788187, %v2275
      %v2277 = vand.u32 2147483647, %v2276
      %v2279 = vcvt.s32.f32 %v2272
      %v2280 = vmul.f32 %v2279, %v2277
      %v2281 = vxor.u32 %v2280, 2147483648
      %v2282 = vsel %vm2199, %v2281, %v2280
      %v2283 = vsub.s32 4, %v2259
      %v2284 = vsel %vm2199, %v2283, %v2259
      %v2285 = vsel %vm2198, %v620, %v2282
      %v2286 = vsel %vm2198, 0, %v2284
      %v2287 = vcosq.f32.pop %v2285
      %v2288 = vsinq.f32.pop %v2285
      %vm2289 = vweird.f32 %v620
      %v2290 = vadd.s32 %v2286, 3
      %v2291 = vand.u32 %v2290, 3
      %vm2292 = vcmp.lt.s32.totalorder %v2291, 2
      %vm2293 = vcmp.eq.s32.totalorder %v2291, 0
      %v2294 = vxor.u32 %v2288, 2147483648
      %v2295 = vsel %vm2293, %v2287, %v2294
      %vm2296 = vcmp.eq.s32.totalorder %v2291, 2
      %v2297 = vxor.u32 %v2287, 2147483648
      %v2298 = vsel %vm2296, %v2297, %v2288
      %v2299 = vsel %vm2292, %v2295, %v2298
      %v2300 = vsel %vm2289, nan, %v2299
      %v2301 = vand.u32 2147483647, %v621
      %vm2302 = vcmp.le.f32.partialorder %v2301, 0.7853982
      %vm2303 = vcmp.lt.s32.totalorder %v621, 0
      %v2304 = vand.u32 %v621, 2139095040
      %v2305 = vshrl.u32 %v2304, 23
      %v2306 = vsub.s32 %v2305, 127
      %v2307 = vand.u32 2147483647, %v621
      %v2308 = vand.u32 %v2307, 8388607
      %v2309 = vor.u32 %v2308, 8388608
      %v2310 = vsub.s32 0, %v2309
      %v2311 = vadd.s32 %v2306, 1
      %vm2312 = vcmp.gt.s32.totalorder %v2311, 0
      %v2313 = vsel %vm2312, %v2311, 0
      %v2314 = vshrl.u32 %v2313, 5
      %v2315 = vand.u32 %v2313, 31
      %v2316 = vsub.s32 32, %v2315
      %v2317 = vshrl.u32 683565275, %v2316
      %v2318 = vshll.u32 683565275, %v2315
      %v2319 = vshrl.u32 2475754826, %v2316
      %v2320 = vor.u32 %v2318, %v2319
      %v2321 = vshll.u32 2475754826, %v2315
      %v2322 = vshrl.u32 2131351028, %v2316
      %v2323 = vor.u32 %v2321, %v2322
      %v2324 = vshll.u32 2131351028, %v2315
      %v2325 = vshrl.u32 2102212464, %v2316
      %v2326 = vor.u32 %v2324, %v2325
      %v2327 = vshll.u32 2102212464, %v2315
      %v2328 = vshrl.u32 920167782, %v2316
      %v2329 = vor.u32 %v2327, %v2328
      %v2330 = vshll.u32 920167782, %v2315
      %v2331 = vshrl.u32 1326507024, %v2316
      %v2332 = vor.u32 %v2330, %v2331
      %vm2333 = vcmp.lt.s32.totalorder %v2314, 1
      %vm2334 = vcmp.lt.s32.totalorder %v2314, 2
      %vm2335 = vcmp.lt.s32.totalorder %v2314, 3
      %vm2336 = vcmp.lt.s32.totalorder %v2314, 4
      %v2337 = vsel %vm2333, %v2317, %v2320
      %v2338 = vsel %vm2336, %v2326, 2102212464
      %v2339 = vsel %vm2335, %v2323, %v2338
      %v2340 = vsel %vm2334, %v2337, %v2339
      %v2341 = vsel %vm2333, %v2320, %v2323
      %v2342 = vsel %vm2336, %v2329, 920167782
      %v2343 = vsel %vm2335, %v2326, %v2342
      %v2344 = vsel %vm2334, %v2341, %v2343
      %v2345 = vsel %vm2333, %v2323, %v2326
      %v2346 = vsel %vm2336, %v2332, 1326507024
      %v2347 = vsel %vm2335, %v2329, %v2346
      %v2348 = vsel %vm2334, %v2345, %v2347
      %v2349 = vshll.u32 %v2309, 8
      %v2350 = vmul.u32.u64.compose %v2349, %v2348
      %v2351 = vextract.low.u32 %v2350
      %v2352 = vextract.high.u32 %v2350
      %v2353 = vmul.u32.u64.compose %v2349, %v2344
      %v2354 = vextract.low.u32 %v2353
      %v2355 = vextract.high.u32 %v2353
      %v2356 = vmul.u32 %v2349, %v2340
      %v2357 = vadd.s32 %v2352, %v2354
      %vm2358 = vc.u32 %v2352, %v2354
      %v2359 = vadd.s32 %v2355, 1
      %v2360 = vsel %vm2358, %v2359, %v2355
      %v2361 = vadd.s32 %v2356, %v2360
      %v2362 = vadd.s32 %v2361, 536870912
      %v2363 = vshrl.u32 %v2362, 30
      %v2364 = vshll.u32 %v2363, 30
      %v2365 = vsub.s32 %v2361, %v2364
      %vm2366 = vcmp.lt.s32.totalorder %v2365, 0
      %v2367 = vsub.s32 0, %v2365
      %v2368 = vsel %vm2366, %v2367, %v2365
      %v2369 = vclz %v2368
      %v2370 = vsub.s32 %v2369, 2
      %vm2371 = vcmp.gt.s32.totalorder 0, %v2370
      %v2372 = vsel %vm2371, 0, %v2370
      %v2373 = vsub.s32 32, %v2372
      %v2374 = vshll.u32 %v2365, %v2372
      %v2375 = vshrl.u32 %v2357, %v2373
      %v2376 = vor.u32 %v2374, %v2375
      %v2377 = vsub.s32 4294967266, %v2372
      %v2378 = vadd.s32 %v2377, 127
      %v2379 = vshll.u32 %v2378, 23
      %v2380 = vor.u32 4788187, %v2379
      %v2381 = vand.u32 2147483647, %v2380
      %v2383 = vcvt.s32.f32 %v2376
      %v2384 = vmul.f32 %v2383, %v2381
      %v2385 = vxor.u32 %v2384, 2147483648
      %v2386 = vsel %vm2303, %v2385, %v2384
      %v2387 = vsub.s32 4, %v2363
      %v2388 = vsel %vm2303, %v2387, %v2363
      %v2389 = vsel %vm2302, %v621, %v2386
      %v2390 = vsel %vm2302, 0, %v2388
      %v2391 = vcosq.f32.pop %v2389
      %v2392 = vsinq.f32.pop %v2389
      %vm2393 = vweird.f32 %v621
      %v2394 = vadd.s32 %v2390, 3
      %v2395 = vand.u32 %v2394, 3
      %vm2396 = vcmp.lt.s32.totalorder %v2395, 2
      %vm2397 = vcmp.eq.s32.totalorder %v2395, 0
      %v2398 = vxor.u32 %v2392, 2147483648
      %v2399 = vsel %vm2397, %v2391, %v2398
      %vm2400 = vcmp.eq.s32.totalorder %v2395, 2
      %v2401 = vxor.u32 %v2391, 2147483648
      %v2402 = vsel %vm2400, %v2401, %v2392
      %v2403 = vsel %vm2396, %v2399, %v2402
      %v2404 = vsel %vm2393, nan, %v2403
      %v2405 = vand.u32 2147483647, %v622
      %vm2406 = vcmp.le.f32.partialorder %v2405, 0.7853982
      %vm2407 = vcmp.lt.s32.totalorder %v622, 0
      %v2408 = vand.u32 %v622, 2139095040
      %v2409 = vshrl.u32 %v2408, 23
      %v2410 = vsub.s32 %v2409, 127
      %v2411 = vand.u32 2147483647, %v622
      %v2412 = vand.u32 %v2411, 8388607
      %v2413 = vor.u32 %v2412, 8388608
      %v2414 = vsub.s32 0, %v2413
      %v2415 = vadd.s32 %v2410, 1
      %vm2416 = vcmp.gt.s32.totalorder %v2415, 0
      %v2417 = vsel %vm2416, %v2415, 0
      %v2418 = vshrl.u32 %v2417, 5
      %v2419 = vand.u32 %v2417, 31
      %v2420 = vsub.s32 32, %v2419
      %v2421 = vshrl.u32 683565275, %v2420
      %v2422 = vshll.u32 683565275, %v2419
      %v2423 = vshrl.u32 2475754826, %v2420
      %v2424 = vor.u32 %v2422, %v2423
      %v2425 = vshll.u32 2475754826, %v2419
      %v2426 = vshrl.u32 2131351028, %v2420
      %v2427 = vor.u32 %v2425, %v2426
      %v2428 = vshll.u32 2131351028, %v2419
      %v2429 = vshrl.u32 2102212464, %v2420
      %v2430 = vor.u32 %v2428, %v2429
      %v2431 = vshll.u32 2102212464, %v2419
      %v2432 = vshrl.u32 920167782, %v2420
      %v2433 = vor.u32 %v2431, %v2432
      %v2434 = vshll.u32 920167782, %v2419
      %v2435 = vshrl.u32 1326507024, %v2420
      %v2436 = vor.u32 %v2434, %v2435
      %vm2437 = vcmp.lt.s32.totalorder %v2418, 1
      %vm2438 = vcmp.lt.s32.totalorder %v2418, 2
      %vm2439 = vcmp.lt.s32.totalorder %v2418, 3
      %vm2440 = vcmp.lt.s32.totalorder %v2418, 4
      %v2441 = vsel %vm2437, %v2421, %v2424
      %v2442 = vsel %vm2440, %v2430, 2102212464
      %v2443 = vsel %vm2439, %v2427, %v2442
      %v2444 = vsel %vm2438, %v2441, %v2443
      %v2445 = vsel %vm2437, %v2424, %v2427
      %v2446 = vsel %vm2440, %v2433, 920167782
      %v2447 = vsel %vm2439, %v2430, %v2446
      %v2448 = vsel %vm2438, %v2445, %v2447
      %v2449 = vsel %vm2437, %v2427, %v2430
      %v2450 = vsel %vm2440, %v2436, 1326507024
      %v2451 = vsel %vm2439, %v2433, %v2450
      %v2452 = vsel %vm2438, %v2449, %v2451
      %v2453 = vshll.u32 %v2413, 8
      %v2454 = vmul.u32.u64.compose %v2453, %v2452
      %v2455 = vextract.low.u32 %v2454
      %v2456 = vextract.high.u32 %v2454
      %v2457 = vmul.u32.u64.compose %v2453, %v2448
      %v2458 = vextract.low.u32 %v2457
      %v2459 = vextract.high.u32 %v2457
      %v2460 = vmul.u32 %v2453, %v2444
      %v2461 = vadd.s32 %v2456, %v2458
      %vm2462 = vc.u32 %v2456, %v2458
      %v2463 = vadd.s32 %v2459, 1
      %v2464 = vsel %vm2462, %v2463, %v2459
      %v2465 = vadd.s32 %v2460, %v2464
      %v2466 = vadd.s32 %v2465, 536870912
      %v2467 = vshrl.u32 %v2466, 30
      %v2468 = vshll.u32 %v2467, 30
      %v2469 = vsub.s32 %v2465, %v2468
      %vm2470 = vcmp.lt.s32.totalorder %v2469, 0
      %v2471 = vsub.s32 0, %v2469
      %v2472 = vsel %vm2470, %v2471, %v2469
      %v2473 = vclz %v2472
      %v2474 = vsub.s32 %v2473, 2
      %vm2475 = vcmp.gt.s32.totalorder 0, %v2474
      %v2476 = vsel %vm2475, 0, %v2474
      %v2477 = vsub.s32 32, %v2476
      %v2478 = vshll.u32 %v2469, %v2476
      %v2479 = vshrl.u32 %v2461, %v2477
      %v2480 = vor.u32 %v2478, %v2479
      %v2481 = vsub.s32 4294967266, %v2476
      %v2482 = vadd.s32 %v2481, 127
      %v2483 = vshll.u32 %v2482, 23
      %v2484 = vor.u32 4788187, %v2483
      %v2485 = vand.u32 2147483647, %v2484
      %v2487 = vcvt.s32.f32 %v2480
      %v2488 = vmul.f32 %v2487, %v2485
      %v2489 = vxor.u32 %v2488, 2147483648
      %v2490 = vsel %vm2407, %v2489, %v2488
      %v2491 = vsub.s32 4, %v2467
      %v2492 = vsel %vm2407, %v2491, %v2467
      %v2493 = vsel %vm2406, %v622, %v2490
      %v2494 = vsel %vm2406, 0, %v2492
      %v2495 = vcosq.f32.pop %v2493
      %v2496 = vsinq.f32.pop %v2493
      %vm2497 = vweird.f32 %v622
      %v2498 = vadd.s32 %v2494, 3
      %v2499 = vand.u32 %v2498, 3
      %vm2500 = vcmp.lt.s32.totalorder %v2499, 2
      %vm2501 = vcmp.eq.s32.totalorder %v2499, 0
      %v2502 = vxor.u32 %v2496, 2147483648
      %v2503 = vsel %vm2501, %v2495, %v2502
      %vm2504 = vcmp.eq.s32.totalorder %v2499, 2
      %v2505 = vxor.u32 %v2495, 2147483648
      %v2506 = vsel %vm2504, %v2505, %v2496
      %v2507 = vsel %vm2500, %v2503, %v2506
      %v2508 = vsel %vm2497, nan, %v2507
      %v2509 = vand.u32 2147483647, %v623
      %vm2510 = vcmp.le.f32.partialorder %v2509, 0.7853982
      %vm2511 = vcmp.lt.s32.totalorder %v623, 0
      %v2512 = vand.u32 %v623, 2139095040
      %v2513 = vshrl.u32 %v2512, 23
      %v2514 = vsub.s32 %v2513, 127
      %v2515 = vand.u32 2147483647, %v623
      %v2516 = vand.u32 %v2515, 8388607
      %v2517 = vor.u32 %v2516, 8388608
      %v2518 = vsub.s32 0, %v2517
      %v2519 = vadd.s32 %v2514, 1
      %vm2520 = vcmp.gt.s32.totalorder %v2519, 0
      %v2521 = vsel %vm2520, %v2519, 0
      %v2522 = vshrl.u32 %v2521, 5
      %v2523 = vand.u32 %v2521, 31
      %v2524 = vsub.s32 32, %v2523
      %v2525 = vshrl.u32 683565275, %v2524
      %v2526 = vshll.u32 683565275, %v2523
      %v2527 = vshrl.u32 2475754826, %v2524
      %v2528 = vor.u32 %v2526, %v2527
      %v2529 = vshll.u32 2475754826, %v2523
      %v2530 = vshrl.u32 2131351028, %v2524
      %v2531 = vor.u32 %v2529, %v2530
      %v2532 = vshll.u32 2131351028, %v2523
      %v2533 = vshrl.u32 2102212464, %v2524
      %v2534 = vor.u32 %v2532, %v2533
      %v2535 = vshll.u32 2102212464, %v2523
      %v2536 = vshrl.u32 920167782, %v2524
      %v2537 = vor.u32 %v2535, %v2536
      %v2538 = vshll.u32 920167782, %v2523
      %v2539 = vshrl.u32 1326507024, %v2524
      %v2540 = vor.u32 %v2538, %v2539
      %vm2541 = vcmp.lt.s32.totalorder %v2522, 1
      %vm2542 = vcmp.lt.s32.totalorder %v2522, 2
      %vm2543 = vcmp.lt.s32.totalorder %v2522, 3
      %vm2544 = vcmp.lt.s32.totalorder %v2522, 4
      %v2545 = vsel %vm2541, %v2525, %v2528
      %v2546 = vsel %vm2544, %v2534, 2102212464
      %v2547 = vsel %vm2543, %v2531, %v2546
      %v2548 = vsel %vm2542, %v2545, %v2547
      %v2549 = vsel %vm2541, %v2528, %v2531
      %v2550 = vsel %vm2544, %v2537, 920167782
      %v2551 = vsel %vm2543, %v2534, %v2550
      %v2552 = vsel %vm2542, %v2549, %v2551
      %v2553 = vsel %vm2541, %v2531, %v2534
      %v2554 = vsel %vm2544, %v2540, 1326507024
      %v2555 = vsel %vm2543, %v2537, %v2554
      %v2556 = vsel %vm2542, %v2553, %v2555
      %v2557 = vshll.u32 %v2517, 8
      %v2558 = vmul.u32.u64.compose %v2557, %v2556
      %v2559 = vextract.low.u32 %v2558
      %v2560 = vextract.high.u32 %v2558
      %v2561 = vmul.u32.u64.compose %v2557, %v2552
      %v2562 = vextract.low.u32 %v2561
      %v2563 = vextract.high.u32 %v2561
      %v2564 = vmul.u32 %v2557, %v2548
      %v2565 = vadd.s32 %v2560, %v2562
      %vm2566 = vc.u32 %v2560, %v2562
      %v2567 = vadd.s32 %v2563, 1
      %v2568 = vsel %vm2566, %v2567, %v2563
      %v2569 = vadd.s32 %v2564, %v2568
      %v2570 = vadd.s32 %v2569, 536870912
      %v2571 = vshrl.u32 %v2570, 30
      %v2572 = vshll.u32 %v2571, 30
      %v2573 = vsub.s32 %v2569, %v2572
      %vm2574 = vcmp.lt.s32.totalorder %v2573, 0
      %v2575 = vsub.s32 0, %v2573
      %v2576 = vsel %vm2574, %v2575, %v2573
      %v2577 = vclz %v2576
      %v2578 = vsub.s32 %v2577, 2
      %vm2579 = vcmp.gt.s32.totalorder 0, %v2578
      %v2580 = vsel %vm2579, 0, %v2578
      %v2581 = vsub.s32 32, %v2580
      %v2582 = vshll.u32 %v2573, %v2580
      %v2583 = vshrl.u32 %v2565, %v2581
      %v2584 = vor.u32 %v2582, %v2583
      %v2585 = vsub.s32 4294967266, %v2580
      %v2586 = vadd.s32 %v2585, 127
      %v2587 = vshll.u32 %v2586, 23
      %v2588 = vor.u32 4788187, %v2587
      %v2589 = vand.u32 2147483647, %v2588
      %v2591 = vcvt.s32.f32 %v2584
      %v2592 = vmul.f32 %v2591, %v2589
      %v2593 = vxor.u32 %v2592, 2147483648
      %v2594 = vsel %vm2511, %v2593, %v2592
      %v2595 = vsub.s32 4, %v2571
      %v2596 = vsel %vm2511, %v2595, %v2571
      %v2597 = vsel %vm2510, %v623, %v2594
      %v2598 = vsel %vm2510, 0, %v2596
      %v2599 = vcosq.f32.pop %v2597
      %v2600 = vsinq.f32.pop %v2597
      %vm2601 = vweird.f32 %v623
      %v2602 = vadd.s32 %v2598, 3
      %v2603 = vand.u32 %v2602, 3
      %vm2604 = vcmp.lt.s32.totalorder %v2603, 2
      %vm2605 = vcmp.eq.s32.totalorder %v2603, 0
      %v2606 = vxor.u32 %v2600, 2147483648
      %v2607 = vsel %vm2605, %v2599, %v2606
      %vm2608 = vcmp.eq.s32.totalorder %v2603, 2
      %v2609 = vxor.u32 %v2599, 2147483648
      %v2610 = vsel %vm2608, %v2609, %v2600
      %v2611 = vsel %vm2604, %v2607, %v2610
      %v2612 = vsel %vm2601, nan, %v2611
      %v2613 = vand.u32 2147483647, %v624
      %vm2614 = vcmp.le.f32.partialorder %v2613, 0.7853982
      %vm2615 = vcmp.lt.s32.totalorder %v624, 0
      %v2616 = vand.u32 %v624, 2139095040
      %v2617 = vshrl.u32 %v2616, 23
      %v2618 = vsub.s32 %v2617, 127
      %v2619 = vand.u32 2147483647, %v624
      %v2620 = vand.u32 %v2619, 8388607
      %v2621 = vor.u32 %v2620, 8388608
      %v2622 = vsub.s32 0, %v2621
      %v2623 = vadd.s32 %v2618, 1
      %vm2624 = vcmp.gt.s32.totalorder %v2623, 0
      %v2625 = vsel %vm2624, %v2623, 0
      %v2626 = vshrl.u32 %v2625, 5
      %v2627 = vand.u32 %v2625, 31
      %v2628 = vsub.s32 32, %v2627
      %v2629 = vshrl.u32 683565275, %v2628
      %v2630 = vshll.u32 683565275, %v2627
      %v2631 = vshrl.u32 2475754826, %v2628
      %v2632 = vor.u32 %v2630, %v2631
      %v2633 = vshll.u32 2475754826, %v2627
      %v2634 = vshrl.u32 2131351028, %v2628
      %v2635 = vor.u32 %v2633, %v2634
      %v2636 = vshll.u32 2131351028, %v2627
      %v2637 = vshrl.u32 2102212464, %v2628
      %v2638 = vor.u32 %v2636, %v2637
      %v2639 = vshll.u32 2102212464, %v2627
      %v2640 = vshrl.u32 920167782, %v2628
      %v2641 = vor.u32 %v2639, %v2640
      %v2642 = vshll.u32 920167782, %v2627
      %v2643 = vshrl.u32 1326507024, %v2628
      %v2644 = vor.u32 %v2642, %v2643
      %vm2645 = vcmp.lt.s32.totalorder %v2626, 1
      %vm2646 = vcmp.lt.s32.totalorder %v2626, 2
      %vm2647 = vcmp.lt.s32.totalorder %v2626, 3
      %vm2648 = vcmp.lt.s32.totalorder %v2626, 4
      %v2649 = vsel %vm2645, %v2629, %v2632
      %v2650 = vsel %vm2648, %v2638, 2102212464
      %v2651 = vsel %vm2647, %v2635, %v2650
      %v2652 = vsel %vm2646, %v2649, %v2651
      %v2653 = vsel %vm2645, %v2632, %v2635
      %v2654 = vsel %vm2648, %v2641, 920167782
      %v2655 = vsel %vm2647, %v2638, %v2654
      %v2656 = vsel %vm2646, %v2653, %v2655
      %v2657 = vsel %vm2645, %v2635, %v2638
      %v2658 = vsel %vm2648, %v2644, 1326507024
      %v2659 = vsel %vm2647, %v2641, %v2658
      %v2660 = vsel %vm2646, %v2657, %v2659
      %v2661 = vshll.u32 %v2621, 8
      %v2662 = vmul.u32.u64.compose %v2661, %v2660
      %v2663 = vextract.low.u32 %v2662
      %v2664 = vextract.high.u32 %v2662
      %v2665 = vmul.u32.u64.compose %v2661, %v2656
      %v2666 = vextract.low.u32 %v2665
      %v2667 = vextract.high.u32 %v2665
      %v2668 = vmul.u32 %v2661, %v2652
      %v2669 = vadd.s32 %v2664, %v2666
      %vm2670 = vc.u32 %v2664, %v2666
      %v2671 = vadd.s32 %v2667, 1
      %v2672 = vsel %vm2670, %v2671, %v2667
      %v2673 = vadd.s32 %v2668, %v2672
      %v2674 = vadd.s32 %v2673, 536870912
      %v2675 = vshrl.u32 %v2674, 30
      %v2676 = vshll.u32 %v2675, 30
      %v2677 = vsub.s32 %v2673, %v2676
      %vm2678 = vcmp.lt.s32.totalorder %v2677, 0
      %v2679 = vsub.s32 0, %v2677
      %v2680 = vsel %vm2678, %v2679, %v2677
      %v2681 = vclz %v2680
      %v2682 = vsub.s32 %v2681, 2
      %vm2683 = vcmp.gt.s32.totalorder 0, %v2682
      %v2684 = vsel %vm2683, 0, %v2682
      %v2685 = vsub.s32 32, %v2684
      %v2686 = vshll.u32 %v2677, %v2684
      %v2687 = vshrl.u32 %v2669, %v2685
      %v2688 = vor.u32 %v2686, %v2687
      %v2689 = vsub.s32 4294967266, %v2684
      %v2690 = vadd.s32 %v2689, 127
      %v2691 = vshll.u32 %v2690, 23
      %v2692 = vor.u32 4788187, %v2691
      %v2693 = vand.u32 2147483647, %v2692
      %v2695 = vcvt.s32.f32 %v2688
      %v2696 = vmul.f32 %v2695, %v2693
      %v2697 = vxor.u32 %v2696, 2147483648
      %v2698 = vsel %vm2615, %v2697, %v2696
      %v2699 = vsub.s32 4, %v2675
      %v2700 = vsel %vm2615, %v2699, %v2675
      %v2701 = vsel %vm2614, %v624, %v2698
      %v2702 = vsel %vm2614, 0, %v2700
      %v2703 = vcosq.f32.pop %v2701
      %v2704 = vsinq.f32.pop %v2701
      %vm2705 = vweird.f32 %v624
      %v2706 = vadd.s32 %v2702, 3
      %v2707 = vand.u32 %v2706, 3
      %vm2708 = vcmp.lt.s32.totalorder %v2707, 2
      %vm2709 = vcmp.eq.s32.totalorder %v2707, 0
      %v2710 = vxor.u32 %v2704, 2147483648
      %v2711 = vsel %vm2709, %v2703, %v2710
      %vm2712 = vcmp.eq.s32.totalorder %v2707, 2
      %v2713 = vxor.u32 %v2703, 2147483648
      %v2714 = vsel %vm2712, %v2713, %v2704
      %v2715 = vsel %vm2708, %v2711, %v2714
      %v2716 = vsel %vm2705, nan, %v2715
      %v2717 = vand.u32 2147483647, %v625
      %vm2718 = vcmp.le.f32.partialorder %v2717, 0.7853982
      %vm2719 = vcmp.lt.s32.totalorder %v625, 0
      %v2720 = vand.u32 %v625, 2139095040
      %v2721 = vshrl.u32 %v2720, 23
      %v2722 = vsub.s32 %v2721, 127
      %v2723 = vand.u32 2147483647, %v625
      %v2724 = vand.u32 %v2723, 8388607
      %v2725 = vor.u32 %v2724, 8388608
      %v2726 = vsub.s32 0, %v2725
      %v2727 = vadd.s32 %v2722, 1
      %vm2728 = vcmp.gt.s32.totalorder %v2727, 0
      %v2729 = vsel %vm2728, %v2727, 0
      %v2730 = vshrl.u32 %v2729, 5
      %v2731 = vand.u32 %v2729, 31
      %v2732 = vsub.s32 32, %v2731
      %v2733 = vshrl.u32 683565275, %v2732
      %v2734 = vshll.u32 683565275, %v2731
      %v2735 = vshrl.u32 2475754826, %v2732
      %v2736 = vor.u32 %v2734, %v2735
      %v2737 = vshll.u32 2475754826, %v2731
      %v2738 = vshrl.u32 2131351028, %v2732
      %v2739 = vor.u32 %v2737, %v2738
      %v2740 = vshll.u32 2131351028, %v2731
      %v2741 = vshrl.u32 2102212464, %v2732
      %v2742 = vor.u32 %v2740, %v2741
      %v2743 = vshll.u32 2102212464, %v2731
      %v2744 = vshrl.u32 920167782, %v2732
      %v2745 = vor.u32 %v2743, %v2744
      %v2746 = vshll.u32 920167782, %v2731
      %v2747 = vshrl.u32 1326507024, %v2732
      %v2748 = vor.u32 %v2746, %v2747
      %vm2749 = vcmp.lt.s32.totalorder %v2730, 1
      %vm2750 = vcmp.lt.s32.totalorder %v2730, 2
      %vm2751 = vcmp.lt.s32.totalorder %v2730, 3
      %vm2752 = vcmp.lt.s32.totalorder %v2730, 4
      %v2753 = vsel %vm2749, %v2733, %v2736
      %v2754 = vsel %vm2752, %v2742, 2102212464
      %v2755 = vsel %vm2751, %v2739, %v2754
      %v2756 = vsel %vm2750, %v2753, %v2755
      %v2757 = vsel %vm2749, %v2736, %v2739
      %v2758 = vsel %vm2752, %v2745, 920167782
      %v2759 = vsel %vm2751, %v2742, %v2758
      %v2760 = vsel %vm2750, %v2757, %v2759
      %v2761 = vsel %vm2749, %v2739, %v2742
      %v2762 = vsel %vm2752, %v2748, 1326507024
      %v2763 = vsel %vm2751, %v2745, %v2762
      %v2764 = vsel %vm2750, %v2761, %v2763
      %v2765 = vshll.u32 %v2725, 8
      %v2766 = vmul.u32.u64.compose %v2765, %v2764
      %v2767 = vextract.low.u32 %v2766
      %v2768 = vextract.high.u32 %v2766
      %v2769 = vmul.u32.u64.compose %v2765, %v2760
      %v2770 = vextract.low.u32 %v2769
      %v2771 = vextract.high.u32 %v2769
      %v2772 = vmul.u32 %v2765, %v2756
      %v2773 = vadd.s32 %v2768, %v2770
      %vm2774 = vc.u32 %v2768, %v2770
      %v2775 = vadd.s32 %v2771, 1
      %v2776 = vsel %vm2774, %v2775, %v2771
      %v2777 = vadd.s32 %v2772, %v2776
      %v2778 = vadd.s32 %v2777, 536870912
      %v2779 = vshrl.u32 %v2778, 30
      %v2780 = vshll.u32 %v2779, 30
      %v2781 = vsub.s32 %v2777, %v2780
      %vm2782 = vcmp.lt.s32.totalorder %v2781, 0
      %v2783 = vsub.s32 0, %v2781
      %v2784 = vsel %vm2782, %v2783, %v2781
      %v2785 = vclz %v2784
      %v2786 = vsub.s32 %v2785, 2
      %vm2787 = vcmp.gt.s32.totalorder 0, %v2786
      %v2788 = vsel %vm2787, 0, %v2786
      %v2789 = vsub.s32 32, %v2788
      %v2790 = vshll.u32 %v2781, %v2788
      %v2791 = vshrl.u32 %v2773, %v2789
      %v2792 = vor.u32 %v2790, %v2791
      %v2793 = vsub.s32 4294967266, %v2788
      %v2794 = vadd.s32 %v2793, 127
      %v2795 = vshll.u32 %v2794, 23
      %v2796 = vor.u32 4788187, %v2795
      %v2797 = vand.u32 2147483647, %v2796
      %v2799 = vcvt.s32.f32 %v2792
      %v2800 = vmul.f32 %v2799, %v2797
      %v2801 = vxor.u32 %v2800, 2147483648
      %v2802 = vsel %vm2719, %v2801, %v2800
      %v2803 = vsub.s32 4, %v2779
      %v2804 = vsel %vm2719, %v2803, %v2779
      %v2805 = vsel %vm2718, %v625, %v2802
      %v2806 = vsel %vm2718, 0, %v2804
      %v2807 = vcosq.f32.pop %v2805
      %v2808 = vsinq.f32.pop %v2805
      %vm2809 = vweird.f32 %v625
      %v2810 = vadd.s32 %v2806, 3
      %v2811 = vand.u32 %v2810, 3
      %vm2812 = vcmp.lt.s32.totalorder %v2811, 2
      %vm2813 = vcmp.eq.s32.totalorder %v2811, 0
      %v2814 = vxor.u32 %v2808, 2147483648
      %v2815 = vsel %vm2813, %v2807, %v2814
      %vm2816 = vcmp.eq.s32.totalorder %v2811, 2
      %v2817 = vxor.u32 %v2807, 2147483648
      %v2818 = vsel %vm2816, %v2817, %v2808
      %v2819 = vsel %vm2812, %v2815, %v2818
      %v2820 = vsel %vm2809, nan, %v2819
      %v2821 = vand.u32 2147483647, %v626
      %vm2822 = vcmp.le.f32.partialorder %v2821, 0.7853982
      %vm2823 = vcmp.lt.s32.totalorder %v626, 0
      %v2824 = vand.u32 %v626, 2139095040
      %v2825 = vshrl.u32 %v2824, 23
      %v2826 = vsub.s32 %v2825, 127
      %v2827 = vand.u32 2147483647, %v626
      %v2828 = vand.u32 %v2827, 8388607
      %v2829 = vor.u32 %v2828, 8388608
      %v2830 = vsub.s32 0, %v2829
      %v2831 = vadd.s32 %v2826, 1
      %vm2832 = vcmp.gt.s32.totalorder %v2831, 0
      %v2833 = vsel %vm2832, %v2831, 0
      %v2834 = vshrl.u32 %v2833, 5
      %v2835 = vand.u32 %v2833, 31
      %v2836 = vsub.s32 32, %v2835
      %v2837 = vshrl.u32 683565275, %v2836
      %v2838 = vshll.u32 683565275, %v2835
      %v2839 = vshrl.u32 2475754826, %v2836
      %v2840 = vor.u32 %v2838, %v2839
      %v2841 = vshll.u32 2475754826, %v2835
      %v2842 = vshrl.u32 2131351028, %v2836
      %v2843 = vor.u32 %v2841, %v2842
      %v2844 = vshll.u32 2131351028, %v2835
      %v2845 = vshrl.u32 2102212464, %v2836
      %v2846 = vor.u32 %v2844, %v2845
      %v2847 = vshll.u32 2102212464, %v2835
      %v2848 = vshrl.u32 920167782, %v2836
      %v2849 = vor.u32 %v2847, %v2848
      %v2850 = vshll.u32 920167782, %v2835
      %v2851 = vshrl.u32 1326507024, %v2836
      %v2852 = vor.u32 %v2850, %v2851
      %vm2853 = vcmp.lt.s32.totalorder %v2834, 1
      %vm2854 = vcmp.lt.s32.totalorder %v2834, 2
      %vm2855 = vcmp.lt.s32.totalorder %v2834, 3
      %vm2856 = vcmp.lt.s32.totalorder %v2834, 4
      %v2857 = vsel %vm2853, %v2837, %v2840
      %v2858 = vsel %vm2856, %v2846, 2102212464
      %v2859 = vsel %vm2855, %v2843, %v2858
      %v2860 = vsel %vm2854, %v2857, %v2859
      %v2861 = vsel %vm2853, %v2840, %v2843
      %v2862 = vsel %vm2856, %v2849, 920167782
      %v2863 = vsel %vm2855, %v2846, %v2862
      %v2864 = vsel %vm2854, %v2861, %v2863
      %v2865 = vsel %vm2853, %v2843, %v2846
      %v2866 = vsel %vm2856, %v2852, 1326507024
      %v2867 = vsel %vm2855, %v2849, %v2866
      %v2868 = vsel %vm2854, %v2865, %v2867
      %v2869 = vshll.u32 %v2829, 8
      %v2870 = vmul.u32.u64.compose %v2869, %v2868
      %v2871 = vextract.low.u32 %v2870
      %v2872 = vextract.high.u32 %v2870
      %v2873 = vmul.u32.u64.compose %v2869, %v2864
      %v2874 = vextract.low.u32 %v2873
      %v2875 = vextract.high.u32 %v2873
      %v2876 = vmul.u32 %v2869, %v2860
      %v2877 = vadd.s32 %v2872, %v2874
      %vm2878 = vc.u32 %v2872, %v2874
      %v2879 = vadd.s32 %v2875, 1
      %v2880 = vsel %vm2878, %v2879, %v2875
      %v2881 = vadd.s32 %v2876, %v2880
      %v2882 = vadd.s32 %v2881, 536870912
      %v2883 = vshrl.u32 %v2882, 30
      %v2884 = vshll.u32 %v2883, 30
      %v2885 = vsub.s32 %v2881, %v2884
      %vm2886 = vcmp.lt.s32.totalorder %v2885, 0
      %v2887 = vsub.s32 0, %v2885
      %v2888 = vsel %vm2886, %v2887, %v2885
      %v2889 = vclz %v2888
      %v2890 = vsub.s32 %v2889, 2
      %vm2891 = vcmp.gt.s32.totalorder 0, %v2890
      %v2892 = vsel %vm2891, 0, %v2890
      %v2893 = vsub.s32 32, %v2892
      %v2894 = vshll.u32 %v2885, %v2892
      %v2895 = vshrl.u32 %v2877, %v2893
      %v2896 = vor.u32 %v2894, %v2895
      %v2897 = vsub.s32 4294967266, %v2892
      %v2898 = vadd.s32 %v2897, 127
      %v2899 = vshll.u32 %v2898, 23
      %v2900 = vor.u32 4788187, %v2899
      %v2901 = vand.u32 2147483647, %v2900
      %v2903 = vcvt.s32.f32 %v2896
      %v2904 = vmul.f32 %v2903, %v2901
      %v2905 = vxor.u32 %v2904, 2147483648
      %v2906 = vsel %vm2823, %v2905, %v2904
      %v2907 = vsub.s32 4, %v2883
      %v2908 = vsel %vm2823, %v2907, %v2883
      %v2909 = vsel %vm2822, %v626, %v2906
      %v2910 = vsel %vm2822, 0, %v2908
      %v2911 = vcosq.f32.pop %v2909
      %v2912 = vsinq.f32.pop %v2909
      %vm2913 = vweird.f32 %v626
      %v2914 = vadd.s32 %v2910, 3
      %v2915 = vand.u32 %v2914, 3
      %vm2916 = vcmp.lt.s32.totalorder %v2915, 2
      %vm2917 = vcmp.eq.s32.totalorder %v2915, 0
      %v2918 = vxor.u32 %v2912, 2147483648
      %v2919 = vsel %vm2917, %v2911, %v2918
      %vm2920 = vcmp.eq.s32.totalorder %v2915, 2
      %v2921 = vxor.u32 %v2911, 2147483648
      %v2922 = vsel %vm2920, %v2921, %v2912
      %v2923 = vsel %vm2916, %v2919, %v2922
      %v2924 = vsel %vm2913, nan, %v2923
      %v2925 = vand.u32 2147483647, %v627
      %vm2926 = vcmp.le.f32.partialorder %v2925, 0.7853982
      %vm2927 = vcmp.lt.s32.totalorder %v627, 0
      %v2928 = vand.u32 %v627, 2139095040
      %v2929 = vshrl.u32 %v2928, 23
      %v2930 = vsub.s32 %v2929, 127
      %v2931 = vand.u32 2147483647, %v627
      %v2932 = vand.u32 %v2931, 8388607
      %v2933 = vor.u32 %v2932, 8388608
      %v2934 = vsub.s32 0, %v2933
      %v2935 = vadd.s32 %v2930, 1
      %vm2936 = vcmp.gt.s32.totalorder %v2935, 0
      %v2937 = vsel %vm2936, %v2935, 0
      %v2938 = vshrl.u32 %v2937, 5
      %v2939 = vand.u32 %v2937, 31
      %v2940 = vsub.s32 32, %v2939
      %v2941 = vshrl.u32 683565275, %v2940
      %v2942 = vshll.u32 683565275, %v2939
      %v2943 = vshrl.u32 2475754826, %v2940
      %v2944 = vor.u32 %v2942, %v2943
      %v2945 = vshll.u32 2475754826, %v2939
      %v2946 = vshrl.u32 2131351028, %v2940
      %v2947 = vor.u32 %v2945, %v2946
      %v2948 = vshll.u32 2131351028, %v2939
      %v2949 = vshrl.u32 2102212464, %v2940
      %v2950 = vor.u32 %v2948, %v2949
      %v2951 = vshll.u32 2102212464, %v2939
      %v2952 = vshrl.u32 920167782, %v2940
      %v2953 = vor.u32 %v2951, %v2952
      %v2954 = vshll.u32 920167782, %v2939
      %v2955 = vshrl.u32 1326507024, %v2940
      %v2956 = vor.u32 %v2954, %v2955
      %vm2957 = vcmp.lt.s32.totalorder %v2938, 1
      %vm2958 = vcmp.lt.s32.totalorder %v2938, 2
      %vm2959 = vcmp.lt.s32.totalorder %v2938, 3
      %vm2960 = vcmp.lt.s32.totalorder %v2938, 4
      %v2961 = vsel %vm2957, %v2941, %v2944
      %v2962 = vsel %vm2960, %v2950, 2102212464
      %v2963 = vsel %vm2959, %v2947, %v2962
      %v2964 = vsel %vm2958, %v2961, %v2963
      %v2965 = vsel %vm2957, %v2944, %v2947
      %v2966 = vsel %vm2960, %v2953, 920167782
      %v2967 = vsel %vm2959, %v2950, %v2966
      %v2968 = vsel %vm2958, %v2965, %v2967
      %v2969 = vsel %vm2957, %v2947, %v2950
      %v2970 = vsel %vm2960, %v2956, 1326507024
      %v2971 = vsel %vm2959, %v2953, %v2970
      %v2972 = vsel %vm2958, %v2969, %v2971
      %v2973 = vshll.u32 %v2933, 8
      %v2974 = vmul.u32.u64.compose %v2973, %v2972
      %v2975 = vextract.low.u32 %v2974
      %v2976 = vextract.high.u32 %v2974
      %v2977 = vmul.u32.u64.compose %v2973, %v2968
      %v2978 = vextract.low.u32 %v2977
      %v2979 = vextract.high.u32 %v2977
      %v2980 = vmul.u32 %v2973, %v2964
      %v2981 = vadd.s32 %v2976, %v2978
      %vm2982 = vc.u32 %v2976, %v2978
      %v2983 = vadd.s32 %v2979, 1
      %v2984 = vsel %vm2982, %v2983, %v2979
      %v2985 = vadd.s32 %v2980, %v2984
      %v2986 = vadd.s32 %v2985, 536870912
      %v2987 = vshrl.u32 %v2986, 30
      %v2988 = vshll.u32 %v2987, 30
      %v2989 = vsub.s32 %v2985, %v2988
      %vm2990 = vcmp.lt.s32.totalorder %v2989, 0
      %v2991 = vsub.s32 0, %v2989
      %v2992 = vsel %vm2990, %v2991, %v2989
      %v2993 = vclz %v2992
      %v2994 = vsub.s32 %v2993, 2
      %vm2995 = vcmp.gt.s32.totalorder 0, %v2994
      %v2996 = vsel %vm2995, 0, %v2994
      %v2997 = vsub.s32 32, %v2996
      %v2998 = vshll.u32 %v2989, %v2996
      %v2999 = vshrl.u32 %v2981, %v2997
      %v3000 = vor.u32 %v2998, %v2999
      %v3001 = vsub.s32 4294967266, %v2996
      %v3002 = vadd.s32 %v3001, 127
      %v3003 = vshll.u32 %v3002, 23
      %v3004 = vor.u32 4788187, %v3003
      %v3005 = vand.u32 2147483647, %v3004
      %v3007 = vcvt.s32.f32 %v3000
      %v3008 = vmul.f32 %v3007, %v3005
      %v3009 = vxor.u32 %v3008, 2147483648
      %v3010 = vsel %vm2927, %v3009, %v3008
      %v3011 = vsub.s32 4, %v2987
      %v3012 = vsel %vm2927, %v3011, %v2987
      %v3013 = vsel %vm2926, %v627, %v3010
      %v3014 = vsel %vm2926, 0, %v3012
      %v3015 = vcosq.f32.pop %v3013
      %v3016 = vsinq.f32.pop %v3013
      %vm3017 = vweird.f32 %v627
      %v3018 = vadd.s32 %v3014, 3
      %v3019 = vand.u32 %v3018, 3
      %vm3020 = vcmp.lt.s32.totalorder %v3019, 2
      %vm3021 = vcmp.eq.s32.totalorder %v3019, 0
      %v3022 = vxor.u32 %v3016, 2147483648
      %v3023 = vsel %vm3021, %v3015, %v3022
      %vm3024 = vcmp.eq.s32.totalorder %v3019, 2
      %v3025 = vxor.u32 %v3015, 2147483648
      %v3026 = vsel %vm3024, %v3025, %v3016
      %v3027 = vsel %vm3020, %v3023, %v3026
      %v3028 = vsel %vm3017, nan, %v3027
      %v3029 = vand.u32 2147483647, %v628
      %vm3030 = vcmp.le.f32.partialorder %v3029, 0.7853982
      %vm3031 = vcmp.lt.s32.totalorder %v628, 0
      %v3032 = vand.u32 %v628, 2139095040
      %v3033 = vshrl.u32 %v3032, 23
      %v3034 = vsub.s32 %v3033, 127
      %v3035 = vand.u32 2147483647, %v628
      %v3036 = vand.u32 %v3035, 8388607
      %v3037 = vor.u32 %v3036, 8388608
      %v3038 = vsub.s32 0, %v3037
      %v3039 = vadd.s32 %v3034, 1
      %vm3040 = vcmp.gt.s32.totalorder %v3039, 0
      %v3041 = vsel %vm3040, %v3039, 0
      %v3042 = vshrl.u32 %v3041, 5
      %v3043 = vand.u32 %v3041, 31
      %v3044 = vsub.s32 32, %v3043
      %v3045 = vshrl.u32 683565275, %v3044
      %v3046 = vshll.u32 683565275, %v3043
      %v3047 = vshrl.u32 2475754826, %v3044
      %v3048 = vor.u32 %v3046, %v3047
      %v3049 = vshll.u32 2475754826, %v3043
      %v3050 = vshrl.u32 2131351028, %v3044
      %v3051 = vor.u32 %v3049, %v3050
      %v3052 = vshll.u32 2131351028, %v3043
      %v3053 = vshrl.u32 2102212464, %v3044
      %v3054 = vor.u32 %v3052, %v3053
      %v3055 = vshll.u32 2102212464, %v3043
      %v3056 = vshrl.u32 920167782, %v3044
      %v3057 = vor.u32 %v3055, %v3056
      %v3058 = vshll.u32 920167782, %v3043
      %v3059 = vshrl.u32 1326507024, %v3044
      %v3060 = vor.u32 %v3058, %v3059
      %vm3061 = vcmp.lt.s32.totalorder %v3042, 1
      %vm3062 = vcmp.lt.s32.totalorder %v3042, 2
      %vm3063 = vcmp.lt.s32.totalorder %v3042, 3
      %vm3064 = vcmp.lt.s32.totalorder %v3042, 4
      %v3065 = vsel %vm3061, %v3045, %v3048
      %v3066 = vsel %vm3064, %v3054, 2102212464
      %v3067 = vsel %vm3063, %v3051, %v3066
      %v3068 = vsel %vm3062, %v3065, %v3067
      %v3069 = vsel %vm3061, %v3048, %v3051
      %v3070 = vsel %vm3064, %v3057, 920167782
      %v3071 = vsel %vm3063, %v3054, %v3070
      %v3072 = vsel %vm3062, %v3069, %v3071
      %v3073 = vsel %vm3061, %v3051, %v3054
      %v3074 = vsel %vm3064, %v3060, 1326507024
      %v3075 = vsel %vm3063, %v3057, %v3074
      %v3076 = vsel %vm3062, %v3073, %v3075
      %v3077 = vshll.u32 %v3037, 8
      %v3078 = vmul.u32.u64.compose %v3077, %v3076
      %v3079 = vextract.low.u32 %v3078
      %v3080 = vextract.high.u32 %v3078
      %v3081 = vmul.u32.u64.compose %v3077, %v3072
      %v3082 = vextract.low.u32 %v3081
      %v3083 = vextract.high.u32 %v3081
      %v3084 = vmul.u32 %v3077, %v3068
      %v3085 = vadd.s32 %v3080, %v3082
      %vm3086 = vc.u32 %v3080, %v3082
      %v3087 = vadd.s32 %v3083, 1
      %v3088 = vsel %vm3086, %v3087, %v3083
      %v3089 = vadd.s32 %v3084, %v3088
      %v3090 = vadd.s32 %v3089, 536870912
      %v3091 = vshrl.u32 %v3090, 30
      %v3092 = vshll.u32 %v3091, 30
      %v3093 = vsub.s32 %v3089, %v3092
      %vm3094 = vcmp.lt.s32.totalorder %v3093, 0
      %v3095 = vsub.s32 0, %v3093
      %v3096 = vsel %vm3094, %v3095, %v3093
      %v3097 = vclz %v3096
      %v3098 = vsub.s32 %v3097, 2
      %vm3099 = vcmp.gt.s32.totalorder 0, %v3098
      %v3100 = vsel %vm3099, 0, %v3098
      %v3101 = vsub.s32 32, %v3100
      %v3102 = vshll.u32 %v3093, %v3100
      %v3103 = vshrl.u32 %v3085, %v3101
      %v3104 = vor.u32 %v3102, %v3103
      %v3105 = vsub.s32 4294967266, %v3100
      %v3106 = vadd.s32 %v3105, 127
      %v3107 = vshll.u32 %v3106, 23
      %v3108 = vor.u32 4788187, %v3107
      %v3109 = vand.u32 2147483647, %v3108
      %v3111 = vcvt.s32.f32 %v3104
      %v3112 = vmul.f32 %v3111, %v3109
      %v3113 = vxor.u32 %v3112, 2147483648
      %v3114 = vsel %vm3031, %v3113, %v3112
      %v3115 = vsub.s32 4, %v3091
      %v3116 = vsel %vm3031, %v3115, %v3091
      %v3117 = vsel %vm3030, %v628, %v3114
      %v3118 = vsel %vm3030, 0, %v3116
      %v3119 = vcosq.f32.pop %v3117
      %v3120 = vsinq.f32.pop %v3117
      %vm3121 = vweird.f32 %v628
      %v3122 = vadd.s32 %v3118, 3
      %v3123 = vand.u32 %v3122, 3
      %vm3124 = vcmp.lt.s32.totalorder %v3123, 2
      %vm3125 = vcmp.eq.s32.totalorder %v3123, 0
      %v3126 = vxor.u32 %v3120, 2147483648
      %v3127 = vsel %vm3125, %v3119, %v3126
      %vm3128 = vcmp.eq.s32.totalorder %v3123, 2
      %v3129 = vxor.u32 %v3119, 2147483648
      %v3130 = vsel %vm3128, %v3129, %v3120
      %v3131 = vsel %vm3124, %v3127, %v3130
      %v3132 = vsel %vm3121, nan, %v3131
      %v3133 = vand.u32 2147483647, %v629
      %vm3134 = vcmp.le.f32.partialorder %v3133, 0.7853982
      %vm3135 = vcmp.lt.s32.totalorder %v629, 0
      %v3136 = vand.u32 %v629, 2139095040
      %v3137 = vshrl.u32 %v3136, 23
      %v3138 = vsub.s32 %v3137, 127
      %v3139 = vand.u32 2147483647, %v629
      %v3140 = vand.u32 %v3139, 8388607
      %v3141 = vor.u32 %v3140, 8388608
      %v3142 = vsub.s32 0, %v3141
      %v3143 = vadd.s32 %v3138, 1
      %vm3144 = vcmp.gt.s32.totalorder %v3143, 0
      %v3145 = vsel %vm3144, %v3143, 0
      %v3146 = vshrl.u32 %v3145, 5
      %v3147 = vand.u32 %v3145, 31
      %v3148 = vsub.s32 32, %v3147
      %v3149 = vshrl.u32 683565275, %v3148
      %v3150 = vshll.u32 683565275, %v3147
      %v3151 = vshrl.u32 2475754826, %v3148
      %v3152 = vor.u32 %v3150, %v3151
      %v3153 = vshll.u32 2475754826, %v3147
      %v3154 = vshrl.u32 2131351028, %v3148
      %v3155 = vor.u32 %v3153, %v3154
      %v3156 = vshll.u32 2131351028, %v3147
      %v3157 = vshrl.u32 2102212464, %v3148
      %v3158 = vor.u32 %v3156, %v3157
      %v3159 = vshll.u32 2102212464, %v3147
      %v3160 = vshrl.u32 920167782, %v3148
      %v3161 = vor.u32 %v3159, %v3160
      %v3162 = vshll.u32 920167782, %v3147
      %v3163 = vshrl.u32 1326507024, %v3148
      %v3164 = vor.u32 %v3162, %v3163
      %vm3165 = vcmp.lt.s32.totalorder %v3146, 1
      %vm3166 = vcmp.lt.s32.totalorder %v3146, 2
      %vm3167 = vcmp.lt.s32.totalorder %v3146, 3
      %vm3168 = vcmp.lt.s32.totalorder %v3146, 4
      %v3169 = vsel %vm3165, %v3149, %v3152
      %v3170 = vsel %vm3168, %v3158, 2102212464
      %v3171 = vsel %vm3167, %v3155, %v3170
      %v3172 = vsel %vm3166, %v3169, %v3171
      %v3173 = vsel %vm3165, %v3152, %v3155
      %v3174 = vsel %vm3168, %v3161, 920167782
      %v3175 = vsel %vm3167, %v3158, %v3174
      %v3176 = vsel %vm3166, %v3173, %v3175
      %v3177 = vsel %vm3165, %v3155, %v3158
      %v3178 = vsel %vm3168, %v3164, 1326507024
      %v3179 = vsel %vm3167, %v3161, %v3178
      %v3180 = vsel %vm3166, %v3177, %v3179
      %v3181 = vshll.u32 %v3141, 8
      %v3182 = vmul.u32.u64.compose %v3181, %v3180
      %v3183 = vextract.low.u32 %v3182
      %v3184 = vextract.high.u32 %v3182
      %v3185 = vmul.u32.u64.compose %v3181, %v3176
      %v3186 = vextract.low.u32 %v3185
      %v3187 = vextract.high.u32 %v3185
      %v3188 = vmul.u32 %v3181, %v3172
      %v3189 = vadd.s32 %v3184, %v3186
      %vm3190 = vc.u32 %v3184, %v3186
      %v3191 = vadd.s32 %v3187, 1
      %v3192 = vsel %vm3190, %v3191, %v3187
      %v3193 = vadd.s32 %v3188, %v3192
      %v3194 = vadd.s32 %v3193, 536870912
      %v3195 = vshrl.u32 %v3194, 30
      %v3196 = vshll.u32 %v3195, 30
      %v3197 = vsub.s32 %v3193, %v3196
      %vm3198 = vcmp.lt.s32.totalorder %v3197, 0
      %v3199 = vsub.s32 0, %v3197
      %v3200 = vsel %vm3198, %v3199, %v3197
      %v3201 = vclz %v3200
      %v3202 = vsub.s32 %v3201, 2
      %vm3203 = vcmp.gt.s32.totalorder 0, %v3202
      %v3204 = vsel %vm3203, 0, %v3202
      %v3205 = vsub.s32 32, %v3204
      %v3206 = vshll.u32 %v3197, %v3204
      %v3207 = vshrl.u32 %v3189, %v3205
      %v3208 = vor.u32 %v3206, %v3207
      %v3209 = vsub.s32 4294967266, %v3204
      %v3210 = vadd.s32 %v3209, 127
      %v3211 = vshll.u32 %v3210, 23
      %v3212 = vor.u32 4788187, %v3211
      %v3213 = vand.u32 2147483647, %v3212
      %v3215 = vcvt.s32.f32 %v3208
      %v3216 = vmul.f32 %v3215, %v3213
      %v3217 = vxor.u32 %v3216, 2147483648
      %v3218 = vsel %vm3135, %v3217, %v3216
      %v3219 = vsub.s32 4, %v3195
      %v3220 = vsel %vm3135, %v3219, %v3195
      %v3221 = vsel %vm3134, %v629, %v3218
      %v3222 = vsel %vm3134, 0, %v3220
      %v3223 = vcosq.f32.pop %v3221
      %v3224 = vsinq.f32.pop %v3221
      %vm3225 = vweird.f32 %v629
      %v3226 = vadd.s32 %v3222, 3
      %v3227 = vand.u32 %v3226, 3
      %vm3228 = vcmp.lt.s32.totalorder %v3227, 2
      %vm3229 = vcmp.eq.s32.totalorder %v3227, 0
      %v3230 = vxor.u32 %v3224, 2147483648
      %v3231 = vsel %vm3229, %v3223, %v3230
      %vm3232 = vcmp.eq.s32.totalorder %v3227, 2
      %v3233 = vxor.u32 %v3223, 2147483648
      %v3234 = vsel %vm3232, %v3233, %v3224
      %v3235 = vsel %vm3228, %v3231, %v3234
      %v3236 = vsel %vm3225, nan, %v3235
      %v3237 = vand.u32 2147483647, %v630
      %vm3238 = vcmp.le.f32.partialorder %v3237, 0.7853982
      %vm3239 = vcmp.lt.s32.totalorder %v630, 0
      %v3240 = vand.u32 %v630, 2139095040
      %v3241 = vshrl.u32 %v3240, 23
      %v3242 = vsub.s32 %v3241, 127
      %v3243 = vand.u32 2147483647, %v630
      %v3244 = vand.u32 %v3243, 8388607
      %v3245 = vor.u32 %v3244, 8388608
      %v3246 = vsub.s32 0, %v3245
      %v3247 = vadd.s32 %v3242, 1
      %vm3248 = vcmp.gt.s32.totalorder %v3247, 0
      %v3249 = vsel %vm3248, %v3247, 0
      %v3250 = vshrl.u32 %v3249, 5
      %v3251 = vand.u32 %v3249, 31
      %v3252 = vsub.s32 32, %v3251
      %v3253 = vshrl.u32 683565275, %v3252
      %v3254 = vshll.u32 683565275, %v3251
      %v3255 = vshrl.u32 2475754826, %v3252
      %v3256 = vor.u32 %v3254, %v3255
      %v3257 = vshll.u32 2475754826, %v3251
      %v3258 = vshrl.u32 2131351028, %v3252
      %v3259 = vor.u32 %v3257, %v3258
      %v3260 = vshll.u32 2131351028, %v3251
      %v3261 = vshrl.u32 2102212464, %v3252
      %v3262 = vor.u32 %v3260, %v3261
      %v3263 = vshll.u32 2102212464, %v3251
      %v3264 = vshrl.u32 920167782, %v3252
      %v3265 = vor.u32 %v3263, %v3264
      %v3266 = vshll.u32 920167782, %v3251
      %v3267 = vshrl.u32 1326507024, %v3252
      %v3268 = vor.u32 %v3266, %v3267
      %vm3269 = vcmp.lt.s32.totalorder %v3250, 1
      %vm3270 = vcmp.lt.s32.totalorder %v3250, 2
      %vm3271 = vcmp.lt.s32.totalorder %v3250, 3
      %vm3272 = vcmp.lt.s32.totalorder %v3250, 4
      %v3273 = vsel %vm3269, %v3253, %v3256
      %v3274 = vsel %vm3272, %v3262, 2102212464
      %v3275 = vsel %vm3271, %v3259, %v3274
      %v3276 = vsel %vm3270, %v3273, %v3275
      %v3277 = vsel %vm3269, %v3256, %v3259
      %v3278 = vsel %vm3272, %v3265, 920167782
      %v3279 = vsel %vm3271, %v3262, %v3278
      %v3280 = vsel %vm3270, %v3277, %v3279
      %v3281 = vsel %vm3269, %v3259, %v3262
      %v3282 = vsel %vm3272, %v3268, 1326507024
      %v3283 = vsel %vm3271, %v3265, %v3282
      %v3284 = vsel %vm3270, %v3281, %v3283
      %v3285 = vshll.u32 %v3245, 8
      %v3286 = vmul.u32.u64.compose %v3285, %v3284
      %v3287 = vextract.low.u32 %v3286
      %v3288 = vextract.high.u32 %v3286
      %v3289 = vmul.u32.u64.compose %v3285, %v3280
      %v3290 = vextract.low.u32 %v3289
      %v3291 = vextract.high.u32 %v3289
      %v3292 = vmul.u32 %v3285, %v3276
      %v3293 = vadd.s32 %v3288, %v3290
      %vm3294 = vc.u32 %v3288, %v3290
      %v3295 = vadd.s32 %v3291, 1
      %v3296 = vsel %vm3294, %v3295, %v3291
      %v3297 = vadd.s32 %v3292, %v3296
      %v3298 = vadd.s32 %v3297, 536870912
      %v3299 = vshrl.u32 %v3298, 30
      %v3300 = vshll.u32 %v3299, 30
      %v3301 = vsub.s32 %v3297, %v3300
      %vm3302 = vcmp.lt.s32.totalorder %v3301, 0
      %v3303 = vsub.s32 0, %v3301
      %v3304 = vsel %vm3302, %v3303, %v3301
      %v3305 = vclz %v3304
      %v3306 = vsub.s32 %v3305, 2
      %vm3307 = vcmp.gt.s32.totalorder 0, %v3306
      %v3308 = vsel %vm3307, 0, %v3306
      %v3309 = vsub.s32 32, %v3308
      %v3310 = vshll.u32 %v3301, %v3308
      %v3311 = vshrl.u32 %v3293, %v3309
      %v3312 = vor.u32 %v3310, %v3311
      %v3313 = vsub.s32 4294967266, %v3308
      %v3314 = vadd.s32 %v3313, 127
      %v3315 = vshll.u32 %v3314, 23
      %v3316 = vor.u32 4788187, %v3315
      %v3317 = vand.u32 2147483647, %v3316
      %v3319 = vcvt.s32.f32 %v3312
      %v3320 = vmul.f32 %v3319, %v3317
      %v3321 = vxor.u32 %v3320, 2147483648
      %v3322 = vsel %vm3239, %v3321, %v3320
      %v3323 = vsub.s32 4, %v3299
      %v3324 = vsel %vm3239, %v3323, %v3299
      %v3325 = vsel %vm3238, %v630, %v3322
      %v3326 = vsel %vm3238, 0, %v3324
      %v3327 = vcosq.f32.pop %v3325
      %v3328 = vsinq.f32.pop %v3325
      %vm3329 = vweird.f32 %v630
      %v3330 = vadd.s32 %v3326, 3
      %v3331 = vand.u32 %v3330, 3
      %vm3332 = vcmp.lt.s32.totalorder %v3331, 2
      %vm3333 = vcmp.eq.s32.totalorder %v3331, 0
      %v3334 = vxor.u32 %v3328, 2147483648
      %v3335 = vsel %vm3333, %v3327, %v3334
      %vm3336 = vcmp.eq.s32.totalorder %v3331, 2
      %v3337 = vxor.u32 %v3327, 2147483648
      %v3338 = vsel %vm3336, %v3337, %v3328
      %v3339 = vsel %vm3332, %v3335, %v3338
      %v3340 = vsel %vm3329, nan, %v3339
      %v3341 = vand.u32 2147483647, %v631
      %vm3342 = vcmp.le.f32.partialorder %v3341, 0.7853982
      %vm3343 = vcmp.lt.s32.totalorder %v631, 0
      %v3344 = vand.u32 %v631, 2139095040
      %v3345 = vshrl.u32 %v3344, 23
      %v3346 = vsub.s32 %v3345, 127
      %v3347 = vand.u32 2147483647, %v631
      %v3348 = vand.u32 %v3347, 8388607
      %v3349 = vor.u32 %v3348, 8388608
      %v3350 = vsub.s32 0, %v3349
      %v3351 = vadd.s32 %v3346, 1
      %vm3352 = vcmp.gt.s32.totalorder %v3351, 0
      %v3353 = vsel %vm3352, %v3351, 0
      %v3354 = vshrl.u32 %v3353, 5
      %v3355 = vand.u32 %v3353, 31
      %v3356 = vsub.s32 32, %v3355
      %v3357 = vshrl.u32 683565275, %v3356
      %v3358 = vshll.u32 683565275, %v3355
      %v3359 = vshrl.u32 2475754826, %v3356
      %v3360 = vor.u32 %v3358, %v3359
      %v3361 = vshll.u32 2475754826, %v3355
      %v3362 = vshrl.u32 2131351028, %v3356
      %v3363 = vor.u32 %v3361, %v3362
      %v3364 = vshll.u32 2131351028, %v3355
      %v3365 = vshrl.u32 2102212464, %v3356
      %v3366 = vor.u32 %v3364, %v3365
      %v3367 = vshll.u32 2102212464, %v3355
      %v3368 = vshrl.u32 920167782, %v3356
      %v3369 = vor.u32 %v3367, %v3368
      %v3370 = vshll.u32 920167782, %v3355
      %v3371 = vshrl.u32 1326507024, %v3356
      %v3372 = vor.u32 %v3370, %v3371
      %vm3373 = vcmp.lt.s32.totalorder %v3354, 1
      %vm3374 = vcmp.lt.s32.totalorder %v3354, 2
      %vm3375 = vcmp.lt.s32.totalorder %v3354, 3
      %vm3376 = vcmp.lt.s32.totalorder %v3354, 4
      %v3377 = vsel %vm3373, %v3357, %v3360
      %v3378 = vsel %vm3376, %v3366, 2102212464
      %v3379 = vsel %vm3375, %v3363, %v3378
      %v3380 = vsel %vm3374, %v3377, %v3379
      %v3381 = vsel %vm3373, %v3360, %v3363
      %v3382 = vsel %vm3376, %v3369, 920167782
      %v3383 = vsel %vm3375, %v3366, %v3382
      %v3384 = vsel %vm3374, %v3381, %v3383
      %v3385 = vsel %vm3373, %v3363, %v3366
      %v3386 = vsel %vm3376, %v3372, 1326507024
      %v3387 = vsel %vm3375, %v3369, %v3386
      %v3388 = vsel %vm3374, %v3385, %v3387
      %v3389 = vshll.u32 %v3349, 8
      %v3390 = vmul.u32.u64.compose %v3389, %v3388
      %v3391 = vextract.low.u32 %v3390
      %v3392 = vextract.high.u32 %v3390
      %v3393 = vmul.u32.u64.compose %v3389, %v3384
      %v3394 = vextract.low.u32 %v3393
      %v3395 = vextract.high.u32 %v3393
      %v3396 = vmul.u32 %v3389, %v3380
      %v3397 = vadd.s32 %v3392, %v3394
      %vm3398 = vc.u32 %v3392, %v3394
      %v3399 = vadd.s32 %v3395, 1
      %v3400 = vsel %vm3398, %v3399, %v3395
      %v3401 = vadd.s32 %v3396, %v3400
      %v3402 = vadd.s32 %v3401, 536870912
      %v3403 = vshrl.u32 %v3402, 30
      %v3404 = vshll.u32 %v3403, 30
      %v3405 = vsub.s32 %v3401, %v3404
      %vm3406 = vcmp.lt.s32.totalorder %v3405, 0
      %v3407 = vsub.s32 0, %v3405
      %v3408 = vsel %vm3406, %v3407, %v3405
      %v3409 = vclz %v3408
      %v3410 = vsub.s32 %v3409, 2
      %vm3411 = vcmp.gt.s32.totalorder 0, %v3410
      %v3412 = vsel %vm3411, 0, %v3410
      %v3413 = vsub.s32 32, %v3412
      %v3414 = vshll.u32 %v3405, %v3412
      %v3415 = vshrl.u32 %v3397, %v3413
      %v3416 = vor.u32 %v3414, %v3415
      %v3417 = vsub.s32 4294967266, %v3412
      %v3418 = vadd.s32 %v3417, 127
      %v3419 = vshll.u32 %v3418, 23
      %v3420 = vor.u32 4788187, %v3419
      %v3421 = vand.u32 2147483647, %v3420
      %v3423 = vcvt.s32.f32 %v3416
      %v3424 = vmul.f32 %v3423, %v3421
      %v3425 = vxor.u32 %v3424, 2147483648
      %v3426 = vsel %vm3343, %v3425, %v3424
      %v3427 = vsub.s32 4, %v3403
      %v3428 = vsel %vm3343, %v3427, %v3403
      %v3429 = vsel %vm3342, %v631, %v3426
      %v3430 = vsel %vm3342, 0, %v3428
      %v3431 = vcosq.f32.pop %v3429
      %v3432 = vsinq.f32.pop %v3429
      %vm3433 = vweird.f32 %v631
      %v3434 = vadd.s32 %v3430, 3
      %v3435 = vand.u32 %v3434, 3
      %vm3436 = vcmp.lt.s32.totalorder %v3435, 2
      %vm3437 = vcmp.eq.s32.totalorder %v3435, 0
      %v3438 = vxor.u32 %v3432, 2147483648
      %v3439 = vsel %vm3437, %v3431, %v3438
      %vm3440 = vcmp.eq.s32.totalorder %v3435, 2
      %v3441 = vxor.u32 %v3431, 2147483648
      %v3442 = vsel %vm3440, %v3441, %v3432
      %v3443 = vsel %vm3436, %v3439, %v3442
      %v3444 = vsel %vm3433, nan, %v3443
      %v3445 = vand.u32 2147483647, %v632
      %vm3446 = vcmp.le.f32.partialorder %v3445, 0.7853982
      %vm3447 = vcmp.lt.s32.totalorder %v632, 0
      %v3448 = vand.u32 %v632, 2139095040
      %v3449 = vshrl.u32 %v3448, 23
      %v3450 = vsub.s32 %v3449, 127
      %v3451 = vand.u32 2147483647, %v632
      %v3452 = vand.u32 %v3451, 8388607
      %v3453 = vor.u32 %v3452, 8388608
      %v3454 = vsub.s32 0, %v3453
      %v3455 = vadd.s32 %v3450, 1
      %vm3456 = vcmp.gt.s32.totalorder %v3455, 0
      %v3457 = vsel %vm3456, %v3455, 0
      %v3458 = vshrl.u32 %v3457, 5
      %v3459 = vand.u32 %v3457, 31
      %v3460 = vsub.s32 32, %v3459
      %v3461 = vshrl.u32 683565275, %v3460
      %v3462 = vshll.u32 683565275, %v3459
      %v3463 = vshrl.u32 2475754826, %v3460
      %v3464 = vor.u32 %v3462, %v3463
      %v3465 = vshll.u32 2475754826, %v3459
      %v3466 = vshrl.u32 2131351028, %v3460
      %v3467 = vor.u32 %v3465, %v3466
      %v3468 = vshll.u32 2131351028, %v3459
      %v3469 = vshrl.u32 2102212464, %v3460
      %v3470 = vor.u32 %v3468, %v3469
      %v3471 = vshll.u32 2102212464, %v3459
      %v3472 = vshrl.u32 920167782, %v3460
      %v3473 = vor.u32 %v3471, %v3472
      %v3474 = vshll.u32 920167782, %v3459
      %v3475 = vshrl.u32 1326507024, %v3460
      %v3476 = vor.u32 %v3474, %v3475
      %vm3477 = vcmp.lt.s32.totalorder %v3458, 1
      %vm3478 = vcmp.lt.s32.totalorder %v3458, 2
      %vm3479 = vcmp.lt.s32.totalorder %v3458, 3
      %vm3480 = vcmp.lt.s32.totalorder %v3458, 4
      %v3481 = vsel %vm3477, %v3461, %v3464
      %v3482 = vsel %vm3480, %v3470, 2102212464
      %v3483 = vsel %vm3479, %v3467, %v3482
      %v3484 = vsel %vm3478, %v3481, %v3483
      %v3485 = vsel %vm3477, %v3464, %v3467
      %v3486 = vsel %vm3480, %v3473, 920167782
      %v3487 = vsel %vm3479, %v3470, %v3486
      %v3488 = vsel %vm3478, %v3485, %v3487
      %v3489 = vsel %vm3477, %v3467, %v3470
      %v3490 = vsel %vm3480, %v3476, 1326507024
      %v3491 = vsel %vm3479, %v3473, %v3490
      %v3492 = vsel %vm3478, %v3489, %v3491
      %v3493 = vshll.u32 %v3453, 8
      %v3494 = vmul.u32.u64.compose %v3493, %v3492
      %v3495 = vextract.low.u32 %v3494
      %v3496 = vextract.high.u32 %v3494
      %v3497 = vmul.u32.u64.compose %v3493, %v3488
      %v3498 = vextract.low.u32 %v3497
      %v3499 = vextract.high.u32 %v3497
      %v3500 = vmul.u32 %v3493, %v3484
      %v3501 = vadd.s32 %v3496, %v3498
      %vm3502 = vc.u32 %v3496, %v3498
      %v3503 = vadd.s32 %v3499, 1
      %v3504 = vsel %vm3502, %v3503, %v3499
      %v3505 = vadd.s32 %v3500, %v3504
      %v3506 = vadd.s32 %v3505, 536870912
      %v3507 = vshrl.u32 %v3506, 30
      %v3508 = vshll.u32 %v3507, 30
      %v3509 = vsub.s32 %v3505, %v3508
      %vm3510 = vcmp.lt.s32.totalorder %v3509, 0
      %v3511 = vsub.s32 0, %v3509
      %v3512 = vsel %vm3510, %v3511, %v3509
      %v3513 = vclz %v3512
      %v3514 = vsub.s32 %v3513, 2
      %vm3515 = vcmp.gt.s32.totalorder 0, %v3514
      %v3516 = vsel %vm3515, 0, %v3514
      %v3517 = vsub.s32 32, %v3516
      %v3518 = vshll.u32 %v3509, %v3516
      %v3519 = vshrl.u32 %v3501, %v3517
      %v3520 = vor.u32 %v3518, %v3519
      %v3521 = vsub.s32 4294967266, %v3516
      %v3522 = vadd.s32 %v3521, 127
      %v3523 = vshll.u32 %v3522, 23
      %v3524 = vor.u32 4788187, %v3523
      %v3525 = vand.u32 2147483647, %v3524
      %v3527 = vcvt.s32.f32 %v3520
      %v3528 = vmul.f32 %v3527, %v3525
      %v3529 = vxor.u32 %v3528, 2147483648
      %v3530 = vsel %vm3447, %v3529, %v3528
      %v3531 = vsub.s32 4, %v3507
      %v3532 = vsel %vm3447, %v3531, %v3507
      %v3533 = vsel %vm3446, %v632, %v3530
      %v3534 = vsel %vm3446, 0, %v3532
      %v3535 = vcosq.f32.pop %v3533
      %v3536 = vsinq.f32.pop %v3533
      %vm3537 = vweird.f32 %v632
      %v3538 = vadd.s32 %v3534, 3
      %v3539 = vand.u32 %v3538, 3
      %vm3540 = vcmp.lt.s32.totalorder %v3539, 2
      %vm3541 = vcmp.eq.s32.totalorder %v3539, 0
      %v3542 = vxor.u32 %v3536, 2147483648
      %v3543 = vsel %vm3541, %v3535, %v3542
      %vm3544 = vcmp.eq.s32.totalorder %v3539, 2
      %v3545 = vxor.u32 %v3535, 2147483648
      %v3546 = vsel %vm3544, %v3545, %v3536
      %v3547 = vsel %vm3540, %v3543, %v3546
      %v3548 = vsel %vm3537, nan, %v3547
      %v3549 = vand.u32 2147483647, %v633
      %vm3550 = vcmp.le.f32.partialorder %v3549, 0.7853982
      %vm3551 = vcmp.lt.s32.totalorder %v633, 0
      %v3552 = vand.u32 %v633, 2139095040
      %v3553 = vshrl.u32 %v3552, 23
      %v3554 = vsub.s32 %v3553, 127
      %v3555 = vand.u32 2147483647, %v633
      %v3556 = vand.u32 %v3555, 8388607
      %v3557 = vor.u32 %v3556, 8388608
      %v3558 = vsub.s32 0, %v3557
      %v3559 = vadd.s32 %v3554, 1
      %vm3560 = vcmp.gt.s32.totalorder %v3559, 0
      %v3561 = vsel %vm3560, %v3559, 0
      %v3562 = vshrl.u32 %v3561, 5
      %v3563 = vand.u32 %v3561, 31
      %v3564 = vsub.s32 32, %v3563
      %v3565 = vshrl.u32 683565275, %v3564
      %v3566 = vshll.u32 683565275, %v3563
      %v3567 = vshrl.u32 2475754826, %v3564
      %v3568 = vor.u32 %v3566, %v3567
      %v3569 = vshll.u32 2475754826, %v3563
      %v3570 = vshrl.u32 2131351028, %v3564
      %v3571 = vor.u32 %v3569, %v3570
      %v3572 = vshll.u32 2131351028, %v3563
      %v3573 = vshrl.u32 2102212464, %v3564
      %v3574 = vor.u32 %v3572, %v3573
      %v3575 = vshll.u32 2102212464, %v3563
      %v3576 = vshrl.u32 920167782, %v3564
      %v3577 = vor.u32 %v3575, %v3576
      %v3578 = vshll.u32 920167782, %v3563
      %v3579 = vshrl.u32 1326507024, %v3564
      %v3580 = vor.u32 %v3578, %v3579
      %vm3581 = vcmp.lt.s32.totalorder %v3562, 1
      %vm3582 = vcmp.lt.s32.totalorder %v3562, 2
      %vm3583 = vcmp.lt.s32.totalorder %v3562, 3
      %vm3584 = vcmp.lt.s32.totalorder %v3562, 4
      %v3585 = vsel %vm3581, %v3565, %v3568
      %v3586 = vsel %vm3584, %v3574, 2102212464
      %v3587 = vsel %vm3583, %v3571, %v3586
      %v3588 = vsel %vm3582, %v3585, %v3587
      %v3589 = vsel %vm3581, %v3568, %v3571
      %v3590 = vsel %vm3584, %v3577, 920167782
      %v3591 = vsel %vm3583, %v3574, %v3590
      %v3592 = vsel %vm3582, %v3589, %v3591
      %v3593 = vsel %vm3581, %v3571, %v3574
      %v3594 = vsel %vm3584, %v3580, 1326507024
      %v3595 = vsel %vm3583, %v3577, %v3594
      %v3596 = vsel %vm3582, %v3593, %v3595
      %v3597 = vshll.u32 %v3557, 8
      %v3598 = vmul.u32.u64.compose %v3597, %v3596
      %v3599 = vextract.low.u32 %v3598
      %v3600 = vextract.high.u32 %v3598
      %v3601 = vmul.u32.u64.compose %v3597, %v3592
      %v3602 = vextract.low.u32 %v3601
      %v3603 = vextract.high.u32 %v3601
      %v3604 = vmul.u32 %v3597, %v3588
      %v3605 = vadd.s32 %v3600, %v3602
      %vm3606 = vc.u32 %v3600, %v3602
      %v3607 = vadd.s32 %v3603, 1
      %v3608 = vsel %vm3606, %v3607, %v3603
      %v3609 = vadd.s32 %v3604, %v3608
      %v3610 = vadd.s32 %v3609, 536870912
      %v3611 = vshrl.u32 %v3610, 30
      %v3612 = vshll.u32 %v3611, 30
      %v3613 = vsub.s32 %v3609, %v3612
      %vm3614 = vcmp.lt.s32.totalorder %v3613, 0
      %v3615 = vsub.s32 0, %v3613
      %v3616 = vsel %vm3614, %v3615, %v3613
      %v3617 = vclz %v3616
      %v3618 = vsub.s32 %v3617, 2
      %vm3619 = vcmp.gt.s32.totalorder 0, %v3618
      %v3620 = vsel %vm3619, 0, %v3618
      %v3621 = vsub.s32 32, %v3620
      %v3622 = vshll.u32 %v3613, %v3620
      %v3623 = vshrl.u32 %v3605, %v3621
      %v3624 = vor.u32 %v3622, %v3623
      %v3625 = vsub.s32 4294967266, %v3620
      %v3626 = vadd.s32 %v3625, 127
      %v3627 = vshll.u32 %v3626, 23
      %v3628 = vor.u32 4788187, %v3627
      %v3629 = vand.u32 2147483647, %v3628
      %v3631 = vcvt.s32.f32 %v3624
      %v3632 = vmul.f32 %v3631, %v3629
      %v3633 = vxor.u32 %v3632, 2147483648
      %v3634 = vsel %vm3551, %v3633, %v3632
      %v3635 = vsub.s32 4, %v3611
      %v3636 = vsel %vm3551, %v3635, %v3611
      %v3637 = vsel %vm3550, %v633, %v3634
      %v3638 = vsel %vm3550, 0, %v3636
      %v3639 = vcosq.f32.pop %v3637
      %v3640 = vsinq.f32.pop %v3637
      %vm3641 = vweird.f32 %v633
      %v3642 = vadd.s32 %v3638, 3
      %v3643 = vand.u32 %v3642, 3
      %vm3644 = vcmp.lt.s32.totalorder %v3643, 2
      %vm3645 = vcmp.eq.s32.totalorder %v3643, 0
      %v3646 = vxor.u32 %v3640, 2147483648
      %v3647 = vsel %vm3645, %v3639, %v3646
      %vm3648 = vcmp.eq.s32.totalorder %v3643, 2
      %v3649 = vxor.u32 %v3639, 2147483648
      %v3650 = vsel %vm3648, %v3649, %v3640
      %v3651 = vsel %vm3644, %v3647, %v3650
      %v3652 = vsel %vm3641, nan, %v3651
      %v3653 = vand.u32 2147483647, %v634
      %vm3654 = vcmp.le.f32.partialorder %v3653, 0.7853982
      %vm3655 = vcmp.lt.s32.totalorder %v634, 0
      %v3656 = vand.u32 %v634, 2139095040
      %v3657 = vshrl.u32 %v3656, 23
      %v3658 = vsub.s32 %v3657, 127
      %v3659 = vand.u32 2147483647, %v634
      %v3660 = vand.u32 %v3659, 8388607
      %v3661 = vor.u32 %v3660, 8388608
      %v3662 = vsub.s32 0, %v3661
      %v3663 = vadd.s32 %v3658, 1
      %vm3664 = vcmp.gt.s32.totalorder %v3663, 0
      %v3665 = vsel %vm3664, %v3663, 0
      %v3666 = vshrl.u32 %v3665, 5
      %v3667 = vand.u32 %v3665, 31
      %v3668 = vsub.s32 32, %v3667
      %v3669 = vshrl.u32 683565275, %v3668
      %v3670 = vshll.u32 683565275, %v3667
      %v3671 = vshrl.u32 2475754826, %v3668
      %v3672 = vor.u32 %v3670, %v3671
      %v3673 = vshll.u32 2475754826, %v3667
      %v3674 = vshrl.u32 2131351028, %v3668
      %v3675 = vor.u32 %v3673, %v3674
      %v3676 = vshll.u32 2131351028, %v3667
      %v3677 = vshrl.u32 2102212464, %v3668
      %v3678 = vor.u32 %v3676, %v3677
      %v3679 = vshll.u32 2102212464, %v3667
      %v3680 = vshrl.u32 920167782, %v3668
      %v3681 = vor.u32 %v3679, %v3680
      %v3682 = vshll.u32 920167782, %v3667
      %v3683 = vshrl.u32 1326507024, %v3668
      %v3684 = vor.u32 %v3682, %v3683
      %vm3685 = vcmp.lt.s32.totalorder %v3666, 1
      %vm3686 = vcmp.lt.s32.totalorder %v3666, 2
      %vm3687 = vcmp.lt.s32.totalorder %v3666, 3
      %vm3688 = vcmp.lt.s32.totalorder %v3666, 4
      %v3689 = vsel %vm3685, %v3669, %v3672
      %v3690 = vsel %vm3688, %v3678, 2102212464
      %v3691 = vsel %vm3687, %v3675, %v3690
      %v3692 = vsel %vm3686, %v3689, %v3691
      %v3693 = vsel %vm3685, %v3672, %v3675
      %v3694 = vsel %vm3688, %v3681, 920167782
      %v3695 = vsel %vm3687, %v3678, %v3694
      %v3696 = vsel %vm3686, %v3693, %v3695
      %v3697 = vsel %vm3685, %v3675, %v3678
      %v3698 = vsel %vm3688, %v3684, 1326507024
      %v3699 = vsel %vm3687, %v3681, %v3698
      %v3700 = vsel %vm3686, %v3697, %v3699
      %v3701 = vshll.u32 %v3661, 8
      %v3702 = vmul.u32.u64.compose %v3701, %v3700
      %v3703 = vextract.low.u32 %v3702
      %v3704 = vextract.high.u32 %v3702
      %v3705 = vmul.u32.u64.compose %v3701, %v3696
      %v3706 = vextract.low.u32 %v3705
      %v3707 = vextract.high.u32 %v3705
      %v3708 = vmul.u32 %v3701, %v3692
      %v3709 = vadd.s32 %v3704, %v3706
      %vm3710 = vc.u32 %v3704, %v3706
      %v3711 = vadd.s32 %v3707, 1
      %v3712 = vsel %vm3710, %v3711, %v3707
      %v3713 = vadd.s32 %v3708, %v3712
      %v3714 = vadd.s32 %v3713, 536870912
      %v3715 = vshrl.u32 %v3714, 30
      %v3716 = vshll.u32 %v3715, 30
      %v3717 = vsub.s32 %v3713, %v3716
      %vm3718 = vcmp.lt.s32.totalorder %v3717, 0
      %v3719 = vsub.s32 0, %v3717
      %v3720 = vsel %vm3718, %v3719, %v3717
      %v3721 = vclz %v3720
      %v3722 = vsub.s32 %v3721, 2
      %vm3723 = vcmp.gt.s32.totalorder 0, %v3722
      %v3724 = vsel %vm3723, 0, %v3722
      %v3725 = vsub.s32 32, %v3724
      %v3726 = vshll.u32 %v3717, %v3724
      %v3727 = vshrl.u32 %v3709, %v3725
      %v3728 = vor.u32 %v3726, %v3727
      %v3729 = vsub.s32 4294967266, %v3724
      %v3730 = vadd.s32 %v3729, 127
      %v3731 = vshll.u32 %v3730, 23
      %v3732 = vor.u32 4788187, %v3731
      %v3733 = vand.u32 2147483647, %v3732
      %v3735 = vcvt.s32.f32 %v3728
      %v3736 = vmul.f32 %v3735, %v3733
      %v3737 = vxor.u32 %v3736, 2147483648
      %v3738 = vsel %vm3655, %v3737, %v3736
      %v3739 = vsub.s32 4, %v3715
      %v3740 = vsel %vm3655, %v3739, %v3715
      %v3741 = vsel %vm3654, %v634, %v3738
      %v3742 = vsel %vm3654, 0, %v3740
      %v3743 = vcosq.f32.pop %v3741
      %v3744 = vsinq.f32.pop %v3741
      %vm3745 = vweird.f32 %v634
      %v3746 = vadd.s32 %v3742, 3
      %v3747 = vand.u32 %v3746, 3
      %vm3748 = vcmp.lt.s32.totalorder %v3747, 2
      %vm3749 = vcmp.eq.s32.totalorder %v3747, 0
      %v3750 = vxor.u32 %v3744, 2147483648
      %v3751 = vsel %vm3749, %v3743, %v3750
      %vm3752 = vcmp.eq.s32.totalorder %v3747, 2
      %v3753 = vxor.u32 %v3743, 2147483648
      %v3754 = vsel %vm3752, %v3753, %v3744
      %v3755 = vsel %vm3748, %v3751, %v3754
      %v3756 = vsel %vm3745, nan, %v3755
      %v3757 = vand.u32 2147483647, %v635
      %vm3758 = vcmp.le.f32.partialorder %v3757, 0.7853982
      %vm3759 = vcmp.lt.s32.totalorder %v635, 0
      %v3760 = vand.u32 %v635, 2139095040
      %v3761 = vshrl.u32 %v3760, 23
      %v3762 = vsub.s32 %v3761, 127
      %v3763 = vand.u32 2147483647, %v635
      %v3764 = vand.u32 %v3763, 8388607
      %v3765 = vor.u32 %v3764, 8388608
      %v3766 = vsub.s32 0, %v3765
      %v3767 = vadd.s32 %v3762, 1
      %vm3768 = vcmp.gt.s32.totalorder %v3767, 0
      %v3769 = vsel %vm3768, %v3767, 0
      %v3770 = vshrl.u32 %v3769, 5
      %v3771 = vand.u32 %v3769, 31
      %v3772 = vsub.s32 32, %v3771
      %v3773 = vshrl.u32 683565275, %v3772
      %v3774 = vshll.u32 683565275, %v3771
      %v3775 = vshrl.u32 2475754826, %v3772
      %v3776 = vor.u32 %v3774, %v3775
      %v3777 = vshll.u32 2475754826, %v3771
      %v3778 = vshrl.u32 2131351028, %v3772
      %v3779 = vor.u32 %v3777, %v3778
      %v3780 = vshll.u32 2131351028, %v3771
      %v3781 = vshrl.u32 2102212464, %v3772
      %v3782 = vor.u32 %v3780, %v3781
      %v3783 = vshll.u32 2102212464, %v3771
      %v3784 = vshrl.u32 920167782, %v3772
      %v3785 = vor.u32 %v3783, %v3784
      %v3786 = vshll.u32 920167782, %v3771
      %v3787 = vshrl.u32 1326507024, %v3772
      %v3788 = vor.u32 %v3786, %v3787
      %vm3789 = vcmp.lt.s32.totalorder %v3770, 1
      %vm3790 = vcmp.lt.s32.totalorder %v3770, 2
      %vm3791 = vcmp.lt.s32.totalorder %v3770, 3
      %vm3792 = vcmp.lt.s32.totalorder %v3770, 4
      %v3793 = vsel %vm3789, %v3773, %v3776
      %v3794 = vsel %vm3792, %v3782, 2102212464
      %v3795 = vsel %vm3791, %v3779, %v3794
      %v3796 = vsel %vm3790, %v3793, %v3795
      %v3797 = vsel %vm3789, %v3776, %v3779
      %v3798 = vsel %vm3792, %v3785, 920167782
      %v3799 = vsel %vm3791, %v3782, %v3798
      %v3800 = vsel %vm3790, %v3797, %v3799
      %v3801 = vsel %vm3789, %v3779, %v3782
      %v3802 = vsel %vm3792, %v3788, 1326507024
      %v3803 = vsel %vm3791, %v3785, %v3802
      %v3804 = vsel %vm3790, %v3801, %v3803
      %v3805 = vshll.u32 %v3765, 8
      %v3806 = vmul.u32.u64.compose %v3805, %v3804
      %v3807 = vextract.low.u32 %v3806
      %v3808 = vextract.high.u32 %v3806
      %v3809 = vmul.u32.u64.compose %v3805, %v3800
      %v3810 = vextract.low.u32 %v3809
      %v3811 = vextract.high.u32 %v3809
      %v3812 = vmul.u32 %v3805, %v3796
      %v3813 = vadd.s32 %v3808, %v3810
      %vm3814 = vc.u32 %v3808, %v3810
      %v3815 = vadd.s32 %v3811, 1
      %v3816 = vsel %vm3814, %v3815, %v3811
      %v3817 = vadd.s32 %v3812, %v3816
      %v3818 = vadd.s32 %v3817, 536870912
      %v3819 = vshrl.u32 %v3818, 30
      %v3820 = vshll.u32 %v3819, 30
      %v3821 = vsub.s32 %v3817, %v3820
      %vm3822 = vcmp.lt.s32.totalorder %v3821, 0
      %v3823 = vsub.s32 0, %v3821
      %v3824 = vsel %vm3822, %v3823, %v3821
      %v3825 = vclz %v3824
      %v3826 = vsub.s32 %v3825, 2
      %vm3827 = vcmp.gt.s32.totalorder 0, %v3826
      %v3828 = vsel %vm3827, 0, %v3826
      %v3829 = vsub.s32 32, %v3828
      %v3830 = vshll.u32 %v3821, %v3828
      %v3831 = vshrl.u32 %v3813, %v3829
      %v3832 = vor.u32 %v3830, %v3831
      %v3833 = vsub.s32 4294967266, %v3828
      %v3834 = vadd.s32 %v3833, 127
      %v3835 = vshll.u32 %v3834, 23
      %v3836 = vor.u32 4788187, %v3835
      %v3837 = vand.u32 2147483647, %v3836
      %v3839 = vcvt.s32.f32 %v3832
      %v3840 = vmul.f32 %v3839, %v3837
      %v3841 = vxor.u32 %v3840, 2147483648
      %v3842 = vsel %vm3759, %v3841, %v3840
      %v3843 = vsub.s32 4, %v3819
      %v3844 = vsel %vm3759, %v3843, %v3819
      %v3845 = vsel %vm3758, %v635, %v3842
      %v3846 = vsel %vm3758, 0, %v3844
      %v3847 = vcosq.f32.pop %v3845
      %v3848 = vsinq.f32.pop %v3845
      %vm3849 = vweird.f32 %v635
      %v3850 = vadd.s32 %v3846, 3
      %v3851 = vand.u32 %v3850, 3
      %vm3852 = vcmp.lt.s32.totalorder %v3851, 2
      %vm3853 = vcmp.eq.s32.totalorder %v3851, 0
      %v3854 = vxor.u32 %v3848, 2147483648
      %v3855 = vsel %vm3853, %v3847, %v3854
      %vm3856 = vcmp.eq.s32.totalorder %v3851, 2
      %v3857 = vxor.u32 %v3847, 2147483648
      %v3858 = vsel %vm3856, %v3857, %v3848
      %v3859 = vsel %vm3852, %v3855, %v3858
      %v3860 = vsel %vm3849, nan, %v3859
      %v3861 = vand.u32 2147483647, %v636
      %vm3862 = vcmp.le.f32.partialorder %v3861, 0.7853982
      %vm3863 = vcmp.lt.s32.totalorder %v636, 0
      %v3864 = vand.u32 %v636, 2139095040
      %v3865 = vshrl.u32 %v3864, 23
      %v3866 = vsub.s32 %v3865, 127
      %v3867 = vand.u32 2147483647, %v636
      %v3868 = vand.u32 %v3867, 8388607
      %v3869 = vor.u32 %v3868, 8388608
      %v3870 = vsub.s32 0, %v3869
      %v3871 = vadd.s32 %v3866, 1
      %vm3872 = vcmp.gt.s32.totalorder %v3871, 0
      %v3873 = vsel %vm3872, %v3871, 0
      %v3874 = vshrl.u32 %v3873, 5
      %v3875 = vand.u32 %v3873, 31
      %v3876 = vsub.s32 32, %v3875
      %v3877 = vshrl.u32 683565275, %v3876
      %v3878 = vshll.u32 683565275, %v3875
      %v3879 = vshrl.u32 2475754826, %v3876
      %v3880 = vor.u32 %v3878, %v3879
      %v3881 = vshll.u32 2475754826, %v3875
      %v3882 = vshrl.u32 2131351028, %v3876
      %v3883 = vor.u32 %v3881, %v3882
      %v3884 = vshll.u32 2131351028, %v3875
      %v3885 = vshrl.u32 2102212464, %v3876
      %v3886 = vor.u32 %v3884, %v3885
      %v3887 = vshll.u32 2102212464, %v3875
      %v3888 = vshrl.u32 920167782, %v3876
      %v3889 = vor.u32 %v3887, %v3888
      %v3890 = vshll.u32 920167782, %v3875
      %v3891 = vshrl.u32 1326507024, %v3876
      %v3892 = vor.u32 %v3890, %v3891
      %vm3893 = vcmp.lt.s32.totalorder %v3874, 1
      %vm3894 = vcmp.lt.s32.totalorder %v3874, 2
      %vm3895 = vcmp.lt.s32.totalorder %v3874, 3
      %vm3896 = vcmp.lt.s32.totalorder %v3874, 4
      %v3897 = vsel %vm3893, %v3877, %v3880
      %v3898 = vsel %vm3896, %v3886, 2102212464
      %v3899 = vsel %vm3895, %v3883, %v3898
      %v3900 = vsel %vm3894, %v3897, %v3899
      %v3901 = vsel %vm3893, %v3880, %v3883
      %v3902 = vsel %vm3896, %v3889, 920167782
      %v3903 = vsel %vm3895, %v3886, %v3902
      %v3904 = vsel %vm3894, %v3901, %v3903
      %v3905 = vsel %vm3893, %v3883, %v3886
      %v3906 = vsel %vm3896, %v3892, 1326507024
      %v3907 = vsel %vm3895, %v3889, %v3906
      %v3908 = vsel %vm3894, %v3905, %v3907
      %v3909 = vshll.u32 %v3869, 8
      %v3910 = vmul.u32.u64.compose %v3909, %v3908
      %v3911 = vextract.low.u32 %v3910
      %v3912 = vextract.high.u32 %v3910
      %v3913 = vmul.u32.u64.compose %v3909, %v3904
      %v3914 = vextract.low.u32 %v3913
      %v3915 = vextract.high.u32 %v3913
      %v3916 = vmul.u32 %v3909, %v3900
      %v3917 = vadd.s32 %v3912, %v3914
      %vm3918 = vc.u32 %v3912, %v3914
      %v3919 = vadd.s32 %v3915, 1
      %v3920 = vsel %vm3918, %v3919, %v3915
      %v3921 = vadd.s32 %v3916, %v3920
      %v3922 = vadd.s32 %v3921, 536870912
      %v3923 = vshrl.u32 %v3922, 30
      %v3924 = vshll.u32 %v3923, 30
      %v3925 = vsub.s32 %v3921, %v3924
      %vm3926 = vcmp.lt.s32.totalorder %v3925, 0
      %v3927 = vsub.s32 0, %v3925
      %v3928 = vsel %vm3926, %v3927, %v3925
      %v3929 = vclz %v3928
      %v3930 = vsub.s32 %v3929, 2
      %vm3931 = vcmp.gt.s32.totalorder 0, %v3930
      %v3932 = vsel %vm3931, 0, %v3930
      %v3933 = vsub.s32 32, %v3932
      %v3934 = vshll.u32 %v3925, %v3932
      %v3935 = vshrl.u32 %v3917, %v3933
      %v3936 = vor.u32 %v3934, %v3935
      %v3937 = vsub.s32 4294967266, %v3932
      %v3938 = vadd.s32 %v3937, 127
      %v3939 = vshll.u32 %v3938, 23
      %v3940 = vor.u32 4788187, %v3939
      %v3941 = vand.u32 2147483647, %v3940
      %v3943 = vcvt.s32.f32 %v3936
      %v3944 = vmul.f32 %v3943, %v3941
      %v3945 = vxor.u32 %v3944, 2147483648
      %v3946 = vsel %vm3863, %v3945, %v3944
      %v3947 = vsub.s32 4, %v3923
      %v3948 = vsel %vm3863, %v3947, %v3923
      %v3949 = vsel %vm3862, %v636, %v3946
      %v3950 = vsel %vm3862, 0, %v3948
      %v3951 = vcosq.f32.pop %v3949
      %v3952 = vsinq.f32.pop %v3949
      %vm3953 = vweird.f32 %v636
      %v3954 = vadd.s32 %v3950, 3
      %v3955 = vand.u32 %v3954, 3
      %vm3956 = vcmp.lt.s32.totalorder %v3955, 2
      %vm3957 = vcmp.eq.s32.totalorder %v3955, 0
      %v3958 = vxor.u32 %v3952, 2147483648
      %v3959 = vsel %vm3957, %v3951, %v3958
      %vm3960 = vcmp.eq.s32.totalorder %v3955, 2
      %v3961 = vxor.u32 %v3951, 2147483648
      %v3962 = vsel %vm3960, %v3961, %v3952
      %v3963 = vsel %vm3956, %v3959, %v3962
      %v3964 = vsel %vm3953, nan, %v3963
      %v3965 = vand.u32 2147483647, %v605
      %vm3966 = vcmp.le.f32.partialorder %v3965, 0.7853982
      %vm3967 = vcmp.lt.s32.totalorder %v605, 0
      %v3968 = vand.u32 %v605, 2139095040
      %v3969 = vshrl.u32 %v3968, 23
      %v3970 = vsub.s32 %v3969, 127
      %v3971 = vand.u32 2147483647, %v605
      %v3972 = vand.u32 %v3971, 8388607
      %v3973 = vor.u32 %v3972, 8388608
      %v3974 = vsub.s32 0, %v3973
      %v3975 = vadd.s32 %v3970, 1
      %vm3976 = vcmp.gt.s32.totalorder %v3975, 0
      %v3977 = vsel %vm3976, %v3975, 0
      %v3978 = vshrl.u32 %v3977, 5
      %v3979 = vand.u32 %v3977, 31
      %v3980 = vsub.s32 32, %v3979
      %v3981 = vshrl.u32 683565275, %v3980
      %v3982 = vshll.u32 683565275, %v3979
      %v3983 = vshrl.u32 2475754826, %v3980
      %v3984 = vor.u32 %v3982, %v3983
      %v3985 = vshll.u32 2475754826, %v3979
      %v3986 = vshrl.u32 2131351028, %v3980
      %v3987 = vor.u32 %v3985, %v3986
      %v3988 = vshll.u32 2131351028, %v3979
      %v3989 = vshrl.u32 2102212464, %v3980
      %v3990 = vor.u32 %v3988, %v3989
      %v3991 = vshll.u32 2102212464, %v3979
      %v3992 = vshrl.u32 920167782, %v3980
      %v3993 = vor.u32 %v3991, %v3992
      %v3994 = vshll.u32 920167782, %v3979
      %v3995 = vshrl.u32 1326507024, %v3980
      %v3996 = vor.u32 %v3994, %v3995
      %vm3997 = vcmp.lt.s32.totalorder %v3978, 1
      %vm3998 = vcmp.lt.s32.totalorder %v3978, 2
      %vm3999 = vcmp.lt.s32.totalorder %v3978, 3
      %vm4000 = vcmp.lt.s32.totalorder %v3978, 4
      %v4001 = vsel %vm3997, %v3981, %v3984
      %v4002 = vsel %vm4000, %v3990, 2102212464
      %v4003 = vsel %vm3999, %v3987, %v4002
      %v4004 = vsel %vm3998, %v4001, %v4003
      %v4005 = vsel %vm3997, %v3984, %v3987
      %v4006 = vsel %vm4000, %v3993, 920167782
      %v4007 = vsel %vm3999, %v3990, %v4006
      %v4008 = vsel %vm3998, %v4005, %v4007
      %v4009 = vsel %vm3997, %v3987, %v3990
      %v4010 = vsel %vm4000, %v3996, 1326507024
      %v4011 = vsel %vm3999, %v3993, %v4010
      %v4012 = vsel %vm3998, %v4009, %v4011
      %v4013 = vshll.u32 %v3973, 8
      %v4014 = vmul.u32.u64.compose %v4013, %v4012
      %v4015 = vextract.low.u32 %v4014
      %v4016 = vextract.high.u32 %v4014
      %v4017 = vmul.u32.u64.compose %v4013, %v4008
      %v4018 = vextract.low.u32 %v4017
      %v4019 = vextract.high.u32 %v4017
      %v4020 = vmul.u32 %v4013, %v4004
      %v4021 = vadd.s32 %v4016, %v4018
      %vm4022 = vc.u32 %v4016, %v4018
      %v4023 = vadd.s32 %v4019, 1
      %v4024 = vsel %vm4022, %v4023, %v4019
      %v4025 = vadd.s32 %v4020, %v4024
      %v4026 = vadd.s32 %v4025, 536870912
      %v4027 = vshrl.u32 %v4026, 30
      %v4028 = vshll.u32 %v4027, 30
      %v4029 = vsub.s32 %v4025, %v4028
      %vm4030 = vcmp.lt.s32.totalorder %v4029, 0
      %v4031 = vsub.s32 0, %v4029
      %v4032 = vsel %vm4030, %v4031, %v4029
      %v4033 = vclz %v4032
      %v4034 = vsub.s32 %v4033, 2
      %vm4035 = vcmp.gt.s32.totalorder 0, %v4034
      %v4036 = vsel %vm4035, 0, %v4034
      %v4037 = vsub.s32 32, %v4036
      %v4038 = vshll.u32 %v4029, %v4036
      %v4039 = vshrl.u32 %v4021, %v4037
      %v4040 = vor.u32 %v4038, %v4039
      %v4041 = vsub.s32 4294967266, %v4036
      %v4042 = vadd.s32 %v4041, 127
      %v4043 = vshll.u32 %v4042, 23
      %v4044 = vor.u32 4788187, %v4043
      %v4045 = vand.u32 2147483647, %v4044
      %v4047 = vcvt.s32.f32 %v4040
      %v4048 = vmul.f32 %v4047, %v4045
      %v4049 = vxor.u32 %v4048, 2147483648
      %v4050 = vsel %vm3967, %v4049, %v4048
      %v4051 = vsub.s32 4, %v4027
      %v4052 = vsel %vm3967, %v4051, %v4027
      %v4053 = vsel %vm3966, %v605, %v4050
      %v4054 = vsel %vm3966, 0, %v4052
      %v4055 = vcosq.f32.pop %v4053
      %v4056 = vsinq.f32.pop %v4053
      %vm4057 = vweird.f32 %v605
      %v4058 = vand.u32 %v4054, 3
      %vm4059 = vcmp.lt.s32.totalorder %v4058, 2
      %vm4060 = vcmp.eq.s32.totalorder %v4058, 0
      %v4061 = vxor.u32 %v4056, 2147483648
      %v4062 = vsel %vm4060, %v4055, %v4061
      %vm4063 = vcmp.eq.s32.totalorder %v4058, 2
      %v4064 = vxor.u32 %v4055, 2147483648
      %v4065 = vsel %vm4063, %v4064, %v4056
      %v4066 = vsel %vm4059, %v4062, %v4065
      %v4067 = vsel %vm4057, nan, %v4066
      %v4068 = vand.u32 2147483647, %v606
      %vm4069 = vcmp.le.f32.partialorder %v4068, 0.7853982
      %vm4070 = vcmp.lt.s32.totalorder %v606, 0
      %v4071 = vand.u32 %v606, 2139095040
      %v4072 = vshrl.u32 %v4071, 23
      %v4073 = vsub.s32 %v4072, 127
      %v4074 = vand.u32 2147483647, %v606
      %v4075 = vand.u32 %v4074, 8388607
      %v4076 = vor.u32 %v4075, 8388608
      %v4077 = vsub.s32 0, %v4076
      %v4078 = vadd.s32 %v4073, 1
      %vm4079 = vcmp.gt.s32.totalorder %v4078, 0
      %v4080 = vsel %vm4079, %v4078, 0
      %v4081 = vshrl.u32 %v4080, 5
      %v4082 = vand.u32 %v4080, 31
      %v4083 = vsub.s32 32, %v4082
      %v4084 = vshrl.u32 683565275, %v4083
      %v4085 = vshll.u32 683565275, %v4082
      %v4086 = vshrl.u32 2475754826, %v4083
      %v4087 = vor.u32 %v4085, %v4086
      %v4088 = vshll.u32 2475754826, %v4082
      %v4089 = vshrl.u32 2131351028, %v4083
      %v4090 = vor.u32 %v4088, %v4089
      %v4091 = vshll.u32 2131351028, %v4082
      %v4092 = vshrl.u32 2102212464, %v4083
      %v4093 = vor.u32 %v4091, %v4092
      %v4094 = vshll.u32 2102212464, %v4082
      %v4095 = vshrl.u32 920167782, %v4083
      %v4096 = vor.u32 %v4094, %v4095
      %v4097 = vshll.u32 920167782, %v4082
      %v4098 = vshrl.u32 1326507024, %v4083
      %v4099 = vor.u32 %v4097, %v4098
      %vm4100 = vcmp.lt.s32.totalorder %v4081, 1
      %vm4101 = vcmp.lt.s32.totalorder %v4081, 2
      %vm4102 = vcmp.lt.s32.totalorder %v4081, 3
      %vm4103 = vcmp.lt.s32.totalorder %v4081, 4
      %v4104 = vsel %vm4100, %v4084, %v4087
      %v4105 = vsel %vm4103, %v4093, 2102212464
      %v4106 = vsel %vm4102, %v4090, %v4105
      %v4107 = vsel %vm4101, %v4104, %v4106
      %v4108 = vsel %vm4100, %v4087, %v4090
      %v4109 = vsel %vm4103, %v4096, 920167782
      %v4110 = vsel %vm4102, %v4093, %v4109
      %v4111 = vsel %vm4101, %v4108, %v4110
      %v4112 = vsel %vm4100, %v4090, %v4093
      %v4113 = vsel %vm4103, %v4099, 1326507024
      %v4114 = vsel %vm4102, %v4096, %v4113
      %v4115 = vsel %vm4101, %v4112, %v4114
      %v4116 = vshll.u32 %v4076, 8
      %v4117 = vmul.u32.u64.compose %v4116, %v4115
      %v4118 = vextract.low.u32 %v4117
      %v4119 = vextract.high.u32 %v4117
      %v4120 = vmul.u32.u64.compose %v4116, %v4111
      %v4121 = vextract.low.u32 %v4120
      %v4122 = vextract.high.u32 %v4120
      %v4123 = vmul.u32 %v4116, %v4107
      %v4124 = vadd.s32 %v4119, %v4121
      %vm4125 = vc.u32 %v4119, %v4121
      %v4126 = vadd.s32 %v4122, 1
      %v4127 = vsel %vm4125, %v4126, %v4122
      %v4128 = vadd.s32 %v4123, %v4127
      %v4129 = vadd.s32 %v4128, 536870912
      %v4130 = vshrl.u32 %v4129, 30
      %v4131 = vshll.u32 %v4130, 30
      %v4132 = vsub.s32 %v4128, %v4131
      %vm4133 = vcmp.lt.s32.totalorder %v4132, 0
      %v4134 = vsub.s32 0, %v4132
      %v4135 = vsel %vm4133, %v4134, %v4132
      %v4136 = vclz %v4135
      %v4137 = vsub.s32 %v4136, 2
      %vm4138 = vcmp.gt.s32.totalorder 0, %v4137
      %v4139 = vsel %vm4138, 0, %v4137
      %v4140 = vsub.s32 32, %v4139
      %v4141 = vshll.u32 %v4132, %v4139
      %v4142 = vshrl.u32 %v4124, %v4140
      %v4143 = vor.u32 %v4141, %v4142
      %v4144 = vsub.s32 4294967266, %v4139
      %v4145 = vadd.s32 %v4144, 127
      %v4146 = vshll.u32 %v4145, 23
      %v4147 = vor.u32 4788187, %v4146
      %v4148 = vand.u32 2147483647, %v4147
      %v4150 = vcvt.s32.f32 %v4143
      %v4151 = vmul.f32 %v4150, %v4148
      %v4152 = vxor.u32 %v4151, 2147483648
      %v4153 = vsel %vm4070, %v4152, %v4151
      %v4154 = vsub.s32 4, %v4130
      %v4155 = vsel %vm4070, %v4154, %v4130
      %v4156 = vsel %vm4069, %v606, %v4153
      %v4157 = vsel %vm4069, 0, %v4155
      %v4158 = vcosq.f32.pop %v4156
      %v4159 = vsinq.f32.pop %v4156
      %vm4160 = vweird.f32 %v606
      %v4161 = vand.u32 %v4157, 3
      %vm4162 = vcmp.lt.s32.totalorder %v4161, 2
      %vm4163 = vcmp.eq.s32.totalorder %v4161, 0
      %v4164 = vxor.u32 %v4159, 2147483648
      %v4165 = vsel %vm4163, %v4158, %v4164
      %vm4166 = vcmp.eq.s32.totalorder %v4161, 2
      %v4167 = vxor.u32 %v4158, 2147483648
      %v4168 = vsel %vm4166, %v4167, %v4159
      %v4169 = vsel %vm4162, %v4165, %v4168
      %v4170 = vsel %vm4160, nan, %v4169
      %v4171 = vand.u32 2147483647, %v607
      %vm4172 = vcmp.le.f32.partialorder %v4171, 0.7853982
      %vm4173 = vcmp.lt.s32.totalorder %v607, 0
      %v4174 = vand.u32 %v607, 2139095040
      %v4175 = vshrl.u32 %v4174, 23
      %v4176 = vsub.s32 %v4175, 127
      %v4177 = vand.u32 2147483647, %v607
      %v4178 = vand.u32 %v4177, 8388607
      %v4179 = vor.u32 %v4178, 8388608
      %v4180 = vsub.s32 0, %v4179
      %v4181 = vadd.s32 %v4176, 1
      %vm4182 = vcmp.gt.s32.totalorder %v4181, 0
      %v4183 = vsel %vm4182, %v4181, 0
      %v4184 = vshrl.u32 %v4183, 5
      %v4185 = vand.u32 %v4183, 31
      %v4186 = vsub.s32 32, %v4185
      %v4187 = vshrl.u32 683565275, %v4186
      %v4188 = vshll.u32 683565275, %v4185
      %v4189 = vshrl.u32 2475754826, %v4186
      %v4190 = vor.u32 %v4188, %v4189
      %v4191 = vshll.u32 2475754826, %v4185
      %v4192 = vshrl.u32 2131351028, %v4186
      %v4193 = vor.u32 %v4191, %v4192
      %v4194 = vshll.u32 2131351028, %v4185
      %v4195 = vshrl.u32 2102212464, %v4186
      %v4196 = vor.u32 %v4194, %v4195
      %v4197 = vshll.u32 2102212464, %v4185
      %v4198 = vshrl.u32 920167782, %v4186
      %v4199 = vor.u32 %v4197, %v4198
      %v4200 = vshll.u32 920167782, %v4185
      %v4201 = vshrl.u32 1326507024, %v4186
      %v4202 = vor.u32 %v4200, %v4201
      %vm4203 = vcmp.lt.s32.totalorder %v4184, 1
      %vm4204 = vcmp.lt.s32.totalorder %v4184, 2
      %vm4205 = vcmp.lt.s32.totalorder %v4184, 3
      %vm4206 = vcmp.lt.s32.totalorder %v4184, 4
      %v4207 = vsel %vm4203, %v4187, %v4190
      %v4208 = vsel %vm4206, %v4196, 2102212464
      %v4209 = vsel %vm4205, %v4193, %v4208
      %v4210 = vsel %vm4204, %v4207, %v4209
      %v4211 = vsel %vm4203, %v4190, %v4193
      %v4212 = vsel %vm4206, %v4199, 920167782
      %v4213 = vsel %vm4205, %v4196, %v4212
      %v4214 = vsel %vm4204, %v4211, %v4213
      %v4215 = vsel %vm4203, %v4193, %v4196
      %v4216 = vsel %vm4206, %v4202, 1326507024
      %v4217 = vsel %vm4205, %v4199, %v4216
      %v4218 = vsel %vm4204, %v4215, %v4217
      %v4219 = vshll.u32 %v4179, 8
      %v4220 = vmul.u32.u64.compose %v4219, %v4218
      %v4221 = vextract.low.u32 %v4220
      %v4222 = vextract.high.u32 %v4220
      %v4223 = vmul.u32.u64.compose %v4219, %v4214
      %v4224 = vextract.low.u32 %v4223
      %v4225 = vextract.high.u32 %v4223
      %v4226 = vmul.u32 %v4219, %v4210
      %v4227 = vadd.s32 %v4222, %v4224
      %vm4228 = vc.u32 %v4222, %v4224
      %v4229 = vadd.s32 %v4225, 1
      %v4230 = vsel %vm4228, %v4229, %v4225
      %v4231 = vadd.s32 %v4226, %v4230
      %v4232 = vadd.s32 %v4231, 536870912
      %v4233 = vshrl.u32 %v4232, 30
      %v4234 = vshll.u32 %v4233, 30
      %v4235 = vsub.s32 %v4231, %v4234
      %vm4236 = vcmp.lt.s32.totalorder %v4235, 0
      %v4237 = vsub.s32 0, %v4235
      %v4238 = vsel %vm4236, %v4237, %v4235
      %v4239 = vclz %v4238
      %v4240 = vsub.s32 %v4239, 2
      %vm4241 = vcmp.gt.s32.totalorder 0, %v4240
      %v4242 = vsel %vm4241, 0, %v4240
      %v4243 = vsub.s32 32, %v4242
      %v4244 = vshll.u32 %v4235, %v4242
      %v4245 = vshrl.u32 %v4227, %v4243
      %v4246 = vor.u32 %v4244, %v4245
      %v4247 = vsub.s32 4294967266, %v4242
      %v4248 = vadd.s32 %v4247, 127
      %v4249 = vshll.u32 %v4248, 23
      %v4250 = vor.u32 4788187, %v4249
      %v4251 = vand.u32 2147483647, %v4250
      %v4253 = vcvt.s32.f32 %v4246
      %v4254 = vmul.f32 %v4253, %v4251
      %v4255 = vxor.u32 %v4254, 2147483648
      %v4256 = vsel %vm4173, %v4255, %v4254
      %v4257 = vsub.s32 4, %v4233
      %v4258 = vsel %vm4173, %v4257, %v4233
      %v4259 = vsel %vm4172, %v607, %v4256
      %v4260 = vsel %vm4172, 0, %v4258
      %v4261 = vcosq.f32.pop %v4259
      %v4262 = vsinq.f32.pop %v4259
      %vm4263 = vweird.f32 %v607
      %v4264 = vand.u32 %v4260, 3
      %vm4265 = vcmp.lt.s32.totalorder %v4264, 2
      %vm4266 = vcmp.eq.s32.totalorder %v4264, 0
      %v4267 = vxor.u32 %v4262, 2147483648
      %v4268 = vsel %vm4266, %v4261, %v4267
      %vm4269 = vcmp.eq.s32.totalorder %v4264, 2
      %v4270 = vxor.u32 %v4261, 2147483648
      %v4271 = vsel %vm4269, %v4270, %v4262
      %v4272 = vsel %vm4265, %v4268, %v4271
      %v4273 = vsel %vm4263, nan, %v4272
      %v4274 = vand.u32 2147483647, %v608
      %vm4275 = vcmp.le.f32.partialorder %v4274, 0.7853982
      %vm4276 = vcmp.lt.s32.totalorder %v608, 0
      %v4277 = vand.u32 %v608, 2139095040
      %v4278 = vshrl.u32 %v4277, 23
      %v4279 = vsub.s32 %v4278, 127
      %v4280 = vand.u32 2147483647, %v608
      %v4281 = vand.u32 %v4280, 8388607
      %v4282 = vor.u32 %v4281, 8388608
      %v4283 = vsub.s32 0, %v4282
      %v4284 = vadd.s32 %v4279, 1
      %vm4285 = vcmp.gt.s32.totalorder %v4284, 0
      %v4286 = vsel %vm4285, %v4284, 0
      %v4287 = vshrl.u32 %v4286, 5
      %v4288 = vand.u32 %v4286, 31
      %v4289 = vsub.s32 32, %v4288
      %v4290 = vshrl.u32 683565275, %v4289
      %v4291 = vshll.u32 683565275, %v4288
      %v4292 = vshrl.u32 2475754826, %v4289
      %v4293 = vor.u32 %v4291, %v4292
      %v4294 = vshll.u32 2475754826, %v4288
      %v4295 = vshrl.u32 2131351028, %v4289
      %v4296 = vor.u32 %v4294, %v4295
      %v4297 = vshll.u32 2131351028, %v4288
      %v4298 = vshrl.u32 2102212464, %v4289
      %v4299 = vor.u32 %v4297, %v4298
      %v4300 = vshll.u32 2102212464, %v4288
      %v4301 = vshrl.u32 920167782, %v4289
      %v4302 = vor.u32 %v4300, %v4301
      %v4303 = vshll.u32 920167782, %v4288
      %v4304 = vshrl.u32 1326507024, %v4289
      %v4305 = vor.u32 %v4303, %v4304
      %vm4306 = vcmp.lt.s32.totalorder %v4287, 1
      %vm4307 = vcmp.lt.s32.totalorder %v4287, 2
      %vm4308 = vcmp.lt.s32.totalorder %v4287, 3
      %vm4309 = vcmp.lt.s32.totalorder %v4287, 4
      %v4310 = vsel %vm4306, %v4290, %v4293
      %v4311 = vsel %vm4309, %v4299, 2102212464
      %v4312 = vsel %vm4308, %v4296, %v4311
      %v4313 = vsel %vm4307, %v4310, %v4312
      %v4314 = vsel %vm4306, %v4293, %v4296
      %v4315 = vsel %vm4309, %v4302, 920167782
      %v4316 = vsel %vm4308, %v4299, %v4315
      %v4317 = vsel %vm4307, %v4314, %v4316
      %v4318 = vsel %vm4306, %v4296, %v4299
      %v4319 = vsel %vm4309, %v4305, 1326507024
      %v4320 = vsel %vm4308, %v4302, %v4319
      %v4321 = vsel %vm4307, %v4318, %v4320
      %v4322 = vshll.u32 %v4282, 8
      %v4323 = vmul.u32.u64.compose %v4322, %v4321
      %v4324 = vextract.low.u32 %v4323
      %v4325 = vextract.high.u32 %v4323
      %v4326 = vmul.u32.u64.compose %v4322, %v4317
      %v4327 = vextract.low.u32 %v4326
      %v4328 = vextract.high.u32 %v4326
      %v4329 = vmul.u32 %v4322, %v4313
      %v4330 = vadd.s32 %v4325, %v4327
      %vm4331 = vc.u32 %v4325, %v4327
      %v4332 = vadd.s32 %v4328, 1
      %v4333 = vsel %vm4331, %v4332, %v4328
      %v4334 = vadd.s32 %v4329, %v4333
      %v4335 = vadd.s32 %v4334, 536870912
      %v4336 = vshrl.u32 %v4335, 30
      %v4337 = vshll.u32 %v4336, 30
      %v4338 = vsub.s32 %v4334, %v4337
      %vm4339 = vcmp.lt.s32.totalorder %v4338, 0
      %v4340 = vsub.s32 0, %v4338
      %v4341 = vsel %vm4339, %v4340, %v4338
      %v4342 = vclz %v4341
      %v4343 = vsub.s32 %v4342, 2
      %vm4344 = vcmp.gt.s32.totalorder 0, %v4343
      %v4345 = vsel %vm4344, 0, %v4343
      %v4346 = vsub.s32 32, %v4345
      %v4347 = vshll.u32 %v4338, %v4345
      %v4348 = vshrl.u32 %v4330, %v4346
      %v4349 = vor.u32 %v4347, %v4348
      %v4350 = vsub.s32 4294967266, %v4345
      %v4351 = vadd.s32 %v4350, 127
      %v4352 = vshll.u32 %v4351, 23
      %v4353 = vor.u32 4788187, %v4352
      %v4354 = vand.u32 2147483647, %v4353
      %v4356 = vcvt.s32.f32 %v4349
      %v4357 = vmul.f32 %v4356, %v4354
      %v4358 = vxor.u32 %v4357, 2147483648
      %v4359 = vsel %vm4276, %v4358, %v4357
      %v4360 = vsub.s32 4, %v4336
      %v4361 = vsel %vm4276, %v4360, %v4336
      %v4362 = vsel %vm4275, %v608, %v4359
      %v4363 = vsel %vm4275, 0, %v4361
      %v4364 = vcosq.f32.pop %v4362
      %v4365 = vsinq.f32.pop %v4362
      %vm4366 = vweird.f32 %v608
      %v4367 = vand.u32 %v4363, 3
      %vm4368 = vcmp.lt.s32.totalorder %v4367, 2
      %vm4369 = vcmp.eq.s32.totalorder %v4367, 0
      %v4370 = vxor.u32 %v4365, 2147483648
      %v4371 = vsel %vm4369, %v4364, %v4370
      %vm4372 = vcmp.eq.s32.totalorder %v4367, 2
      %v4373 = vxor.u32 %v4364, 2147483648
      %v4374 = vsel %vm4372, %v4373, %v4365
      %v4375 = vsel %vm4368, %v4371, %v4374
      %v4376 = vsel %vm4366, nan, %v4375
      %v4377 = vand.u32 2147483647, %v609
      %vm4378 = vcmp.le.f32.partialorder %v4377, 0.7853982
      %vm4379 = vcmp.lt.s32.totalorder %v609, 0
      %v4380 = vand.u32 %v609, 2139095040
      %v4381 = vshrl.u32 %v4380, 23
      %v4382 = vsub.s32 %v4381, 127
      %v4383 = vand.u32 2147483647, %v609
      %v4384 = vand.u32 %v4383, 8388607
      %v4385 = vor.u32 %v4384, 8388608
      %v4386 = vsub.s32 0, %v4385
      %v4387 = vadd.s32 %v4382, 1
      %vm4388 = vcmp.gt.s32.totalorder %v4387, 0
      %v4389 = vsel %vm4388, %v4387, 0
      %v4390 = vshrl.u32 %v4389, 5
      %v4391 = vand.u32 %v4389, 31
      %v4392 = vsub.s32 32, %v4391
      %v4393 = vshrl.u32 683565275, %v4392
      %v4394 = vshll.u32 683565275, %v4391
      %v4395 = vshrl.u32 2475754826, %v4392
      %v4396 = vor.u32 %v4394, %v4395
      %v4397 = vshll.u32 2475754826, %v4391
      %v4398 = vshrl.u32 2131351028, %v4392
      %v4399 = vor.u32 %v4397, %v4398
      %v4400 = vshll.u32 2131351028, %v4391
      %v4401 = vshrl.u32 2102212464, %v4392
      %v4402 = vor.u32 %v4400, %v4401
      %v4403 = vshll.u32 2102212464, %v4391
      %v4404 = vshrl.u32 920167782, %v4392
      %v4405 = vor.u32 %v4403, %v4404
      %v4406 = vshll.u32 920167782, %v4391
      %v4407 = vshrl.u32 1326507024, %v4392
      %v4408 = vor.u32 %v4406, %v4407
      %vm4409 = vcmp.lt.s32.totalorder %v4390, 1
      %vm4410 = vcmp.lt.s32.totalorder %v4390, 2
      %vm4411 = vcmp.lt.s32.totalorder %v4390, 3
      %vm4412 = vcmp.lt.s32.totalorder %v4390, 4
      %v4413 = vsel %vm4409, %v4393, %v4396
      %v4414 = vsel %vm4412, %v4402, 2102212464
      %v4415 = vsel %vm4411, %v4399, %v4414
      %v4416 = vsel %vm4410, %v4413, %v4415
      %v4417 = vsel %vm4409, %v4396, %v4399
      %v4418 = vsel %vm4412, %v4405, 920167782
      %v4419 = vsel %vm4411, %v4402, %v4418
      %v4420 = vsel %vm4410, %v4417, %v4419
      %v4421 = vsel %vm4409, %v4399, %v4402
      %v4422 = vsel %vm4412, %v4408, 1326507024
      %v4423 = vsel %vm4411, %v4405, %v4422
      %v4424 = vsel %vm4410, %v4421, %v4423
      %v4425 = vshll.u32 %v4385, 8
      %v4426 = vmul.u32.u64.compose %v4425, %v4424
      %v4427 = vextract.low.u32 %v4426
      %v4428 = vextract.high.u32 %v4426
      %v4429 = vmul.u32.u64.compose %v4425, %v4420
      %v4430 = vextract.low.u32 %v4429
      %v4431 = vextract.high.u32 %v4429
      %v4432 = vmul.u32 %v4425, %v4416
      %v4433 = vadd.s32 %v4428, %v4430
      %vm4434 = vc.u32 %v4428, %v4430
      %v4435 = vadd.s32 %v4431, 1
      %v4436 = vsel %vm4434, %v4435, %v4431
      %v4437 = vadd.s32 %v4432, %v4436
      %v4438 = vadd.s32 %v4437, 536870912
      %v4439 = vshrl.u32 %v4438, 30
      %v4440 = vshll.u32 %v4439, 30
      %v4441 = vsub.s32 %v4437, %v4440
      %vm4442 = vcmp.lt.s32.totalorder %v4441, 0
      %v4443 = vsub.s32 0, %v4441
      %v4444 = vsel %vm4442, %v4443, %v4441
      %v4445 = vclz %v4444
      %v4446 = vsub.s32 %v4445, 2
      %vm4447 = vcmp.gt.s32.totalorder 0, %v4446
      %v4448 = vsel %vm4447, 0, %v4446
      %v4449 = vsub.s32 32, %v4448
      %v4450 = vshll.u32 %v4441, %v4448
      %v4451 = vshrl.u32 %v4433, %v4449
      %v4452 = vor.u32 %v4450, %v4451
      %v4453 = vsub.s32 4294967266, %v4448
      %v4454 = vadd.s32 %v4453, 127
      %v4455 = vshll.u32 %v4454, 23
      %v4456 = vor.u32 4788187, %v4455
      %v4457 = vand.u32 2147483647, %v4456
      %v4459 = vcvt.s32.f32 %v4452
      %v4460 = vmul.f32 %v4459, %v4457
      %v4461 = vxor.u32 %v4460, 2147483648
      %v4462 = vsel %vm4379, %v4461, %v4460
      %v4463 = vsub.s32 4, %v4439
      %v4464 = vsel %vm4379, %v4463, %v4439
      %v4465 = vsel %vm4378, %v609, %v4462
      %v4466 = vsel %vm4378, 0, %v4464
      %v4467 = vcosq.f32.pop %v4465
      %v4468 = vsinq.f32.pop %v4465
      %vm4469 = vweird.f32 %v609
      %v4470 = vand.u32 %v4466, 3
      %vm4471 = vcmp.lt.s32.totalorder %v4470, 2
      %vm4472 = vcmp.eq.s32.totalorder %v4470, 0
      %v4473 = vxor.u32 %v4468, 2147483648
      %v4474 = vsel %vm4472, %v4467, %v4473
      %vm4475 = vcmp.eq.s32.totalorder %v4470, 2
      %v4476 = vxor.u32 %v4467, 2147483648
      %v4477 = vsel %vm4475, %v4476, %v4468
      %v4478 = vsel %vm4471, %v4474, %v4477
      %v4479 = vsel %vm4469, nan, %v4478
      %v4480 = vand.u32 2147483647, %v610
      %vm4481 = vcmp.le.f32.partialorder %v4480, 0.7853982
      %vm4482 = vcmp.lt.s32.totalorder %v610, 0
      %v4483 = vand.u32 %v610, 2139095040
      %v4484 = vshrl.u32 %v4483, 23
      %v4485 = vsub.s32 %v4484, 127
      %v4486 = vand.u32 2147483647, %v610
      %v4487 = vand.u32 %v4486, 8388607
      %v4488 = vor.u32 %v4487, 8388608
      %v4489 = vsub.s32 0, %v4488
      %v4490 = vadd.s32 %v4485, 1
      %vm4491 = vcmp.gt.s32.totalorder %v4490, 0
      %v4492 = vsel %vm4491, %v4490, 0
      %v4493 = vshrl.u32 %v4492, 5
      %v4494 = vand.u32 %v4492, 31
      %v4495 = vsub.s32 32, %v4494
      %v4496 = vshrl.u32 683565275, %v4495
      %v4497 = vshll.u32 683565275, %v4494
      %v4498 = vshrl.u32 2475754826, %v4495
      %v4499 = vor.u32 %v4497, %v4498
      %v4500 = vshll.u32 2475754826, %v4494
      %v4501 = vshrl.u32 2131351028, %v4495
      %v4502 = vor.u32 %v4500, %v4501
      %v4503 = vshll.u32 2131351028, %v4494
      %v4504 = vshrl.u32 2102212464, %v4495
      %v4505 = vor.u32 %v4503, %v4504
      %v4506 = vshll.u32 2102212464, %v4494
      %v4507 = vshrl.u32 920167782, %v4495
      %v4508 = vor.u32 %v4506, %v4507
      %v4509 = vshll.u32 920167782, %v4494
      %v4510 = vshrl.u32 1326507024, %v4495
      %v4511 = vor.u32 %v4509, %v4510
      %vm4512 = vcmp.lt.s32.totalorder %v4493, 1
      %vm4513 = vcmp.lt.s32.totalorder %v4493, 2
      %vm4514 = vcmp.lt.s32.totalorder %v4493, 3
      %vm4515 = vcmp.lt.s32.totalorder %v4493, 4
      %v4516 = vsel %vm4512, %v4496, %v4499
      %v4517 = vsel %vm4515, %v4505, 2102212464
      %v4518 = vsel %vm4514, %v4502, %v4517
      %v4519 = vsel %vm4513, %v4516, %v4518
      %v4520 = vsel %vm4512, %v4499, %v4502
      %v4521 = vsel %vm4515, %v4508, 920167782
      %v4522 = vsel %vm4514, %v4505, %v4521
      %v4523 = vsel %vm4513, %v4520, %v4522
      %v4524 = vsel %vm4512, %v4502, %v4505
      %v4525 = vsel %vm4515, %v4511, 1326507024
      %v4526 = vsel %vm4514, %v4508, %v4525
      %v4527 = vsel %vm4513, %v4524, %v4526
      %v4528 = vshll.u32 %v4488, 8
      %v4529 = vmul.u32.u64.compose %v4528, %v4527
      %v4530 = vextract.low.u32 %v4529
      %v4531 = vextract.high.u32 %v4529
      %v4532 = vmul.u32.u64.compose %v4528, %v4523
      %v4533 = vextract.low.u32 %v4532
      %v4534 = vextract.high.u32 %v4532
      %v4535 = vmul.u32 %v4528, %v4519
      %v4536 = vadd.s32 %v4531, %v4533
      %vm4537 = vc.u32 %v4531, %v4533
      %v4538 = vadd.s32 %v4534, 1
      %v4539 = vsel %vm4537, %v4538, %v4534
      %v4540 = vadd.s32 %v4535, %v4539
      %v4541 = vadd.s32 %v4540, 536870912
      %v4542 = vshrl.u32 %v4541, 30
      %v4543 = vshll.u32 %v4542, 30
      %v4544 = vsub.s32 %v4540, %v4543
      %vm4545 = vcmp.lt.s32.totalorder %v4544, 0
      %v4546 = vsub.s32 0, %v4544
      %v4547 = vsel %vm4545, %v4546, %v4544
      %v4548 = vclz %v4547
      %v4549 = vsub.s32 %v4548, 2
      %vm4550 = vcmp.gt.s32.totalorder 0, %v4549
      %v4551 = vsel %vm4550, 0, %v4549
      %v4552 = vsub.s32 32, %v4551
      %v4553 = vshll.u32 %v4544, %v4551
      %v4554 = vshrl.u32 %v4536, %v4552
      %v4555 = vor.u32 %v4553, %v4554
      %v4556 = vsub.s32 4294967266, %v4551
      %v4557 = vadd.s32 %v4556, 127
      %v4558 = vshll.u32 %v4557, 23
      %v4559 = vor.u32 4788187, %v4558
      %v4560 = vand.u32 2147483647, %v4559
      %v4562 = vcvt.s32.f32 %v4555
      %v4563 = vmul.f32 %v4562, %v4560
      %v4564 = vxor.u32 %v4563, 2147483648
      %v4565 = vsel %vm4482, %v4564, %v4563
      %v4566 = vsub.s32 4, %v4542
      %v4567 = vsel %vm4482, %v4566, %v4542
      %v4568 = vsel %vm4481, %v610, %v4565
      %v4569 = vsel %vm4481, 0, %v4567
      %v4570 = vcosq.f32.pop %v4568
      %v4571 = vsinq.f32.pop %v4568
      %vm4572 = vweird.f32 %v610
      %v4573 = vand.u32 %v4569, 3
      %vm4574 = vcmp.lt.s32.totalorder %v4573, 2
      %vm4575 = vcmp.eq.s32.totalorder %v4573, 0
      %v4576 = vxor.u32 %v4571, 2147483648
      %v4577 = vsel %vm4575, %v4570, %v4576
      %vm4578 = vcmp.eq.s32.totalorder %v4573, 2
      %v4579 = vxor.u32 %v4570, 2147483648
      %v4580 = vsel %vm4578, %v4579, %v4571
      %v4581 = vsel %vm4574, %v4577, %v4580
      %v4582 = vsel %vm4572, nan, %v4581
      %v4583 = vand.u32 2147483647, %v611
      %vm4584 = vcmp.le.f32.partialorder %v4583, 0.7853982
      %vm4585 = vcmp.lt.s32.totalorder %v611, 0
      %v4586 = vand.u32 %v611, 2139095040
      %v4587 = vshrl.u32 %v4586, 23
      %v4588 = vsub.s32 %v4587, 127
      %v4589 = vand.u32 2147483647, %v611
      %v4590 = vand.u32 %v4589, 8388607
      %v4591 = vor.u32 %v4590, 8388608
      %v4592 = vsub.s32 0, %v4591
      %v4593 = vadd.s32 %v4588, 1
      %vm4594 = vcmp.gt.s32.totalorder %v4593, 0
      %v4595 = vsel %vm4594, %v4593, 0
      %v4596 = vshrl.u32 %v4595, 5
      %v4597 = vand.u32 %v4595, 31
      %v4598 = vsub.s32 32, %v4597
      %v4599 = vshrl.u32 683565275, %v4598
      %v4600 = vshll.u32 683565275, %v4597
      %v4601 = vshrl.u32 2475754826, %v4598
      %v4602 = vor.u32 %v4600, %v4601
      %v4603 = vshll.u32 2475754826, %v4597
      %v4604 = vshrl.u32 2131351028, %v4598
      %v4605 = vor.u32 %v4603, %v4604
      %v4606 = vshll.u32 2131351028, %v4597
      %v4607 = vshrl.u32 2102212464, %v4598
      %v4608 = vor.u32 %v4606, %v4607
      %v4609 = vshll.u32 2102212464, %v4597
      %v4610 = vshrl.u32 920167782, %v4598
      %v4611 = vor.u32 %v4609, %v4610
      %v4612 = vshll.u32 920167782, %v4597
      %v4613 = vshrl.u32 1326507024, %v4598
      %v4614 = vor.u32 %v4612, %v4613
      %vm4615 = vcmp.lt.s32.totalorder %v4596, 1
      %vm4616 = vcmp.lt.s32.totalorder %v4596, 2
      %vm4617 = vcmp.lt.s32.totalorder %v4596, 3
      %vm4618 = vcmp.lt.s32.totalorder %v4596, 4
      %v4619 = vsel %vm4615, %v4599, %v4602
      %v4620 = vsel %vm4618, %v4608, 2102212464
      %v4621 = vsel %vm4617, %v4605, %v4620
      %v4622 = vsel %vm4616, %v4619, %v4621
      %v4623 = vsel %vm4615, %v4602, %v4605
      %v4624 = vsel %vm4618, %v4611, 920167782
      %v4625 = vsel %vm4617, %v4608, %v4624
      %v4626 = vsel %vm4616, %v4623, %v4625
      %v4627 = vsel %vm4615, %v4605, %v4608
      %v4628 = vsel %vm4618, %v4614, 1326507024
      %v4629 = vsel %vm4617, %v4611, %v4628
      %v4630 = vsel %vm4616, %v4627, %v4629
      %v4631 = vshll.u32 %v4591, 8
      %v4632 = vmul.u32.u64.compose %v4631, %v4630
      %v4633 = vextract.low.u32 %v4632
      %v4634 = vextract.high.u32 %v4632
      %v4635 = vmul.u32.u64.compose %v4631, %v4626
      %v4636 = vextract.low.u32 %v4635
      %v4637 = vextract.high.u32 %v4635
      %v4638 = vmul.u32 %v4631, %v4622
      %v4639 = vadd.s32 %v4634, %v4636
      %vm4640 = vc.u32 %v4634, %v4636
      %v4641 = vadd.s32 %v4637, 1
      %v4642 = vsel %vm4640, %v4641, %v4637
      %v4643 = vadd.s32 %v4638, %v4642
      %v4644 = vadd.s32 %v4643, 536870912
      %v4645 = vshrl.u32 %v4644, 30
      %v4646 = vshll.u32 %v4645, 30
      %v4647 = vsub.s32 %v4643, %v4646
      %vm4648 = vcmp.lt.s32.totalorder %v4647, 0
      %v4649 = vsub.s32 0, %v4647
      %v4650 = vsel %vm4648, %v4649, %v4647
      %v4651 = vclz %v4650
      %v4652 = vsub.s32 %v4651, 2
      %vm4653 = vcmp.gt.s32.totalorder 0, %v4652
      %v4654 = vsel %vm4653, 0, %v4652
      %v4655 = vsub.s32 32, %v4654
      %v4656 = vshll.u32 %v4647, %v4654
      %v4657 = vshrl.u32 %v4639, %v4655
      %v4658 = vor.u32 %v4656, %v4657
      %v4659 = vsub.s32 4294967266, %v4654
      %v4660 = vadd.s32 %v4659, 127
      %v4661 = vshll.u32 %v4660, 23
      %v4662 = vor.u32 4788187, %v4661
      %v4663 = vand.u32 2147483647, %v4662
      %v4665 = vcvt.s32.f32 %v4658
      %v4666 = vmul.f32 %v4665, %v4663
      %v4667 = vxor.u32 %v4666, 2147483648
      %v4668 = vsel %vm4585, %v4667, %v4666
      %v4669 = vsub.s32 4, %v4645
      %v4670 = vsel %vm4585, %v4669, %v4645
      %v4671 = vsel %vm4584, %v611, %v4668
      %v4672 = vsel %vm4584, 0, %v4670
      %v4673 = vcosq.f32.pop %v4671
      %v4674 = vsinq.f32.pop %v4671
      %vm4675 = vweird.f32 %v611
      %v4676 = vand.u32 %v4672, 3
      %vm4677 = vcmp.lt.s32.totalorder %v4676, 2
      %vm4678 = vcmp.eq.s32.totalorder %v4676, 0
      %v4679 = vxor.u32 %v4674, 2147483648
      %v4680 = vsel %vm4678, %v4673, %v4679
      %vm4681 = vcmp.eq.s32.totalorder %v4676, 2
      %v4682 = vxor.u32 %v4673, 2147483648
      %v4683 = vsel %vm4681, %v4682, %v4674
      %v4684 = vsel %vm4677, %v4680, %v4683
      %v4685 = vsel %vm4675, nan, %v4684
      %v4686 = vand.u32 2147483647, %v612
      %vm4687 = vcmp.le.f32.partialorder %v4686, 0.7853982
      %vm4688 = vcmp.lt.s32.totalorder %v612, 0
      %v4689 = vand.u32 %v612, 2139095040
      %v4690 = vshrl.u32 %v4689, 23
      %v4691 = vsub.s32 %v4690, 127
      %v4692 = vand.u32 2147483647, %v612
      %v4693 = vand.u32 %v4692, 8388607
      %v4694 = vor.u32 %v4693, 8388608
      %v4695 = vsub.s32 0, %v4694
      %v4696 = vadd.s32 %v4691, 1
      %vm4697 = vcmp.gt.s32.totalorder %v4696, 0
      %v4698 = vsel %vm4697, %v4696, 0
      %v4699 = vshrl.u32 %v4698, 5
      %v4700 = vand.u32 %v4698, 31
      %v4701 = vsub.s32 32, %v4700
      %v4702 = vshrl.u32 683565275, %v4701
      %v4703 = vshll.u32 683565275, %v4700
      %v4704 = vshrl.u32 2475754826, %v4701
      %v4705 = vor.u32 %v4703, %v4704
      %v4706 = vshll.u32 2475754826, %v4700
      %v4707 = vshrl.u32 2131351028, %v4701
      %v4708 = vor.u32 %v4706, %v4707
      %v4709 = vshll.u32 2131351028, %v4700
      %v4710 = vshrl.u32 2102212464, %v4701
      %v4711 = vor.u32 %v4709, %v4710
      %v4712 = vshll.u32 2102212464, %v4700
      %v4713 = vshrl.u32 920167782, %v4701
      %v4714 = vor.u32 %v4712, %v4713
      %v4715 = vshll.u32 920167782, %v4700
      %v4716 = vshrl.u32 1326507024, %v4701
      %v4717 = vor.u32 %v4715, %v4716
      %vm4718 = vcmp.lt.s32.totalorder %v4699, 1
      %vm4719 = vcmp.lt.s32.totalorder %v4699, 2
      %vm4720 = vcmp.lt.s32.totalorder %v4699, 3
      %vm4721 = vcmp.lt.s32.totalorder %v4699, 4
      %v4722 = vsel %vm4718, %v4702, %v4705
      %v4723 = vsel %vm4721, %v4711, 2102212464
      %v4724 = vsel %vm4720, %v4708, %v4723
      %v4725 = vsel %vm4719, %v4722, %v4724
      %v4726 = vsel %vm4718, %v4705, %v4708
      %v4727 = vsel %vm4721, %v4714, 920167782
      %v4728 = vsel %vm4720, %v4711, %v4727
      %v4729 = vsel %vm4719, %v4726, %v4728
      %v4730 = vsel %vm4718, %v4708, %v4711
      %v4731 = vsel %vm4721, %v4717, 1326507024
      %v4732 = vsel %vm4720, %v4714, %v4731
      %v4733 = vsel %vm4719, %v4730, %v4732
      %v4734 = vshll.u32 %v4694, 8
      %v4735 = vmul.u32.u64.compose %v4734, %v4733
      %v4736 = vextract.low.u32 %v4735
      %v4737 = vextract.high.u32 %v4735
      %v4738 = vmul.u32.u64.compose %v4734, %v4729
      %v4739 = vextract.low.u32 %v4738
      %v4740 = vextract.high.u32 %v4738
      %v4741 = vmul.u32 %v4734, %v4725
      %v4742 = vadd.s32 %v4737, %v4739
      %vm4743 = vc.u32 %v4737, %v4739
      %v4744 = vadd.s32 %v4740, 1
      %v4745 = vsel %vm4743, %v4744, %v4740
      %v4746 = vadd.s32 %v4741, %v4745
      %v4747 = vadd.s32 %v4746, 536870912
      %v4748 = vshrl.u32 %v4747, 30
      %v4749 = vshll.u32 %v4748, 30
      %v4750 = vsub.s32 %v4746, %v4749
      %vm4751 = vcmp.lt.s32.totalorder %v4750, 0
      %v4752 = vsub.s32 0, %v4750
      %v4753 = vsel %vm4751, %v4752, %v4750
      %v4754 = vclz %v4753
      %v4755 = vsub.s32 %v4754, 2
      %vm4756 = vcmp.gt.s32.totalorder 0, %v4755
      %v4757 = vsel %vm4756, 0, %v4755
      %v4758 = vsub.s32 32, %v4757
      %v4759 = vshll.u32 %v4750, %v4757
      %v4760 = vshrl.u32 %v4742, %v4758
      %v4761 = vor.u32 %v4759, %v4760
      %v4762 = vsub.s32 4294967266, %v4757
      %v4763 = vadd.s32 %v4762, 127
      %v4764 = vshll.u32 %v4763, 23
      %v4765 = vor.u32 4788187, %v4764
      %v4766 = vand.u32 2147483647, %v4765
      %v4768 = vcvt.s32.f32 %v4761
      %v4769 = vmul.f32 %v4768, %v4766
      %v4770 = vxor.u32 %v4769, 2147483648
      %v4771 = vsel %vm4688, %v4770, %v4769
      %v4772 = vsub.s32 4, %v4748
      %v4773 = vsel %vm4688, %v4772, %v4748
      %v4774 = vsel %vm4687, %v612, %v4771
      %v4775 = vsel %vm4687, 0, %v4773
      %v4776 = vcosq.f32.pop %v4774
      %v4777 = vsinq.f32.pop %v4774
      %vm4778 = vweird.f32 %v612
      %v4779 = vand.u32 %v4775, 3
      %vm4780 = vcmp.lt.s32.totalorder %v4779, 2
      %vm4781 = vcmp.eq.s32.totalorder %v4779, 0
      %v4782 = vxor.u32 %v4777, 2147483648
      %v4783 = vsel %vm4781, %v4776, %v4782
      %vm4784 = vcmp.eq.s32.totalorder %v4779, 2
      %v4785 = vxor.u32 %v4776, 2147483648
      %v4786 = vsel %vm4784, %v4785, %v4777
      %v4787 = vsel %vm4780, %v4783, %v4786
      %v4788 = vsel %vm4778, nan, %v4787
      %v4789 = vand.u32 2147483647, %v613
      %vm4790 = vcmp.le.f32.partialorder %v4789, 0.7853982
      %vm4791 = vcmp.lt.s32.totalorder %v613, 0
      %v4792 = vand.u32 %v613, 2139095040
      %v4793 = vshrl.u32 %v4792, 23
      %v4794 = vsub.s32 %v4793, 127
      %v4795 = vand.u32 2147483647, %v613
      %v4796 = vand.u32 %v4795, 8388607
      %v4797 = vor.u32 %v4796, 8388608
      %v4798 = vsub.s32 0, %v4797
      %v4799 = vadd.s32 %v4794, 1
      %vm4800 = vcmp.gt.s32.totalorder %v4799, 0
      %v4801 = vsel %vm4800, %v4799, 0
      %v4802 = vshrl.u32 %v4801, 5
      %v4803 = vand.u32 %v4801, 31
      %v4804 = vsub.s32 32, %v4803
      %v4805 = vshrl.u32 683565275, %v4804
      %v4806 = vshll.u32 683565275, %v4803
      %v4807 = vshrl.u32 2475754826, %v4804
      %v4808 = vor.u32 %v4806, %v4807
      %v4809 = vshll.u32 2475754826, %v4803
      %v4810 = vshrl.u32 2131351028, %v4804
      %v4811 = vor.u32 %v4809, %v4810
      %v4812 = vshll.u32 2131351028, %v4803
      %v4813 = vshrl.u32 2102212464, %v4804
      %v4814 = vor.u32 %v4812, %v4813
      %v4815 = vshll.u32 2102212464, %v4803
      %v4816 = vshrl.u32 920167782, %v4804
      %v4817 = vor.u32 %v4815, %v4816
      %v4818 = vshll.u32 920167782, %v4803
      %v4819 = vshrl.u32 1326507024, %v4804
      %v4820 = vor.u32 %v4818, %v4819
      %vm4821 = vcmp.lt.s32.totalorder %v4802, 1
      %vm4822 = vcmp.lt.s32.totalorder %v4802, 2
      %vm4823 = vcmp.lt.s32.totalorder %v4802, 3
      %vm4824 = vcmp.lt.s32.totalorder %v4802, 4
      %v4825 = vsel %vm4821, %v4805, %v4808
      %v4826 = vsel %vm4824, %v4814, 2102212464
      %v4827 = vsel %vm4823, %v4811, %v4826
      %v4828 = vsel %vm4822, %v4825, %v4827
      %v4829 = vsel %vm4821, %v4808, %v4811
      %v4830 = vsel %vm4824, %v4817, 920167782
      %v4831 = vsel %vm4823, %v4814, %v4830
      %v4832 = vsel %vm4822, %v4829, %v4831
      %v4833 = vsel %vm4821, %v4811, %v4814
      %v4834 = vsel %vm4824, %v4820, 1326507024
      %v4835 = vsel %vm4823, %v4817, %v4834
      %v4836 = vsel %vm4822, %v4833, %v4835
      %v4837 = vshll.u32 %v4797, 8
      %v4838 = vmul.u32.u64.compose %v4837, %v4836
      %v4839 = vextract.low.u32 %v4838
      %v4840 = vextract.high.u32 %v4838
      %v4841 = vmul.u32.u64.compose %v4837, %v4832
      %v4842 = vextract.low.u32 %v4841
      %v4843 = vextract.high.u32 %v4841
      %v4844 = vmul.u32 %v4837, %v4828
      %v4845 = vadd.s32 %v4840, %v4842
      %vm4846 = vc.u32 %v4840, %v4842
      %v4847 = vadd.s32 %v4843, 1
      %v4848 = vsel %vm4846, %v4847, %v4843
      %v4849 = vadd.s32 %v4844, %v4848
      %v4850 = vadd.s32 %v4849, 536870912
      %v4851 = vshrl.u32 %v4850, 30
      %v4852 = vshll.u32 %v4851, 30
      %v4853 = vsub.s32 %v4849, %v4852
      %vm4854 = vcmp.lt.s32.totalorder %v4853, 0
      %v4855 = vsub.s32 0, %v4853
      %v4856 = vsel %vm4854, %v4855, %v4853
      %v4857 = vclz %v4856
      %v4858 = vsub.s32 %v4857, 2
      %vm4859 = vcmp.gt.s32.totalorder 0, %v4858
      %v4860 = vsel %vm4859, 0, %v4858
      %v4861 = vsub.s32 32, %v4860
      %v4862 = vshll.u32 %v4853, %v4860
      %v4863 = vshrl.u32 %v4845, %v4861
      %v4864 = vor.u32 %v4862, %v4863
      %v4865 = vsub.s32 4294967266, %v4860
      %v4866 = vadd.s32 %v4865, 127
      %v4867 = vshll.u32 %v4866, 23
      %v4868 = vor.u32 4788187, %v4867
      %v4869 = vand.u32 2147483647, %v4868
      %v4871 = vcvt.s32.f32 %v4864
      %v4872 = vmul.f32 %v4871, %v4869
      %v4873 = vxor.u32 %v4872, 2147483648
      %v4874 = vsel %vm4791, %v4873, %v4872
      %v4875 = vsub.s32 4, %v4851
      %v4876 = vsel %vm4791, %v4875, %v4851
      %v4877 = vsel %vm4790, %v613, %v4874
      %v4878 = vsel %vm4790, 0, %v4876
      %v4879 = vcosq.f32.pop %v4877
      %v4880 = vsinq.f32.pop %v4877
      %vm4881 = vweird.f32 %v613
      %v4882 = vand.u32 %v4878, 3
      %vm4883 = vcmp.lt.s32.totalorder %v4882, 2
      %vm4884 = vcmp.eq.s32.totalorder %v4882, 0
      %v4885 = vxor.u32 %v4880, 2147483648
      %v4886 = vsel %vm4884, %v4879, %v4885
      %vm4887 = vcmp.eq.s32.totalorder %v4882, 2
      %v4888 = vxor.u32 %v4879, 2147483648
      %v4889 = vsel %vm4887, %v4888, %v4880
      %v4890 = vsel %vm4883, %v4886, %v4889
      %v4891 = vsel %vm4881, nan, %v4890
      %v4892 = vand.u32 2147483647, %v614
      %vm4893 = vcmp.le.f32.partialorder %v4892, 0.7853982
      %vm4894 = vcmp.lt.s32.totalorder %v614, 0
      %v4895 = vand.u32 %v614, 2139095040
      %v4896 = vshrl.u32 %v4895, 23
      %v4897 = vsub.s32 %v4896, 127
      %v4898 = vand.u32 2147483647, %v614
      %v4899 = vand.u32 %v4898, 8388607
      %v4900 = vor.u32 %v4899, 8388608
      %v4901 = vsub.s32 0, %v4900
      %v4902 = vadd.s32 %v4897, 1
      %vm4903 = vcmp.gt.s32.totalorder %v4902, 0
      %v4904 = vsel %vm4903, %v4902, 0
      %v4905 = vshrl.u32 %v4904, 5
      %v4906 = vand.u32 %v4904, 31
      %v4907 = vsub.s32 32, %v4906
      %v4908 = vshrl.u32 683565275, %v4907
      %v4909 = vshll.u32 683565275, %v4906
      %v4910 = vshrl.u32 2475754826, %v4907
      %v4911 = vor.u32 %v4909, %v4910
      %v4912 = vshll.u32 2475754826, %v4906
      %v4913 = vshrl.u32 2131351028, %v4907
      %v4914 = vor.u32 %v4912, %v4913
      %v4915 = vshll.u32 2131351028, %v4906
      %v4916 = vshrl.u32 2102212464, %v4907
      %v4917 = vor.u32 %v4915, %v4916
      %v4918 = vshll.u32 2102212464, %v4906
      %v4919 = vshrl.u32 920167782, %v4907
      %v4920 = vor.u32 %v4918, %v4919
      %v4921 = vshll.u32 920167782, %v4906
      %v4922 = vshrl.u32 1326507024, %v4907
      %v4923 = vor.u32 %v4921, %v4922
      %vm4924 = vcmp.lt.s32.totalorder %v4905, 1
      %vm4925 = vcmp.lt.s32.totalorder %v4905, 2
      %vm4926 = vcmp.lt.s32.totalorder %v4905, 3
      %vm4927 = vcmp.lt.s32.totalorder %v4905, 4
      %v4928 = vsel %vm4924, %v4908, %v4911
      %v4929 = vsel %vm4927, %v4917, 2102212464
      %v4930 = vsel %vm4926, %v4914, %v4929
      %v4931 = vsel %vm4925, %v4928, %v4930
      %v4932 = vsel %vm4924, %v4911, %v4914
      %v4933 = vsel %vm4927, %v4920, 920167782
      %v4934 = vsel %vm4926, %v4917, %v4933
      %v4935 = vsel %vm4925, %v4932, %v4934
      %v4936 = vsel %vm4924, %v4914, %v4917
      %v4937 = vsel %vm4927, %v4923, 1326507024
      %v4938 = vsel %vm4926, %v4920, %v4937
      %v4939 = vsel %vm4925, %v4936, %v4938
      %v4940 = vshll.u32 %v4900, 8
      %v4941 = vmul.u32.u64.compose %v4940, %v4939
      %v4942 = vextract.low.u32 %v4941
      %v4943 = vextract.high.u32 %v4941
      %v4944 = vmul.u32.u64.compose %v4940, %v4935
      %v4945 = vextract.low.u32 %v4944
      %v4946 = vextract.high.u32 %v4944
      %v4947 = vmul.u32 %v4940, %v4931
      %v4948 = vadd.s32 %v4943, %v4945
      %vm4949 = vc.u32 %v4943, %v4945
      %v4950 = vadd.s32 %v4946, 1
      %v4951 = vsel %vm4949, %v4950, %v4946
      %v4952 = vadd.s32 %v4947, %v4951
      %v4953 = vadd.s32 %v4952, 536870912
      %v4954 = vshrl.u32 %v4953, 30
      %v4955 = vshll.u32 %v4954, 30
      %v4956 = vsub.s32 %v4952, %v4955
      %vm4957 = vcmp.lt.s32.totalorder %v4956, 0
      %v4958 = vsub.s32 0, %v4956
      %v4959 = vsel %vm4957, %v4958, %v4956
      %v4960 = vclz %v4959
      %v4961 = vsub.s32 %v4960, 2
      %vm4962 = vcmp.gt.s32.totalorder 0, %v4961
      %v4963 = vsel %vm4962, 0, %v4961
      %v4964 = vsub.s32 32, %v4963
      %v4965 = vshll.u32 %v4956, %v4963
      %v4966 = vshrl.u32 %v4948, %v4964
      %v4967 = vor.u32 %v4965, %v4966
      %v4968 = vsub.s32 4294967266, %v4963
      %v4969 = vadd.s32 %v4968, 127
      %v4970 = vshll.u32 %v4969, 23
      %v4971 = vor.u32 4788187, %v4970
      %v4972 = vand.u32 2147483647, %v4971
      %v4974 = vcvt.s32.f32 %v4967
      %v4975 = vmul.f32 %v4974, %v4972
      %v4976 = vxor.u32 %v4975, 2147483648
      %v4977 = vsel %vm4894, %v4976, %v4975
      %v4978 = vsub.s32 4, %v4954
      %v4979 = vsel %vm4894, %v4978, %v4954
      %v4980 = vsel %vm4893, %v614, %v4977
      %v4981 = vsel %vm4893, 0, %v4979
      %v4982 = vcosq.f32.pop %v4980
      %v4983 = vsinq.f32.pop %v4980
      %vm4984 = vweird.f32 %v614
      %v4985 = vand.u32 %v4981, 3
      %vm4986 = vcmp.lt.s32.totalorder %v4985, 2
      %vm4987 = vcmp.eq.s32.totalorder %v4985, 0
      %v4988 = vxor.u32 %v4983, 2147483648
      %v4989 = vsel %vm4987, %v4982, %v4988
      %vm4990 = vcmp.eq.s32.totalorder %v4985, 2
      %v4991 = vxor.u32 %v4982, 2147483648
      %v4992 = vsel %vm4990, %v4991, %v4983
      %v4993 = vsel %vm4986, %v4989, %v4992
      %v4994 = vsel %vm4984, nan, %v4993
      %v4995 = vand.u32 2147483647, %v615
      %vm4996 = vcmp.le.f32.partialorder %v4995, 0.7853982
      %vm4997 = vcmp.lt.s32.totalorder %v615, 0
      %v4998 = vand.u32 %v615, 2139095040
      %v4999 = vshrl.u32 %v4998, 23
      %v5000 = vsub.s32 %v4999, 127
      %v5001 = vand.u32 2147483647, %v615
      %v5002 = vand.u32 %v5001, 8388607
      %v5003 = vor.u32 %v5002, 8388608
      %v5004 = vsub.s32 0, %v5003
      %v5005 = vadd.s32 %v5000, 1
      %vm5006 = vcmp.gt.s32.totalorder %v5005, 0
      %v5007 = vsel %vm5006, %v5005, 0
      %v5008 = vshrl.u32 %v5007, 5
      %v5009 = vand.u32 %v5007, 31
      %v5010 = vsub.s32 32, %v5009
      %v5011 = vshrl.u32 683565275, %v5010
      %v5012 = vshll.u32 683565275, %v5009
      %v5013 = vshrl.u32 2475754826, %v5010
      %v5014 = vor.u32 %v5012, %v5013
      %v5015 = vshll.u32 2475754826, %v5009
      %v5016 = vshrl.u32 2131351028, %v5010
      %v5017 = vor.u32 %v5015, %v5016
      %v5018 = vshll.u32 2131351028, %v5009
      %v5019 = vshrl.u32 2102212464, %v5010
      %v5020 = vor.u32 %v5018, %v5019
      %v5021 = vshll.u32 2102212464, %v5009
      %v5022 = vshrl.u32 920167782, %v5010
      %v5023 = vor.u32 %v5021, %v5022
      %v5024 = vshll.u32 920167782, %v5009
      %v5025 = vshrl.u32 1326507024, %v5010
      %v5026 = vor.u32 %v5024, %v5025
      %vm5027 = vcmp.lt.s32.totalorder %v5008, 1
      %vm5028 = vcmp.lt.s32.totalorder %v5008, 2
      %vm5029 = vcmp.lt.s32.totalorder %v5008, 3
      %vm5030 = vcmp.lt.s32.totalorder %v5008, 4
      %v5031 = vsel %vm5027, %v5011, %v5014
      %v5032 = vsel %vm5030, %v5020, 2102212464
      %v5033 = vsel %vm5029, %v5017, %v5032
      %v5034 = vsel %vm5028, %v5031, %v5033
      %v5035 = vsel %vm5027, %v5014, %v5017
      %v5036 = vsel %vm5030, %v5023, 920167782
      %v5037 = vsel %vm5029, %v5020, %v5036
      %v5038 = vsel %vm5028, %v5035, %v5037
      %v5039 = vsel %vm5027, %v5017, %v5020
      %v5040 = vsel %vm5030, %v5026, 1326507024
      %v5041 = vsel %vm5029, %v5023, %v5040
      %v5042 = vsel %vm5028, %v5039, %v5041
      %v5043 = vshll.u32 %v5003, 8
      %v5044 = vmul.u32.u64.compose %v5043, %v5042
      %v5045 = vextract.low.u32 %v5044
      %v5046 = vextract.high.u32 %v5044
      %v5047 = vmul.u32.u64.compose %v5043, %v5038
      %v5048 = vextract.low.u32 %v5047
      %v5049 = vextract.high.u32 %v5047
      %v5050 = vmul.u32 %v5043, %v5034
      %v5051 = vadd.s32 %v5046, %v5048
      %vm5052 = vc.u32 %v5046, %v5048
      %v5053 = vadd.s32 %v5049, 1
      %v5054 = vsel %vm5052, %v5053, %v5049
      %v5055 = vadd.s32 %v5050, %v5054
      %v5056 = vadd.s32 %v5055, 536870912
      %v5057 = vshrl.u32 %v5056, 30
      %v5058 = vshll.u32 %v5057, 30
      %v5059 = vsub.s32 %v5055, %v5058
      %vm5060 = vcmp.lt.s32.totalorder %v5059, 0
      %v5061 = vsub.s32 0, %v5059
      %v5062 = vsel %vm5060, %v5061, %v5059
      %v5063 = vclz %v5062
      %v5064 = vsub.s32 %v5063, 2
      %vm5065 = vcmp.gt.s32.totalorder 0, %v5064
      %v5066 = vsel %vm5065, 0, %v5064
      %v5067 = vsub.s32 32, %v5066
      %v5068 = vshll.u32 %v5059, %v5066
      %v5069 = vshrl.u32 %v5051, %v5067
      %v5070 = vor.u32 %v5068, %v5069
      %v5071 = vsub.s32 4294967266, %v5066
      %v5072 = vadd.s32 %v5071, 127
      %v5073 = vshll.u32 %v5072, 23
      %v5074 = vor.u32 4788187, %v5073
      %v5075 = vand.u32 2147483647, %v5074
      %v5077 = vcvt.s32.f32 %v5070
      %v5078 = vmul.f32 %v5077, %v5075
      %v5079 = vxor.u32 %v5078, 2147483648
      %v5080 = vsel %vm4997, %v5079, %v5078
      %v5081 = vsub.s32 4, %v5057
      %v5082 = vsel %vm4997, %v5081, %v5057
      %v5083 = vsel %vm4996, %v615, %v5080
      %v5084 = vsel %vm4996, 0, %v5082
      %v5085 = vcosq.f32.pop %v5083
      %v5086 = vsinq.f32.pop %v5083
      %vm5087 = vweird.f32 %v615
      %v5088 = vand.u32 %v5084, 3
      %vm5089 = vcmp.lt.s32.totalorder %v5088, 2
      %vm5090 = vcmp.eq.s32.totalorder %v5088, 0
      %v5091 = vxor.u32 %v5086, 2147483648
      %v5092 = vsel %vm5090, %v5085, %v5091
      %vm5093 = vcmp.eq.s32.totalorder %v5088, 2
      %v5094 = vxor.u32 %v5085, 2147483648
      %v5095 = vsel %vm5093, %v5094, %v5086
      %v5096 = vsel %vm5089, %v5092, %v5095
      %v5097 = vsel %vm5087, nan, %v5096
      %v5098 = vand.u32 2147483647, %v616
      %vm5099 = vcmp.le.f32.partialorder %v5098, 0.7853982
      %vm5100 = vcmp.lt.s32.totalorder %v616, 0
      %v5101 = vand.u32 %v616, 2139095040
      %v5102 = vshrl.u32 %v5101, 23
      %v5103 = vsub.s32 %v5102, 127
      %v5104 = vand.u32 2147483647, %v616
      %v5105 = vand.u32 %v5104, 8388607
      %v5106 = vor.u32 %v5105, 8388608
      %v5107 = vsub.s32 0, %v5106
      %v5108 = vadd.s32 %v5103, 1
      %vm5109 = vcmp.gt.s32.totalorder %v5108, 0
      %v5110 = vsel %vm5109, %v5108, 0
      %v5111 = vshrl.u32 %v5110, 5
      %v5112 = vand.u32 %v5110, 31
      %v5113 = vsub.s32 32, %v5112
      %v5114 = vshrl.u32 683565275, %v5113
      %v5115 = vshll.u32 683565275, %v5112
      %v5116 = vshrl.u32 2475754826, %v5113
      %v5117 = vor.u32 %v5115, %v5116
      %v5118 = vshll.u32 2475754826, %v5112
      %v5119 = vshrl.u32 2131351028, %v5113
      %v5120 = vor.u32 %v5118, %v5119
      %v5121 = vshll.u32 2131351028, %v5112
      %v5122 = vshrl.u32 2102212464, %v5113
      %v5123 = vor.u32 %v5121, %v5122
      %v5124 = vshll.u32 2102212464, %v5112
      %v5125 = vshrl.u32 920167782, %v5113
      %v5126 = vor.u32 %v5124, %v5125
      %v5127 = vshll.u32 920167782, %v5112
      %v5128 = vshrl.u32 1326507024, %v5113
      %v5129 = vor.u32 %v5127, %v5128
      %vm5130 = vcmp.lt.s32.totalorder %v5111, 1
      %vm5131 = vcmp.lt.s32.totalorder %v5111, 2
      %vm5132 = vcmp.lt.s32.totalorder %v5111, 3
      %vm5133 = vcmp.lt.s32.totalorder %v5111, 4
      %v5134 = vsel %vm5130, %v5114, %v5117
      %v5135 = vsel %vm5133, %v5123, 2102212464
      %v5136 = vsel %vm5132, %v5120, %v5135
      %v5137 = vsel %vm5131, %v5134, %v5136
      %v5138 = vsel %vm5130, %v5117, %v5120
      %v5139 = vsel %vm5133, %v5126, 920167782
      %v5140 = vsel %vm5132, %v5123, %v5139
      %v5141 = vsel %vm5131, %v5138, %v5140
      %v5142 = vsel %vm5130, %v5120, %v5123
      %v5143 = vsel %vm5133, %v5129, 1326507024
      %v5144 = vsel %vm5132, %v5126, %v5143
      %v5145 = vsel %vm5131, %v5142, %v5144
      %v5146 = vshll.u32 %v5106, 8
      %v5147 = vmul.u32.u64.compose %v5146, %v5145
      %v5148 = vextract.low.u32 %v5147
      %v5149 = vextract.high.u32 %v5147
      %v5150 = vmul.u32.u64.compose %v5146, %v5141
      %v5151 = vextract.low.u32 %v5150
      %v5152 = vextract.high.u32 %v5150
      %v5153 = vmul.u32 %v5146, %v5137
      %v5154 = vadd.s32 %v5149, %v5151
      %vm5155 = vc.u32 %v5149, %v5151
      %v5156 = vadd.s32 %v5152, 1
      %v5157 = vsel %vm5155, %v5156, %v5152
      %v5158 = vadd.s32 %v5153, %v5157
      %v5159 = vadd.s32 %v5158, 536870912
      %v5160 = vshrl.u32 %v5159, 30
      %v5161 = vshll.u32 %v5160, 30
      %v5162 = vsub.s32 %v5158, %v5161
      %vm5163 = vcmp.lt.s32.totalorder %v5162, 0
      %v5164 = vsub.s32 0, %v5162
      %v5165 = vsel %vm5163, %v5164, %v5162
      %v5166 = vclz %v5165
      %v5167 = vsub.s32 %v5166, 2
      %vm5168 = vcmp.gt.s32.totalorder 0, %v5167
      %v5169 = vsel %vm5168, 0, %v5167
      %v5170 = vsub.s32 32, %v5169
      %v5171 = vshll.u32 %v5162, %v5169
      %v5172 = vshrl.u32 %v5154, %v5170
      %v5173 = vor.u32 %v5171, %v5172
      %v5174 = vsub.s32 4294967266, %v5169
      %v5175 = vadd.s32 %v5174, 127
      %v5176 = vshll.u32 %v5175, 23
      %v5177 = vor.u32 4788187, %v5176
      %v5178 = vand.u32 2147483647, %v5177
      %v5180 = vcvt.s32.f32 %v5173
      %v5181 = vmul.f32 %v5180, %v5178
      %v5182 = vxor.u32 %v5181, 2147483648
      %v5183 = vsel %vm5100, %v5182, %v5181
      %v5184 = vsub.s32 4, %v5160
      %v5185 = vsel %vm5100, %v5184, %v5160
      %v5186 = vsel %vm5099, %v616, %v5183
      %v5187 = vsel %vm5099, 0, %v5185
      %v5188 = vcosq.f32.pop %v5186
      %v5189 = vsinq.f32.pop %v5186
      %vm5190 = vweird.f32 %v616
      %v5191 = vand.u32 %v5187, 3
      %vm5192 = vcmp.lt.s32.totalorder %v5191, 2
      %vm5193 = vcmp.eq.s32.totalorder %v5191, 0
      %v5194 = vxor.u32 %v5189, 2147483648
      %v5195 = vsel %vm5193, %v5188, %v5194
      %vm5196 = vcmp.eq.s32.totalorder %v5191, 2
      %v5197 = vxor.u32 %v5188, 2147483648
      %v5198 = vsel %vm5196, %v5197, %v5189
      %v5199 = vsel %vm5192, %v5195, %v5198
      %v5200 = vsel %vm5190, nan, %v5199
      %v5201 = vand.u32 2147483647, %v617
      %vm5202 = vcmp.le.f32.partialorder %v5201, 0.7853982
      %vm5203 = vcmp.lt.s32.totalorder %v617, 0
      %v5204 = vand.u32 %v617, 2139095040
      %v5205 = vshrl.u32 %v5204, 23
      %v5206 = vsub.s32 %v5205, 127
      %v5207 = vand.u32 2147483647, %v617
      %v5208 = vand.u32 %v5207, 8388607
      %v5209 = vor.u32 %v5208, 8388608
      %v5210 = vsub.s32 0, %v5209
      %v5211 = vadd.s32 %v5206, 1
      %vm5212 = vcmp.gt.s32.totalorder %v5211, 0
      %v5213 = vsel %vm5212, %v5211, 0
      %v5214 = vshrl.u32 %v5213, 5
      %v5215 = vand.u32 %v5213, 31
      %v5216 = vsub.s32 32, %v5215
      %v5217 = vshrl.u32 683565275, %v5216
      %v5218 = vshll.u32 683565275, %v5215
      %v5219 = vshrl.u32 2475754826, %v5216
      %v5220 = vor.u32 %v5218, %v5219
      %v5221 = vshll.u32 2475754826, %v5215
      %v5222 = vshrl.u32 2131351028, %v5216
      %v5223 = vor.u32 %v5221, %v5222
      %v5224 = vshll.u32 2131351028, %v5215
      %v5225 = vshrl.u32 2102212464, %v5216
      %v5226 = vor.u32 %v5224, %v5225
      %v5227 = vshll.u32 2102212464, %v5215
      %v5228 = vshrl.u32 920167782, %v5216
      %v5229 = vor.u32 %v5227, %v5228
      %v5230 = vshll.u32 920167782, %v5215
      %v5231 = vshrl.u32 1326507024, %v5216
      %v5232 = vor.u32 %v5230, %v5231
      %vm5233 = vcmp.lt.s32.totalorder %v5214, 1
      %vm5234 = vcmp.lt.s32.totalorder %v5214, 2
      %vm5235 = vcmp.lt.s32.totalorder %v5214, 3
      %vm5236 = vcmp.lt.s32.totalorder %v5214, 4
      %v5237 = vsel %vm5233, %v5217, %v5220
      %v5238 = vsel %vm5236, %v5226, 2102212464
      %v5239 = vsel %vm5235, %v5223, %v5238
      %v5240 = vsel %vm5234, %v5237, %v5239
      %v5241 = vsel %vm5233, %v5220, %v5223
      %v5242 = vsel %vm5236, %v5229, 920167782
      %v5243 = vsel %vm5235, %v5226, %v5242
      %v5244 = vsel %vm5234, %v5241, %v5243
      %v5245 = vsel %vm5233, %v5223, %v5226
      %v5246 = vsel %vm5236, %v5232, 1326507024
      %v5247 = vsel %vm5235, %v5229, %v5246
      %v5248 = vsel %vm5234, %v5245, %v5247
      %v5249 = vshll.u32 %v5209, 8
      %v5250 = vmul.u32.u64.compose %v5249, %v5248
      %v5251 = vextract.low.u32 %v5250
      %v5252 = vextract.high.u32 %v5250
      %v5253 = vmul.u32.u64.compose %v5249, %v5244
      %v5254 = vextract.low.u32 %v5253
      %v5255 = vextract.high.u32 %v5253
      %v5256 = vmul.u32 %v5249, %v5240
      %v5257 = vadd.s32 %v5252, %v5254
      %vm5258 = vc.u32 %v5252, %v5254
      %v5259 = vadd.s32 %v5255, 1
      %v5260 = vsel %vm5258, %v5259, %v5255
      %v5261 = vadd.s32 %v5256, %v5260
      %v5262 = vadd.s32 %v5261, 536870912
      %v5263 = vshrl.u32 %v5262, 30
      %v5264 = vshll.u32 %v5263, 30
      %v5265 = vsub.s32 %v5261, %v5264
      %vm5266 = vcmp.lt.s32.totalorder %v5265, 0
      %v5267 = vsub.s32 0, %v5265
      %v5268 = vsel %vm5266, %v5267, %v5265
      %v5269 = vclz %v5268
      %v5270 = vsub.s32 %v5269, 2
      %vm5271 = vcmp.gt.s32.totalorder 0, %v5270
      %v5272 = vsel %vm5271, 0, %v5270
      %v5273 = vsub.s32 32, %v5272
      %v5274 = vshll.u32 %v5265, %v5272
      %v5275 = vshrl.u32 %v5257, %v5273
      %v5276 = vor.u32 %v5274, %v5275
      %v5277 = vsub.s32 4294967266, %v5272
      %v5278 = vadd.s32 %v5277, 127
      %v5279 = vshll.u32 %v5278, 23
      %v5280 = vor.u32 4788187, %v5279
      %v5281 = vand.u32 2147483647, %v5280
      %v5283 = vcvt.s32.f32 %v5276
      %v5284 = vmul.f32 %v5283, %v5281
      %v5285 = vxor.u32 %v5284, 2147483648
      %v5286 = vsel %vm5203, %v5285, %v5284
      %v5287 = vsub.s32 4, %v5263
      %v5288 = vsel %vm5203, %v5287, %v5263
      %v5289 = vsel %vm5202, %v617, %v5286
      %v5290 = vsel %vm5202, 0, %v5288
      %v5291 = vcosq.f32.pop %v5289
      %v5292 = vsinq.f32.pop %v5289
      %vm5293 = vweird.f32 %v617
      %v5294 = vand.u32 %v5290, 3
      %vm5295 = vcmp.lt.s32.totalorder %v5294, 2
      %vm5296 = vcmp.eq.s32.totalorder %v5294, 0
      %v5297 = vxor.u32 %v5292, 2147483648
      %v5298 = vsel %vm5296, %v5291, %v5297
      %vm5299 = vcmp.eq.s32.totalorder %v5294, 2
      %v5300 = vxor.u32 %v5291, 2147483648
      %v5301 = vsel %vm5299, %v5300, %v5292
      %v5302 = vsel %vm5295, %v5298, %v5301
      %v5303 = vsel %vm5293, nan, %v5302
      %v5304 = vand.u32 2147483647, %v618
      %vm5305 = vcmp.le.f32.partialorder %v5304, 0.7853982
      %vm5306 = vcmp.lt.s32.totalorder %v618, 0
      %v5307 = vand.u32 %v618, 2139095040
      %v5308 = vshrl.u32 %v5307, 23
      %v5309 = vsub.s32 %v5308, 127
      %v5310 = vand.u32 2147483647, %v618
      %v5311 = vand.u32 %v5310, 8388607
      %v5312 = vor.u32 %v5311, 8388608
      %v5313 = vsub.s32 0, %v5312
      %v5314 = vadd.s32 %v5309, 1
      %vm5315 = vcmp.gt.s32.totalorder %v5314, 0
      %v5316 = vsel %vm5315, %v5314, 0
      %v5317 = vshrl.u32 %v5316, 5
      %v5318 = vand.u32 %v5316, 31
      %v5319 = vsub.s32 32, %v5318
      %v5320 = vshrl.u32 683565275, %v5319
      %v5321 = vshll.u32 683565275, %v5318
      %v5322 = vshrl.u32 2475754826, %v5319
      %v5323 = vor.u32 %v5321, %v5322
      %v5324 = vshll.u32 2475754826, %v5318
      %v5325 = vshrl.u32 2131351028, %v5319
      %v5326 = vor.u32 %v5324, %v5325
      %v5327 = vshll.u32 2131351028, %v5318
      %v5328 = vshrl.u32 2102212464, %v5319
      %v5329 = vor.u32 %v5327, %v5328
      %v5330 = vshll.u32 2102212464, %v5318
      %v5331 = vshrl.u32 920167782, %v5319
      %v5332 = vor.u32 %v5330, %v5331
      %v5333 = vshll.u32 920167782, %v5318
      %v5334 = vshrl.u32 1326507024, %v5319
      %v5335 = vor.u32 %v5333, %v5334
      %vm5336 = vcmp.lt.s32.totalorder %v5317, 1
      %vm5337 = vcmp.lt.s32.totalorder %v5317, 2
      %vm5338 = vcmp.lt.s32.totalorder %v5317, 3
      %vm5339 = vcmp.lt.s32.totalorder %v5317, 4
      %v5340 = vsel %vm5336, %v5320, %v5323
      %v5341 = vsel %vm5339, %v5329, 2102212464
      %v5342 = vsel %vm5338, %v5326, %v5341
      %v5343 = vsel %vm5337, %v5340, %v5342
      %v5344 = vsel %vm5336, %v5323, %v5326
      %v5345 = vsel %vm5339, %v5332, 920167782
      %v5346 = vsel %vm5338, %v5329, %v5345
      %v5347 = vsel %vm5337, %v5344, %v5346
      %v5348 = vsel %vm5336, %v5326, %v5329
      %v5349 = vsel %vm5339, %v5335, 1326507024
      %v5350 = vsel %vm5338, %v5332, %v5349
      %v5351 = vsel %vm5337, %v5348, %v5350
      %v5352 = vshll.u32 %v5312, 8
      %v5353 = vmul.u32.u64.compose %v5352, %v5351
      %v5354 = vextract.low.u32 %v5353
      %v5355 = vextract.high.u32 %v5353
      %v5356 = vmul.u32.u64.compose %v5352, %v5347
      %v5357 = vextract.low.u32 %v5356
      %v5358 = vextract.high.u32 %v5356
      %v5359 = vmul.u32 %v5352, %v5343
      %v5360 = vadd.s32 %v5355, %v5357
      %vm5361 = vc.u32 %v5355, %v5357
      %v5362 = vadd.s32 %v5358, 1
      %v5363 = vsel %vm5361, %v5362, %v5358
      %v5364 = vadd.s32 %v5359, %v5363
      %v5365 = vadd.s32 %v5364, 536870912
      %v5366 = vshrl.u32 %v5365, 30
      %v5367 = vshll.u32 %v5366, 30
      %v5368 = vsub.s32 %v5364, %v5367
      %vm5369 = vcmp.lt.s32.totalorder %v5368, 0
      %v5370 = vsub.s32 0, %v5368
      %v5371 = vsel %vm5369, %v5370, %v5368
      %v5372 = vclz %v5371
      %v5373 = vsub.s32 %v5372, 2
      %vm5374 = vcmp.gt.s32.totalorder 0, %v5373
      %v5375 = vsel %vm5374, 0, %v5373
      %v5376 = vsub.s32 32, %v5375
      %v5377 = vshll.u32 %v5368, %v5375
      %v5378 = vshrl.u32 %v5360, %v5376
      %v5379 = vor.u32 %v5377, %v5378
      %v5380 = vsub.s32 4294967266, %v5375
      %v5381 = vadd.s32 %v5380, 127
      %v5382 = vshll.u32 %v5381, 23
      %v5383 = vor.u32 4788187, %v5382
      %v5384 = vand.u32 2147483647, %v5383
      %v5386 = vcvt.s32.f32 %v5379
      %v5387 = vmul.f32 %v5386, %v5384
      %v5388 = vxor.u32 %v5387, 2147483648
      %v5389 = vsel %vm5306, %v5388, %v5387
      %v5390 = vsub.s32 4, %v5366
      %v5391 = vsel %vm5306, %v5390, %v5366
      %v5392 = vsel %vm5305, %v618, %v5389
      %v5393 = vsel %vm5305, 0, %v5391
      %v5394 = vcosq.f32.pop %v5392
      %v5395 = vsinq.f32.pop %v5392
      %vm5396 = vweird.f32 %v618
      %v5397 = vand.u32 %v5393, 3
      %vm5398 = vcmp.lt.s32.totalorder %v5397, 2
      %vm5399 = vcmp.eq.s32.totalorder %v5397, 0
      %v5400 = vxor.u32 %v5395, 2147483648
      %v5401 = vsel %vm5399, %v5394, %v5400
      %vm5402 = vcmp.eq.s32.totalorder %v5397, 2
      %v5403 = vxor.u32 %v5394, 2147483648
      %v5404 = vsel %vm5402, %v5403, %v5395
      %v5405 = vsel %vm5398, %v5401, %v5404
      %v5406 = vsel %vm5396, nan, %v5405
      %v5407 = vand.u32 2147483647, %v619
      %vm5408 = vcmp.le.f32.partialorder %v5407, 0.7853982
      %vm5409 = vcmp.lt.s32.totalorder %v619, 0
      %v5410 = vand.u32 %v619, 2139095040
      %v5411 = vshrl.u32 %v5410, 23
      %v5412 = vsub.s32 %v5411, 127
      %v5413 = vand.u32 2147483647, %v619
      %v5414 = vand.u32 %v5413, 8388607
      %v5415 = vor.u32 %v5414, 8388608
      %v5416 = vsub.s32 0, %v5415
      %v5417 = vadd.s32 %v5412, 1
      %vm5418 = vcmp.gt.s32.totalorder %v5417, 0
      %v5419 = vsel %vm5418, %v5417, 0
      %v5420 = vshrl.u32 %v5419, 5
      %v5421 = vand.u32 %v5419, 31
      %v5422 = vsub.s32 32, %v5421
      %v5423 = vshrl.u32 683565275, %v5422
      %v5424 = vshll.u32 683565275, %v5421
      %v5425 = vshrl.u32 2475754826, %v5422
      %v5426 = vor.u32 %v5424, %v5425
      %v5427 = vshll.u32 2475754826, %v5421
      %v5428 = vshrl.u32 2131351028, %v5422
      %v5429 = vor.u32 %v5427, %v5428
      %v5430 = vshll.u32 2131351028, %v5421
      %v5431 = vshrl.u32 2102212464, %v5422
      %v5432 = vor.u32 %v5430, %v5431
      %v5433 = vshll.u32 2102212464, %v5421
      %v5434 = vshrl.u32 920167782, %v5422
      %v5435 = vor.u32 %v5433, %v5434
      %v5436 = vshll.u32 920167782, %v5421
      %v5437 = vshrl.u32 1326507024, %v5422
      %v5438 = vor.u32 %v5436, %v5437
      %vm5439 = vcmp.lt.s32.totalorder %v5420, 1
      %vm5440 = vcmp.lt.s32.totalorder %v5420, 2
      %vm5441 = vcmp.lt.s32.totalorder %v5420, 3
      %vm5442 = vcmp.lt.s32.totalorder %v5420, 4
      %v5443 = vsel %vm5439, %v5423, %v5426
      %v5444 = vsel %vm5442, %v5432, 2102212464
      %v5445 = vsel %vm5441, %v5429, %v5444
      %v5446 = vsel %vm5440, %v5443, %v5445
      %v5447 = vsel %vm5439, %v5426, %v5429
      %v5448 = vsel %vm5442, %v5435, 920167782
      %v5449 = vsel %vm5441, %v5432, %v5448
      %v5450 = vsel %vm5440, %v5447, %v5449
      %v5451 = vsel %vm5439, %v5429, %v5432
      %v5452 = vsel %vm5442, %v5438, 1326507024
      %v5453 = vsel %vm5441, %v5435, %v5452
      %v5454 = vsel %vm5440, %v5451, %v5453
      %v5455 = vshll.u32 %v5415, 8
      %v5456 = vmul.u32.u64.compose %v5455, %v5454
      %v5457 = vextract.low.u32 %v5456
      %v5458 = vextract.high.u32 %v5456
      %v5459 = vmul.u32.u64.compose %v5455, %v5450
      %v5460 = vextract.low.u32 %v5459
      %v5461 = vextract.high.u32 %v5459
      %v5462 = vmul.u32 %v5455, %v5446
      %v5463 = vadd.s32 %v5458, %v5460
      %vm5464 = vc.u32 %v5458, %v5460
      %v5465 = vadd.s32 %v5461, 1
      %v5466 = vsel %vm5464, %v5465, %v5461
      %v5467 = vadd.s32 %v5462, %v5466
      %v5468 = vadd.s32 %v5467, 536870912
      %v5469 = vshrl.u32 %v5468, 30
      %v5470 = vshll.u32 %v5469, 30
      %v5471 = vsub.s32 %v5467, %v5470
      %vm5472 = vcmp.lt.s32.totalorder %v5471, 0
      %v5473 = vsub.s32 0, %v5471
      %v5474 = vsel %vm5472, %v5473, %v5471
      %v5475 = vclz %v5474
      %v5476 = vsub.s32 %v5475, 2
      %vm5477 = vcmp.gt.s32.totalorder 0, %v5476
      %v5478 = vsel %vm5477, 0, %v5476
      %v5479 = vsub.s32 32, %v5478
      %v5480 = vshll.u32 %v5471, %v5478
      %v5481 = vshrl.u32 %v5463, %v5479
      %v5482 = vor.u32 %v5480, %v5481
      %v5483 = vsub.s32 4294967266, %v5478
      %v5484 = vadd.s32 %v5483, 127
      %v5485 = vshll.u32 %v5484, 23
      %v5486 = vor.u32 4788187, %v5485
      %v5487 = vand.u32 2147483647, %v5486
      %v5489 = vcvt.s32.f32 %v5482
      %v5490 = vmul.f32 %v5489, %v5487
      %v5491 = vxor.u32 %v5490, 2147483648
      %v5492 = vsel %vm5409, %v5491, %v5490
      %v5493 = vsub.s32 4, %v5469
      %v5494 = vsel %vm5409, %v5493, %v5469
      %v5495 = vsel %vm5408, %v619, %v5492
      %v5496 = vsel %vm5408, 0, %v5494
      %v5497 = vcosq.f32.pop %v5495
      %v5498 = vsinq.f32.pop %v5495
      %vm5499 = vweird.f32 %v619
      %v5500 = vand.u32 %v5496, 3
      %vm5501 = vcmp.lt.s32.totalorder %v5500, 2
      %vm5502 = vcmp.eq.s32.totalorder %v5500, 0
      %v5503 = vxor.u32 %v5498, 2147483648
      %v5504 = vsel %vm5502, %v5497, %v5503
      %vm5505 = vcmp.eq.s32.totalorder %v5500, 2
      %v5506 = vxor.u32 %v5497, 2147483648
      %v5507 = vsel %vm5505, %v5506, %v5498
      %v5508 = vsel %vm5501, %v5504, %v5507
      %v5509 = vsel %vm5499, nan, %v5508
      %v5510 = vand.u32 2147483647, %v620
      %vm5511 = vcmp.le.f32.partialorder %v5510, 0.7853982
      %vm5512 = vcmp.lt.s32.totalorder %v620, 0
      %v5513 = vand.u32 %v620, 2139095040
      %v5514 = vshrl.u32 %v5513, 23
      %v5515 = vsub.s32 %v5514, 127
      %v5516 = vand.u32 2147483647, %v620
      %v5517 = vand.u32 %v5516, 8388607
      %v5518 = vor.u32 %v5517, 8388608
      %v5519 = vsub.s32 0, %v5518
      %v5520 = vadd.s32 %v5515, 1
      %vm5521 = vcmp.gt.s32.totalorder %v5520, 0
      %v5522 = vsel %vm5521, %v5520, 0
      %v5523 = vshrl.u32 %v5522, 5
      %v5524 = vand.u32 %v5522, 31
      %v5525 = vsub.s32 32, %v5524
      %v5526 = vshrl.u32 683565275, %v5525
      %v5527 = vshll.u32 683565275, %v5524
      %v5528 = vshrl.u32 2475754826, %v5525
      %v5529 = vor.u32 %v5527, %v5528
      %v5530 = vshll.u32 2475754826, %v5524
      %v5531 = vshrl.u32 2131351028, %v5525
      %v5532 = vor.u32 %v5530, %v5531
      %v5533 = vshll.u32 2131351028, %v5524
      %v5534 = vshrl.u32 2102212464, %v5525
      %v5535 = vor.u32 %v5533, %v5534
      %v5536 = vshll.u32 2102212464, %v5524
      %v5537 = vshrl.u32 920167782, %v5525
      %v5538 = vor.u32 %v5536, %v5537
      %v5539 = vshll.u32 920167782, %v5524
      %v5540 = vshrl.u32 1326507024, %v5525
      %v5541 = vor.u32 %v5539, %v5540
      %vm5542 = vcmp.lt.s32.totalorder %v5523, 1
      %vm5543 = vcmp.lt.s32.totalorder %v5523, 2
      %vm5544 = vcmp.lt.s32.totalorder %v5523, 3
      %vm5545 = vcmp.lt.s32.totalorder %v5523, 4
      %v5546 = vsel %vm5542, %v5526, %v5529
      %v5547 = vsel %vm5545, %v5535, 2102212464
      %v5548 = vsel %vm5544, %v5532, %v5547
      %v5549 = vsel %vm5543, %v5546, %v5548
      %v5550 = vsel %vm5542, %v5529, %v5532
      %v5551 = vsel %vm5545, %v5538, 920167782
      %v5552 = vsel %vm5544, %v5535, %v5551
      %v5553 = vsel %vm5543, %v5550, %v5552
      %v5554 = vsel %vm5542, %v5532, %v5535
      %v5555 = vsel %vm5545, %v5541, 1326507024
      %v5556 = vsel %vm5544, %v5538, %v5555
      %v5557 = vsel %vm5543, %v5554, %v5556
      %v5558 = vshll.u32 %v5518, 8
      %v5559 = vmul.u32.u64.compose %v5558, %v5557
      %v5560 = vextract.low.u32 %v5559
      %v5561 = vextract.high.u32 %v5559
      %v5562 = vmul.u32.u64.compose %v5558, %v5553
      %v5563 = vextract.low.u32 %v5562
      %v5564 = vextract.high.u32 %v5562
      %v5565 = vmul.u32 %v5558, %v5549
      %v5566 = vadd.s32 %v5561, %v5563
      %vm5567 = vc.u32 %v5561, %v5563
      %v5568 = vadd.s32 %v5564, 1
      %v5569 = vsel %vm5567, %v5568, %v5564
      %v5570 = vadd.s32 %v5565, %v5569
      %v5571 = vadd.s32 %v5570, 536870912
      %v5572 = vshrl.u32 %v5571, 30
      %v5573 = vshll.u32 %v5572, 30
      %v5574 = vsub.s32 %v5570, %v5573
      %vm5575 = vcmp.lt.s32.totalorder %v5574, 0
      %v5576 = vsub.s32 0, %v5574
      %v5577 = vsel %vm5575, %v5576, %v5574
      %v5578 = vclz %v5577
      %v5579 = vsub.s32 %v5578, 2
      %vm5580 = vcmp.gt.s32.totalorder 0, %v5579
      %v5581 = vsel %vm5580, 0, %v5579
      %v5582 = vsub.s32 32, %v5581
      %v5583 = vshll.u32 %v5574, %v5581
      %v5584 = vshrl.u32 %v5566, %v5582
      %v5585 = vor.u32 %v5583, %v5584
      %v5586 = vsub.s32 4294967266, %v5581
      %v5587 = vadd.s32 %v5586, 127
      %v5588 = vshll.u32 %v5587, 23
      %v5589 = vor.u32 4788187, %v5588
      %v5590 = vand.u32 2147483647, %v5589
      %v5592 = vcvt.s32.f32 %v5585
      %v5593 = vmul.f32 %v5592, %v5590
      %v5594 = vxor.u32 %v5593, 2147483648
      %v5595 = vsel %vm5512, %v5594, %v5593
      %v5596 = vsub.s32 4, %v5572
      %v5597 = vsel %vm5512, %v5596, %v5572
      %v5598 = vsel %vm5511, %v620, %v5595
      %v5599 = vsel %vm5511, 0, %v5597
      %v5600 = vcosq.f32.pop %v5598
      %v5601 = vsinq.f32.pop %v5598
      %vm5602 = vweird.f32 %v620
      %v5603 = vand.u32 %v5599, 3
      %vm5604 = vcmp.lt.s32.totalorder %v5603, 2
      %vm5605 = vcmp.eq.s32.totalorder %v5603, 0
      %v5606 = vxor.u32 %v5601, 2147483648
      %v5607 = vsel %vm5605, %v5600, %v5606
      %vm5608 = vcmp.eq.s32.totalorder %v5603, 2
      %v5609 = vxor.u32 %v5600, 2147483648
      %v5610 = vsel %vm5608, %v5609, %v5601
      %v5611 = vsel %vm5604, %v5607, %v5610
      %v5612 = vsel %vm5602, nan, %v5611
      %v5613 = vand.u32 2147483647, %v621
      %vm5614 = vcmp.le.f32.partialorder %v5613, 0.7853982
      %vm5615 = vcmp.lt.s32.totalorder %v621, 0
      %v5616 = vand.u32 %v621, 2139095040
      %v5617 = vshrl.u32 %v5616, 23
      %v5618 = vsub.s32 %v5617, 127
      %v5619 = vand.u32 2147483647, %v621
      %v5620 = vand.u32 %v5619, 8388607
      %v5621 = vor.u32 %v5620, 8388608
      %v5622 = vsub.s32 0, %v5621
      %v5623 = vadd.s32 %v5618, 1
      %vm5624 = vcmp.gt.s32.totalorder %v5623, 0
      %v5625 = vsel %vm5624, %v5623, 0
      %v5626 = vshrl.u32 %v5625, 5
      %v5627 = vand.u32 %v5625, 31
      %v5628 = vsub.s32 32, %v5627
      %v5629 = vshrl.u32 683565275, %v5628
      %v5630 = vshll.u32 683565275, %v5627
      %v5631 = vshrl.u32 2475754826, %v5628
      %v5632 = vor.u32 %v5630, %v5631
      %v5633 = vshll.u32 2475754826, %v5627
      %v5634 = vshrl.u32 2131351028, %v5628
      %v5635 = vor.u32 %v5633, %v5634
      %v5636 = vshll.u32 2131351028, %v5627
      %v5637 = vshrl.u32 2102212464, %v5628
      %v5638 = vor.u32 %v5636, %v5637
      %v5639 = vshll.u32 2102212464, %v5627
      %v5640 = vshrl.u32 920167782, %v5628
      %v5641 = vor.u32 %v5639, %v5640
      %v5642 = vshll.u32 920167782, %v5627
      %v5643 = vshrl.u32 1326507024, %v5628
      %v5644 = vor.u32 %v5642, %v5643
      %vm5645 = vcmp.lt.s32.totalorder %v5626, 1
      %vm5646 = vcmp.lt.s32.totalorder %v5626, 2
      %vm5647 = vcmp.lt.s32.totalorder %v5626, 3
      %vm5648 = vcmp.lt.s32.totalorder %v5626, 4
      %v5649 = vsel %vm5645, %v5629, %v5632
      %v5650 = vsel %vm5648, %v5638, 2102212464
      %v5651 = vsel %vm5647, %v5635, %v5650
      %v5652 = vsel %vm5646, %v5649, %v5651
      %v5653 = vsel %vm5645, %v5632, %v5635
      %v5654 = vsel %vm5648, %v5641, 920167782
      %v5655 = vsel %vm5647, %v5638, %v5654
      %v5656 = vsel %vm5646, %v5653, %v5655
      %v5657 = vsel %vm5645, %v5635, %v5638
      %v5658 = vsel %vm5648, %v5644, 1326507024
      %v5659 = vsel %vm5647, %v5641, %v5658
      %v5660 = vsel %vm5646, %v5657, %v5659
      %v5661 = vshll.u32 %v5621, 8
      %v5662 = vmul.u32.u64.compose %v5661, %v5660
      %v5663 = vextract.low.u32 %v5662
      %v5664 = vextract.high.u32 %v5662
      %v5665 = vmul.u32.u64.compose %v5661, %v5656
      %v5666 = vextract.low.u32 %v5665
      %v5667 = vextract.high.u32 %v5665
      %v5668 = vmul.u32 %v5661, %v5652
      %v5669 = vadd.s32 %v5664, %v5666
      %vm5670 = vc.u32 %v5664, %v5666
      %v5671 = vadd.s32 %v5667, 1
      %v5672 = vsel %vm5670, %v5671, %v5667
      %v5673 = vadd.s32 %v5668, %v5672
      %v5674 = vadd.s32 %v5673, 536870912
      %v5675 = vshrl.u32 %v5674, 30
      %v5676 = vshll.u32 %v5675, 30
      %v5677 = vsub.s32 %v5673, %v5676
      %vm5678 = vcmp.lt.s32.totalorder %v5677, 0
      %v5679 = vsub.s32 0, %v5677
      %v5680 = vsel %vm5678, %v5679, %v5677
      %v5681 = vclz %v5680
      %v5682 = vsub.s32 %v5681, 2
      %vm5683 = vcmp.gt.s32.totalorder 0, %v5682
      %v5684 = vsel %vm5683, 0, %v5682
      %v5685 = vsub.s32 32, %v5684
      %v5686 = vshll.u32 %v5677, %v5684
      %v5687 = vshrl.u32 %v5669, %v5685
      %v5688 = vor.u32 %v5686, %v5687
      %v5689 = vsub.s32 4294967266, %v5684
      %v5690 = vadd.s32 %v5689, 127
      %v5691 = vshll.u32 %v5690, 23
      %v5692 = vor.u32 4788187, %v5691
      %v5693 = vand.u32 2147483647, %v5692
      %v5695 = vcvt.s32.f32 %v5688
      %v5696 = vmul.f32 %v5695, %v5693
      %v5697 = vxor.u32 %v5696, 2147483648
      %v5698 = vsel %vm5615, %v5697, %v5696
      %v5699 = vsub.s32 4, %v5675
      %v5700 = vsel %vm5615, %v5699, %v5675
      %v5701 = vsel %vm5614, %v621, %v5698
      %v5702 = vsel %vm5614, 0, %v5700
      %v5703 = vcosq.f32.pop %v5701
      %v5704 = vsinq.f32.pop %v5701
      %vm5705 = vweird.f32 %v621
      %v5706 = vand.u32 %v5702, 3
      %vm5707 = vcmp.lt.s32.totalorder %v5706, 2
      %vm5708 = vcmp.eq.s32.totalorder %v5706, 0
      %v5709 = vxor.u32 %v5704, 2147483648
      %v5710 = vsel %vm5708, %v5703, %v5709
      %vm5711 = vcmp.eq.s32.totalorder %v5706, 2
      %v5712 = vxor.u32 %v5703, 2147483648
      %v5713 = vsel %vm5711, %v5712, %v5704
      %v5714 = vsel %vm5707, %v5710, %v5713
      %v5715 = vsel %vm5705, nan, %v5714
      %v5716 = vand.u32 2147483647, %v622
      %vm5717 = vcmp.le.f32.partialorder %v5716, 0.7853982
      %vm5718 = vcmp.lt.s32.totalorder %v622, 0
      %v5719 = vand.u32 %v622, 2139095040
      %v5720 = vshrl.u32 %v5719, 23
      %v5721 = vsub.s32 %v5720, 127
      %v5722 = vand.u32 2147483647, %v622
      %v5723 = vand.u32 %v5722, 8388607
      %v5724 = vor.u32 %v5723, 8388608
      %v5725 = vsub.s32 0, %v5724
      %v5726 = vadd.s32 %v5721, 1
      %vm5727 = vcmp.gt.s32.totalorder %v5726, 0
      %v5728 = vsel %vm5727, %v5726, 0
      %v5729 = vshrl.u32 %v5728, 5
      %v5730 = vand.u32 %v5728, 31
      %v5731 = vsub.s32 32, %v5730
      %v5732 = vshrl.u32 683565275, %v5731
      %v5733 = vshll.u32 683565275, %v5730
      %v5734 = vshrl.u32 2475754826, %v5731
      %v5735 = vor.u32 %v5733, %v5734
      %v5736 = vshll.u32 2475754826, %v5730
      %v5737 = vshrl.u32 2131351028, %v5731
      %v5738 = vor.u32 %v5736, %v5737
      %v5739 = vshll.u32 2131351028, %v5730
      %v5740 = vshrl.u32 2102212464, %v5731
      %v5741 = vor.u32 %v5739, %v5740
      %v5742 = vshll.u32 2102212464, %v5730
      %v5743 = vshrl.u32 920167782, %v5731
      %v5744 = vor.u32 %v5742, %v5743
      %v5745 = vshll.u32 920167782, %v5730
      %v5746 = vshrl.u32 1326507024, %v5731
      %v5747 = vor.u32 %v5745, %v5746
      %vm5748 = vcmp.lt.s32.totalorder %v5729, 1
      %vm5749 = vcmp.lt.s32.totalorder %v5729, 2
      %vm5750 = vcmp.lt.s32.totalorder %v5729, 3
      %vm5751 = vcmp.lt.s32.totalorder %v5729, 4
      %v5752 = vsel %vm5748, %v5732, %v5735
      %v5753 = vsel %vm5751, %v5741, 2102212464
      %v5754 = vsel %vm5750, %v5738, %v5753
      %v5755 = vsel %vm5749, %v5752, %v5754
      %v5756 = vsel %vm5748, %v5735, %v5738
      %v5757 = vsel %vm5751, %v5744, 920167782
      %v5758 = vsel %vm5750, %v5741, %v5757
      %v5759 = vsel %vm5749, %v5756, %v5758
      %v5760 = vsel %vm5748, %v5738, %v5741
      %v5761 = vsel %vm5751, %v5747, 1326507024
      %v5762 = vsel %vm5750, %v5744, %v5761
      %v5763 = vsel %vm5749, %v5760, %v5762
      %v5764 = vshll.u32 %v5724, 8
      %v5765 = vmul.u32.u64.compose %v5764, %v5763
      %v5766 = vextract.low.u32 %v5765
      %v5767 = vextract.high.u32 %v5765
      %v5768 = vmul.u32.u64.compose %v5764, %v5759
      %v5769 = vextract.low.u32 %v5768
      %v5770 = vextract.high.u32 %v5768
      %v5771 = vmul.u32 %v5764, %v5755
      %v5772 = vadd.s32 %v5767, %v5769
      %vm5773 = vc.u32 %v5767, %v5769
      %v5774 = vadd.s32 %v5770, 1
      %v5775 = vsel %vm5773, %v5774, %v5770
      %v5776 = vadd.s32 %v5771, %v5775
      %v5777 = vadd.s32 %v5776, 536870912
      %v5778 = vshrl.u32 %v5777, 30
      %v5779 = vshll.u32 %v5778, 30
      %v5780 = vsub.s32 %v5776, %v5779
      %vm5781 = vcmp.lt.s32.totalorder %v5780, 0
      %v5782 = vsub.s32 0, %v5780
      %v5783 = vsel %vm5781, %v5782, %v5780
      %v5784 = vclz %v5783
      %v5785 = vsub.s32 %v5784, 2
      %vm5786 = vcmp.gt.s32.totalorder 0, %v5785
      %v5787 = vsel %vm5786, 0, %v5785
      %v5788 = vsub.s32 32, %v5787
      %v5789 = vshll.u32 %v5780, %v5787
      %v5790 = vshrl.u32 %v5772, %v5788
      %v5791 = vor.u32 %v5789, %v5790
      %v5792 = vsub.s32 4294967266, %v5787
      %v5793 = vadd.s32 %v5792, 127
      %v5794 = vshll.u32 %v5793, 23
      %v5795 = vor.u32 4788187, %v5794
      %v5796 = vand.u32 2147483647, %v5795
      %v5798 = vcvt.s32.f32 %v5791
      %v5799 = vmul.f32 %v5798, %v5796
      %v5800 = vxor.u32 %v5799, 2147483648
      %v5801 = vsel %vm5718, %v5800, %v5799
      %v5802 = vsub.s32 4, %v5778
      %v5803 = vsel %vm5718, %v5802, %v5778
      %v5804 = vsel %vm5717, %v622, %v5801
      %v5805 = vsel %vm5717, 0, %v5803
      %v5806 = vcosq.f32.pop %v5804
      %v5807 = vsinq.f32.pop %v5804
      %vm5808 = vweird.f32 %v622
      %v5809 = vand.u32 %v5805, 3
      %vm5810 = vcmp.lt.s32.totalorder %v5809, 2
      %vm5811 = vcmp.eq.s32.totalorder %v5809, 0
      %v5812 = vxor.u32 %v5807, 2147483648
      %v5813 = vsel %vm5811, %v5806, %v5812
      %vm5814 = vcmp.eq.s32.totalorder %v5809, 2
      %v5815 = vxor.u32 %v5806, 2147483648
      %v5816 = vsel %vm5814, %v5815, %v5807
      %v5817 = vsel %vm5810, %v5813, %v5816
      %v5818 = vsel %vm5808, nan, %v5817
      %v5819 = vand.u32 2147483647, %v623
      %vm5820 = vcmp.le.f32.partialorder %v5819, 0.7853982
      %vm5821 = vcmp.lt.s32.totalorder %v623, 0
      %v5822 = vand.u32 %v623, 2139095040
      %v5823 = vshrl.u32 %v5822, 23
      %v5824 = vsub.s32 %v5823, 127
      %v5825 = vand.u32 2147483647, %v623
      %v5826 = vand.u32 %v5825, 8388607
      %v5827 = vor.u32 %v5826, 8388608
      %v5828 = vsub.s32 0, %v5827
      %v5829 = vadd.s32 %v5824, 1
      %vm5830 = vcmp.gt.s32.totalorder %v5829, 0
      %v5831 = vsel %vm5830, %v5829, 0
      %v5832 = vshrl.u32 %v5831, 5
      %v5833 = vand.u32 %v5831, 31
      %v5834 = vsub.s32 32, %v5833
      %v5835 = vshrl.u32 683565275, %v5834
      %v5836 = vshll.u32 683565275, %v5833
      %v5837 = vshrl.u32 2475754826, %v5834
      %v5838 = vor.u32 %v5836, %v5837
      %v5839 = vshll.u32 2475754826, %v5833
      %v5840 = vshrl.u32 2131351028, %v5834
      %v5841 = vor.u32 %v5839, %v5840
      %v5842 = vshll.u32 2131351028, %v5833
      %v5843 = vshrl.u32 2102212464, %v5834
      %v5844 = vor.u32 %v5842, %v5843
      %v5845 = vshll.u32 2102212464, %v5833
      %v5846 = vshrl.u32 920167782, %v5834
      %v5847 = vor.u32 %v5845, %v5846
      %v5848 = vshll.u32 920167782, %v5833
      %v5849 = vshrl.u32 1326507024, %v5834
      %v5850 = vor.u32 %v5848, %v5849
      %vm5851 = vcmp.lt.s32.totalorder %v5832, 1
      %vm5852 = vcmp.lt.s32.totalorder %v5832, 2
      %vm5853 = vcmp.lt.s32.totalorder %v5832, 3
      %vm5854 = vcmp.lt.s32.totalorder %v5832, 4
      %v5855 = vsel %vm5851, %v5835, %v5838
      %v5856 = vsel %vm5854, %v5844, 2102212464
      %v5857 = vsel %vm5853, %v5841, %v5856
      %v5858 = vsel %vm5852, %v5855, %v5857
      %v5859 = vsel %vm5851, %v5838, %v5841
      %v5860 = vsel %vm5854, %v5847, 920167782
      %v5861 = vsel %vm5853, %v5844, %v5860
      %v5862 = vsel %vm5852, %v5859, %v5861
      %v5863 = vsel %vm5851, %v5841, %v5844
      %v5864 = vsel %vm5854, %v5850, 1326507024
      %v5865 = vsel %vm5853, %v5847, %v5864
      %v5866 = vsel %vm5852, %v5863, %v5865
      %v5867 = vshll.u32 %v5827, 8
      %v5868 = vmul.u32.u64.compose %v5867, %v5866
      %v5869 = vextract.low.u32 %v5868
      %v5870 = vextract.high.u32 %v5868
      %v5871 = vmul.u32.u64.compose %v5867, %v5862
      %v5872 = vextract.low.u32 %v5871
      %v5873 = vextract.high.u32 %v5871
      %v5874 = vmul.u32 %v5867, %v5858
      %v5875 = vadd.s32 %v5870, %v5872
      %vm5876 = vc.u32 %v5870, %v5872
      %v5877 = vadd.s32 %v5873, 1
      %v5878 = vsel %vm5876, %v5877, %v5873
      %v5879 = vadd.s32 %v5874, %v5878
      %v5880 = vadd.s32 %v5879, 536870912
      %v5881 = vshrl.u32 %v5880, 30
      %v5882 = vshll.u32 %v5881, 30
      %v5883 = vsub.s32 %v5879, %v5882
      %vm5884 = vcmp.lt.s32.totalorder %v5883, 0
      %v5885 = vsub.s32 0, %v5883
      %v5886 = vsel %vm5884, %v5885, %v5883
      %v5887 = vclz %v5886
      %v5888 = vsub.s32 %v5887, 2
      %vm5889 = vcmp.gt.s32.totalorder 0, %v5888
      %v5890 = vsel %vm5889, 0, %v5888
      %v5891 = vsub.s32 32, %v5890
      %v5892 = vshll.u32 %v5883, %v5890
      %v5893 = vshrl.u32 %v5875, %v5891
      %v5894 = vor.u32 %v5892, %v5893
      %v5895 = vsub.s32 4294967266, %v5890
      %v5896 = vadd.s32 %v5895, 127
      %v5897 = vshll.u32 %v5896, 23
      %v5898 = vor.u32 4788187, %v5897
      %v5899 = vand.u32 2147483647, %v5898
      %v5901 = vcvt.s32.f32 %v5894
      %v5902 = vmul.f32 %v5901, %v5899
      %v5903 = vxor.u32 %v5902, 2147483648
      %v5904 = vsel %vm5821, %v5903, %v5902
      %v5905 = vsub.s32 4, %v5881
      %v5906 = vsel %vm5821, %v5905, %v5881
      %v5907 = vsel %vm5820, %v623, %v5904
      %v5908 = vsel %vm5820, 0, %v5906
      %v5909 = vcosq.f32.pop %v5907
      %v5910 = vsinq.f32.pop %v5907
      %vm5911 = vweird.f32 %v623
      %v5912 = vand.u32 %v5908, 3
      %vm5913 = vcmp.lt.s32.totalorder %v5912, 2
      %vm5914 = vcmp.eq.s32.totalorder %v5912, 0
      %v5915 = vxor.u32 %v5910, 2147483648
      %v5916 = vsel %vm5914, %v5909, %v5915
      %vm5917 = vcmp.eq.s32.totalorder %v5912, 2
      %v5918 = vxor.u32 %v5909, 2147483648
      %v5919 = vsel %vm5917, %v5918, %v5910
      %v5920 = vsel %vm5913, %v5916, %v5919
      %v5921 = vsel %vm5911, nan, %v5920
      %v5922 = vand.u32 2147483647, %v624
      %vm5923 = vcmp.le.f32.partialorder %v5922, 0.7853982
      %vm5924 = vcmp.lt.s32.totalorder %v624, 0
      %v5925 = vand.u32 %v624, 2139095040
      %v5926 = vshrl.u32 %v5925, 23
      %v5927 = vsub.s32 %v5926, 127
      %v5928 = vand.u32 2147483647, %v624
      %v5929 = vand.u32 %v5928, 8388607
      %v5930 = vor.u32 %v5929, 8388608
      %v5931 = vsub.s32 0, %v5930
      %v5932 = vadd.s32 %v5927, 1
      %vm5933 = vcmp.gt.s32.totalorder %v5932, 0
      %v5934 = vsel %vm5933, %v5932, 0
      %v5935 = vshrl.u32 %v5934, 5
      %v5936 = vand.u32 %v5934, 31
      %v5937 = vsub.s32 32, %v5936
      %v5938 = vshrl.u32 683565275, %v5937
      %v5939 = vshll.u32 683565275, %v5936
      %v5940 = vshrl.u32 2475754826, %v5937
      %v5941 = vor.u32 %v5939, %v5940
      %v5942 = vshll.u32 2475754826, %v5936
      %v5943 = vshrl.u32 2131351028, %v5937
      %v5944 = vor.u32 %v5942, %v5943
      %v5945 = vshll.u32 2131351028, %v5936
      %v5946 = vshrl.u32 2102212464, %v5937
      %v5947 = vor.u32 %v5945, %v5946
      %v5948 = vshll.u32 2102212464, %v5936
      %v5949 = vshrl.u32 920167782, %v5937
      %v5950 = vor.u32 %v5948, %v5949
      %v5951 = vshll.u32 920167782, %v5936
      %v5952 = vshrl.u32 1326507024, %v5937
      %v5953 = vor.u32 %v5951, %v5952
      %vm5954 = vcmp.lt.s32.totalorder %v5935, 1
      %vm5955 = vcmp.lt.s32.totalorder %v5935, 2
      %vm5956 = vcmp.lt.s32.totalorder %v5935, 3
      %vm5957 = vcmp.lt.s32.totalorder %v5935, 4
      %v5958 = vsel %vm5954, %v5938, %v5941
      %v5959 = vsel %vm5957, %v5947, 2102212464
      %v5960 = vsel %vm5956, %v5944, %v5959
      %v5961 = vsel %vm5955, %v5958, %v5960
      %v5962 = vsel %vm5954, %v5941, %v5944
      %v5963 = vsel %vm5957, %v5950, 920167782
      %v5964 = vsel %vm5956, %v5947, %v5963
      %v5965 = vsel %vm5955, %v5962, %v5964
      %v5966 = vsel %vm5954, %v5944, %v5947
      %v5967 = vsel %vm5957, %v5953, 1326507024
      %v5968 = vsel %vm5956, %v5950, %v5967
      %v5969 = vsel %vm5955, %v5966, %v5968
      %v5970 = vshll.u32 %v5930, 8
      %v5971 = vmul.u32.u64.compose %v5970, %v5969
      %v5972 = vextract.low.u32 %v5971
      %v5973 = vextract.high.u32 %v5971
      %v5974 = vmul.u32.u64.compose %v5970, %v5965
      %v5975 = vextract.low.u32 %v5974
      %v5976 = vextract.high.u32 %v5974
      %v5977 = vmul.u32 %v5970, %v5961
      %v5978 = vadd.s32 %v5973, %v5975
      %vm5979 = vc.u32 %v5973, %v5975
      %v5980 = vadd.s32 %v5976, 1
      %v5981 = vsel %vm5979, %v5980, %v5976
      %v5982 = vadd.s32 %v5977, %v5981
      %v5983 = vadd.s32 %v5982, 536870912
      %v5984 = vshrl.u32 %v5983, 30
      %v5985 = vshll.u32 %v5984, 30
      %v5986 = vsub.s32 %v5982, %v5985
      %vm5987 = vcmp.lt.s32.totalorder %v5986, 0
      %v5988 = vsub.s32 0, %v5986
      %v5989 = vsel %vm5987, %v5988, %v5986
      %v5990 = vclz %v5989
      %v5991 = vsub.s32 %v5990, 2
      %vm5992 = vcmp.gt.s32.totalorder 0, %v5991
      %v5993 = vsel %vm5992, 0, %v5991
      %v5994 = vsub.s32 32, %v5993
      %v5995 = vshll.u32 %v5986, %v5993
      %v5996 = vshrl.u32 %v5978, %v5994
      %v5997 = vor.u32 %v5995, %v5996
      %v5998 = vsub.s32 4294967266, %v5993
      %v5999 = vadd.s32 %v5998, 127
      %v6000 = vshll.u32 %v5999, 23
      %v6001 = vor.u32 4788187, %v6000
      %v6002 = vand.u32 2147483647, %v6001
      %v6004 = vcvt.s32.f32 %v5997
      %v6005 = vmul.f32 %v6004, %v6002
      %v6006 = vxor.u32 %v6005, 2147483648
      %v6007 = vsel %vm5924, %v6006, %v6005
      %v6008 = vsub.s32 4, %v5984
      %v6009 = vsel %vm5924, %v6008, %v5984
      %v6010 = vsel %vm5923, %v624, %v6007
      %v6011 = vsel %vm5923, 0, %v6009
      %v6012 = vcosq.f32.pop %v6010
      %v6013 = vsinq.f32.pop %v6010
      %vm6014 = vweird.f32 %v624
      %v6015 = vand.u32 %v6011, 3
      %vm6016 = vcmp.lt.s32.totalorder %v6015, 2
      %vm6017 = vcmp.eq.s32.totalorder %v6015, 0
      %v6018 = vxor.u32 %v6013, 2147483648
      %v6019 = vsel %vm6017, %v6012, %v6018
      %vm6020 = vcmp.eq.s32.totalorder %v6015, 2
      %v6021 = vxor.u32 %v6012, 2147483648
      %v6022 = vsel %vm6020, %v6021, %v6013
      %v6023 = vsel %vm6016, %v6019, %v6022
      %v6024 = vsel %vm6014, nan, %v6023
      %v6025 = vand.u32 2147483647, %v625
      %vm6026 = vcmp.le.f32.partialorder %v6025, 0.7853982
      %vm6027 = vcmp.lt.s32.totalorder %v625, 0
      %v6028 = vand.u32 %v625, 2139095040
      %v6029 = vshrl.u32 %v6028, 23
      %v6030 = vsub.s32 %v6029, 127
      %v6031 = vand.u32 2147483647, %v625
      %v6032 = vand.u32 %v6031, 8388607
      %v6033 = vor.u32 %v6032, 8388608
      %v6034 = vsub.s32 0, %v6033
      %v6035 = vadd.s32 %v6030, 1
      %vm6036 = vcmp.gt.s32.totalorder %v6035, 0
      %v6037 = vsel %vm6036, %v6035, 0
      %v6038 = vshrl.u32 %v6037, 5
      %v6039 = vand.u32 %v6037, 31
      %v6040 = vsub.s32 32, %v6039
      %v6041 = vshrl.u32 683565275, %v6040
      %v6042 = vshll.u32 683565275, %v6039
      %v6043 = vshrl.u32 2475754826, %v6040
      %v6044 = vor.u32 %v6042, %v6043
      %v6045 = vshll.u32 2475754826, %v6039
      %v6046 = vshrl.u32 2131351028, %v6040
      %v6047 = vor.u32 %v6045, %v6046
      %v6048 = vshll.u32 2131351028, %v6039
      %v6049 = vshrl.u32 2102212464, %v6040
      %v6050 = vor.u32 %v6048, %v6049
      %v6051 = vshll.u32 2102212464, %v6039
      %v6052 = vshrl.u32 920167782, %v6040
      %v6053 = vor.u32 %v6051, %v6052
      %v6054 = vshll.u32 920167782, %v6039
      %v6055 = vshrl.u32 1326507024, %v6040
      %v6056 = vor.u32 %v6054, %v6055
      %vm6057 = vcmp.lt.s32.totalorder %v6038, 1
      %vm6058 = vcmp.lt.s32.totalorder %v6038, 2
      %vm6059 = vcmp.lt.s32.totalorder %v6038, 3
      %vm6060 = vcmp.lt.s32.totalorder %v6038, 4
      %v6061 = vsel %vm6057, %v6041, %v6044
      %v6062 = vsel %vm6060, %v6050, 2102212464
      %v6063 = vsel %vm6059, %v6047, %v6062
      %v6064 = vsel %vm6058, %v6061, %v6063
      %v6065 = vsel %vm6057, %v6044, %v6047
      %v6066 = vsel %vm6060, %v6053, 920167782
      %v6067 = vsel %vm6059, %v6050, %v6066
      %v6068 = vsel %vm6058, %v6065, %v6067
      %v6069 = vsel %vm6057, %v6047, %v6050
      %v6070 = vsel %vm6060, %v6056, 1326507024
      %v6071 = vsel %vm6059, %v6053, %v6070
      %v6072 = vsel %vm6058, %v6069, %v6071
      %v6073 = vshll.u32 %v6033, 8
      %v6074 = vmul.u32.u64.compose %v6073, %v6072
      %v6075 = vextract.low.u32 %v6074
      %v6076 = vextract.high.u32 %v6074
      %v6077 = vmul.u32.u64.compose %v6073, %v6068
      %v6078 = vextract.low.u32 %v6077
      %v6079 = vextract.high.u32 %v6077
      %v6080 = vmul.u32 %v6073, %v6064
      %v6081 = vadd.s32 %v6076, %v6078
      %vm6082 = vc.u32 %v6076, %v6078
      %v6083 = vadd.s32 %v6079, 1
      %v6084 = vsel %vm6082, %v6083, %v6079
      %v6085 = vadd.s32 %v6080, %v6084
      %v6086 = vadd.s32 %v6085, 536870912
      %v6087 = vshrl.u32 %v6086, 30
      %v6088 = vshll.u32 %v6087, 30
      %v6089 = vsub.s32 %v6085, %v6088
      %vm6090 = vcmp.lt.s32.totalorder %v6089, 0
      %v6091 = vsub.s32 0, %v6089
      %v6092 = vsel %vm6090, %v6091, %v6089
      %v6093 = vclz %v6092
      %v6094 = vsub.s32 %v6093, 2
      %vm6095 = vcmp.gt.s32.totalorder 0, %v6094
      %v6096 = vsel %vm6095, 0, %v6094
      %v6097 = vsub.s32 32, %v6096
      %v6098 = vshll.u32 %v6089, %v6096
      %v6099 = vshrl.u32 %v6081, %v6097
      %v6100 = vor.u32 %v6098, %v6099
      %v6101 = vsub.s32 4294967266, %v6096
      %v6102 = vadd.s32 %v6101, 127
      %v6103 = vshll.u32 %v6102, 23
      %v6104 = vor.u32 4788187, %v6103
      %v6105 = vand.u32 2147483647, %v6104
      %v6107 = vcvt.s32.f32 %v6100
      %v6108 = vmul.f32 %v6107, %v6105
      %v6109 = vxor.u32 %v6108, 2147483648
      %v6110 = vsel %vm6027, %v6109, %v6108
      %v6111 = vsub.s32 4, %v6087
      %v6112 = vsel %vm6027, %v6111, %v6087
      %v6113 = vsel %vm6026, %v625, %v6110
      %v6114 = vsel %vm6026, 0, %v6112
      %v6115 = vcosq.f32.pop %v6113
      %v6116 = vsinq.f32.pop %v6113
      %vm6117 = vweird.f32 %v625
      %v6118 = vand.u32 %v6114, 3
      %vm6119 = vcmp.lt.s32.totalorder %v6118, 2
      %vm6120 = vcmp.eq.s32.totalorder %v6118, 0
      %v6121 = vxor.u32 %v6116, 2147483648
      %v6122 = vsel %vm6120, %v6115, %v6121
      %vm6123 = vcmp.eq.s32.totalorder %v6118, 2
      %v6124 = vxor.u32 %v6115, 2147483648
      %v6125 = vsel %vm6123, %v6124, %v6116
      %v6126 = vsel %vm6119, %v6122, %v6125
      %v6127 = vsel %vm6117, nan, %v6126
      %v6128 = vand.u32 2147483647, %v626
      %vm6129 = vcmp.le.f32.partialorder %v6128, 0.7853982
      %vm6130 = vcmp.lt.s32.totalorder %v626, 0
      %v6131 = vand.u32 %v626, 2139095040
      %v6132 = vshrl.u32 %v6131, 23
      %v6133 = vsub.s32 %v6132, 127
      %v6134 = vand.u32 2147483647, %v626
      %v6135 = vand.u32 %v6134, 8388607
      %v6136 = vor.u32 %v6135, 8388608
      %v6137 = vsub.s32 0, %v6136
      %v6138 = vadd.s32 %v6133, 1
      %vm6139 = vcmp.gt.s32.totalorder %v6138, 0
      %v6140 = vsel %vm6139, %v6138, 0
      %v6141 = vshrl.u32 %v6140, 5
      %v6142 = vand.u32 %v6140, 31
      %v6143 = vsub.s32 32, %v6142
      %v6144 = vshrl.u32 683565275, %v6143
      %v6145 = vshll.u32 683565275, %v6142
      %v6146 = vshrl.u32 2475754826, %v6143
      %v6147 = vor.u32 %v6145, %v6146
      %v6148 = vshll.u32 2475754826, %v6142
      %v6149 = vshrl.u32 2131351028, %v6143
      %v6150 = vor.u32 %v6148, %v6149
      %v6151 = vshll.u32 2131351028, %v6142
      %v6152 = vshrl.u32 2102212464, %v6143
      %v6153 = vor.u32 %v6151, %v6152
      %v6154 = vshll.u32 2102212464, %v6142
      %v6155 = vshrl.u32 920167782, %v6143
      %v6156 = vor.u32 %v6154, %v6155
      %v6157 = vshll.u32 920167782, %v6142
      %v6158 = vshrl.u32 1326507024, %v6143
      %v6159 = vor.u32 %v6157, %v6158
      %vm6160 = vcmp.lt.s32.totalorder %v6141, 1
      %vm6161 = vcmp.lt.s32.totalorder %v6141, 2
      %vm6162 = vcmp.lt.s32.totalorder %v6141, 3
      %vm6163 = vcmp.lt.s32.totalorder %v6141, 4
      %v6164 = vsel %vm6160, %v6144, %v6147
      %v6165 = vsel %vm6163, %v6153, 2102212464
      %v6166 = vsel %vm6162, %v6150, %v6165
      %v6167 = vsel %vm6161, %v6164, %v6166
      %v6168 = vsel %vm6160, %v6147, %v6150
      %v6169 = vsel %vm6163, %v6156, 920167782
      %v6170 = vsel %vm6162, %v6153, %v6169
      %v6171 = vsel %vm6161, %v6168, %v6170
      %v6172 = vsel %vm6160, %v6150, %v6153
      %v6173 = vsel %vm6163, %v6159, 1326507024
      %v6174 = vsel %vm6162, %v6156, %v6173
      %v6175 = vsel %vm6161, %v6172, %v6174
      %v6176 = vshll.u32 %v6136, 8
      %v6177 = vmul.u32.u64.compose %v6176, %v6175
      %v6178 = vextract.low.u32 %v6177
      %v6179 = vextract.high.u32 %v6177
      %v6180 = vmul.u32.u64.compose %v6176, %v6171
      %v6181 = vextract.low.u32 %v6180
      %v6182 = vextract.high.u32 %v6180
      %v6183 = vmul.u32 %v6176, %v6167
      %v6184 = vadd.s32 %v6179, %v6181
      %vm6185 = vc.u32 %v6179, %v6181
      %v6186 = vadd.s32 %v6182, 1
      %v6187 = vsel %vm6185, %v6186, %v6182
      %v6188 = vadd.s32 %v6183, %v6187
      %v6189 = vadd.s32 %v6188, 536870912
      %v6190 = vshrl.u32 %v6189, 30
      %v6191 = vshll.u32 %v6190, 30
      %v6192 = vsub.s32 %v6188, %v6191
      %vm6193 = vcmp.lt.s32.totalorder %v6192, 0
      %v6194 = vsub.s32 0, %v6192
      %v6195 = vsel %vm6193, %v6194, %v6192
      %v6196 = vclz %v6195
      %v6197 = vsub.s32 %v6196, 2
      %vm6198 = vcmp.gt.s32.totalorder 0, %v6197
      %v6199 = vsel %vm6198, 0, %v6197
      %v6200 = vsub.s32 32, %v6199
      %v6201 = vshll.u32 %v6192, %v6199
      %v6202 = vshrl.u32 %v6184, %v6200
      %v6203 = vor.u32 %v6201, %v6202
      %v6204 = vsub.s32 4294967266, %v6199
      %v6205 = vadd.s32 %v6204, 127
      %v6206 = vshll.u32 %v6205, 23
      %v6207 = vor.u32 4788187, %v6206
      %v6208 = vand.u32 2147483647, %v6207
      %v6210 = vcvt.s32.f32 %v6203
      %v6211 = vmul.f32 %v6210, %v6208
      %v6212 = vxor.u32 %v6211, 2147483648
      %v6213 = vsel %vm6130, %v6212, %v6211
      %v6214 = vsub.s32 4, %v6190
      %v6215 = vsel %vm6130, %v6214, %v6190
      %v6216 = vsel %vm6129, %v626, %v6213
      %v6217 = vsel %vm6129, 0, %v6215
      %v6218 = vcosq.f32.pop %v6216
      %v6219 = vsinq.f32.pop %v6216
      %vm6220 = vweird.f32 %v626
      %v6221 = vand.u32 %v6217, 3
      %vm6222 = vcmp.lt.s32.totalorder %v6221, 2
      %vm6223 = vcmp.eq.s32.totalorder %v6221, 0
      %v6224 = vxor.u32 %v6219, 2147483648
      %v6225 = vsel %vm6223, %v6218, %v6224
      %vm6226 = vcmp.eq.s32.totalorder %v6221, 2
      %v6227 = vxor.u32 %v6218, 2147483648
      %v6228 = vsel %vm6226, %v6227, %v6219
      %v6229 = vsel %vm6222, %v6225, %v6228
      %v6230 = vsel %vm6220, nan, %v6229
      %v6231 = vand.u32 2147483647, %v627
      %vm6232 = vcmp.le.f32.partialorder %v6231, 0.7853982
      %vm6233 = vcmp.lt.s32.totalorder %v627, 0
      %v6234 = vand.u32 %v627, 2139095040
      %v6235 = vshrl.u32 %v6234, 23
      %v6236 = vsub.s32 %v6235, 127
      %v6237 = vand.u32 2147483647, %v627
      %v6238 = vand.u32 %v6237, 8388607
      %v6239 = vor.u32 %v6238, 8388608
      %v6240 = vsub.s32 0, %v6239
      %v6241 = vadd.s32 %v6236, 1
      %vm6242 = vcmp.gt.s32.totalorder %v6241, 0
      %v6243 = vsel %vm6242, %v6241, 0
      %v6244 = vshrl.u32 %v6243, 5
      %v6245 = vand.u32 %v6243, 31
      %v6246 = vsub.s32 32, %v6245
      %v6247 = vshrl.u32 683565275, %v6246
      %v6248 = vshll.u32 683565275, %v6245
      %v6249 = vshrl.u32 2475754826, %v6246
      %v6250 = vor.u32 %v6248, %v6249
      %v6251 = vshll.u32 2475754826, %v6245
      %v6252 = vshrl.u32 2131351028, %v6246
      %v6253 = vor.u32 %v6251, %v6252
      %v6254 = vshll.u32 2131351028, %v6245
      %v6255 = vshrl.u32 2102212464, %v6246
      %v6256 = vor.u32 %v6254, %v6255
      %v6257 = vshll.u32 2102212464, %v6245
      %v6258 = vshrl.u32 920167782, %v6246
      %v6259 = vor.u32 %v6257, %v6258
      %v6260 = vshll.u32 920167782, %v6245
      %v6261 = vshrl.u32 1326507024, %v6246
      %v6262 = vor.u32 %v6260, %v6261
      %vm6263 = vcmp.lt.s32.totalorder %v6244, 1
      %vm6264 = vcmp.lt.s32.totalorder %v6244, 2
      %vm6265 = vcmp.lt.s32.totalorder %v6244, 3
      %vm6266 = vcmp.lt.s32.totalorder %v6244, 4
      %v6267 = vsel %vm6263, %v6247, %v6250
      %v6268 = vsel %vm6266, %v6256, 2102212464
      %v6269 = vsel %vm6265, %v6253, %v6268
      %v6270 = vsel %vm6264, %v6267, %v6269
      %v6271 = vsel %vm6263, %v6250, %v6253
      %v6272 = vsel %vm6266, %v6259, 920167782
      %v6273 = vsel %vm6265, %v6256, %v6272
      %v6274 = vsel %vm6264, %v6271, %v6273
      %v6275 = vsel %vm6263, %v6253, %v6256
      %v6276 = vsel %vm6266, %v6262, 1326507024
      %v6277 = vsel %vm6265, %v6259, %v6276
      %v6278 = vsel %vm6264, %v6275, %v6277
      %v6279 = vshll.u32 %v6239, 8
      %v6280 = vmul.u32.u64.compose %v6279, %v6278
      %v6281 = vextract.low.u32 %v6280
      %v6282 = vextract.high.u32 %v6280
      %v6283 = vmul.u32.u64.compose %v6279, %v6274
      %v6284 = vextract.low.u32 %v6283
      %v6285 = vextract.high.u32 %v6283
      %v6286 = vmul.u32 %v6279, %v6270
      %v6287 = vadd.s32 %v6282, %v6284
      %vm6288 = vc.u32 %v6282, %v6284
      %v6289 = vadd.s32 %v6285, 1
      %v6290 = vsel %vm6288, %v6289, %v6285
      %v6291 = vadd.s32 %v6286, %v6290
      %v6292 = vadd.s32 %v6291, 536870912
      %v6293 = vshrl.u32 %v6292, 30
      %v6294 = vshll.u32 %v6293, 30
      %v6295 = vsub.s32 %v6291, %v6294
      %vm6296 = vcmp.lt.s32.totalorder %v6295, 0
      %v6297 = vsub.s32 0, %v6295
      %v6298 = vsel %vm6296, %v6297, %v6295
      %v6299 = vclz %v6298
      %v6300 = vsub.s32 %v6299, 2
      %vm6301 = vcmp.gt.s32.totalorder 0, %v6300
      %v6302 = vsel %vm6301, 0, %v6300
      %v6303 = vsub.s32 32, %v6302
      %v6304 = vshll.u32 %v6295, %v6302
      %v6305 = vshrl.u32 %v6287, %v6303
      %v6306 = vor.u32 %v6304, %v6305
      %v6307 = vsub.s32 4294967266, %v6302
      %v6308 = vadd.s32 %v6307, 127
      %v6309 = vshll.u32 %v6308, 23
      %v6310 = vor.u32 4788187, %v6309
      %v6311 = vand.u32 2147483647, %v6310
      %v6313 = vcvt.s32.f32 %v6306
      %v6314 = vmul.f32 %v6313, %v6311
      %v6315 = vxor.u32 %v6314, 2147483648
      %v6316 = vsel %vm6233, %v6315, %v6314
      %v6317 = vsub.s32 4, %v6293
      %v6318 = vsel %vm6233, %v6317, %v6293
      %v6319 = vsel %vm6232, %v627, %v6316
      %v6320 = vsel %vm6232, 0, %v6318
      %v6321 = vcosq.f32.pop %v6319
      %v6322 = vsinq.f32.pop %v6319
      %vm6323 = vweird.f32 %v627
      %v6324 = vand.u32 %v6320, 3
      %vm6325 = vcmp.lt.s32.totalorder %v6324, 2
      %vm6326 = vcmp.eq.s32.totalorder %v6324, 0
      %v6327 = vxor.u32 %v6322, 2147483648
      %v6328 = vsel %vm6326, %v6321, %v6327
      %vm6329 = vcmp.eq.s32.totalorder %v6324, 2
      %v6330 = vxor.u32 %v6321, 2147483648
      %v6331 = vsel %vm6329, %v6330, %v6322
      %v6332 = vsel %vm6325, %v6328, %v6331
      %v6333 = vsel %vm6323, nan, %v6332
      %v6334 = vand.u32 2147483647, %v628
      %vm6335 = vcmp.le.f32.partialorder %v6334, 0.7853982
      %vm6336 = vcmp.lt.s32.totalorder %v628, 0
      %v6337 = vand.u32 %v628, 2139095040
      %v6338 = vshrl.u32 %v6337, 23
      %v6339 = vsub.s32 %v6338, 127
      %v6340 = vand.u32 2147483647, %v628
      %v6341 = vand.u32 %v6340, 8388607
      %v6342 = vor.u32 %v6341, 8388608
      %v6343 = vsub.s32 0, %v6342
      %v6344 = vadd.s32 %v6339, 1
      %vm6345 = vcmp.gt.s32.totalorder %v6344, 0
      %v6346 = vsel %vm6345, %v6344, 0
      %v6347 = vshrl.u32 %v6346, 5
      %v6348 = vand.u32 %v6346, 31
      %v6349 = vsub.s32 32, %v6348
      %v6350 = vshrl.u32 683565275, %v6349
      %v6351 = vshll.u32 683565275, %v6348
      %v6352 = vshrl.u32 2475754826, %v6349
      %v6353 = vor.u32 %v6351, %v6352
      %v6354 = vshll.u32 2475754826, %v6348
      %v6355 = vshrl.u32 2131351028, %v6349
      %v6356 = vor.u32 %v6354, %v6355
      %v6357 = vshll.u32 2131351028, %v6348
      %v6358 = vshrl.u32 2102212464, %v6349
      %v6359 = vor.u32 %v6357, %v6358
      %v6360 = vshll.u32 2102212464, %v6348
      %v6361 = vshrl.u32 920167782, %v6349
      %v6362 = vor.u32 %v6360, %v6361
      %v6363 = vshll.u32 920167782, %v6348
      %v6364 = vshrl.u32 1326507024, %v6349
      %v6365 = vor.u32 %v6363, %v6364
      %vm6366 = vcmp.lt.s32.totalorder %v6347, 1
      %vm6367 = vcmp.lt.s32.totalorder %v6347, 2
      %vm6368 = vcmp.lt.s32.totalorder %v6347, 3
      %vm6369 = vcmp.lt.s32.totalorder %v6347, 4
      %v6370 = vsel %vm6366, %v6350, %v6353
      %v6371 = vsel %vm6369, %v6359, 2102212464
      %v6372 = vsel %vm6368, %v6356, %v6371
      %v6373 = vsel %vm6367, %v6370, %v6372
      %v6374 = vsel %vm6366, %v6353, %v6356
      %v6375 = vsel %vm6369, %v6362, 920167782
      %v6376 = vsel %vm6368, %v6359, %v6375
      %v6377 = vsel %vm6367, %v6374, %v6376
      %v6378 = vsel %vm6366, %v6356, %v6359
      %v6379 = vsel %vm6369, %v6365, 1326507024
      %v6380 = vsel %vm6368, %v6362, %v6379
      %v6381 = vsel %vm6367, %v6378, %v6380
      %v6382 = vshll.u32 %v6342, 8
      %v6383 = vmul.u32.u64.compose %v6382, %v6381
      %v6384 = vextract.low.u32 %v6383
      %v6385 = vextract.high.u32 %v6383
      %v6386 = vmul.u32.u64.compose %v6382, %v6377
      %v6387 = vextract.low.u32 %v6386
      %v6388 = vextract.high.u32 %v6386
      %v6389 = vmul.u32 %v6382, %v6373
      %v6390 = vadd.s32 %v6385, %v6387
      %vm6391 = vc.u32 %v6385, %v6387
      %v6392 = vadd.s32 %v6388, 1
      %v6393 = vsel %vm6391, %v6392, %v6388
      %v6394 = vadd.s32 %v6389, %v6393
      %v6395 = vadd.s32 %v6394, 536870912
      %v6396 = vshrl.u32 %v6395, 30
      %v6397 = vshll.u32 %v6396, 30
      %v6398 = vsub.s32 %v6394, %v6397
      %vm6399 = vcmp.lt.s32.totalorder %v6398, 0
      %v6400 = vsub.s32 0, %v6398
      %v6401 = vsel %vm6399, %v6400, %v6398
      %v6402 = vclz %v6401
      %v6403 = vsub.s32 %v6402, 2
      %vm6404 = vcmp.gt.s32.totalorder 0, %v6403
      %v6405 = vsel %vm6404, 0, %v6403
      %v6406 = vsub.s32 32, %v6405
      %v6407 = vshll.u32 %v6398, %v6405
      %v6408 = vshrl.u32 %v6390, %v6406
      %v6409 = vor.u32 %v6407, %v6408
      %v6410 = vsub.s32 4294967266, %v6405
      %v6411 = vadd.s32 %v6410, 127
      %v6412 = vshll.u32 %v6411, 23
      %v6413 = vor.u32 4788187, %v6412
      %v6414 = vand.u32 2147483647, %v6413
      %v6416 = vcvt.s32.f32 %v6409
      %v6417 = vmul.f32 %v6416, %v6414
      %v6418 = vxor.u32 %v6417, 2147483648
      %v6419 = vsel %vm6336, %v6418, %v6417
      %v6420 = vsub.s32 4, %v6396
      %v6421 = vsel %vm6336, %v6420, %v6396
      %v6422 = vsel %vm6335, %v628, %v6419
      %v6423 = vsel %vm6335, 0, %v6421
      %v6424 = vcosq.f32.pop %v6422
      %v6425 = vsinq.f32.pop %v6422
      %vm6426 = vweird.f32 %v628
      %v6427 = vand.u32 %v6423, 3
      %vm6428 = vcmp.lt.s32.totalorder %v6427, 2
      %vm6429 = vcmp.eq.s32.totalorder %v6427, 0
      %v6430 = vxor.u32 %v6425, 2147483648
      %v6431 = vsel %vm6429, %v6424, %v6430
      %vm6432 = vcmp.eq.s32.totalorder %v6427, 2
      %v6433 = vxor.u32 %v6424, 2147483648
      %v6434 = vsel %vm6432, %v6433, %v6425
      %v6435 = vsel %vm6428, %v6431, %v6434
      %v6436 = vsel %vm6426, nan, %v6435
      %v6437 = vand.u32 2147483647, %v629
      %vm6438 = vcmp.le.f32.partialorder %v6437, 0.7853982
      %vm6439 = vcmp.lt.s32.totalorder %v629, 0
      %v6440 = vand.u32 %v629, 2139095040
      %v6441 = vshrl.u32 %v6440, 23
      %v6442 = vsub.s32 %v6441, 127
      %v6443 = vand.u32 2147483647, %v629
      %v6444 = vand.u32 %v6443, 8388607
      %v6445 = vor.u32 %v6444, 8388608
      %v6446 = vsub.s32 0, %v6445
      %v6447 = vadd.s32 %v6442, 1
      %vm6448 = vcmp.gt.s32.totalorder %v6447, 0
      %v6449 = vsel %vm6448, %v6447, 0
      %v6450 = vshrl.u32 %v6449, 5
      %v6451 = vand.u32 %v6449, 31
      %v6452 = vsub.s32 32, %v6451
      %v6453 = vshrl.u32 683565275, %v6452
      %v6454 = vshll.u32 683565275, %v6451
      %v6455 = vshrl.u32 2475754826, %v6452
      %v6456 = vor.u32 %v6454, %v6455
      %v6457 = vshll.u32 2475754826, %v6451
      %v6458 = vshrl.u32 2131351028, %v6452
      %v6459 = vor.u32 %v6457, %v6458
      %v6460 = vshll.u32 2131351028, %v6451
      %v6461 = vshrl.u32 2102212464, %v6452
      %v6462 = vor.u32 %v6460, %v6461
      %v6463 = vshll.u32 2102212464, %v6451
      %v6464 = vshrl.u32 920167782, %v6452
      %v6465 = vor.u32 %v6463, %v6464
      %v6466 = vshll.u32 920167782, %v6451
      %v6467 = vshrl.u32 1326507024, %v6452
      %v6468 = vor.u32 %v6466, %v6467
      %vm6469 = vcmp.lt.s32.totalorder %v6450, 1
      %vm6470 = vcmp.lt.s32.totalorder %v6450, 2
      %vm6471 = vcmp.lt.s32.totalorder %v6450, 3
      %vm6472 = vcmp.lt.s32.totalorder %v6450, 4
      %v6473 = vsel %vm6469, %v6453, %v6456
      %v6474 = vsel %vm6472, %v6462, 2102212464
      %v6475 = vsel %vm6471, %v6459, %v6474
      %v6476 = vsel %vm6470, %v6473, %v6475
      %v6477 = vsel %vm6469, %v6456, %v6459
      %v6478 = vsel %vm6472, %v6465, 920167782
      %v6479 = vsel %vm6471, %v6462, %v6478
      %v6480 = vsel %vm6470, %v6477, %v6479
      %v6481 = vsel %vm6469, %v6459, %v6462
      %v6482 = vsel %vm6472, %v6468, 1326507024
      %v6483 = vsel %vm6471, %v6465, %v6482
      %v6484 = vsel %vm6470, %v6481, %v6483
      %v6485 = vshll.u32 %v6445, 8
      %v6486 = vmul.u32.u64.compose %v6485, %v6484
      %v6487 = vextract.low.u32 %v6486
      %v6488 = vextract.high.u32 %v6486
      %v6489 = vmul.u32.u64.compose %v6485, %v6480
      %v6490 = vextract.low.u32 %v6489
      %v6491 = vextract.high.u32 %v6489
      %v6492 = vmul.u32 %v6485, %v6476
      %v6493 = vadd.s32 %v6488, %v6490
      %vm6494 = vc.u32 %v6488, %v6490
      %v6495 = vadd.s32 %v6491, 1
      %v6496 = vsel %vm6494, %v6495, %v6491
      %v6497 = vadd.s32 %v6492, %v6496
      %v6498 = vadd.s32 %v6497, 536870912
      %v6499 = vshrl.u32 %v6498, 30
      %v6500 = vshll.u32 %v6499, 30
      %v6501 = vsub.s32 %v6497, %v6500
      %vm6502 = vcmp.lt.s32.totalorder %v6501, 0
      %v6503 = vsub.s32 0, %v6501
      %v6504 = vsel %vm6502, %v6503, %v6501
      %v6505 = vclz %v6504
      %v6506 = vsub.s32 %v6505, 2
      %vm6507 = vcmp.gt.s32.totalorder 0, %v6506
      %v6508 = vsel %vm6507, 0, %v6506
      %v6509 = vsub.s32 32, %v6508
      %v6510 = vshll.u32 %v6501, %v6508
      %v6511 = vshrl.u32 %v6493, %v6509
      %v6512 = vor.u32 %v6510, %v6511
      %v6513 = vsub.s32 4294967266, %v6508
      %v6514 = vadd.s32 %v6513, 127
      %v6515 = vshll.u32 %v6514, 23
      %v6516 = vor.u32 4788187, %v6515
      %v6517 = vand.u32 2147483647, %v6516
      %v6519 = vcvt.s32.f32 %v6512
      %v6520 = vmul.f32 %v6519, %v6517
      %v6521 = vxor.u32 %v6520, 2147483648
      %v6522 = vsel %vm6439, %v6521, %v6520
      %v6523 = vsub.s32 4, %v6499
      %v6524 = vsel %vm6439, %v6523, %v6499
      %v6525 = vsel %vm6438, %v629, %v6522
      %v6526 = vsel %vm6438, 0, %v6524
      %v6527 = vcosq.f32.pop %v6525
      %v6528 = vsinq.f32.pop %v6525
      %vm6529 = vweird.f32 %v629
      %v6530 = vand.u32 %v6526, 3
      %vm6531 = vcmp.lt.s32.totalorder %v6530, 2
      %vm6532 = vcmp.eq.s32.totalorder %v6530, 0
      %v6533 = vxor.u32 %v6528, 2147483648
      %v6534 = vsel %vm6532, %v6527, %v6533
      %vm6535 = vcmp.eq.s32.totalorder %v6530, 2
      %v6536 = vxor.u32 %v6527, 2147483648
      %v6537 = vsel %vm6535, %v6536, %v6528
      %v6538 = vsel %vm6531, %v6534, %v6537
      %v6539 = vsel %vm6529, nan, %v6538
      %v6540 = vand.u32 2147483647, %v630
      %vm6541 = vcmp.le.f32.partialorder %v6540, 0.7853982
      %vm6542 = vcmp.lt.s32.totalorder %v630, 0
      %v6543 = vand.u32 %v630, 2139095040
      %v6544 = vshrl.u32 %v6543, 23
      %v6545 = vsub.s32 %v6544, 127
      %v6546 = vand.u32 2147483647, %v630
      %v6547 = vand.u32 %v6546, 8388607
      %v6548 = vor.u32 %v6547, 8388608
      %v6549 = vsub.s32 0, %v6548
      %v6550 = vadd.s32 %v6545, 1
      %vm6551 = vcmp.gt.s32.totalorder %v6550, 0
      %v6552 = vsel %vm6551, %v6550, 0
      %v6553 = vshrl.u32 %v6552, 5
      %v6554 = vand.u32 %v6552, 31
      %v6555 = vsub.s32 32, %v6554
      %v6556 = vshrl.u32 683565275, %v6555
      %v6557 = vshll.u32 683565275, %v6554
      %v6558 = vshrl.u32 2475754826, %v6555
      %v6559 = vor.u32 %v6557, %v6558
      %v6560 = vshll.u32 2475754826, %v6554
      %v6561 = vshrl.u32 2131351028, %v6555
      %v6562 = vor.u32 %v6560, %v6561
      %v6563 = vshll.u32 2131351028, %v6554
      %v6564 = vshrl.u32 2102212464, %v6555
      %v6565 = vor.u32 %v6563, %v6564
      %v6566 = vshll.u32 2102212464, %v6554
      %v6567 = vshrl.u32 920167782, %v6555
      %v6568 = vor.u32 %v6566, %v6567
      %v6569 = vshll.u32 920167782, %v6554
      %v6570 = vshrl.u32 1326507024, %v6555
      %v6571 = vor.u32 %v6569, %v6570
      %vm6572 = vcmp.lt.s32.totalorder %v6553, 1
      %vm6573 = vcmp.lt.s32.totalorder %v6553, 2
      %vm6574 = vcmp.lt.s32.totalorder %v6553, 3
      %vm6575 = vcmp.lt.s32.totalorder %v6553, 4
      %v6576 = vsel %vm6572, %v6556, %v6559
      %v6577 = vsel %vm6575, %v6565, 2102212464
      %v6578 = vsel %vm6574, %v6562, %v6577
      %v6579 = vsel %vm6573, %v6576, %v6578
      %v6580 = vsel %vm6572, %v6559, %v6562
      %v6581 = vsel %vm6575, %v6568, 920167782
      %v6582 = vsel %vm6574, %v6565, %v6581
      %v6583 = vsel %vm6573, %v6580, %v6582
      %v6584 = vsel %vm6572, %v6562, %v6565
      %v6585 = vsel %vm6575, %v6571, 1326507024
      %v6586 = vsel %vm6574, %v6568, %v6585
      %v6587 = vsel %vm6573, %v6584, %v6586
      %v6588 = vshll.u32 %v6548, 8
      %v6589 = vmul.u32.u64.compose %v6588, %v6587
      %v6590 = vextract.low.u32 %v6589
      %v6591 = vextract.high.u32 %v6589
      %v6592 = vmul.u32.u64.compose %v6588, %v6583
      %v6593 = vextract.low.u32 %v6592
      %v6594 = vextract.high.u32 %v6592
      %v6595 = vmul.u32 %v6588, %v6579
      %v6596 = vadd.s32 %v6591, %v6593
      %vm6597 = vc.u32 %v6591, %v6593
      %v6598 = vadd.s32 %v6594, 1
      %v6599 = vsel %vm6597, %v6598, %v6594
      %v6600 = vadd.s32 %v6595, %v6599
      %v6601 = vadd.s32 %v6600, 536870912
      %v6602 = vshrl.u32 %v6601, 30
      %v6603 = vshll.u32 %v6602, 30
      %v6604 = vsub.s32 %v6600, %v6603
      %vm6605 = vcmp.lt.s32.totalorder %v6604, 0
      %v6606 = vsub.s32 0, %v6604
      %v6607 = vsel %vm6605, %v6606, %v6604
      %v6608 = vclz %v6607
      %v6609 = vsub.s32 %v6608, 2
      %vm6610 = vcmp.gt.s32.totalorder 0, %v6609
      %v6611 = vsel %vm6610, 0, %v6609
      %v6612 = vsub.s32 32, %v6611
      %v6613 = vshll.u32 %v6604, %v6611
      %v6614 = vshrl.u32 %v6596, %v6612
      %v6615 = vor.u32 %v6613, %v6614
      %v6616 = vsub.s32 4294967266, %v6611
      %v6617 = vadd.s32 %v6616, 127
      %v6618 = vshll.u32 %v6617, 23
      %v6619 = vor.u32 4788187, %v6618
      %v6620 = vand.u32 2147483647, %v6619
      %v6622 = vcvt.s32.f32 %v6615
      %v6623 = vmul.f32 %v6622, %v6620
      %v6624 = vxor.u32 %v6623, 2147483648
      %v6625 = vsel %vm6542, %v6624, %v6623
      %v6626 = vsub.s32 4, %v6602
      %v6627 = vsel %vm6542, %v6626, %v6602
      %v6628 = vsel %vm6541, %v630, %v6625
      %v6629 = vsel %vm6541, 0, %v6627
      %v6630 = vcosq.f32.pop %v6628
      %v6631 = vsinq.f32.pop %v6628
      %vm6632 = vweird.f32 %v630
      %v6633 = vand.u32 %v6629, 3
      %vm6634 = vcmp.lt.s32.totalorder %v6633, 2
      %vm6635 = vcmp.eq.s32.totalorder %v6633, 0
      %v6636 = vxor.u32 %v6631, 2147483648
      %v6637 = vsel %vm6635, %v6630, %v6636
      %vm6638 = vcmp.eq.s32.totalorder %v6633, 2
      %v6639 = vxor.u32 %v6630, 2147483648
      %v6640 = vsel %vm6638, %v6639, %v6631
      %v6641 = vsel %vm6634, %v6637, %v6640
      %v6642 = vsel %vm6632, nan, %v6641
      %v6643 = vand.u32 2147483647, %v631
      %vm6644 = vcmp.le.f32.partialorder %v6643, 0.7853982
      %vm6645 = vcmp.lt.s32.totalorder %v631, 0
      %v6646 = vand.u32 %v631, 2139095040
      %v6647 = vshrl.u32 %v6646, 23
      %v6648 = vsub.s32 %v6647, 127
      %v6649 = vand.u32 2147483647, %v631
      %v6650 = vand.u32 %v6649, 8388607
      %v6651 = vor.u32 %v6650, 8388608
      %v6652 = vsub.s32 0, %v6651
      %v6653 = vadd.s32 %v6648, 1
      %vm6654 = vcmp.gt.s32.totalorder %v6653, 0
      %v6655 = vsel %vm6654, %v6653, 0
      %v6656 = vshrl.u32 %v6655, 5
      %v6657 = vand.u32 %v6655, 31
      %v6658 = vsub.s32 32, %v6657
      %v6659 = vshrl.u32 683565275, %v6658
      %v6660 = vshll.u32 683565275, %v6657
      %v6661 = vshrl.u32 2475754826, %v6658
      %v6662 = vor.u32 %v6660, %v6661
      %v6663 = vshll.u32 2475754826, %v6657
      %v6664 = vshrl.u32 2131351028, %v6658
      %v6665 = vor.u32 %v6663, %v6664
      %v6666 = vshll.u32 2131351028, %v6657
      %v6667 = vshrl.u32 2102212464, %v6658
      %v6668 = vor.u32 %v6666, %v6667
      %v6669 = vshll.u32 2102212464, %v6657
      %v6670 = vshrl.u32 920167782, %v6658
      %v6671 = vor.u32 %v6669, %v6670
      %v6672 = vshll.u32 920167782, %v6657
      %v6673 = vshrl.u32 1326507024, %v6658
      %v6674 = vor.u32 %v6672, %v6673
      %vm6675 = vcmp.lt.s32.totalorder %v6656, 1
      %vm6676 = vcmp.lt.s32.totalorder %v6656, 2
      %vm6677 = vcmp.lt.s32.totalorder %v6656, 3
      %vm6678 = vcmp.lt.s32.totalorder %v6656, 4
      %v6679 = vsel %vm6675, %v6659, %v6662
      %v6680 = vsel %vm6678, %v6668, 2102212464
      %v6681 = vsel %vm6677, %v6665, %v6680
      %v6682 = vsel %vm6676, %v6679, %v6681
      %v6683 = vsel %vm6675, %v6662, %v6665
      %v6684 = vsel %vm6678, %v6671, 920167782
      %v6685 = vsel %vm6677, %v6668, %v6684
      %v6686 = vsel %vm6676, %v6683, %v6685
      %v6687 = vsel %vm6675, %v6665, %v6668
      %v6688 = vsel %vm6678, %v6674, 1326507024
      %v6689 = vsel %vm6677, %v6671, %v6688
      %v6690 = vsel %vm6676, %v6687, %v6689
      %v6691 = vshll.u32 %v6651, 8
      %v6692 = vmul.u32.u64.compose %v6691, %v6690
      %v6693 = vextract.low.u32 %v6692
      %v6694 = vextract.high.u32 %v6692
      %v6695 = vmul.u32.u64.compose %v6691, %v6686
      %v6696 = vextract.low.u32 %v6695
      %v6697 = vextract.high.u32 %v6695
      %v6698 = vmul.u32 %v6691, %v6682
      %v6699 = vadd.s32 %v6694, %v6696
      %vm6700 = vc.u32 %v6694, %v6696
      %v6701 = vadd.s32 %v6697, 1
      %v6702 = vsel %vm6700, %v6701, %v6697
      %v6703 = vadd.s32 %v6698, %v6702
      %v6704 = vadd.s32 %v6703, 536870912
      %v6705 = vshrl.u32 %v6704, 30
      %v6706 = vshll.u32 %v6705, 30
      %v6707 = vsub.s32 %v6703, %v6706
      %vm6708 = vcmp.lt.s32.totalorder %v6707, 0
      %v6709 = vsub.s32 0, %v6707
      %v6710 = vsel %vm6708, %v6709, %v6707
      %v6711 = vclz %v6710
      %v6712 = vsub.s32 %v6711, 2
      %vm6713 = vcmp.gt.s32.totalorder 0, %v6712
      %v6714 = vsel %vm6713, 0, %v6712
      %v6715 = vsub.s32 32, %v6714
      %v6716 = vshll.u32 %v6707, %v6714
      %v6717 = vshrl.u32 %v6699, %v6715
      %v6718 = vor.u32 %v6716, %v6717
      %v6719 = vsub.s32 4294967266, %v6714
      %v6720 = vadd.s32 %v6719, 127
      %v6721 = vshll.u32 %v6720, 23
      %v6722 = vor.u32 4788187, %v6721
      %v6723 = vand.u32 2147483647, %v6722
      %v6725 = vcvt.s32.f32 %v6718
      %v6726 = vmul.f32 %v6725, %v6723
      %v6727 = vxor.u32 %v6726, 2147483648
      %v6728 = vsel %vm6645, %v6727, %v6726
      %v6729 = vsub.s32 4, %v6705
      %v6730 = vsel %vm6645, %v6729, %v6705
      %v6731 = vsel %vm6644, %v631, %v6728
      %v6732 = vsel %vm6644, 0, %v6730
      %v6733 = vcosq.f32.pop %v6731
      %v6734 = vsinq.f32.pop %v6731
      %vm6735 = vweird.f32 %v631
      %v6736 = vand.u32 %v6732, 3
      %vm6737 = vcmp.lt.s32.totalorder %v6736, 2
      %vm6738 = vcmp.eq.s32.totalorder %v6736, 0
      %v6739 = vxor.u32 %v6734, 2147483648
      %v6740 = vsel %vm6738, %v6733, %v6739
      %vm6741 = vcmp.eq.s32.totalorder %v6736, 2
      %v6742 = vxor.u32 %v6733, 2147483648
      %v6743 = vsel %vm6741, %v6742, %v6734
      %v6744 = vsel %vm6737, %v6740, %v6743
      %v6745 = vsel %vm6735, nan, %v6744
      %v6746 = vand.u32 2147483647, %v632
      %vm6747 = vcmp.le.f32.partialorder %v6746, 0.7853982
      %vm6748 = vcmp.lt.s32.totalorder %v632, 0
      %v6749 = vand.u32 %v632, 2139095040
      %v6750 = vshrl.u32 %v6749, 23
      %v6751 = vsub.s32 %v6750, 127
      %v6752 = vand.u32 2147483647, %v632
      %v6753 = vand.u32 %v6752, 8388607
      %v6754 = vor.u32 %v6753, 8388608
      %v6755 = vsub.s32 0, %v6754
      %v6756 = vadd.s32 %v6751, 1
      %vm6757 = vcmp.gt.s32.totalorder %v6756, 0
      %v6758 = vsel %vm6757, %v6756, 0
      %v6759 = vshrl.u32 %v6758, 5
      %v6760 = vand.u32 %v6758, 31
      %v6761 = vsub.s32 32, %v6760
      %v6762 = vshrl.u32 683565275, %v6761
      %v6763 = vshll.u32 683565275, %v6760
      %v6764 = vshrl.u32 2475754826, %v6761
      %v6765 = vor.u32 %v6763, %v6764
      %v6766 = vshll.u32 2475754826, %v6760
      %v6767 = vshrl.u32 2131351028, %v6761
      %v6768 = vor.u32 %v6766, %v6767
      %v6769 = vshll.u32 2131351028, %v6760
      %v6770 = vshrl.u32 2102212464, %v6761
      %v6771 = vor.u32 %v6769, %v6770
      %v6772 = vshll.u32 2102212464, %v6760
      %v6773 = vshrl.u32 920167782, %v6761
      %v6774 = vor.u32 %v6772, %v6773
      %v6775 = vshll.u32 920167782, %v6760
      %v6776 = vshrl.u32 1326507024, %v6761
      %v6777 = vor.u32 %v6775, %v6776
      %vm6778 = vcmp.lt.s32.totalorder %v6759, 1
      %vm6779 = vcmp.lt.s32.totalorder %v6759, 2
      %vm6780 = vcmp.lt.s32.totalorder %v6759, 3
      %vm6781 = vcmp.lt.s32.totalorder %v6759, 4
      %v6782 = vsel %vm6778, %v6762, %v6765
      %v6783 = vsel %vm6781, %v6771, 2102212464
      %v6784 = vsel %vm6780, %v6768, %v6783
      %v6785 = vsel %vm6779, %v6782, %v6784
      %v6786 = vsel %vm6778, %v6765, %v6768
      %v6787 = vsel %vm6781, %v6774, 920167782
      %v6788 = vsel %vm6780, %v6771, %v6787
      %v6789 = vsel %vm6779, %v6786, %v6788
      %v6790 = vsel %vm6778, %v6768, %v6771
      %v6791 = vsel %vm6781, %v6777, 1326507024
      %v6792 = vsel %vm6780, %v6774, %v6791
      %v6793 = vsel %vm6779, %v6790, %v6792
      %v6794 = vshll.u32 %v6754, 8
      %v6795 = vmul.u32.u64.compose %v6794, %v6793
      %v6796 = vextract.low.u32 %v6795
      %v6797 = vextract.high.u32 %v6795
      %v6798 = vmul.u32.u64.compose %v6794, %v6789
      %v6799 = vextract.low.u32 %v6798
      %v6800 = vextract.high.u32 %v6798
      %v6801 = vmul.u32 %v6794, %v6785
      %v6802 = vadd.s32 %v6797, %v6799
      %vm6803 = vc.u32 %v6797, %v6799
      %v6804 = vadd.s32 %v6800, 1
      %v6805 = vsel %vm6803, %v6804, %v6800
      %v6806 = vadd.s32 %v6801, %v6805
      %v6807 = vadd.s32 %v6806, 536870912
      %v6808 = vshrl.u32 %v6807, 30
      %v6809 = vshll.u32 %v6808, 30
      %v6810 = vsub.s32 %v6806, %v6809
      %vm6811 = vcmp.lt.s32.totalorder %v6810, 0
      %v6812 = vsub.s32 0, %v6810
      %v6813 = vsel %vm6811, %v6812, %v6810
      %v6814 = vclz %v6813
      %v6815 = vsub.s32 %v6814, 2
      %vm6816 = vcmp.gt.s32.totalorder 0, %v6815
      %v6817 = vsel %vm6816, 0, %v6815
      %v6818 = vsub.s32 32, %v6817
      %v6819 = vshll.u32 %v6810, %v6817
      %v6820 = vshrl.u32 %v6802, %v6818
      %v6821 = vor.u32 %v6819, %v6820
      %v6822 = vsub.s32 4294967266, %v6817
      %v6823 = vadd.s32 %v6822, 127
      %v6824 = vshll.u32 %v6823, 23
      %v6825 = vor.u32 4788187, %v6824
      %v6826 = vand.u32 2147483647, %v6825
      %v6828 = vcvt.s32.f32 %v6821
      %v6829 = vmul.f32 %v6828, %v6826
      %v6830 = vxor.u32 %v6829, 2147483648
      %v6831 = vsel %vm6748, %v6830, %v6829
      %v6832 = vsub.s32 4, %v6808
      %v6833 = vsel %vm6748, %v6832, %v6808
      %v6834 = vsel %vm6747, %v632, %v6831
      %v6835 = vsel %vm6747, 0, %v6833
      %v6836 = vcosq.f32.pop %v6834
      %v6837 = vsinq.f32.pop %v6834
      %vm6838 = vweird.f32 %v632
      %v6839 = vand.u32 %v6835, 3
      %vm6840 = vcmp.lt.s32.totalorder %v6839, 2
      %vm6841 = vcmp.eq.s32.totalorder %v6839, 0
      %v6842 = vxor.u32 %v6837, 2147483648
      %v6843 = vsel %vm6841, %v6836, %v6842
      %vm6844 = vcmp.eq.s32.totalorder %v6839, 2
      %v6845 = vxor.u32 %v6836, 2147483648
      %v6846 = vsel %vm6844, %v6845, %v6837
      %v6847 = vsel %vm6840, %v6843, %v6846
      %v6848 = vsel %vm6838, nan, %v6847
      %v6849 = vand.u32 2147483647, %v633
      %vm6850 = vcmp.le.f32.partialorder %v6849, 0.7853982
      %vm6851 = vcmp.lt.s32.totalorder %v633, 0
      %v6852 = vand.u32 %v633, 2139095040
      %v6853 = vshrl.u32 %v6852, 23
      %v6854 = vsub.s32 %v6853, 127
      %v6855 = vand.u32 2147483647, %v633
      %v6856 = vand.u32 %v6855, 8388607
      %v6857 = vor.u32 %v6856, 8388608
      %v6858 = vsub.s32 0, %v6857
      %v6859 = vadd.s32 %v6854, 1
      %vm6860 = vcmp.gt.s32.totalorder %v6859, 0
      %v6861 = vsel %vm6860, %v6859, 0
      %v6862 = vshrl.u32 %v6861, 5
      %v6863 = vand.u32 %v6861, 31
      %v6864 = vsub.s32 32, %v6863
      %v6865 = vshrl.u32 683565275, %v6864
      %v6866 = vshll.u32 683565275, %v6863
      %v6867 = vshrl.u32 2475754826, %v6864
      %v6868 = vor.u32 %v6866, %v6867
      %v6869 = vshll.u32 2475754826, %v6863
      %v6870 = vshrl.u32 2131351028, %v6864
      %v6871 = vor.u32 %v6869, %v6870
      %v6872 = vshll.u32 2131351028, %v6863
      %v6873 = vshrl.u32 2102212464, %v6864
      %v6874 = vor.u32 %v6872, %v6873
      %v6875 = vshll.u32 2102212464, %v6863
      %v6876 = vshrl.u32 920167782, %v6864
      %v6877 = vor.u32 %v6875, %v6876
      %v6878 = vshll.u32 920167782, %v6863
      %v6879 = vshrl.u32 1326507024, %v6864
      %v6880 = vor.u32 %v6878, %v6879
      %vm6881 = vcmp.lt.s32.totalorder %v6862, 1
      %vm6882 = vcmp.lt.s32.totalorder %v6862, 2
      %vm6883 = vcmp.lt.s32.totalorder %v6862, 3
      %vm6884 = vcmp.lt.s32.totalorder %v6862, 4
      %v6885 = vsel %vm6881, %v6865, %v6868
      %v6886 = vsel %vm6884, %v6874, 2102212464
      %v6887 = vsel %vm6883, %v6871, %v6886
      %v6888 = vsel %vm6882, %v6885, %v6887
      %v6889 = vsel %vm6881, %v6868, %v6871
      %v6890 = vsel %vm6884, %v6877, 920167782
      %v6891 = vsel %vm6883, %v6874, %v6890
      %v6892 = vsel %vm6882, %v6889, %v6891
      %v6893 = vsel %vm6881, %v6871, %v6874
      %v6894 = vsel %vm6884, %v6880, 1326507024
      %v6895 = vsel %vm6883, %v6877, %v6894
      %v6896 = vsel %vm6882, %v6893, %v6895
      %v6897 = vshll.u32 %v6857, 8
      %v6898 = vmul.u32.u64.compose %v6897, %v6896
      %v6899 = vextract.low.u32 %v6898
      %v6900 = vextract.high.u32 %v6898
      %v6901 = vmul.u32.u64.compose %v6897, %v6892
      %v6902 = vextract.low.u32 %v6901
      %v6903 = vextract.high.u32 %v6901
      %v6904 = vmul.u32 %v6897, %v6888
      %v6905 = vadd.s32 %v6900, %v6902
      %vm6906 = vc.u32 %v6900, %v6902
      %v6907 = vadd.s32 %v6903, 1
      %v6908 = vsel %vm6906, %v6907, %v6903
      %v6909 = vadd.s32 %v6904, %v6908
      %v6910 = vadd.s32 %v6909, 536870912
      %v6911 = vshrl.u32 %v6910, 30
      %v6912 = vshll.u32 %v6911, 30
      %v6913 = vsub.s32 %v6909, %v6912
      %vm6914 = vcmp.lt.s32.totalorder %v6913, 0
      %v6915 = vsub.s32 0, %v6913
      %v6916 = vsel %vm6914, %v6915, %v6913
      %v6917 = vclz %v6916
      %v6918 = vsub.s32 %v6917, 2
      %vm6919 = vcmp.gt.s32.totalorder 0, %v6918
      %v6920 = vsel %vm6919, 0, %v6918
      %v6921 = vsub.s32 32, %v6920
      %v6922 = vshll.u32 %v6913, %v6920
      %v6923 = vshrl.u32 %v6905, %v6921
      %v6924 = vor.u32 %v6922, %v6923
      %v6925 = vsub.s32 4294967266, %v6920
      %v6926 = vadd.s32 %v6925, 127
      %v6927 = vshll.u32 %v6926, 23
      %v6928 = vor.u32 4788187, %v6927
      %v6929 = vand.u32 2147483647, %v6928
      %v6931 = vcvt.s32.f32 %v6924
      %v6932 = vmul.f32 %v6931, %v6929
      %v6933 = vxor.u32 %v6932, 2147483648
      %v6934 = vsel %vm6851, %v6933, %v6932
      %v6935 = vsub.s32 4, %v6911
      %v6936 = vsel %vm6851, %v6935, %v6911
      %v6937 = vsel %vm6850, %v633, %v6934
      %v6938 = vsel %vm6850, 0, %v6936
      %v6939 = vcosq.f32.pop %v6937
      %v6940 = vsinq.f32.pop %v6937
      %vm6941 = vweird.f32 %v633
      %v6942 = vand.u32 %v6938, 3
      %vm6943 = vcmp.lt.s32.totalorder %v6942, 2
      %vm6944 = vcmp.eq.s32.totalorder %v6942, 0
      %v6945 = vxor.u32 %v6940, 2147483648
      %v6946 = vsel %vm6944, %v6939, %v6945
      %vm6947 = vcmp.eq.s32.totalorder %v6942, 2
      %v6948 = vxor.u32 %v6939, 2147483648
      %v6949 = vsel %vm6947, %v6948, %v6940
      %v6950 = vsel %vm6943, %v6946, %v6949
      %v6951 = vsel %vm6941, nan, %v6950
      %v6952 = vand.u32 2147483647, %v634
      %vm6953 = vcmp.le.f32.partialorder %v6952, 0.7853982
      %vm6954 = vcmp.lt.s32.totalorder %v634, 0
      %v6955 = vand.u32 %v634, 2139095040
      %v6956 = vshrl.u32 %v6955, 23
      %v6957 = vsub.s32 %v6956, 127
      %v6958 = vand.u32 2147483647, %v634
      %v6959 = vand.u32 %v6958, 8388607
      %v6960 = vor.u32 %v6959, 8388608
      %v6961 = vsub.s32 0, %v6960
      %v6962 = vadd.s32 %v6957, 1
      %vm6963 = vcmp.gt.s32.totalorder %v6962, 0
      %v6964 = vsel %vm6963, %v6962, 0
      %v6965 = vshrl.u32 %v6964, 5
      %v6966 = vand.u32 %v6964, 31
      %v6967 = vsub.s32 32, %v6966
      %v6968 = vshrl.u32 683565275, %v6967
      %v6969 = vshll.u32 683565275, %v6966
      %v6970 = vshrl.u32 2475754826, %v6967
      %v6971 = vor.u32 %v6969, %v6970
      %v6972 = vshll.u32 2475754826, %v6966
      %v6973 = vshrl.u32 2131351028, %v6967
      %v6974 = vor.u32 %v6972, %v6973
      %v6975 = vshll.u32 2131351028, %v6966
      %v6976 = vshrl.u32 2102212464, %v6967
      %v6977 = vor.u32 %v6975, %v6976
      %v6978 = vshll.u32 2102212464, %v6966
      %v6979 = vshrl.u32 920167782, %v6967
      %v6980 = vor.u32 %v6978, %v6979
      %v6981 = vshll.u32 920167782, %v6966
      %v6982 = vshrl.u32 1326507024, %v6967
      %v6983 = vor.u32 %v6981, %v6982
      %vm6984 = vcmp.lt.s32.totalorder %v6965, 1
      %vm6985 = vcmp.lt.s32.totalorder %v6965, 2
      %vm6986 = vcmp.lt.s32.totalorder %v6965, 3
      %vm6987 = vcmp.lt.s32.totalorder %v6965, 4
      %v6988 = vsel %vm6984, %v6968, %v6971
      %v6989 = vsel %vm6987, %v6977, 2102212464
      %v6990 = vsel %vm6986, %v6974, %v6989
      %v6991 = vsel %vm6985, %v6988, %v6990
      %v6992 = vsel %vm6984, %v6971, %v6974
      %v6993 = vsel %vm6987, %v6980, 920167782
      %v6994 = vsel %vm6986, %v6977, %v6993
      %v6995 = vsel %vm6985, %v6992, %v6994
      %v6996 = vsel %vm6984, %v6974, %v6977
      %v6997 = vsel %vm6987, %v6983, 1326507024
      %v6998 = vsel %vm6986, %v6980, %v6997
      %v6999 = vsel %vm6985, %v6996, %v6998
      %v7000 = vshll.u32 %v6960, 8
      %v7001 = vmul.u32.u64.compose %v7000, %v6999
      %v7002 = vextract.low.u32 %v7001
      %v7003 = vextract.high.u32 %v7001
      %v7004 = vmul.u32.u64.compose %v7000, %v6995
      %v7005 = vextract.low.u32 %v7004
      %v7006 = vextract.high.u32 %v7004
      %v7007 = vmul.u32 %v7000, %v6991
      %v7008 = vadd.s32 %v7003, %v7005
      %vm7009 = vc.u32 %v7003, %v7005
      %v7010 = vadd.s32 %v7006, 1
      %v7011 = vsel %vm7009, %v7010, %v7006
      %v7012 = vadd.s32 %v7007, %v7011
      %v7013 = vadd.s32 %v7012, 536870912
      %v7014 = vshrl.u32 %v7013, 30
      %v7015 = vshll.u32 %v7014, 30
      %v7016 = vsub.s32 %v7012, %v7015
      %vm7017 = vcmp.lt.s32.totalorder %v7016, 0
      %v7018 = vsub.s32 0, %v7016
      %v7019 = vsel %vm7017, %v7018, %v7016
      %v7020 = vclz %v7019
      %v7021 = vsub.s32 %v7020, 2
      %vm7022 = vcmp.gt.s32.totalorder 0, %v7021
      %v7023 = vsel %vm7022, 0, %v7021
      %v7024 = vsub.s32 32, %v7023
      %v7025 = vshll.u32 %v7016, %v7023
      %v7026 = vshrl.u32 %v7008, %v7024
      %v7027 = vor.u32 %v7025, %v7026
      %v7028 = vsub.s32 4294967266, %v7023
      %v7029 = vadd.s32 %v7028, 127
      %v7030 = vshll.u32 %v7029, 23
      %v7031 = vor.u32 4788187, %v7030
      %v7032 = vand.u32 2147483647, %v7031
      %v7034 = vcvt.s32.f32 %v7027
      %v7035 = vmul.f32 %v7034, %v7032
      %v7036 = vxor.u32 %v7035, 2147483648
      %v7037 = vsel %vm6954, %v7036, %v7035
      %v7038 = vsub.s32 4, %v7014
      %v7039 = vsel %vm6954, %v7038, %v7014
      %v7040 = vsel %vm6953, %v634, %v7037
      %v7041 = vsel %vm6953, 0, %v7039
      %v7042 = vcosq.f32.pop %v7040
      %v7043 = vsinq.f32.pop %v7040
      %vm7044 = vweird.f32 %v634
      %v7045 = vand.u32 %v7041, 3
      %vm7046 = vcmp.lt.s32.totalorder %v7045, 2
      %vm7047 = vcmp.eq.s32.totalorder %v7045, 0
      %v7048 = vxor.u32 %v7043, 2147483648
      %v7049 = vsel %vm7047, %v7042, %v7048
      %vm7050 = vcmp.eq.s32.totalorder %v7045, 2
      %v7051 = vxor.u32 %v7042, 2147483648
      %v7052 = vsel %vm7050, %v7051, %v7043
      %v7053 = vsel %vm7046, %v7049, %v7052
      %v7054 = vsel %vm7044, nan, %v7053
      %v7055 = vand.u32 2147483647, %v635
      %vm7056 = vcmp.le.f32.partialorder %v7055, 0.7853982
      %vm7057 = vcmp.lt.s32.totalorder %v635, 0
      %v7058 = vand.u32 %v635, 2139095040
      %v7059 = vshrl.u32 %v7058, 23
      %v7060 = vsub.s32 %v7059, 127
      %v7061 = vand.u32 2147483647, %v635
      %v7062 = vand.u32 %v7061, 8388607
      %v7063 = vor.u32 %v7062, 8388608
      %v7064 = vsub.s32 0, %v7063
      %v7065 = vadd.s32 %v7060, 1
      %vm7066 = vcmp.gt.s32.totalorder %v7065, 0
      %v7067 = vsel %vm7066, %v7065, 0
      %v7068 = vshrl.u32 %v7067, 5
      %v7069 = vand.u32 %v7067, 31
      %v7070 = vsub.s32 32, %v7069
      %v7071 = vshrl.u32 683565275, %v7070
      %v7072 = vshll.u32 683565275, %v7069
      %v7073 = vshrl.u32 2475754826, %v7070
      %v7074 = vor.u32 %v7072, %v7073
      %v7075 = vshll.u32 2475754826, %v7069
      %v7076 = vshrl.u32 2131351028, %v7070
      %v7077 = vor.u32 %v7075, %v7076
      %v7078 = vshll.u32 2131351028, %v7069
      %v7079 = vshrl.u32 2102212464, %v7070
      %v7080 = vor.u32 %v7078, %v7079
      %v7081 = vshll.u32 2102212464, %v7069
      %v7082 = vshrl.u32 920167782, %v7070
      %v7083 = vor.u32 %v7081, %v7082
      %v7084 = vshll.u32 920167782, %v7069
      %v7085 = vshrl.u32 1326507024, %v7070
      %v7086 = vor.u32 %v7084, %v7085
      %vm7087 = vcmp.lt.s32.totalorder %v7068, 1
      %vm7088 = vcmp.lt.s32.totalorder %v7068, 2
      %vm7089 = vcmp.lt.s32.totalorder %v7068, 3
      %vm7090 = vcmp.lt.s32.totalorder %v7068, 4
      %v7091 = vsel %vm7087, %v7071, %v7074
      %v7092 = vsel %vm7090, %v7080, 2102212464
      %v7093 = vsel %vm7089, %v7077, %v7092
      %v7094 = vsel %vm7088, %v7091, %v7093
      %v7095 = vsel %vm7087, %v7074, %v7077
      %v7096 = vsel %vm7090, %v7083, 920167782
      %v7097 = vsel %vm7089, %v7080, %v7096
      %v7098 = vsel %vm7088, %v7095, %v7097
      %v7099 = vsel %vm7087, %v7077, %v7080
      %v7100 = vsel %vm7090, %v7086, 1326507024
      %v7101 = vsel %vm7089, %v7083, %v7100
      %v7102 = vsel %vm7088, %v7099, %v7101
      %v7103 = vshll.u32 %v7063, 8
      %v7104 = vmul.u32.u64.compose %v7103, %v7102
      %v7105 = vextract.low.u32 %v7104
      %v7106 = vextract.high.u32 %v7104
      %v7107 = vmul.u32.u64.compose %v7103, %v7098
      %v7108 = vextract.low.u32 %v7107
      %v7109 = vextract.high.u32 %v7107
      %v7110 = vmul.u32 %v7103, %v7094
      %v7111 = vadd.s32 %v7106, %v7108
      %vm7112 = vc.u32 %v7106, %v7108
      %v7113 = vadd.s32 %v7109, 1
      %v7114 = vsel %vm7112, %v7113, %v7109
      %v7115 = vadd.s32 %v7110, %v7114
      %v7116 = vadd.s32 %v7115, 536870912
      %v7117 = vshrl.u32 %v7116, 30
      %v7118 = vshll.u32 %v7117, 30
      %v7119 = vsub.s32 %v7115, %v7118
      %vm7120 = vcmp.lt.s32.totalorder %v7119, 0
      %v7121 = vsub.s32 0, %v7119
      %v7122 = vsel %vm7120, %v7121, %v7119
      %v7123 = vclz %v7122
      %v7124 = vsub.s32 %v7123, 2
      %vm7125 = vcmp.gt.s32.totalorder 0, %v7124
      %v7126 = vsel %vm7125, 0, %v7124
      %v7127 = vsub.s32 32, %v7126
      %v7128 = vshll.u32 %v7119, %v7126
      %v7129 = vshrl.u32 %v7111, %v7127
      %v7130 = vor.u32 %v7128, %v7129
      %v7131 = vsub.s32 4294967266, %v7126
      %v7132 = vadd.s32 %v7131, 127
      %v7133 = vshll.u32 %v7132, 23
      %v7134 = vor.u32 4788187, %v7133
      %v7135 = vand.u32 2147483647, %v7134
      %v7137 = vcvt.s32.f32 %v7130
      %v7138 = vmul.f32 %v7137, %v7135
      %v7139 = vxor.u32 %v7138, 2147483648
      %v7140 = vsel %vm7057, %v7139, %v7138
      %v7141 = vsub.s32 4, %v7117
      %v7142 = vsel %vm7057, %v7141, %v7117
      %v7143 = vsel %vm7056, %v635, %v7140
      %v7144 = vsel %vm7056, 0, %v7142
      %v7145 = vcosq.f32.pop %v7143
      %v7146 = vsinq.f32.pop %v7143
      %vm7147 = vweird.f32 %v635
      %v7148 = vand.u32 %v7144, 3
      %vm7149 = vcmp.lt.s32.totalorder %v7148, 2
      %vm7150 = vcmp.eq.s32.totalorder %v7148, 0
      %v7151 = vxor.u32 %v7146, 2147483648
      %v7152 = vsel %vm7150, %v7145, %v7151
      %vm7153 = vcmp.eq.s32.totalorder %v7148, 2
      %v7154 = vxor.u32 %v7145, 2147483648
      %v7155 = vsel %vm7153, %v7154, %v7146
      %v7156 = vsel %vm7149, %v7152, %v7155
      %v7157 = vsel %vm7147, nan, %v7156
      %v7158 = vand.u32 2147483647, %v636
      %vm7159 = vcmp.le.f32.partialorder %v7158, 0.7853982
      %vm7160 = vcmp.lt.s32.totalorder %v636, 0
      %v7161 = vand.u32 %v636, 2139095040
      %v7162 = vshrl.u32 %v7161, 23
      %v7163 = vsub.s32 %v7162, 127
      %v7164 = vand.u32 2147483647, %v636
      %v7165 = vand.u32 %v7164, 8388607
      %v7166 = vor.u32 %v7165, 8388608
      %v7167 = vsub.s32 0, %v7166
      %v7168 = vadd.s32 %v7163, 1
      %vm7169 = vcmp.gt.s32.totalorder %v7168, 0
      %v7170 = vsel %vm7169, %v7168, 0
      %v7171 = vshrl.u32 %v7170, 5
      %v7172 = vand.u32 %v7170, 31
      %v7173 = vsub.s32 32, %v7172
      %v7174 = vshrl.u32 683565275, %v7173
      %v7175 = vshll.u32 683565275, %v7172
      %v7176 = vshrl.u32 2475754826, %v7173
      %v7177 = vor.u32 %v7175, %v7176
      %v7178 = vshll.u32 2475754826, %v7172
      %v7179 = vshrl.u32 2131351028, %v7173
      %v7180 = vor.u32 %v7178, %v7179
      %v7181 = vshll.u32 2131351028, %v7172
      %v7182 = vshrl.u32 2102212464, %v7173
      %v7183 = vor.u32 %v7181, %v7182
      %v7184 = vshll.u32 2102212464, %v7172
      %v7185 = vshrl.u32 920167782, %v7173
      %v7186 = vor.u32 %v7184, %v7185
      %v7187 = vshll.u32 920167782, %v7172
      %v7188 = vshrl.u32 1326507024, %v7173
      %v7189 = vor.u32 %v7187, %v7188
      %vm7190 = vcmp.lt.s32.totalorder %v7171, 1
      %vm7191 = vcmp.lt.s32.totalorder %v7171, 2
      %vm7192 = vcmp.lt.s32.totalorder %v7171, 3
      %vm7193 = vcmp.lt.s32.totalorder %v7171, 4
      %v7194 = vsel %vm7190, %v7174, %v7177
      %v7195 = vsel %vm7193, %v7183, 2102212464
      %v7196 = vsel %vm7192, %v7180, %v7195
      %v7197 = vsel %vm7191, %v7194, %v7196
      %v7198 = vsel %vm7190, %v7177, %v7180
      %v7199 = vsel %vm7193, %v7186, 920167782
      %v7200 = vsel %vm7192, %v7183, %v7199
      %v7201 = vsel %vm7191, %v7198, %v7200
      %v7202 = vsel %vm7190, %v7180, %v7183
      %v7203 = vsel %vm7193, %v7189, 1326507024
      %v7204 = vsel %vm7192, %v7186, %v7203
      %v7205 = vsel %vm7191, %v7202, %v7204
      %v7206 = vshll.u32 %v7166, 8
      %v7207 = vmul.u32.u64.compose %v7206, %v7205
      %v7208 = vextract.low.u32 %v7207
      %v7209 = vextract.high.u32 %v7207
      %v7210 = vmul.u32.u64.compose %v7206, %v7201
      %v7211 = vextract.low.u32 %v7210
      %v7212 = vextract.high.u32 %v7210
      %v7213 = vmul.u32 %v7206, %v7197
      %v7214 = vadd.s32 %v7209, %v7211
      %vm7215 = vc.u32 %v7209, %v7211
      %v7216 = vadd.s32 %v7212, 1
      %v7217 = vsel %vm7215, %v7216, %v7212
      %v7218 = vadd.s32 %v7213, %v7217
      %v7219 = vadd.s32 %v7218, 536870912
      %v7220 = vshrl.u32 %v7219, 30
      %v7221 = vshll.u32 %v7220, 30
      %v7222 = vsub.s32 %v7218, %v7221
      %vm7223 = vcmp.lt.s32.totalorder %v7222, 0
      %v7224 = vsub.s32 0, %v7222
      %v7225 = vsel %vm7223, %v7224, %v7222
      %v7226 = vclz %v7225
      %v7227 = vsub.s32 %v7226, 2
      %vm7228 = vcmp.gt.s32.totalorder 0, %v7227
      %v7229 = vsel %vm7228, 0, %v7227
      %v7230 = vsub.s32 32, %v7229
      %v7231 = vshll.u32 %v7222, %v7229
      %v7232 = vshrl.u32 %v7214, %v7230
      %v7233 = vor.u32 %v7231, %v7232
      %v7234 = vsub.s32 4294967266, %v7229
      %v7235 = vadd.s32 %v7234, 127
      %v7236 = vshll.u32 %v7235, 23
      %v7237 = vor.u32 4788187, %v7236
      %v7238 = vand.u32 2147483647, %v7237
      %v7240 = vcvt.s32.f32 %v7233
      %v7241 = vmul.f32 %v7240, %v7238
      %v7242 = vxor.u32 %v7241, 2147483648
      %v7243 = vsel %vm7160, %v7242, %v7241
      %v7244 = vsub.s32 4, %v7220
      %v7245 = vsel %vm7160, %v7244, %v7220
      %v7246 = vsel %vm7159, %v636, %v7243
      %v7247 = vsel %vm7159, 0, %v7245
      %v7248 = vcosq.f32.pop %v7246
      %v7249 = vsinq.f32.pop %v7246
      %vm7250 = vweird.f32 %v636
      %v7251 = vand.u32 %v7247, 3
      %vm7252 = vcmp.lt.s32.totalorder %v7251, 2
      %vm7253 = vcmp.eq.s32.totalorder %v7251, 0
      %v7254 = vxor.u32 %v7249, 2147483648
      %v7255 = vsel %vm7253, %v7248, %v7254
      %vm7256 = vcmp.eq.s32.totalorder %v7251, 2
      %v7257 = vxor.u32 %v7248, 2147483648
      %v7258 = vsel %vm7256, %v7257, %v7249
      %v7259 = vsel %vm7252, %v7255, %v7258
      %v7260 = vsel %vm7250, nan, %v7259
      %7293 = vrot.lane.b32.xlu0 %v740, 3
      %v7294 = vpop.permute.xlu0 %7293
      %7295 = vrot.lane.b32.xlu0 %v844, 3
      %v7296 = vpop.permute.xlu0 %7295
      %7297 = vrot.lane.b32.xlu0 %v948, 3
      %v7298 = vpop.permute.xlu0 %7297
      %7299 = vrot.lane.b32.xlu0 %v1052, 3
      %v7300 = vpop.permute.xlu0 %7299
      %7301 = vrot.lane.b32.xlu0 %v1156, 3
      %v7302 = vpop.permute.xlu0 %7301
      %7303 = vrot.lane.b32.xlu0 %v1260, 3
      %v7304 = vpop.permute.xlu0 %7303
      %7305 = vrot.lane.b32.xlu0 %v1364, 3
      %v7306 = vpop.permute.xlu0 %7305
      %7307 = vrot.lane.b32.xlu0 %v1468, 3
      %v7308 = vpop.permute.xlu0 %7307
      %7309 = vrot.lane.b32.xlu0 %v1572, 3
      %v7310 = vpop.permute.xlu0 %7309
      %7311 = vrot.lane.b32.xlu0 %v1676, 3
      %v7312 = vpop.permute.xlu0 %7311
      %7313 = vrot.lane.b32.xlu0 %v1780, 3
      %v7314 = vpop.permute.xlu0 %7313
      %7315 = vrot.lane.b32.xlu0 %v1884, 3
      %v7316 = vpop.permute.xlu0 %7315
      %7317 = vrot.lane.b32.xlu0 %v1988, 3
      %v7318 = vpop.permute.xlu0 %7317
      %7319 = vrot.lane.b32.xlu0 %v2092, 3
      %v7320 = vpop.permute.xlu0 %7319
      %7321 = vrot.lane.b32.xlu0 %v2196, 3
      %v7322 = vpop.permute.xlu0 %7321
      %7323 = vrot.lane.b32.xlu0 %v2300, 3
      %v7324 = vpop.permute.xlu0 %7323
      %7325 = vrot.lane.b32.xlu0 %v2404, 3
      %v7326 = vpop.permute.xlu0 %7325
      %7327 = vrot.lane.b32.xlu0 %v2508, 3
      %v7328 = vpop.permute.xlu0 %7327
      %7329 = vrot.lane.b32.xlu0 %v2612, 3
      %v7330 = vpop.permute.xlu0 %7329
      %7331 = vrot.lane.b32.xlu0 %v2716, 3
      %v7332 = vpop.permute.xlu0 %7331
      %7333 = vrot.lane.b32.xlu0 %v2820, 3
      %v7334 = vpop.permute.xlu0 %7333
      %7335 = vrot.lane.b32.xlu0 %v2924, 3
      %v7336 = vpop.permute.xlu0 %7335
      %7337 = vrot.lane.b32.xlu0 %v3028, 3
      %v7338 = vpop.permute.xlu0 %7337
      %7339 = vrot.lane.b32.xlu0 %v3132, 3
      %v7340 = vpop.permute.xlu0 %7339
      %7341 = vrot.lane.b32.xlu0 %v3236, 3
      %v7342 = vpop.permute.xlu0 %7341
      %7343 = vrot.lane.b32.xlu0 %v3340, 3
      %v7344 = vpop.permute.xlu0 %7343
      %7345 = vrot.lane.b32.xlu0 %v3444, 3
      %v7346 = vpop.permute.xlu0 %7345
      %7347 = vrot.lane.b32.xlu0 %v3548, 3
      %v7348 = vpop.permute.xlu0 %7347
      %7349 = vrot.lane.b32.xlu0 %v3652, 3
      %v7350 = vpop.permute.xlu0 %7349
      %7351 = vrot.lane.b32.xlu0 %v3756, 3
      %v7352 = vpop.permute.xlu0 %7351
      %7353 = vrot.lane.b32.xlu0 %v3860, 3
      %v7354 = vpop.permute.xlu0 %7353
      %7355 = vrot.lane.b32.xlu0 %v3964, 3
      %v7356 = vpop.permute.xlu0 %7355
      %7421 = vrot.lane.b32.xlu0 %v4067, 6
      %v7422 = vpop.permute.xlu0 %7421
      %7423 = vrot.lane.b32.xlu0 %v4170, 6
      %v7424 = vpop.permute.xlu0 %7423
      %7425 = vrot.lane.b32.xlu0 %v4273, 6
      %v7426 = vpop.permute.xlu0 %7425
      %7427 = vrot.lane.b32.xlu0 %v4376, 6
      %v7428 = vpop.permute.xlu0 %7427
      %7429 = vrot.lane.b32.xlu0 %v4479, 6
      %v7430 = vpop.permute.xlu0 %7429
      %7431 = vrot.lane.b32.xlu0 %v4582, 6
      %v7432 = vpop.permute.xlu0 %7431
      %7433 = vrot.lane.b32.xlu0 %v4685, 6
      %v7434 = vpop.permute.xlu0 %7433
      %7435 = vrot.lane.b32.xlu0 %v4788, 6
      %v7436 = vpop.permute.xlu0 %7435
      %7437 = vrot.lane.b32.xlu0 %v4891, 6
      %v7438 = vpop.permute.xlu0 %7437
      %7439 = vrot.lane.b32.xlu0 %v4994, 6
      %v7440 = vpop.permute.xlu0 %7439
      %7441 = vrot.lane.b32.xlu0 %v5097, 6
      %v7442 = vpop.permute.xlu0 %7441
      %7443 = vrot.lane.b32.xlu0 %v5200, 6
      %v7444 = vpop.permute.xlu0 %7443
      %7445 = vrot.lane.b32.xlu0 %v5303, 6
      %v7446 = vpop.permute.xlu0 %7445
      %7447 = vrot.lane.b32.xlu0 %v5406, 6
      %v7448 = vpop.permute.xlu0 %7447
      %7449 = vrot.lane.b32.xlu0 %v5509, 6
      %v7450 = vpop.permute.xlu0 %7449
      %7451 = vrot.lane.b32.xlu0 %v5612, 6
      %v7452 = vpop.permute.xlu0 %7451
      %7453 = vrot.lane.b32.xlu0 %v5715, 6
      %v7454 = vpop.permute.xlu0 %7453
      %7455 = vrot.lane.b32.xlu0 %v5818, 6
      %v7456 = vpop.permute.xlu0 %7455
      %7457 = vrot.lane.b32.xlu0 %v5921, 6
      %v7458 = vpop.permute.xlu0 %7457
      %7459 = vrot.lane.b32.xlu0 %v6024, 6
      %v7460 = vpop.permute.xlu0 %7459
      %7461 = vrot.lane.b32.xlu0 %v6127, 6
      %v7462 = vpop.permute.xlu0 %7461
      %7463 = vrot.lane.b32.xlu0 %v6230, 6
      %v7464 = vpop.permute.xlu0 %7463
      %7465 = vrot.lane.b32.xlu0 %v6333, 6
      %v7466 = vpop.permute.xlu0 %7465
      %7467 = vrot.lane.b32.xlu0 %v6436, 6
      %v7468 = vpop.permute.xlu0 %7467
      %7469 = vrot.lane.b32.xlu0 %v6539, 6
      %v7470 = vpop.permute.xlu0 %7469
      %7471 = vrot.lane.b32.xlu0 %v6642, 6
      %v7472 = vpop.permute.xlu0 %7471
      %7473 = vrot.lane.b32.xlu0 %v6745, 6
      %v7474 = vpop.permute.xlu0 %7473
      %7475 = vrot.lane.b32.xlu0 %v6848, 6
      %v7476 = vpop.permute.xlu0 %7475
      %7477 = vrot.lane.b32.xlu0 %v6951, 6
      %v7478 = vpop.permute.xlu0 %7477
      %7479 = vrot.lane.b32.xlu0 %v7054, 6
      %v7480 = vpop.permute.xlu0 %7479
      %7481 = vrot.lane.b32.xlu0 %v7157, 6
      %v7482 = vpop.permute.xlu0 %7481
      %7483 = vrot.lane.b32.xlu0 %v7260, 6
      %v7484 = vpop.permute.xlu0 %7483
      %7517 = vrot.lane.b32.xlu0 %v740, 6
      %v7518 = vpop.permute.xlu0 %7517
      %7519 = vrot.lane.b32.xlu0 %v844, 6
      %v7520 = vpop.permute.xlu0 %7519
      %7521 = vrot.lane.b32.xlu0 %v948, 6
      %v7522 = vpop.permute.xlu0 %7521
      %7523 = vrot.lane.b32.xlu0 %v1052, 6
      %v7524 = vpop.permute.xlu0 %7523
      %7525 = vrot.lane.b32.xlu0 %v1156, 6
      %v7526 = vpop.permute.xlu0 %7525
      %7527 = vrot.lane.b32.xlu0 %v1260, 6
      %v7528 = vpop.permute.xlu0 %7527
      %7529 = vrot.lane.b32.xlu0 %v1364, 6
      %v7530 = vpop.permute.xlu0 %7529
      %7531 = vrot.lane.b32.xlu0 %v1468, 6
      %v7532 = vpop.permute.xlu0 %7531
      %7533 = vrot.lane.b32.xlu0 %v1572, 6
      %v7534 = vpop.permute.xlu0 %7533
      %7535 = vrot.lane.b32.xlu0 %v1676, 6
      %v7536 = vpop.permute.xlu0 %7535
      %7537 = vrot.lane.b32.xlu0 %v1780, 6
      %v7538 = vpop.permute.xlu0 %7537
      %7539 = vrot.lane.b32.xlu0 %v1884, 6
      %v7540 = vpop.permute.xlu0 %7539
      %7541 = vrot.lane.b32.xlu0 %v1988, 6
      %v7542 = vpop.permute.xlu0 %7541
      %7543 = vrot.lane.b32.xlu0 %v2092, 6
      %v7544 = vpop.permute.xlu0 %7543
      %7545 = vrot.lane.b32.xlu0 %v2196, 6
      %v7546 = vpop.permute.xlu0 %7545
      %7547 = vrot.lane.b32.xlu0 %v2300, 6
      %v7548 = vpop.permute.xlu0 %7547
      %7549 = vrot.lane.b32.xlu0 %v2404, 6
      %v7550 = vpop.permute.xlu0 %7549
      %7551 = vrot.lane.b32.xlu0 %v2508, 6
      %v7552 = vpop.permute.xlu0 %7551
      %7553 = vrot.lane.b32.xlu0 %v2612, 6
      %v7554 = vpop.permute.xlu0 %7553
      %7555 = vrot.lane.b32.xlu0 %v2716, 6
      %v7556 = vpop.permute.xlu0 %7555
      %7557 = vrot.lane.b32.xlu0 %v2820, 6
      %v7558 = vpop.permute.xlu0 %7557
      %7559 = vrot.lane.b32.xlu0 %v2924, 6
      %v7560 = vpop.permute.xlu0 %7559
      %7561 = vrot.lane.b32.xlu0 %v3028, 6
      %v7562 = vpop.permute.xlu0 %7561
      %7563 = vrot.lane.b32.xlu0 %v3132, 6
      %v7564 = vpop.permute.xlu0 %7563
      %7565 = vrot.lane.b32.xlu0 %v3236, 6
      %v7566 = vpop.permute.xlu0 %7565
      %7567 = vrot.lane.b32.xlu0 %v3340, 6
      %v7568 = vpop.permute.xlu0 %7567
      %7569 = vrot.lane.b32.xlu0 %v3444, 6
      %v7570 = vpop.permute.xlu0 %7569
      %7571 = vrot.lane.b32.xlu0 %v3548, 6
      %v7572 = vpop.permute.xlu0 %7571
      %7573 = vrot.lane.b32.xlu0 %v3652, 6
      %v7574 = vpop.permute.xlu0 %7573
      %7575 = vrot.lane.b32.xlu0 %v3756, 6
      %v7576 = vpop.permute.xlu0 %7575
      %7577 = vrot.lane.b32.xlu0 %v3860, 6
      %v7578 = vpop.permute.xlu0 %7577
      %7579 = vrot.lane.b32.xlu0 %v3964, 6
      %v7580 = vpop.permute.xlu0 %7579
      %7613 = vrot.lane.b32.xlu0 %v4067, 9
      %v7614 = vpop.permute.xlu0 %7613
      %7615 = vrot.lane.b32.xlu0 %v4170, 9
      %v7616 = vpop.permute.xlu0 %7615
      %7617 = vrot.lane.b32.xlu0 %v4273, 9
      %v7618 = vpop.permute.xlu0 %7617
      %7619 = vrot.lane.b32.xlu0 %v4376, 9
      %v7620 = vpop.permute.xlu0 %7619
      %7621 = vrot.lane.b32.xlu0 %v4479, 9
      %v7622 = vpop.permute.xlu0 %7621
      %7623 = vrot.lane.b32.xlu0 %v4582, 9
      %v7624 = vpop.permute.xlu0 %7623
      %7625 = vrot.lane.b32.xlu0 %v4685, 9
      %v7626 = vpop.permute.xlu0 %7625
      %7627 = vrot.lane.b32.xlu0 %v4788, 9
      %v7628 = vpop.permute.xlu0 %7627
      %7629 = vrot.lane.b32.xlu0 %v4891, 9
      %v7630 = vpop.permute.xlu0 %7629
      %7631 = vrot.lane.b32.xlu0 %v4994, 9
      %v7632 = vpop.permute.xlu0 %7631
      %7633 = vrot.lane.b32.xlu0 %v5097, 9
      %v7634 = vpop.permute.xlu0 %7633
      %7635 = vrot.lane.b32.xlu0 %v5200, 9
      %v7636 = vpop.permute.xlu0 %7635
      %7637 = vrot.lane.b32.xlu0 %v5303, 9
      %v7638 = vpop.permute.xlu0 %7637
      %7639 = vrot.lane.b32.xlu0 %v5406, 9
      %v7640 = vpop.permute.xlu0 %7639
      %7641 = vrot.lane.b32.xlu0 %v5509, 9
      %v7642 = vpop.permute.xlu0 %7641
      %7643 = vrot.lane.b32.xlu0 %v5612, 9
      %v7644 = vpop.permute.xlu0 %7643
      %7645 = vrot.lane.b32.xlu0 %v5715, 9
      %v7646 = vpop.permute.xlu0 %7645
      %7647 = vrot.lane.b32.xlu0 %v5818, 9
      %v7648 = vpop.permute.xlu0 %7647
      %7649 = vrot.lane.b32.xlu0 %v5921, 9
      %v7650 = vpop.permute.xlu0 %7649
      %7651 = vrot.lane.b32.xlu0 %v6024, 9
      %v7652 = vpop.permute.xlu0 %7651
      %7653 = vrot.lane.b32.xlu0 %v6127, 9
      %v7654 = vpop.permute.xlu0 %7653
      %7655 = vrot.lane.b32.xlu0 %v6230, 9
      %v7656 = vpop.permute.xlu0 %7655
      %7657 = vrot.lane.b32.xlu0 %v6333, 9
      %v7658 = vpop.permute.xlu0 %7657
      %7659 = vrot.lane.b32.xlu0 %v6436, 9
      %v7660 = vpop.permute.xlu0 %7659
      %7661 = vrot.lane.b32.xlu0 %v6539, 9
      %v7662 = vpop.permute.xlu0 %7661
      %7663 = vrot.lane.b32.xlu0 %v6642, 9
      %v7664 = vpop.permute.xlu0 %7663
      %7665 = vrot.lane.b32.xlu0 %v6745, 9
      %v7666 = vpop.permute.xlu0 %7665
      %7667 = vrot.lane.b32.xlu0 %v6848, 9
      %v7668 = vpop.permute.xlu0 %7667
      %7669 = vrot.lane.b32.xlu0 %v6951, 9
      %v7670 = vpop.permute.xlu0 %7669
      %7671 = vrot.lane.b32.xlu0 %v7054, 9
      %v7672 = vpop.permute.xlu0 %7671
      %7673 = vrot.lane.b32.xlu0 %v7157, 9
      %v7674 = vpop.permute.xlu0 %7673
      %7675 = vrot.lane.b32.xlu0 %v7260, 9
      %v7676 = vpop.permute.xlu0 %7675
      %7709 = vrot.lane.b32.xlu0 %v740, 9
      %v7710 = vpop.permute.xlu0 %7709
      %7711 = vrot.lane.b32.xlu0 %v844, 9
      %v7712 = vpop.permute.xlu0 %7711
      %7713 = vrot.lane.b32.xlu0 %v948, 9
      %v7714 = vpop.permute.xlu0 %7713
      %7715 = vrot.lane.b32.xlu0 %v1052, 9
      %v7716 = vpop.permute.xlu0 %7715
      %7717 = vrot.lane.b32.xlu0 %v1156, 9
      %v7718 = vpop.permute.xlu0 %7717
      %7719 = vrot.lane.b32.xlu0 %v1260, 9
      %v7720 = vpop.permute.xlu0 %7719
      %7721 = vrot.lane.b32.xlu0 %v1364, 9
      %v7722 = vpop.permute.xlu0 %7721
      %7723 = vrot.lane.b32.xlu0 %v1468, 9
      %v7724 = vpop.permute.xlu0 %7723
      %7725 = vrot.lane.b32.xlu0 %v1572, 9
      %v7726 = vpop.permute.xlu0 %7725
      %7727 = vrot.lane.b32.xlu0 %v1676, 9
      %v7728 = vpop.permute.xlu0 %7727
      %7729 = vrot.lane.b32.xlu0 %v1780, 9
      %v7730 = vpop.permute.xlu0 %7729
      %7731 = vrot.lane.b32.xlu0 %v1884, 9
      %v7732 = vpop.permute.xlu0 %7731
      %7733 = vrot.lane.b32.xlu0 %v1988, 9
      %v7734 = vpop.permute.xlu0 %7733
      %7735 = vrot.lane.b32.xlu0 %v2092, 9
      %v7736 = vpop.permute.xlu0 %7735
      %7737 = vrot.lane.b32.xlu0 %v2196, 9
      %v7738 = vpop.permute.xlu0 %7737
      %7739 = vrot.lane.b32.xlu0 %v2300, 9
      %v7740 = vpop.permute.xlu0 %7739
      %7741 = vrot.lane.b32.xlu0 %v2404, 9
      %v7742 = vpop.permute.xlu0 %7741
      %7743 = vrot.lane.b32.xlu0 %v2508, 9
      %v7744 = vpop.permute.xlu0 %7743
      %7745 = vrot.lane.b32.xlu0 %v2612, 9
      %v7746 = vpop.permute.xlu0 %7745
      %7747 = vrot.lane.b32.xlu0 %v2716, 9
      %v7748 = vpop.permute.xlu0 %7747
      %7749 = vrot.lane.b32.xlu0 %v2820, 9
      %v7750 = vpop.permute.xlu0 %7749
      %7751 = vrot.lane.b32.xlu0 %v2924, 9
      %v7752 = vpop.permute.xlu0 %7751
      %7753 = vrot.lane.b32.xlu0 %v3028, 9
      %v7754 = vpop.permute.xlu0 %7753
      %7755 = vrot.lane.b32.xlu0 %v3132, 9
      %v7756 = vpop.permute.xlu0 %7755
      %7757 = vrot.lane.b32.xlu0 %v3236, 9
      %v7758 = vpop.permute.xlu0 %7757
      %7759 = vrot.lane.b32.xlu0 %v3340, 9
      %v7760 = vpop.permute.xlu0 %7759
      %7761 = vrot.lane.b32.xlu0 %v3444, 9
      %v7762 = vpop.permute.xlu0 %7761
      %7763 = vrot.lane.b32.xlu0 %v3548, 9
      %v7764 = vpop.permute.xlu0 %7763
      %7765 = vrot.lane.b32.xlu0 %v3652, 9
      %v7766 = vpop.permute.xlu0 %7765
      %7767 = vrot.lane.b32.xlu0 %v3756, 9
      %v7768 = vpop.permute.xlu0 %7767
      %7769 = vrot.lane.b32.xlu0 %v3860, 9
      %v7770 = vpop.permute.xlu0 %7769
      %7771 = vrot.lane.b32.xlu0 %v3964, 9
      %v7772 = vpop.permute.xlu0 %7771
      %7805 = vrot.lane.b32.xlu0 %v4067, 12
      %v7806 = vpop.permute.xlu0 %7805
      %7807 = vrot.lane.b32.xlu0 %v4170, 12
      %v7808 = vpop.permute.xlu0 %7807
      %7809 = vrot.lane.b32.xlu0 %v4273, 12
      %v7810 = vpop.permute.xlu0 %7809
      %7811 = vrot.lane.b32.xlu0 %v4376, 12
      %v7812 = vpop.permute.xlu0 %7811
      %7813 = vrot.lane.b32.xlu0 %v4479, 12
      %v7814 = vpop.permute.xlu0 %7813
      %7815 = vrot.lane.b32.xlu0 %v4582, 12
      %v7816 = vpop.permute.xlu0 %7815
      %7817 = vrot.lane.b32.xlu0 %v4685, 12
      %v7818 = vpop.permute.xlu0 %7817
      %7819 = vrot.lane.b32.xlu0 %v4788, 12
      %v7820 = vpop.permute.xlu0 %7819
      %7821 = vrot.lane.b32.xlu0 %v4891, 12
      %v7822 = vpop.permute.xlu0 %7821
      %7823 = vrot.lane.b32.xlu0 %v4994, 12
      %v7824 = vpop.permute.xlu0 %7823
      %7825 = vrot.lane.b32.xlu0 %v5097, 12
      %v7826 = vpop.permute.xlu0 %7825
      %7827 = vrot.lane.b32.xlu0 %v5200, 12
      %v7828 = vpop.permute.xlu0 %7827
      %7829 = vrot.lane.b32.xlu0 %v5303, 12
      %v7830 = vpop.permute.xlu0 %7829
      %7831 = vrot.lane.b32.xlu0 %v5406, 12
      %v7832 = vpop.permute.xlu0 %7831
      %7833 = vrot.lane.b32.xlu0 %v5509, 12
      %v7834 = vpop.permute.xlu0 %7833
      %7835 = vrot.lane.b32.xlu0 %v5612, 12
      %v7836 = vpop.permute.xlu0 %7835
      %7837 = vrot.lane.b32.xlu0 %v5715, 12
      %v7838 = vpop.permute.xlu0 %7837
      %7839 = vrot.lane.b32.xlu0 %v5818, 12
      %v7840 = vpop.permute.xlu0 %7839
      %7841 = vrot.lane.b32.xlu0 %v5921, 12
      %v7842 = vpop.permute.xlu0 %7841
      %7843 = vrot.lane.b32.xlu0 %v6024, 12
      %v7844 = vpop.permute.xlu0 %7843
      %7845 = vrot.lane.b32.xlu0 %v6127, 12
      %v7846 = vpop.permute.xlu0 %7845
      %7847 = vrot.lane.b32.xlu0 %v6230, 12
      %v7848 = vpop.permute.xlu0 %7847
      %7849 = vrot.lane.b32.xlu0 %v6333, 12
      %v7850 = vpop.permute.xlu0 %7849
      %7851 = vrot.lane.b32.xlu0 %v6436, 12
      %v7852 = vpop.permute.xlu0 %7851
      %7853 = vrot.lane.b32.xlu0 %v6539, 12
      %v7854 = vpop.permute.xlu0 %7853
      %7855 = vrot.lane.b32.xlu0 %v6642, 12
      %v7856 = vpop.permute.xlu0 %7855
      %7857 = vrot.lane.b32.xlu0 %v6745, 12
      %v7858 = vpop.permute.xlu0 %7857
      %7859 = vrot.lane.b32.xlu0 %v6848, 12
      %v7860 = vpop.permute.xlu0 %7859
      %7861 = vrot.lane.b32.xlu0 %v6951, 12
      %v7862 = vpop.permute.xlu0 %7861
      %7863 = vrot.lane.b32.xlu0 %v7054, 12
      %v7864 = vpop.permute.xlu0 %7863
      %7865 = vrot.lane.b32.xlu0 %v7157, 12
      %v7866 = vpop.permute.xlu0 %7865
      %7867 = vrot.lane.b32.xlu0 %v7260, 12
      %v7868 = vpop.permute.xlu0 %7867
      %7901 = vrot.lane.b32.xlu0 %v740, 12
      %v7902 = vpop.permute.xlu0 %7901
      %7903 = vrot.lane.b32.xlu0 %v844, 12
      %v7904 = vpop.permute.xlu0 %7903
      %7905 = vrot.lane.b32.xlu0 %v948, 12
      %v7906 = vpop.permute.xlu0 %7905
      %7907 = vrot.lane.b32.xlu0 %v1052, 12
      %v7908 = vpop.permute.xlu0 %7907
      %7909 = vrot.lane.b32.xlu0 %v1156, 12
      %v7910 = vpop.permute.xlu0 %7909
      %7911 = vrot.lane.b32.xlu0 %v1260, 12
      %v7912 = vpop.permute.xlu0 %7911
      %7913 = vrot.lane.b32.xlu0 %v1364, 12
      %v7914 = vpop.permute.xlu0 %7913
      %7915 = vrot.lane.b32.xlu0 %v1468, 12
      %v7916 = vpop.permute.xlu0 %7915
      %7917 = vrot.lane.b32.xlu0 %v1572, 12
      %v7918 = vpop.permute.xlu0 %7917
      %7919 = vrot.lane.b32.xlu0 %v1676, 12
      %v7920 = vpop.permute.xlu0 %7919
      %7921 = vrot.lane.b32.xlu0 %v1780, 12
      %v7922 = vpop.permute.xlu0 %7921
      %7923 = vrot.lane.b32.xlu0 %v1884, 12
      %v7924 = vpop.permute.xlu0 %7923
      %7925 = vrot.lane.b32.xlu0 %v1988, 12
      %v7926 = vpop.permute.xlu0 %7925
      %7927 = vrot.lane.b32.xlu0 %v2092, 12
      %v7928 = vpop.permute.xlu0 %7927
      %7929 = vrot.lane.b32.xlu0 %v2196, 12
      %v7930 = vpop.permute.xlu0 %7929
      %7931 = vrot.lane.b32.xlu0 %v2300, 12
      %v7932 = vpop.permute.xlu0 %7931
      %7933 = vrot.lane.b32.xlu0 %v2404, 12
      %v7934 = vpop.permute.xlu0 %7933
      %7935 = vrot.lane.b32.xlu0 %v2508, 12
      %v7936 = vpop.permute.xlu0 %7935
      %7937 = vrot.lane.b32.xlu0 %v2612, 12
      %v7938 = vpop.permute.xlu0 %7937
      %7939 = vrot.lane.b32.xlu0 %v2716, 12
      %v7940 = vpop.permute.xlu0 %7939
      %7941 = vrot.lane.b32.xlu0 %v2820, 12
      %v7942 = vpop.permute.xlu0 %7941
      %7943 = vrot.lane.b32.xlu0 %v2924, 12
      %v7944 = vpop.permute.xlu0 %7943
      %7945 = vrot.lane.b32.xlu0 %v3028, 12
      %v7946 = vpop.permute.xlu0 %7945
      %7947 = vrot.lane.b32.xlu0 %v3132, 12
      %v7948 = vpop.permute.xlu0 %7947
      %7949 = vrot.lane.b32.xlu0 %v3236, 12
      %v7950 = vpop.permute.xlu0 %7949
      %7951 = vrot.lane.b32.xlu0 %v3340, 12
      %v7952 = vpop.permute.xlu0 %7951
      %7953 = vrot.lane.b32.xlu0 %v3444, 12
      %v7954 = vpop.permute.xlu0 %7953
      %7955 = vrot.lane.b32.xlu0 %v3548, 12
      %v7956 = vpop.permute.xlu0 %7955
      %7957 = vrot.lane.b32.xlu0 %v3652, 12
      %v7958 = vpop.permute.xlu0 %7957
      %7959 = vrot.lane.b32.xlu0 %v3756, 12
      %v7960 = vpop.permute.xlu0 %7959
      %7961 = vrot.lane.b32.xlu0 %v3860, 12
      %v7962 = vpop.permute.xlu0 %7961
      %7963 = vrot.lane.b32.xlu0 %v3964, 12
      %v7964 = vpop.permute.xlu0 %7963
      %7997 = vrot.lane.b32.xlu0 %v4067, 15
      %v7998 = vpop.permute.xlu0 %7997
      %7999 = vrot.lane.b32.xlu0 %v4170, 15
      %v8000 = vpop.permute.xlu0 %7999
      %8001 = vrot.lane.b32.xlu0 %v4273, 15
      %v8002 = vpop.permute.xlu0 %8001
      %8003 = vrot.lane.b32.xlu0 %v4376, 15
      %v8004 = vpop.permute.xlu0 %8003
      %8005 = vrot.lane.b32.xlu0 %v4479, 15
      %v8006 = vpop.permute.xlu0 %8005
      %8007 = vrot.lane.b32.xlu0 %v4582, 15
      %v8008 = vpop.permute.xlu0 %8007
      %8009 = vrot.lane.b32.xlu0 %v4685, 15
      %v8010 = vpop.permute.xlu0 %8009
      %8011 = vrot.lane.b32.xlu0 %v4788, 15
      %v8012 = vpop.permute.xlu0 %8011
      %8013 = vrot.lane.b32.xlu0 %v4891, 15
      %v8014 = vpop.permute.xlu0 %8013
      %8015 = vrot.lane.b32.xlu0 %v4994, 15
      %v8016 = vpop.permute.xlu0 %8015
      %8017 = vrot.lane.b32.xlu0 %v5097, 15
      %v8018 = vpop.permute.xlu0 %8017
      %8019 = vrot.lane.b32.xlu0 %v5200, 15
      %v8020 = vpop.permute.xlu0 %8019
      %8021 = vrot.lane.b32.xlu0 %v5303, 15
      %v8022 = vpop.permute.xlu0 %8021
      %8023 = vrot.lane.b32.xlu0 %v5406, 15
      %v8024 = vpop.permute.xlu0 %8023
      %8025 = vrot.lane.b32.xlu0 %v5509, 15
      %v8026 = vpop.permute.xlu0 %8025
      %8027 = vrot.lane.b32.xlu0 %v5612, 15
      %v8028 = vpop.permute.xlu0 %8027
      %8029 = vrot.lane.b32.xlu0 %v5715, 15
      %v8030 = vpop.permute.xlu0 %8029
      %8031 = vrot.lane.b32.xlu0 %v5818, 15
      %v8032 = vpop.permute.xlu0 %8031
      %8033 = vrot.lane.b32.xlu0 %v5921, 15
      %v8034 = vpop.permute.xlu0 %8033
      %8035 = vrot.lane.b32.xlu0 %v6024, 15
      %v8036 = vpop.permute.xlu0 %8035
      %8037 = vrot.lane.b32.xlu0 %v6127, 15
      %v8038 = vpop.permute.xlu0 %8037
      %8039 = vrot.lane.b32.xlu0 %v6230, 15
      %v8040 = vpop.permute.xlu0 %8039
      %8041 = vrot.lane.b32.xlu0 %v6333, 15
      %v8042 = vpop.permute.xlu0 %8041
      %8043 = vrot.lane.b32.xlu0 %v6436, 15
      %v8044 = vpop.permute.xlu0 %8043
      %8045 = vrot.lane.b32.xlu0 %v6539, 15
      %v8046 = vpop.permute.xlu0 %8045
      %8047 = vrot.lane.b32.xlu0 %v6642, 15
      %v8048 = vpop.permute.xlu0 %8047
      %8049 = vrot.lane.b32.xlu0 %v6745, 15
      %v8050 = vpop.permute.xlu0 %8049
      %8051 = vrot.lane.b32.xlu0 %v6848, 15
      %v8052 = vpop.permute.xlu0 %8051
      %8053 = vrot.lane.b32.xlu0 %v6951, 15
      %v8054 = vpop.permute.xlu0 %8053
      %8055 = vrot.lane.b32.xlu0 %v7054, 15
      %v8056 = vpop.permute.xlu0 %8055
      %8057 = vrot.lane.b32.xlu0 %v7157, 15
      %v8058 = vpop.permute.xlu0 %8057
      %8059 = vrot.lane.b32.xlu0 %v7260, 15
      %v8060 = vpop.permute.xlu0 %8059
      %v8093 = vsel %vm499, %v147, %v7294
      %v8094 = vsel %vm499, %v148, %v7296
      %v8095 = vsel %vm499, %v149, %v7298
      %v8096 = vsel %vm499, %v150, %v7300
      %v8097 = vsel %vm499, %v151, %v7302
      %v8098 = vsel %vm499, %v152, %v7304
      %v8099 = vsel %vm499, %v153, %v7306
      %v8100 = vsel %vm499, %v154, %v7308
      %v8101 = vsel %vm499, %v155, %v7310
      %v8102 = vsel %vm499, %v156, %v7312
      %v8103 = vsel %vm499, %v157, %v7314
      %v8104 = vsel %vm499, %v158, %v7316
      %v8105 = vsel %vm499, %v159, %v7318
      %v8106 = vsel %vm499, %v160, %v7320
      %v8107 = vsel %vm499, %v161, %v7322
      %v8108 = vsel %vm499, %v162, %v7324
      %v8109 = vsel %vm499, %v163, %v7326
      %v8110 = vsel %vm499, %v164, %v7328
      %v8111 = vsel %vm499, %v165, %v7330
      %v8112 = vsel %vm499, %v166, %v7332
      %v8113 = vsel %vm499, %v167, %v7334
      %v8114 = vsel %vm499, %v168, %v7336
      %v8115 = vsel %vm499, %v169, %v7338
      %v8116 = vsel %vm499, %v170, %v7340
      %v8117 = vsel %vm499, %v171, %v7342
      %v8118 = vsel %vm499, %v172, %v7344
      %v8119 = vsel %vm499, %v173, %v7346
      %v8120 = vsel %vm499, %v174, %v7348
      %v8121 = vsel %vm499, %v175, %v7350
      %v8122 = vsel %vm499, %v176, %v7352
      %v8123 = vsel %vm499, %v177, %v7354
      %v8124 = vsel %vm499, %v178, %v7356
      %v8125 = vsel %vm532, %v8093, %v7422
      %v8126 = vsel %vm532, %v8094, %v7424
      %v8127 = vsel %vm532, %v8095, %v7426
      %v8128 = vsel %vm532, %v8096, %v7428
      %v8129 = vsel %vm532, %v8097, %v7430
      %v8130 = vsel %vm532, %v8098, %v7432
      %v8131 = vsel %vm532, %v8099, %v7434
      %v8132 = vsel %vm532, %v8100, %v7436
      %v8133 = vsel %vm532, %v8101, %v7438
      %v8134 = vsel %vm532, %v8102, %v7440
      %v8135 = vsel %vm532, %v8103, %v7442
      %v8136 = vsel %vm532, %v8104, %v7444
      %v8137 = vsel %vm532, %v8105, %v7446
      %v8138 = vsel %vm532, %v8106, %v7448
      %v8139 = vsel %vm532, %v8107, %v7450
      %v8140 = vsel %vm532, %v8108, %v7452
      %v8141 = vsel %vm532, %v8109, %v7454
      %v8142 = vsel %vm532, %v8110, %v7456
      %v8143 = vsel %vm532, %v8111, %v7458
      %v8144 = vsel %vm532, %v8112, %v7460
      %v8145 = vsel %vm532, %v8113, %v7462
      %v8146 = vsel %vm532, %v8114, %v7464
      %v8147 = vsel %vm532, %v8115, %v7466
      %v8148 = vsel %vm532, %v8116, %v7468
      %v8149 = vsel %vm532, %v8117, %v7470
      %v8150 = vsel %vm532, %v8118, %v7472
      %v8151 = vsel %vm532, %v8119, %v7474
      %v8152 = vsel %vm532, %v8120, %v7476
      %v8153 = vsel %vm532, %v8121, %v7478
      %v8154 = vsel %vm532, %v8122, %v7480
      %v8155 = vsel %vm532, %v8123, %v7482
      %v8156 = vsel %vm532, %v8124, %v7484
      %v8157 = vsel %vm565, %v8125, %v7518
      %v8158 = vsel %vm565, %v8126, %v7520
      %v8159 = vsel %vm565, %v8127, %v7522
      %v8160 = vsel %vm565, %v8128, %v7524
      %v8161 = vsel %vm565, %v8129, %v7526
      %v8162 = vsel %vm565, %v8130, %v7528
      %v8163 = vsel %vm565, %v8131, %v7530
      %v8164 = vsel %vm565, %v8132, %v7532
      %v8165 = vsel %vm565, %v8133, %v7534
      %v8166 = vsel %vm565, %v8134, %v7536
      %v8167 = vsel %vm565, %v8135, %v7538
      %v8168 = vsel %vm565, %v8136, %v7540
      %v8169 = vsel %vm565, %v8137, %v7542
      %v8170 = vsel %vm565, %v8138, %v7544
      %v8171 = vsel %vm565, %v8139, %v7546
      %v8172 = vsel %vm565, %v8140, %v7548
      %v8173 = vsel %vm565, %v8141, %v7550
      %v8174 = vsel %vm565, %v8142, %v7552
      %v8175 = vsel %vm565, %v8143, %v7554
      %v8176 = vsel %vm565, %v8144, %v7556
      %v8177 = vsel %vm565, %v8145, %v7558
      %v8178 = vsel %vm565, %v8146, %v7560
      %v8179 = vsel %vm565, %v8147, %v7562
      %v8180 = vsel %vm565, %v8148, %v7564
      %v8181 = vsel %vm565, %v8149, %v7566
      %v8182 = vsel %vm565, %v8150, %v7568
      %v8183 = vsel %vm565, %v8151, %v7570
      %v8184 = vsel %vm565, %v8152, %v7572
      %v8185 = vsel %vm565, %v8153, %v7574
      %v8186 = vsel %vm565, %v8154, %v7576
      %v8187 = vsel %vm565, %v8155, %v7578
      %v8188 = vsel %vm565, %v8156, %v7580
      %vm8189 = vcmask 97280
      %v8190 = vsel %vm8189, %v8157, %v7614
      %v8191 = vsel %vm8189, %v8158, %v7616
      %v8192 = vsel %vm8189, %v8159, %v7618
      %v8193 = vsel %vm8189, %v8160, %v7620
      %v8194 = vsel %vm8189, %v8161, %v7622
      %v8195 = vsel %vm8189, %v8162, %v7624
      %v8196 = vsel %vm8189, %v8163, %v7626
      %v8197 = vsel %vm8189, %v8164, %v7628
      %v8198 = vsel %vm8189, %v8165, %v7630
      %v8199 = vsel %vm8189, %v8166, %v7632
      %v8200 = vsel %vm8189, %v8167, %v7634
      %v8201 = vsel %vm8189, %v8168, %v7636
      %v8202 = vsel %vm8189, %v8169, %v7638
      %v8203 = vsel %vm8189, %v8170, %v7640
      %v8204 = vsel %vm8189, %v8171, %v7642
      %v8205 = vsel %vm8189, %v8172, %v7644
      %v8206 = vsel %vm8189, %v8173, %v7646
      %v8207 = vsel %vm8189, %v8174, %v7648
      %v8208 = vsel %vm8189, %v8175, %v7650
      %v8209 = vsel %vm8189, %v8176, %v7652
      %v8210 = vsel %vm8189, %v8177, %v7654
      %v8211 = vsel %vm8189, %v8178, %v7656
      %v8212 = vsel %vm8189, %v8179, %v7658
      %v8213 = vsel %vm8189, %v8180, %v7660
      %v8214 = vsel %vm8189, %v8181, %v7662
      %v8215 = vsel %vm8189, %v8182, %v7664
      %v8216 = vsel %vm8189, %v8183, %v7666
      %v8217 = vsel %vm8189, %v8184, %v7668
      %v8218 = vsel %vm8189, %v8185, %v7670
      %v8219 = vsel %vm8189, %v8186, %v7672
      %v8220 = vsel %vm8189, %v8187, %v7674
      %v8221 = vsel %vm8189, %v8188, %v7676
      %vm8222 = vcmask 121856
      %v8223 = vsel %vm8222, %v8190, %v7710
      %v8224 = vsel %vm8222, %v8191, %v7712
      %v8225 = vsel %vm8222, %v8192, %v7714
      %v8226 = vsel %vm8222, %v8193, %v7716
      %v8227 = vsel %vm8222, %v8194, %v7718
      %v8228 = vsel %vm8222, %v8195, %v7720
      %v8229 = vsel %vm8222, %v8196, %v7722
      %v8230 = vsel %vm8222, %v8197, %v7724
      %v8231 = vsel %vm8222, %v8198, %v7726
      %v8232 = vsel %vm8222, %v8199, %v7728
      %v8233 = vsel %vm8222, %v8200, %v7730
      %v8234 = vsel %vm8222, %v8201, %v7732
      %v8235 = vsel %vm8222, %v8202, %v7734
      %v8236 = vsel %vm8222, %v8203, %v7736
      %v8237 = vsel %vm8222, %v8204, %v7738
      %v8238 = vsel %vm8222, %v8205, %v7740
      %v8239 = vsel %vm8222, %v8206, %v7742
      %v8240 = vsel %vm8222, %v8207, %v7744
      %v8241 = vsel %vm8222, %v8208, %v7746
      %v8242 = vsel %vm8222, %v8209, %v7748
      %v8243 = vsel %vm8222, %v8210, %v7750
      %v8244 = vsel %vm8222, %v8211, %v7752
      %v8245 = vsel %vm8222, %v8212, %v7754
      %v8246 = vsel %vm8222, %v8213, %v7756
      %v8247 = vsel %vm8222, %v8214, %v7758
      %v8248 = vsel %vm8222, %v8215, %v7760
      %v8249 = vsel %vm8222, %v8216, %v7762
      %v8250 = vsel %vm8222, %v8217, %v7764
      %v8251 = vsel %vm8222, %v8218, %v7766
      %v8252 = vsel %vm8222, %v8219, %v7768
      %v8253 = vsel %vm8222, %v8220, %v7770
      %v8254 = vsel %vm8222, %v8221, %v7772
      %vm8255 = vcmask 146432
      %v8256 = vsel %vm8255, %v8223, %v7806
      %v8257 = vsel %vm8255, %v8224, %v7808
      %v8258 = vsel %vm8255, %v8225, %v7810
      %v8259 = vsel %vm8255, %v8226, %v7812
      %v8260 = vsel %vm8255, %v8227, %v7814
      %v8261 = vsel %vm8255, %v8228, %v7816
      %v8262 = vsel %vm8255, %v8229, %v7818
      %v8263 = vsel %vm8255, %v8230, %v7820
      %v8264 = vsel %vm8255, %v8231, %v7822
      %v8265 = vsel %vm8255, %v8232, %v7824
      %v8266 = vsel %vm8255, %v8233, %v7826
      %v8267 = vsel %vm8255, %v8234, %v7828
      %v8268 = vsel %vm8255, %v8235, %v7830
      %v8269 = vsel %vm8255, %v8236, %v7832
      %v8270 = vsel %vm8255, %v8237, %v7834
      %v8271 = vsel %vm8255, %v8238, %v7836
      %v8272 = vsel %vm8255, %v8239, %v7838
      %v8273 = vsel %vm8255, %v8240, %v7840
      %v8274 = vsel %vm8255, %v8241, %v7842
      %v8275 = vsel %vm8255, %v8242, %v7844
      %v8276 = vsel %vm8255, %v8243, %v7846
      %v8277 = vsel %vm8255, %v8244, %v7848
      %v8278 = vsel %vm8255, %v8245, %v7850
      %v8279 = vsel %vm8255, %v8246, %v7852
      %v8280 = vsel %vm8255, %v8247, %v7854
      %v8281 = vsel %vm8255, %v8248, %v7856
      %v8282 = vsel %vm8255, %v8249, %v7858
      %v8283 = vsel %vm8255, %v8250, %v7860
      %v8284 = vsel %vm8255, %v8251, %v7862
      %v8285 = vsel %vm8255, %v8252, %v7864
      %v8286 = vsel %vm8255, %v8253, %v7866
      %v8287 = vsel %vm8255, %v8254, %v7868
      %vm8288 = vcmask 171008
      %v8289 = vsel %vm8288, %v8256, %v7902
      %v8290 = vsel %vm8288, %v8257, %v7904
      %v8291 = vsel %vm8288, %v8258, %v7906
      %v8292 = vsel %vm8288, %v8259, %v7908
      %v8293 = vsel %vm8288, %v8260, %v7910
      %v8294 = vsel %vm8288, %v8261, %v7912
      %v8295 = vsel %vm8288, %v8262, %v7914
      %v8296 = vsel %vm8288, %v8263, %v7916
      %v8297 = vsel %vm8288, %v8264, %v7918
      %v8298 = vsel %vm8288, %v8265, %v7920
      %v8299 = vsel %vm8288, %v8266, %v7922
      %v8300 = vsel %vm8288, %v8267, %v7924
      %v8301 = vsel %vm8288, %v8268, %v7926
      %v8302 = vsel %vm8288, %v8269, %v7928
      %v8303 = vsel %vm8288, %v8270, %v7930
      %v8304 = vsel %vm8288, %v8271, %v7932
      %v8305 = vsel %vm8288, %v8272, %v7934
      %v8306 = vsel %vm8288, %v8273, %v7936
      %v8307 = vsel %vm8288, %v8274, %v7938
      %v8308 = vsel %vm8288, %v8275, %v7940
      %v8309 = vsel %vm8288, %v8276, %v7942
      %v8310 = vsel %vm8288, %v8277, %v7944
      %v8311 = vsel %vm8288, %v8278, %v7946
      %v8312 = vsel %vm8288, %v8279, %v7948
      %v8313 = vsel %vm8288, %v8280, %v7950
      %v8314 = vsel %vm8288, %v8281, %v7952
      %v8315 = vsel %vm8288, %v8282, %v7954
      %v8316 = vsel %vm8288, %v8283, %v7956
      %v8317 = vsel %vm8288, %v8284, %v7958
      %v8318 = vsel %vm8288, %v8285, %v7960
      %v8319 = vsel %vm8288, %v8286, %v7962
      %v8320 = vsel %vm8288, %v8287, %v7964
      %vm8321 = vcmask 195584
      %v8322 = vsel %vm8321, %v8289, %v7998
      %v8323 = vsel %vm8321, %v8290, %v8000
      %v8324 = vsel %vm8321, %v8291, %v8002
      %v8325 = vsel %vm8321, %v8292, %v8004
      %v8326 = vsel %vm8321, %v8293, %v8006
      %v8327 = vsel %vm8321, %v8294, %v8008
      %v8328 = vsel %vm8321, %v8295, %v8010
      %v8329 = vsel %vm8321, %v8296, %v8012
      %v8330 = vsel %vm8321, %v8297, %v8014
      %v8331 = vsel %vm8321, %v8298, %v8016
      %v8332 = vsel %vm8321, %v8299, %v8018
      %v8333 = vsel %vm8321, %v8300, %v8020
      %v8334 = vsel %vm8321, %v8301, %v8022
      %v8335 = vsel %vm8321, %v8302, %v8024
      %v8336 = vsel %vm8321, %v8303, %v8026
      %v8337 = vsel %vm8321, %v8304, %v8028
      %v8338 = vsel %vm8321, %v8305, %v8030
      %v8339 = vsel %vm8321, %v8306, %v8032
      %v8340 = vsel %vm8321, %v8307, %v8034
      %v8341 = vsel %vm8321, %v8308, %v8036
      %v8342 = vsel %vm8321, %v8309, %v8038
      %v8343 = vsel %vm8321, %v8310, %v8040
      %v8344 = vsel %vm8321, %v8311, %v8042
      %v8345 = vsel %vm8321, %v8312, %v8044
      %v8346 = vsel %vm8321, %v8313, %v8046
      %v8347 = vsel %vm8321, %v8314, %v8048
      %v8348 = vsel %vm8321, %v8315, %v8050
      %v8349 = vsel %vm8321, %v8316, %v8052
      %v8350 = vsel %vm8321, %v8317, %v8054
      %v8351 = vsel %vm8321, %v8318, %v8056
      %v8352 = vsel %vm8321, %v8319, %v8058
      %v8353 = vsel %vm8321, %v8320, %v8060
      %vm8354 = vcmask 220160
      %8355 = vst.msk [vmem:[%s145] sm:$0xff] %vm8354, %v8322
      %8356 = vst.msk [vmem:[%s145 + $0x8] sm:$0xff] %vm8354, %v8323
      %8357 = vst.msk [vmem:[%s145 + $0x10] sm:$0xff] %vm8354, %v8324
      %8358 = vst.msk [vmem:[%s145 + $0x18] sm:$0xff] %vm8354, %v8325
      %8359 = vst.msk [vmem:[%s145 + $0x20] sm:$0xff] %vm8354, %v8326
      %8360 = vst.msk [vmem:[%s145 + $0x28] sm:$0xff] %vm8354, %v8327
      %8361 = vst.msk [vmem:[%s145 + $0x30] sm:$0xff] %vm8354, %v8328
      %8362 = vst.msk [vmem:[%s145 + $0x38] sm:$0xff] %vm8354, %v8329
      %8363 = vst.msk [vmem:[%s145 + $0x40] sm:$0xff] %vm8354, %v8330
      %8364 = vst.msk [vmem:[%s145 + $0x48] sm:$0xff] %vm8354, %v8331
      %8365 = vst.msk [vmem:[%s145 + $0x50] sm:$0xff] %vm8354, %v8332
      %8366 = vst.msk [vmem:[%s145 + $0x58] sm:$0xff] %vm8354, %v8333
      %8367 = vst.msk [vmem:[%s145 + $0x60] sm:$0xff] %vm8354, %v8334
      %8368 = vst.msk [vmem:[%s145 + $0x68] sm:$0xff] %vm8354, %v8335
      %8369 = vst.msk [vmem:[%s145 + $0x70] sm:$0xff] %vm8354, %v8336
      %8370 = vst.msk [vmem:[%s145 + $0x78] sm:$0xff] %vm8354, %v8337
      %8371 = vst.msk [vmem:[%s145 + $0x80] sm:$0xff] %vm8354, %v8338
      %8372 = vst.msk [vmem:[%s145 + $0x88] sm:$0xff] %vm8354, %v8339
      %8373 = vst.msk [vmem:[%s145 + $0x90] sm:$0xff] %vm8354, %v8340
      %8374 = vst.msk [vmem:[%s145 + $0x98] sm:$0xff] %vm8354, %v8341
      %8375 = vst.msk [vmem:[%s145 + $0xa0] sm:$0xff] %vm8354, %v8342
      %8376 = vst.msk [vmem:[%s145 + $0xa8] sm:$0xff] %vm8354, %v8343
      %8377 = vst.msk [vmem:[%s145 + $0xb0] sm:$0xff] %vm8354, %v8344
      %8378 = vst.msk [vmem:[%s145 + $0xb8] sm:$0xff] %vm8354, %v8345
      %8379 = vst.msk [vmem:[%s145 + $0xc0] sm:$0xff] %vm8354, %v8346
      %8380 = vst.msk [vmem:[%s145 + $0xc8] sm:$0xff] %vm8354, %v8347
      %8381 = vst.msk [vmem:[%s145 + $0xd0] sm:$0xff] %vm8354, %v8348
      %8382 = vst.msk [vmem:[%s145 + $0xd8] sm:$0xff] %vm8354, %v8349
      %8383 = vst.msk [vmem:[%s145 + $0xe0] sm:$0xff] %vm8354, %v8350
      %8384 = vst.msk [vmem:[%s145 + $0xe8] sm:$0xff] %vm8354, %v8351
      %8385 = vst.msk [vmem:[%s145 + $0xf0] sm:$0xff] %vm8354, %v8352
      %8386 = vst.msk [vmem:[%s145 + $0xf8] sm:$0xff] %vm8354, %v8353
      %s8387 = smul.u32 32, %s13
      %p8388 = scmp.lt.s32.totalorder %s8387, 127
      %s8389 = scalar_select %p8388, %s8387, 127
      %s8390 = smul.addr %s8389, 8
      %s8391 = scalar_lea.vmem %s2, %s8390
      // Predicated region
      $region29: #{tpu_custom_call.1} parent=27 // pred_check
        %p8392 = pneg %p78
      $region30: #{tpu_custom_call.1} parent=27 // pred_check_branch
        %8394 = sbr.rel (%p8392) target = $region32
      $region31: #{tpu_custom_call.1} parent=27 // pred_region
        %s8395 = smul.u32 32, %s13
      $region32: #{tpu_custom_call.1} parent=27 // pred_fallthru
        _
    $region28: #{tpu_custom_call.1} parent=5 // pred_fallthru
      _
    %p8396 = scmp.le.s32.totalorder 2, %s8
    // Predicated region
    $region33: #{tpu_custom_call.1} parent=5 // pred_check
      %p8397 = pneg %p8396
    $region34: #{tpu_custom_call.1} parent=5 // pred_check_branch
      %8399 = sbr.rel (%p8397) target = $region36
    $region35: #{tpu_custom_call.1} parent=5 // pred_region
      %s8400 = ssub.s32 %s8, 2
      // Predicated region
      $region37: #{tpu_custom_call.1} parent=35 // pred_check
        %p8401 = pneg %p84
      $region38: #{tpu_custom_call.1} parent=35 // pred_check_branch
        %8403 = sbr.rel (%p8401) target = $region40
      $region39: #{tpu_custom_call.1} parent=35 // pred_region
        %s8404 = smul.u32 32, %s14
        %p8405 = scmp.lt.s32.totalorder %s8404, 127
        %s8406 = scalar_select %p8405, %s8404, 127
        %s8407 = smul.addr %s8406, 8
        %s8408 = scalar_lea.vmem %s2, %s8407
      $region40: #{tpu_custom_call.1} parent=35 // pred_fallthru
        _
    $region36: #{tpu_custom_call.1} parent=5 // pred_fallthru
      _
  $region6: #{tpu_custom_call.1} parent=0 // loop_footer
    %s12 = sadd.s32 1, %s8
  $region7: #{tpu_custom_call.1} parent=0 // loop_footer_branch
    %7 = sbr.rel target = $region3
  $region8: #{tpu_custom_call.1} parent=0 // loop_exit
    _

</llo_original>
